<compile_context>
chip_gen: v5e
topology: v5e:2x2
jax: 0.10.0
libtpu: 0.0.40
codegen_flags: <defaults>
</compile_context>

<pallas_src>
import jax
import jax.numpy as jnp
from jax import lax
from jax.experimental import pallas as pl
from jax.experimental.pallas import tpu as pltpu

EPS = 1e-5
# Explicit scoped-VMEM budget: below v7x's 64 MiB physical (leaves headroom for
# double buffering), above the 16/32 MiB defaults on v5e/v6e.
_VMEM_LIMIT = 48 * 1024 * 1024


def _round_up(x, m):
    return ((x + m - 1) // m) * m


# ---------------------------------------------------------------------------
# Shared in-kernel helpers.
# ---------------------------------------------------------------------------
def _conv3x3_interior(get_rows, w_ref, b_ref, H, W, Cp):
    """3x3 conv over a flattened, spatially padded slab.

    get_rows(off) -> (H*(W+2), Cp) bf16: contiguous rows [off, off+H*(W+2))
    of the flat padded slab (padded frame has 1 top halo row, W+2 columns and
    >= 2 rows below the last interior row so every tap window is in bounds).

    Returns the conv + bias output restricted to the interior, (H, W, Cp) f32.
    The two rightmost columns of the padded-width accumulator are wrap-around
    garbage and are dropped by the final slice.
    """
    Wp = W + 2
    M = H * Wp
    acc = jnp.zeros((M, Cp), jnp.float32)
    for t in range(9):                       # statically unrolled taps
        ky, kx = divmod(t, 3)
        acc = acc + jnp.dot(get_rows(ky * Wp + kx), w_ref[t],
                            preferred_element_type=jnp.float32)
    acc = acc + b_ref[...]                                  # (M, Cp) + (1, Cp)
    return acc.reshape(H, Wp, Cp)[:, :W, :]                 # interior, f32


def _stats_rows(y_flat, Cp):
    """Per-tile BN partials, padded to 8 sublanes for a dense store."""
    s1 = jnp.sum(y_flat, axis=0, keepdims=True)             # (1, Cp)
    s2 = jnp.sum(y_flat * y_flat, axis=0, keepdims=True)    # (1, Cp)
    return jnp.concatenate([s1, s2, jnp.zeros((6, Cp), jnp.float32)], axis=0)


# ---------------------------------------------------------------------------
# Kernel A: conv1 + bias + per-image BN partials.
# ---------------------------------------------------------------------------
def _conv_stats_kernel(xp_ref, w_ref, b_ref, y_ref, stats_ref):
    """xp_ref: (1, L, Cp) bf16 flat padded input; w_ref: (9, Cp, Cp) bf16;
    b_ref: (1, Cp) f32; y_ref: (1, H, W, Cp) bf16; stats_ref: (1, 8, Cp) f32."""
    _, H, W, Cp = y_ref.shape
    Wp = W + 2
    M = H * Wp

    def get_rows(off):
        return xp_ref[:, off:off + M, :].reshape(M, Cp)     # contiguous view

    y = _conv3x3_interior(get_rows, w_ref, b_ref, H, W, Cp)     # (H, W, Cp) f32
    yf = y.reshape(H * W, Cp)
    stats_ref[...] = _stats_rows(yf, Cp).reshape(1, 8, Cp)
    y_ref[...] = y.reshape(1, H, W, Cp).astype(y_ref.dtype)


# ---------------------------------------------------------------------------
# Kernel B: fused [BN1 scale/shift + ReLU + halo re-zero] -> conv2 + bias +
#           per-image BN partials.
# ---------------------------------------------------------------------------
def _fused_bn_relu_conv_stats_kernel(y1p_ref, mask_ref, ss1_ref, w_ref, b_ref,
                                     y_ref, stats_ref, a_scr):
    """y1p_ref: (1, L, Cp) bf16 flat padded conv1 output (pre-BN, zero halo);
    mask_ref: (L, 1) f32 interior mask; ss1_ref: (8, Cp) f32 (rows 0/1 =
    scale/shift of BN1); w_ref: (9, Cp, Cp) bf16; b_ref: (1, Cp) f32;
    y_ref: (1, H, W, Cp) bf16; stats_ref: (1, 8, Cp) f32;
    a_scr: (L, Cp) bf16 VMEM scratch holding the normalized activation."""
    _, H, W, Cp = y_ref.shape
    Wp = W + 2
    M = H * Wp

    # Stage-1 pass B fused into the load path.  relu(0*scale+shift) != 0, so
    # the halo (and bottom slack rows) are forced back to zero with the mask
    # before conv2 consumes the slab.
    scale = ss1_ref[0:1, :]
    shift = ss1_ref[1:2, :]
    z = jnp.maximum(y1p_ref[0].astype(jnp.float32) * scale + shift, 0.0)
    a_scr[...] = (z * mask_ref[...]).astype(a_scr.dtype)

    def get_rows(off):
        return a_scr[off:off + M, :]                        # contiguous view

    y = _conv3x3_interior(get_rows, w_ref, b_ref, H, W, Cp)     # (H, W, Cp) f32
    yf = y.reshape(H * W, Cp)
    stats_ref[...] = _stats_rows(yf, Cp).reshape(1, 8, Cp)
    y_ref[...] = y.reshape(1, H, W, Cp).astype(y_ref.dtype)


# ---------------------------------------------------------------------------
# Kernel C: BN2 scale/shift + residual add + ReLU.
# ---------------------------------------------------------------------------
def _bn_residual_relu_kernel(y2_ref, ss2_ref, xp_ref, o_ref):
    """y2_ref: (1, H, W, Cp) bf16; ss2_ref: (8, Cp) f32; xp_ref: (1, Hq, Wp, Cp)
    bf16 padded original input (residual read from its interior); o_ref f32."""
    _, H, W, Cp = o_ref.shape
    scale = ss2_ref[0:1, :]
    shift = ss2_ref[1:2, :]
    y2 = y2_ref[...].reshape(H * W, Cp).astype(jnp.float32)
    xres = xp_ref[:, 1:H + 1, 1:W + 1, :].reshape(H * W, Cp).astype(jnp.float32)
    z = y2 * scale + shift + xres
    o_ref[...] = jnp.maximum(z, 0.0).reshape(1, H, W, Cp).astype(o_ref.dtype)


# ---------------------------------------------------------------------------
# Wrapper-side helpers (tiny, O(Cp) work).
# ---------------------------------------------------------------------------
def _fold_bn(partial, gamma, beta, count):
    """Combine per-image [sum, sum_sq] partials into folded (scale, shift)."""
    s = jnp.sum(partial[:, :2, :], axis=0)                  # (2, Cp)
    mean = s[0] / count
    var = jnp.maximum(s[1] / count - mean * mean, 0.0)      # biased variance
    # TODO(synk): Welford/Chan-style merge for better numerical robustness.
    scale = gamma * lax.rsqrt(var + EPS)
    shift = beta - mean * scale
    Cp = gamma.shape[0]
    pad = jnp.zeros((6, Cp), jnp.float32)
    return jnp.concatenate([scale[None], shift[None], pad], axis=0)   # (8, Cp)


def _prep_stage_params(w_hwio, b, g, beta, C, Cp):
    """(3,3,C,C) HWIO f32 -> (9, Cp, Cp) bf16 per-tap matrices + padded params."""
    w9 = jnp.zeros((9, Cp, Cp), jnp.float32).at[:, :C, :C].set(w_hwio.reshape(9, C, C))
    bp = jnp.zeros((1, Cp), jnp.float32).at[0, :C].set(b)
    gp = jnp.zeros((Cp,), jnp.float32).at[:C].set(g)
    betap = jnp.zeros((Cp,), jnp.float32).at[:C].set(beta)
    return w9.astype(jnp.bfloat16), bp, gp, betap


def residual_block_forward(x_nchw, params):
    """ResidualBlock(in_c, out_c, 3, padding=1, stride=1, use_1x1conv=False)."""
    N, C, H, W = x_nchw.shape
    Cp = _round_up(C, 128)                  # lane-dense channel dim
    Wp = W + 2
    # Padded frame: 1 top halo row, 1 bottom halo row + 1 slack row so all nine
    # shifted tap windows of the flattened slab stay in bounds.
    Hq = H + 3
    L = Hq * Wp
    count = jnp.float32(N * H * W)

    # ---- layout plumbing: NCHW -> NHWC, bf16, ONE merged spatial+channel pad
    x_nhwc = jnp.transpose(x_nchw, (0, 2, 3, 1)).astype(jnp.bfloat16)
    xp4 = jnp.pad(x_nhwc, ((0, 0), (1, 2), (1, 1), (0, Cp - C)))   # (N,Hq,Wp,Cp)
    xp_flat = xp4.reshape(N, L, Cp)                                 # free reshape

    w1m, b1r, g1p, bt1p = _prep_stage_params(params["w1"], params["b1"],
                                             params["g1"], params["beta1"], C, Cp)
    w2m, b2r, g2p, bt2p = _prep_stage_params(params["w2"], params["b2"],
                                             params["g2"], params["beta2"], C, Cp)

    # Interior mask over the flat padded frame (1.0 inside the HxW interior).
    rows = jnp.arange(L, dtype=jnp.int32)
    py, px = rows // Wp, rows % Wp
    interior = ((py >= 1) & (py <= H) & (px >= 1) & (px <= W))
    interior = interior.astype(jnp.float32).reshape(L, 1)

    cparams = pltpu.CompilerParams(
        dimension_semantics=("parallel",),      # per-image partial stats => safe
        vmem_limit_bytes=_VMEM_LIMIT,
    )
    conv_out_shape = (
        jax.ShapeDtypeStruct((N, H, W, Cp), jnp.bfloat16),
        jax.ShapeDtypeStruct((N, 8, Cp), jnp.float32),
    )
    conv_out_specs = (
        pl.BlockSpec((1, H, W, Cp), lambda n: (n, 0, 0, 0)),
        pl.BlockSpec((1, 8, Cp), lambda n: (n, 0, 0)),
    )

    # ---- Stage 1, pass A: conv1 + bias + per-image BN partials --------------
    # TODO(synk): row-slab tiling (grid=(N, H//TH)) for large H*W / small N.
    y1conv, stats1 = pl.pallas_call(
        _conv_stats_kernel,
        grid=(N,),
        in_specs=[
            pl.BlockSpec((1, L, Cp), lambda n: (n, 0, 0)),
            pl.BlockSpec((9, Cp, Cp), lambda n: (0, 0, 0)),
            pl.BlockSpec((1, Cp), lambda n: (0, 0)),
        ],
        out_specs=conv_out_specs,
        out_shape=conv_out_shape,
        compiler_params=cparams,
    )(xp_flat, w1m, b1r)

    ss1 = _fold_bn(stats1, g1p, bt1p, count)                        # (8, Cp)

    # ---- Stage 2, pass A fused with stage 1 pass B: bn1+relu -> conv2 -------
    # TODO(synk): build this halo in-kernel (pl.ANY + make_async_copy into a
    #             zeroed VMEM slab) to drop this wrapper-side pad pass too.
    y1p_flat = jnp.pad(y1conv, ((0, 0), (1, 2), (1, 1), (0, 0))).reshape(N, L, Cp)

    y2conv, stats2 = pl.pallas_call(
        _fused_bn_relu_conv_stats_kernel,
        grid=(N,),
        in_specs=[
            pl.BlockSpec((1, L, Cp), lambda n: (n, 0, 0)),
            pl.BlockSpec((L, 1), lambda n: (0, 0)),
            pl.BlockSpec((8, Cp), lambda n: (0, 0)),
            pl.BlockSpec((9, Cp, Cp), lambda n: (0, 0, 0)),
            pl.BlockSpec((1, Cp), lambda n: (0, 0)),
        ],
        out_specs=conv_out_specs,
        out_shape=conv_out_shape,
        scratch_shapes=[pltpu.VMEM((L, Cp), jnp.bfloat16)],
        compiler_params=cparams,
    )(y1p_flat, interior, ss1, w2m, b2r)

    ss2 = _fold_bn(stats2, g2p, bt2p, count)                        # (8, Cp)

    # ---- Stage 2, pass B: bn2 + residual (from padded x interior) + relu ----
    out_nhwc = pl.pallas_call(
        _bn_residual_relu_kernel,
        grid=(N,),
        in_specs=[
            pl.BlockSpec((1, H, W, Cp), lambda n: (n, 0, 0, 0)),
            pl.BlockSpec((8, Cp), lambda n: (0, 0)),
            pl.BlockSpec((1, Hq, Wp, Cp), lambda n: (n, 0, 0, 0)),
        ],
        out_specs=pl.BlockSpec((1, H, W, Cp), lambda n: (n, 0, 0, 0)),
        out_shape=jax.ShapeDtypeStruct((N, H, W, Cp), jnp.float32),
        compiler_params=cparams,
    )(y2conv, ss2, xp4)

    out = out_nhwc[..., :C]                                 # drop channel padding
    return jnp.transpose(out, (0, 3, 1, 2))                 # NHWC -> NCHW


# ---------------------------------------------------------------------------
# Pure-JAX reference with the same mixed precision (bf16 conv operands,
# f32 accumulation / BN / residual / ReLU) for tight validation.
# ---------------------------------------------------------------------------
def _reference_forward(x_nchw, params):
    x = jnp.transpose(x_nchw, (0, 2, 3, 1)).astype(jnp.float32)     # NHWC
    xb = x.astype(jnp.bfloat16)

    def conv_bn(inp_bf16, w_hwio, b, g, beta):
        C = w_hwio.shape[-1]
        y = lax.conv_general_dilated(
            inp_bf16, w_hwio.astype(jnp.bfloat16),
            window_strides=(1, 1), padding="SAME",
            dimension_numbers=("NHWC", "HWIO", "NHWC"),
            preferred_element_type=jnp.float32)
        y = y + b.reshape(1, 1, 1, C)
        mean = jnp.mean(y, axis=(0, 1, 2), keepdims=True)
        var = jnp.mean((y - mean) ** 2, axis=(0, 1, 2), keepdims=True)
        return (y - mean) * lax.rsqrt(var + EPS) * g.reshape(1, 1, 1, C) \
            + beta.reshape(1, 1, 1, C)

    y1 = jax.nn.relu(conv_bn(xb, params["w1"], params["b1"],
                             params["g1"], params["beta1"]))
    y2 = conv_bn(y1.astype(jnp.bfloat16), params["w2"], params["b2"],
                 params["g2"], params["beta2"])
    out = jax.nn.relu(y2 + xb.astype(jnp.float32))
    return jnp.transpose(out, (0, 3, 1, 2))


def _init_params(key, C):
    ks = jax.random.split(key, 6)
    # Conv weights in (kH, kW, Cin, Cout) order (HWIO).
    w1 = jax.random.normal(ks[0], (3, 3, C, C), jnp.float32) * 0.1
    w2 = jax.random.normal(ks[1], (3, 3, C, C), jnp.float32) * 0.1
    b1 = jax.random.normal(ks[2], (C,), jnp.float32) * 0.05
    b2 = jax.random.normal(ks[3], (C,), jnp.float32) * 0.05
    g1 = 1.0 + jax.random.normal(ks[4], (C,), jnp.float32) * 0.05
    g2 = 1.0 + jax.random.normal(ks[5], (C,), jnp.float32) * 0.05
    beta1 = jnp.zeros((C,), jnp.float32)
    beta2 = jnp.zeros((C,), jnp.float32)
    return dict(w1=w1, b1=b1, g1=g1, beta1=beta1,
                w2=w2, b2=b2, g2=g2, beta2=beta2)


if __name__ == "__main__":
    N, C, H, W = 2, 4, 16, 16   # in_channels == out_channels (use_1x1conv=False)
    key = jax.random.PRNGKey(0)
    kx, kp = jax.random.split(key)
    x = jax.random.normal(kx, (N, C, H, W), jnp.float32)
    params = _init_params(kp, C)

    fwd = jax.jit(residual_block_forward)
    out = jax.block_until_ready(fwd(x, params))

    ref = _reference_forward(x, params)
    assert out.shape == (N, C, H, W)
    err = float(jnp.max(jnp.abs(out - ref)))
    assert err < 2e-2, f"Pallas output mismatch vs reference: max abs err = {err}"

    print("KERNEL_OK")
</pallas_src>

<mosaic_0001>
module attributes {stable_mosaic.version = 11 : i64} {
  func.func @_conv_stats_kernel(%arg0: i32, %arg1: memref<1x342x128xbf16, #tpu.memory_space<vmem>>, %arg2: memref<9x128x128xbf16, #tpu.memory_space<vmem>>, %arg3: memref<1x128xf32, #tpu.memory_space<vmem>>, %arg4: memref<1x16x16x128xbf16, #tpu.memory_space<vmem>>, %arg5: memref<1x8x128xf32, #tpu.memory_space<vmem>>) attributes {dimension_semantics = [#tpu.dimension_semantics<parallel>], iteration_bounds = array<i64: 2>, scalar_prefetch = 0 : i64, scratch_operands = 0 : i64, tpu.core_type = #tpu.core_type<tc>, window_params = [{transform_indices = @transform_0, window_bounds = array<i64: 1, 342, 128>}, {pipeline_mode = #tpu.pipeline_mode<synchronous>, transform_indices = @transform_1, window_bounds = array<i64: 9, 128, 128>}, {pipeline_mode = #tpu.pipeline_mode<synchronous>, transform_indices = @transform_2, window_bounds = array<i64: 1, 128>}, {transform_indices = @transform_3, window_bounds = array<i64: 1, 16, 16, 128>}, {transform_indices = @transform_4, window_bounds = array<i64: 1, 8, 128>}]} {
    %cst = arith.constant 0.000000e+00 : f32
    %0 = vector.broadcast %cst : f32 to vector<288x128xf32>
    %c0 = arith.constant 0 : index
    %c0_0 = arith.constant 0 : index
    %c0_1 = arith.constant 0 : index
    %1 = vector.load %arg1[%c0, %c0_0, %c0_1] : memref<1x342x128xbf16, #tpu.memory_space<vmem>>, vector<1x288x128xbf16>
    %2 = vector.shape_cast %1 : vector<1x288x128xbf16> to vector<288x128xbf16>
    %c0_2 = arith.constant 0 : index
    %c0_3 = arith.constant 0 : index
    %c0_4 = arith.constant 0 : index
    %3 = vector.load %arg2[%c0_2, %c0_3, %c0_4] : memref<9x128x128xbf16, #tpu.memory_space<vmem>>, vector<1x128x128xbf16>
    %4 = vector.shape_cast %3 : vector<1x128x128xbf16> to vector<128x128xbf16>
    %cst_5 = arith.constant dense<0.000000e+00> : vector<288x128xf32>
    %5 = tpu.matmul %2, %4, %cst_5 {dimension_numbers = #tpu.dot_dimension_numbers<[1], [0], [0], [1], [0, 0, 1, 1], [], []>} : vector<288x128xbf16>, vector<128x128xbf16>, vector<288x128xf32> -> vector<288x128xf32>
    %6 = arith.addf %0, %5 : vector<288x128xf32>
    %c0_6 = arith.constant 0 : index
    %c1 = arith.constant 1 : index
    %c0_7 = arith.constant 0 : index
    %7 = vector.load %arg1[%c0_6, %c1, %c0_7] : memref<1x342x128xbf16, #tpu.memory_space<vmem>>, vector<1x288x128xbf16>
    %8 = vector.shape_cast %7 : vector<1x288x128xbf16> to vector<288x128xbf16>
    %c1_8 = arith.constant 1 : index
    %c0_9 = arith.constant 0 : index
    %c0_10 = arith.constant 0 : index
    %9 = vector.load %arg2[%c1_8, %c0_9, %c0_10] : memref<9x128x128xbf16, #tpu.memory_space<vmem>>, vector<1x128x128xbf16>
    %10 = vector.shape_cast %9 : vector<1x128x128xbf16> to vector<128x128xbf16>
    %cst_11 = arith.constant dense<0.000000e+00> : vector<288x128xf32>
    %11 = tpu.matmul %8, %10, %cst_11 {dimension_numbers = #tpu.dot_dimension_numbers<[1], [0], [0], [1], [0, 0, 1, 1], [], []>} : vector<288x128xbf16>, vector<128x128xbf16>, vector<288x128xf32> -> vector<288x128xf32>
    %12 = arith.addf %6, %11 : vector<288x128xf32>
    %c0_12 = arith.constant 0 : index
    %c2 = arith.constant 2 : index
    %c0_13 = arith.constant 0 : index
    %13 = vector.load %arg1[%c0_12, %c2, %c0_13] : memref<1x342x128xbf16, #tpu.memory_space<vmem>>, vector<1x288x128xbf16>
    %14 = vector.shape_cast %13 : vector<1x288x128xbf16> to vector<288x128xbf16>
    %c2_14 = arith.constant 2 : index
    %c0_15 = arith.constant 0 : index
    %c0_16 = arith.constant 0 : index
    %15 = vector.load %arg2[%c2_14, %c0_15, %c0_16] : memref<9x128x128xbf16, #tpu.memory_space<vmem>>, vector<1x128x128xbf16>
    %16 = vector.shape_cast %15 : vector<1x128x128xbf16> to vector<128x128xbf16>
    %cst_17 = arith.constant dense<0.000000e+00> : vector<288x128xf32>
    %17 = tpu.matmul %14, %16, %cst_17 {dimension_numbers = #tpu.dot_dimension_numbers<[1], [0], [0], [1], [0, 0, 1, 1], [], []>} : vector<288x128xbf16>, vector<128x128xbf16>, vector<288x128xf32> -> vector<288x128xf32>
    %18 = arith.addf %12, %17 : vector<288x128xf32>
    %c0_18 = arith.constant 0 : index
    %c18 = arith.constant 18 : index
    %c0_19 = arith.constant 0 : index
    %19 = vector.load %arg1[%c0_18, %c18, %c0_19] : memref<1x342x128xbf16, #tpu.memory_space<vmem>>, vector<1x288x128xbf16>
    %20 = vector.shape_cast %19 : vector<1x288x128xbf16> to vector<288x128xbf16>
    %c3 = arith.constant 3 : index
    %c0_20 = arith.constant 0 : index
    %c0_21 = arith.constant 0 : index
    %21 = vector.load %arg2[%c3, %c0_20, %c0_21] : memref<9x128x128xbf16, #tpu.memory_space<vmem>>, vector<1x128x128xbf16>
    %22 = vector.shape_cast %21 : vector<1x128x128xbf16> to vector<128x128xbf16>
    %cst_22 = arith.constant dense<0.000000e+00> : vector<288x128xf32>
    %23 = tpu.matmul %20, %22, %cst_22 {dimension_numbers = #tpu.dot_dimension_numbers<[1], [0], [0], [1], [0, 0, 1, 1], [], []>} : vector<288x128xbf16>, vector<128x128xbf16>, vector<288x128xf32> -> vector<288x128xf32>
    %24 = arith.addf %18, %23 : vector<288x128xf32>
    %c0_23 = arith.constant 0 : index
    %c19 = arith.constant 19 : index
    %c0_24 = arith.constant 0 : index
    %25 = vector.load %arg1[%c0_23, %c19, %c0_24] : memref<1x342x128xbf16, #tpu.memory_space<vmem>>, vector<1x288x128xbf16>
    %26 = vector.shape_cast %25 : vector<1x288x128xbf16> to vector<288x128xbf16>
    %c4 = arith.constant 4 : index
    %c0_25 = arith.constant 0 : index
    %c0_26 = arith.constant 0 : index
    %27 = vector.load %arg2[%c4, %c0_25, %c0_26] : memref<9x128x128xbf16, #tpu.memory_space<vmem>>, vector<1x128x128xbf16>
    %28 = vector.shape_cast %27 : vector<1x128x128xbf16> to vector<128x128xbf16>
    %cst_27 = arith.constant dense<0.000000e+00> : vector<288x128xf32>
    %29 = tpu.matmul %26, %28, %cst_27 {dimension_numbers = #tpu.dot_dimension_numbers<[1], [0], [0], [1], [0, 0, 1, 1], [], []>} : vector<288x128xbf16>, vector<128x128xbf16>, vector<288x128xf32> -> vector<288x128xf32>
    %30 = arith.addf %24, %29 : vector<288x128xf32>
    %c0_28 = arith.constant 0 : index
    %c20 = arith.constant 20 : index
    %c0_29 = arith.constant 0 : index
    %31 = vector.load %arg1[%c0_28, %c20, %c0_29] : memref<1x342x128xbf16, #tpu.memory_space<vmem>>, vector<1x288x128xbf16>
    %32 = vector.shape_cast %31 : vector<1x288x128xbf16> to vector<288x128xbf16>
    %c5 = arith.constant 5 : index
    %c0_30 = arith.constant 0 : index
    %c0_31 = arith.constant 0 : index
    %33 = vector.load %arg2[%c5, %c0_30, %c0_31] : memref<9x128x128xbf16, #tpu.memory_space<vmem>>, vector<1x128x128xbf16>
    %34 = vector.shape_cast %33 : vector<1x128x128xbf16> to vector<128x128xbf16>
    %cst_32 = arith.constant dense<0.000000e+00> : vector<288x128xf32>
    %35 = tpu.matmul %32, %34, %cst_32 {dimension_numbers = #tpu.dot_dimension_numbers<[1], [0], [0], [1], [0, 0, 1, 1], [], []>} : vector<288x128xbf16>, vector<128x128xbf16>, vector<288x128xf32> -> vector<288x128xf32>
    %36 = arith.addf %30, %35 : vector<288x128xf32>
    %c0_33 = arith.constant 0 : index
    %c36 = arith.constant 36 : index
    %c0_34 = arith.constant 0 : index
    %37 = vector.load %arg1[%c0_33, %c36, %c0_34] : memref<1x342x128xbf16, #tpu.memory_space<vmem>>, vector<1x288x128xbf16>
    %38 = vector.shape_cast %37 : vector<1x288x128xbf16> to vector<288x128xbf16>
    %c6 = arith.constant 6 : index
    %c0_35 = arith.constant 0 : index
    %c0_36 = arith.constant 0 : index
    %39 = vector.load %arg2[%c6, %c0_35, %c0_36] : memref<9x128x128xbf16, #tpu.memory_space<vmem>>, vector<1x128x128xbf16>
    %40 = vector.shape_cast %39 : vector<1x128x128xbf16> to vector<128x128xbf16>
    %cst_37 = arith.constant dense<0.000000e+00> : vector<288x128xf32>
    %41 = tpu.matmul %38, %40, %cst_37 {dimension_numbers = #tpu.dot_dimension_numbers<[1], [0], [0], [1], [0, 0, 1, 1], [], []>} : vector<288x128xbf16>, vector<128x128xbf16>, vector<288x128xf32> -> vector<288x128xf32>
    %42 = arith.addf %36, %41 : vector<288x128xf32>
    %c0_38 = arith.constant 0 : index
    %c37 = arith.constant 37 : index
    %c0_39 = arith.constant 0 : index
    %43 = vector.load %arg1[%c0_38, %c37, %c0_39] : memref<1x342x128xbf16, #tpu.memory_space<vmem>>, vector<1x288x128xbf16>
    %44 = vector.shape_cast %43 : vector<1x288x128xbf16> to vector<288x128xbf16>
    %c7 = arith.constant 7 : index
    %c0_40 = arith.constant 0 : index
    %c0_41 = arith.constant 0 : index
    %45 = vector.load %arg2[%c7, %c0_40, %c0_41] : memref<9x128x128xbf16, #tpu.memory_space<vmem>>, vector<1x128x128xbf16>
    %46 = vector.shape_cast %45 : vector<1x128x128xbf16> to vector<128x128xbf16>
    %cst_42 = arith.constant dense<0.000000e+00> : vector<288x128xf32>
    %47 = tpu.matmul %44, %46, %cst_42 {dimension_numbers = #tpu.dot_dimension_numbers<[1], [0], [0], [1], [0, 0, 1, 1], [], []>} : vector<288x128xbf16>, vector<128x128xbf16>, vector<288x128xf32> -> vector<288x128xf32>
    %48 = arith.addf %42, %47 : vector<288x128xf32>
    %c0_43 = arith.constant 0 : index
    %c38 = arith.constant 38 : index
    %c0_44 = arith.constant 0 : index
    %49 = vector.load %arg1[%c0_43, %c38, %c0_44] : memref<1x342x128xbf16, #tpu.memory_space<vmem>>, vector<1x288x128xbf16>
    %50 = vector.shape_cast %49 : vector<1x288x128xbf16> to vector<288x128xbf16>
    %c8 = arith.constant 8 : index
    %c0_45 = arith.constant 0 : index
    %c0_46 = arith.constant 0 : index
    %51 = vector.load %arg2[%c8, %c0_45, %c0_46] : memref<9x128x128xbf16, #tpu.memory_space<vmem>>, vector<1x128x128xbf16>
    %52 = vector.shape_cast %51 : vector<1x128x128xbf16> to vector<128x128xbf16>
    %cst_47 = arith.constant dense<0.000000e+00> : vector<288x128xf32>
    %53 = tpu.matmul %50, %52, %cst_47 {dimension_numbers = #tpu.dot_dimension_numbers<[1], [0], [0], [1], [0, 0, 1, 1], [], []>} : vector<288x128xbf16>, vector<128x128xbf16>, vector<288x128xf32> -> vector<288x128xf32>
    %54 = arith.addf %48, %53 : vector<288x128xf32>
    %c0_48 = arith.constant 0 : index
    %c0_49 = arith.constant 0 : index
    %55 = vector.load %arg3[%c0_48, %c0_49] : memref<1x128xf32, #tpu.memory_space<vmem>>, vector<1x128xf32>
    %56 = vector.broadcast %55 : vector<1x128xf32> to vector<288x128xf32>
    %57 = arith.addf %54, %56 : vector<288x128xf32>
    %58 = vector.shape_cast %57 : vector<288x128xf32> to vector<16x18x128xf32>
    %59 = vector.extract_strided_slice %58 {offsets = [0, 0, 0], sizes = [16, 16, 128], strides = [1, 1, 1]} : vector<16x18x128xf32> to vector<16x16x128xf32>
    %60 = vector.shape_cast %59 : vector<16x16x128xf32> to vector<256x128xf32>
    %cst_50 = arith.constant dense<0.000000e+00> : vector<128xf32>
    %61 = vector.multi_reduction <add>, %60, %cst_50 [0] : vector<256x128xf32> to vector<128xf32>
    %62 = vector.shape_cast %61 : vector<128xf32> to vector<1x128xf32>
    %63 = arith.mulf %60, %60 : vector<256x128xf32>
    %cst_51 = arith.constant dense<0.000000e+00> : vector<128xf32>
    %64 = vector.multi_reduction <add>, %63, %cst_51 [0] : vector<256x128xf32> to vector<128xf32>
    %65 = vector.shape_cast %64 : vector<128xf32> to vector<1x128xf32>
    %cst_52 = arith.constant 0.000000e+00 : f32
    %66 = vector.broadcast %cst_52 : f32 to vector<6x128xf32>
    %67 = tpu.concatenate %62, %65, %66 in 0 : vector<1x128xf32>, vector<1x128xf32>, vector<6x128xf32> -> vector<8x128xf32>
    %68 = vector.shape_cast %67 : vector<8x128xf32> to vector<1x8x128xf32>
    %c0_53 = arith.constant 0 : index
    %c0_54 = arith.constant 0 : index
    %c0_55 = arith.constant 0 : index
    %69 = vector.load %arg5[%c0_53, %c0_54, %c0_55] : memref<1x8x128xf32, #tpu.memory_space<vmem>>, vector<1x8x128xf32>
    tpu.vector_store %arg5[%c0_53, %c0_54, %c0_55], %68 {strides = array<i32>} : memref<1x8x128xf32, #tpu.memory_space<vmem>>, vector<1x8x128xf32>,
    %70 = vector.shape_cast %59 : vector<16x16x128xf32> to vector<1x16x16x128xf32>
    %71 = arith.truncf %70 : vector<1x16x16x128xf32> to vector<1x16x16x128xbf16>
    %c0_56 = arith.constant 0 : index
    %c0_57 = arith.constant 0 : index
    %c0_58 = arith.constant 0 : index
    %c0_59 = arith.constant 0 : index
    %72 = vector.load %arg4[%c0_56, %c0_57, %c0_58, %c0_59] : memref<1x16x16x128xbf16, #tpu.memory_space<vmem>>, vector<1x16x16x128xbf16>
    tpu.vector_store %arg4[%c0_56, %c0_57, %c0_58, %c0_59], %71 {strides = array<i32>} : memref<1x16x16x128xbf16, #tpu.memory_space<vmem>>, vector<1x16x16x128xbf16>,
    return
  }
  func.func @transform_0(%arg0: i32) -> (i32, i32, i32) {
    %c0_i32 = arith.constant 0 : i32
    %c0_i32_0 = arith.constant 0 : i32
    %c0_i32_1 = arith.constant 0 : i32
    return %arg0, %c0_i32, %c0_i32_0 : i32, i32, i32
  }
  func.func @transform_1(%arg0: i32) -> (i32, i32, i32) {
    %c0_i32 = arith.constant 0 : i32
    %c0_i32_0 = arith.constant 0 : i32
    %c0_i32_1 = arith.constant 0 : i32
    %c0_i32_2 = arith.constant 0 : i32
    return %c0_i32, %c0_i32_0, %c0_i32_1 : i32, i32, i32
  }
  func.func @transform_2(%arg0: i32) -> (i32, i32) {
    %c0_i32 = arith.constant 0 : i32
    %c0_i32_0 = arith.constant 0 : i32
    %c0_i32_1 = arith.constant 0 : i32
    return %c0_i32, %c0_i32_0 : i32, i32
  }
  func.func @transform_3(%arg0: i32) -> (i32, i32, i32, i32) {
    %c0_i32 = arith.constant 0 : i32
    %c0_i32_0 = arith.constant 0 : i32
    %c0_i32_1 = arith.constant 0 : i32
    %c0_i32_2 = arith.constant 0 : i32
    return %arg0, %c0_i32, %c0_i32_0, %c0_i32_1 : i32, i32, i32, i32
  }
  func.func @transform_4(%arg0: i32) -> (i32, i32, i32) {
    %c0_i32 = arith.constant 0 : i32
    %c0_i32_0 = arith.constant 0 : i32
    %c0_i32_1 = arith.constant 0 : i32
    return %arg0, %c0_i32, %c0_i32_0 : i32, i32, i32
  }
}

module attributes {stable_mosaic.version = 11 : i64} {
  func.func @_bn_residual_relu_kernel(%arg0: i32, %arg1: memref<1x16x16x128xbf16, #tpu.memory_space<vmem>>, %arg2: memref<8x128xf32, #tpu.memory_space<vmem>>, %arg3: memref<1x19x18x128xbf16, #tpu.memory_space<vmem>>, %arg4: memref<1x16x16x128xf32, #tpu.memory_space<vmem>>) attributes {dimension_semantics = [#tpu.dimension_semantics<parallel>], iteration_bounds = array<i64: 2>, scalar_prefetch = 0 : i64, scratch_operands = 0 : i64, tpu.core_type = #tpu.core_type<tc>, window_params = [{transform_indices = @transform_0, window_bounds = array<i64: 1, 16, 16, 128>}, {pipeline_mode = #tpu.pipeline_mode<synchronous>, transform_indices = @transform_1, window_bounds = array<i64: 8, 128>}, {transform_indices = @transform_2, window_bounds = array<i64: 1, 19, 18, 128>}, {transform_indices = @transform_3, window_bounds = array<i64: 1, 16, 16, 128>}]} {
    %c0 = arith.constant 0 : index
    %c0_0 = arith.constant 0 : index
    %0 = vector.load %arg2[%c0, %c0_0] : memref<8x128xf32, #tpu.memory_space<vmem>>, vector<1x128xf32>
    %c1 = arith.constant 1 : index
    %c0_1 = arith.constant 0 : index
    %1 = vector.load %arg2[%c1, %c0_1] : memref<8x128xf32, #tpu.memory_space<vmem>>, vector<1x128xf32>
    %c0_2 = arith.constant 0 : index
    %c0_3 = arith.constant 0 : index
    %c0_4 = arith.constant 0 : index
    %c0_5 = arith.constant 0 : index
    %2 = vector.load %arg1[%c0_2, %c0_3, %c0_4, %c0_5] : memref<1x16x16x128xbf16, #tpu.memory_space<vmem>>, vector<1x16x16x128xbf16>
    %3 = vector.shape_cast %2 : vector<1x16x16x128xbf16> to vector<256x128xbf16>
    %4 = arith.extf %3 : vector<256x128xbf16> to vector<256x128xf32>
    %c0_6 = arith.constant 0 : index
    %c1_7 = arith.constant 1 : index
    %c1_8 = arith.constant 1 : index
    %c0_9 = arith.constant 0 : index
    %5 = vector.load %arg3[%c0_6, %c1_7, %c1_8, %c0_9] : memref<1x19x18x128xbf16, #tpu.memory_space<vmem>>, vector<1x16x16x128xbf16>
    %6 = vector.shape_cast %5 : vector<1x16x16x128xbf16> to vector<256x128xbf16>
    %7 = arith.extf %6 : vector<256x128xbf16> to vector<256x128xf32>
    %8 = vector.broadcast %0 : vector<1x128xf32> to vector<256x128xf32>
    %9 = arith.mulf %4, %8 : vector<256x128xf32>
    %10 = vector.broadcast %1 : vector<1x128xf32> to vector<256x128xf32>
    %11 = arith.addf %9, %10 : vector<256x128xf32>
    %12 = arith.addf %11, %7 : vector<256x128xf32>
    %cst = arith.constant 0.000000e+00 : f32
    %13 = vector.broadcast %cst : f32 to vector<256x128xf32>
    %14 = arith.maximumf %12, %13 : vector<256x128xf32>
    %15 = vector.shape_cast %14 : vector<256x128xf32> to vector<1x16x16x128xf32>
    %c0_10 = arith.constant 0 : index
    %c0_11 = arith.constant 0 : index
    %c0_12 = arith.constant 0 : index
    %c0_13 = arith.constant 0 : index
    %16 = vector.load %arg4[%c0_10, %c0_11, %c0_12, %c0_13] : memref<1x16x16x128xf32, #tpu.memory_space<vmem>>, vector<1x16x16x128xf32>
    tpu.vector_store %arg4[%c0_10, %c0_11, %c0_12, %c0_13], %15 {strides = array<i32>} : memref<1x16x16x128xf32, #tpu.memory_space<vmem>>, vector<1x16x16x128xf32>,
    return
  }
  func.func @transform_0(%arg0: i32) -> (i32, i32, i32, i32) {
    %c0_i32 = arith.constant 0 : i32
    %c0_i32_0 = arith.constant 0 : i32
    %c0_i32_1 = arith.constant 0 : i32
    %c0_i32_2 = arith.constant 0 : i32
    return %arg0, %c0_i32, %c0_i32_0, %c0_i32_1 : i32, i32, i32, i32
  }
  func.func @transform_1(%arg0: i32) -> (i32, i32) {
    %c0_i32 = arith.constant 0 : i32
    %c0_i32_0 = arith.constant 0 : i32
    %c0_i32_1 = arith.constant 0 : i32
    return %c0_i32, %c0_i32_0 : i32, i32
  }
  func.func @transform_2(%arg0: i32) -> (i32, i32, i32, i32) {
    %c0_i32 = arith.constant 0 : i32
    %c0_i32_0 = arith.constant 0 : i32
    %c0_i32_1 = arith.constant 0 : i32
    %c0_i32_2 = arith.constant 0 : i32
    return %arg0, %c0_i32, %c0_i32_0, %c0_i32_1 : i32, i32, i32, i32
  }
  func.func @transform_3(%arg0: i32) -> (i32, i32, i32, i32) {
    %c0_i32 = arith.constant 0 : i32
    %c0_i32_0 = arith.constant 0 : i32
    %c0_i32_1 = arith.constant 0 : i32
    %c0_i32_2 = arith.constant 0 : i32
    return %arg0, %c0_i32, %c0_i32_0, %c0_i32_1 : i32, i32, i32, i32
  }
}

module attributes {stable_mosaic.version = 11 : i64} {
  func.func @_fused_bn_relu_conv_stats_kernel(%arg0: i32, %arg1: memref<1x342x128xbf16, #tpu.memory_space<vmem>>, %arg2: memref<342x1xf32, #tpu.memory_space<vmem>>, %arg3: memref<8x128xf32, #tpu.memory_space<vmem>>, %arg4: memref<9x128x128xbf16, #tpu.memory_space<vmem>>, %arg5: memref<1x128xf32, #tpu.memory_space<vmem>>, %arg6: memref<1x16x16x128xbf16, #tpu.memory_space<vmem>>, %arg7: memref<1x8x128xf32, #tpu.memory_space<vmem>>, %arg8: memref<342x128xbf16, #tpu.memory_space<vmem>>) attributes {dimension_semantics = [#tpu.dimension_semantics<parallel>], iteration_bounds = array<i64: 2>, scalar_prefetch = 0 : i64, scratch_operands = 1 : i64, tpu.core_type = #tpu.core_type<tc>, window_params = [{transform_indices = @transform_0, window_bounds = array<i64: 1, 342, 128>}, {pipeline_mode = #tpu.pipeline_mode<synchronous>, transform_indices = @transform_1, window_bounds = array<i64: 342, 1>}, {pipeline_mode = #tpu.pipeline_mode<synchronous>, transform_indices = @transform_2, window_bounds = array<i64: 8, 128>}, {pipeline_mode = #tpu.pipeline_mode<synchronous>, transform_indices = @transform_3, window_bounds = array<i64: 9, 128, 128>}, {pipeline_mode = #tpu.pipeline_mode<synchronous>, transform_indices = @transform_4, window_bounds = array<i64: 1, 128>}, {transform_indices = @transform_5, window_bounds = array<i64: 1, 16, 16, 128>}, {transform_indices = @transform_6, window_bounds = array<i64: 1, 8, 128>}]} {
    %c0 = arith.constant 0 : index
    %c0_0 = arith.constant 0 : index
    %0 = vector.load %arg3[%c0, %c0_0] : memref<8x128xf32, #tpu.memory_space<vmem>>, vector<1x128xf32>
    %c1 = arith.constant 1 : index
    %c0_1 = arith.constant 0 : index
    %1 = vector.load %arg3[%c1, %c0_1] : memref<8x128xf32, #tpu.memory_space<vmem>>, vector<1x128xf32>
    %c0_2 = arith.constant 0 : index
    %c0_3 = arith.constant 0 : index
    %c0_4 = arith.constant 0 : index
    %2 = vector.load %arg1[%c0_2, %c0_3, %c0_4] : memref<1x342x128xbf16, #tpu.memory_space<vmem>>, vector<1x342x128xbf16>
    %3 = vector.shape_cast %2 : vector<1x342x128xbf16> to vector<342x128xbf16>
    %4 = arith.extf %3 : vector<342x128xbf16> to vector<342x128xf32>
    %5 = vector.broadcast %0 : vector<1x128xf32> to vector<342x128xf32>
    %6 = arith.mulf %4, %5 : vector<342x128xf32>
    %7 = vector.broadcast %1 : vector<1x128xf32> to vector<342x128xf32>
    %8 = arith.addf %6, %7 : vector<342x128xf32>
    %cst = arith.constant 0.000000e+00 : f32
    %9 = vector.broadcast %cst : f32 to vector<342x128xf32>
    %10 = arith.maximumf %8, %9 : vector<342x128xf32>
    %c0_5 = arith.constant 0 : index
    %c0_6 = arith.constant 0 : index
    %11 = vector.load %arg2[%c0_5, %c0_6] : memref<342x1xf32, #tpu.memory_space<vmem>>, vector<342x1xf32>
    %12 = vector.broadcast %11 : vector<342x1xf32> to vector<342x128xf32>
    %13 = arith.mulf %10, %12 : vector<342x128xf32>
    %14 = arith.truncf %13 : vector<342x128xf32> to vector<342x128xbf16>
    %c0_7 = arith.constant 0 : index
    %c0_8 = arith.constant 0 : index
    %15 = vector.load %arg8[%c0_7, %c0_8] : memref<342x128xbf16, #tpu.memory_space<vmem>>, vector<342x128xbf16>
    tpu.vector_store %arg8[%c0_7, %c0_8], %14 {strides = array<i32>} : memref<342x128xbf16, #tpu.memory_space<vmem>>, vector<342x128xbf16>,
    %cst_9 = arith.constant 0.000000e+00 : f32
    %16 = vector.broadcast %cst_9 : f32 to vector<288x128xf32>
    %c0_10 = arith.constant 0 : index
    %c0_11 = arith.constant 0 : index
    %17 = vector.load %arg8[%c0_10, %c0_11] : memref<342x128xbf16, #tpu.memory_space<vmem>>, vector<288x128xbf16>
    %c0_12 = arith.constant 0 : index
    %c0_13 = arith.constant 0 : index
    %c0_14 = arith.constant 0 : index
    %18 = vector.load %arg4[%c0_12, %c0_13, %c0_14] : memref<9x128x128xbf16, #tpu.memory_space<vmem>>, vector<1x128x128xbf16>
    %19 = vector.shape_cast %18 : vector<1x128x128xbf16> to vector<128x128xbf16>
    %cst_15 = arith.constant dense<0.000000e+00> : vector<288x128xf32>
    %20 = tpu.matmul %17, %19, %cst_15 {dimension_numbers = #tpu.dot_dimension_numbers<[1], [0], [0], [1], [0, 0, 1, 1], [], []>} : vector<288x128xbf16>, vector<128x128xbf16>, vector<288x128xf32> -> vector<288x128xf32>
    %21 = arith.addf %16, %20 : vector<288x128xf32>
    %c1_16 = arith.constant 1 : index
    %c0_17 = arith.constant 0 : index
    %22 = vector.load %arg8[%c1_16, %c0_17] : memref<342x128xbf16, #tpu.memory_space<vmem>>, vector<288x128xbf16>
    %c1_18 = arith.constant 1 : index
    %c0_19 = arith.constant 0 : index
    %c0_20 = arith.constant 0 : index
    %23 = vector.load %arg4[%c1_18, %c0_19, %c0_20] : memref<9x128x128xbf16, #tpu.memory_space<vmem>>, vector<1x128x128xbf16>
    %24 = vector.shape_cast %23 : vector<1x128x128xbf16> to vector<128x128xbf16>
    %cst_21 = arith.constant dense<0.000000e+00> : vector<288x128xf32>
    %25 = tpu.matmul %22, %24, %cst_21 {dimension_numbers = #tpu.dot_dimension_numbers<[1], [0], [0], [1], [0, 0, 1, 1], [], []>} : vector<288x128xbf16>, vector<128x128xbf16>, vector<288x128xf32> -> vector<288x128xf32>
    %26 = arith.addf %21, %25 : vector<288x128xf32>
    %c2 = arith.constant 2 : index
    %c0_22 = arith.constant 0 : index
    %27 = vector.load %arg8[%c2, %c0_22] : memref<342x128xbf16, #tpu.memory_space<vmem>>, vector<288x128xbf16>
    %c2_23 = arith.constant 2 : index
    %c0_24 = arith.constant 0 : index
    %c0_25 = arith.constant 0 : index
    %28 = vector.load %arg4[%c2_23, %c0_24, %c0_25] : memref<9x128x128xbf16, #tpu.memory_space<vmem>>, vector<1x128x128xbf16>
    %29 = vector.shape_cast %28 : vector<1x128x128xbf16> to vector<128x128xbf16>
    %cst_26 = arith.constant dense<0.000000e+00> : vector<288x128xf32>
    %30 = tpu.matmul %27, %29, %cst_26 {dimension_numbers = #tpu.dot_dimension_numbers<[1], [0], [0], [1], [0, 0, 1, 1], [], []>} : vector<288x128xbf16>, vector<128x128xbf16>, vector<288x128xf32> -> vector<288x128xf32>
    %31 = arith.addf %26, %30 : vector<288x128xf32>
    %c18 = arith.constant 18 : index
    %c0_27 = arith.constant 0 : index
    %32 = vector.load %arg8[%c18, %c0_27] : memref<342x128xbf16, #tpu.memory_space<vmem>>, vector<288x128xbf16>
    %c3 = arith.constant 3 : index
    %c0_28 = arith.constant 0 : index
    %c0_29 = arith.constant 0 : index
    %33 = vector.load %arg4[%c3, %c0_28, %c0_29] : memref<9x128x128xbf16, #tpu.memory_space<vmem>>, vector<1x128x128xbf16>
    %34 = vector.shape_cast %33 : vector<1x128x128xbf16> to vector<128x128xbf16>
    %cst_30 = arith.constant dense<0.000000e+00> : vector<288x128xf32>
    %35 = tpu.matmul %32, %34, %cst_30 {dimension_numbers = #tpu.dot_dimension_numbers<[1], [0], [0], [1], [0, 0, 1, 1], [], []>} : vector<288x128xbf16>, vector<128x128xbf16>, vector<288x128xf32> -> vector<288x128xf32>
    %36 = arith.addf %31, %35 : vector<288x128xf32>
    %c19 = arith.constant 19 : index
    %c0_31 = arith.constant 0 : index
    %37 = vector.load %arg8[%c19, %c0_31] : memref<342x128xbf16, #tpu.memory_space<vmem>>, vector<288x128xbf16>
    %c4 = arith.constant 4 : index
    %c0_32 = arith.constant 0 : index
    %c0_33 = arith.constant 0 : index
    %38 = vector.load %arg4[%c4, %c0_32, %c0_33] : memref<9x128x128xbf16, #tpu.memory_space<vmem>>, vector<1x128x128xbf16>
    %39 = vector.shape_cast %38 : vector<1x128x128xbf16> to vector<128x128xbf16>
    %cst_34 = arith.constant dense<0.000000e+00> : vector<288x128xf32>
    %40 = tpu.matmul %37, %39, %cst_34 {dimension_numbers = #tpu.dot_dimension_numbers<[1], [0], [0], [1], [0, 0, 1, 1], [], []>} : vector<288x128xbf16>, vector<128x128xbf16>, vector<288x128xf32> -> vector<288x128xf32>
    %41 = arith.addf %36, %40 : vector<288x128xf32>
    %c20 = arith.constant 20 : index
    %c0_35 = arith.constant 0 : index
    %42 = vector.load %arg8[%c20, %c0_35] : memref<342x128xbf16, #tpu.memory_space<vmem>>, vector<288x128xbf16>
    %c5 = arith.constant 5 : index
    %c0_36 = arith.constant 0 : index
    %c0_37 = arith.constant 0 : index
    %43 = vector.load %arg4[%c5, %c0_36, %c0_37] : memref<9x128x128xbf16, #tpu.memory_space<vmem>>, vector<1x128x128xbf16>
    %44 = vector.shape_cast %43 : vector<1x128x128xbf16> to vector<128x128xbf16>
    %cst_38 = arith.constant dense<0.000000e+00> : vector<288x128xf32>
    %45 = tpu.matmul %42, %44, %cst_38 {dimension_numbers = #tpu.dot_dimension_numbers<[1], [0], [0], [1], [0, 0, 1, 1], [], []>} : vector<288x128xbf16>, vector<128x128xbf16>, vector<288x128xf32> -> vector<288x128xf32>
    %46 = arith.addf %41, %45 : vector<288x128xf32>
    %c36 = arith.constant 36 : index
    %c0_39 = arith.constant 0 : index
    %47 = vector.load %arg8[%c36, %c0_39] : memref<342x128xbf16, #tpu.memory_space<vmem>>, vector<288x128xbf16>
    %c6 = arith.constant 6 : index
    %c0_40 = arith.constant 0 : index
    %c0_41 = arith.constant 0 : index
    %48 = vector.load %arg4[%c6, %c0_40, %c0_41] : memref<9x128x128xbf16, #tpu.memory_space<vmem>>, vector<1x128x128xbf16>
    %49 = vector.shape_cast %48 : vector<1x128x128xbf16> to vector<128x128xbf16>
    %cst_42 = arith.constant dense<0.000000e+00> : vector<288x128xf32>
    %50 = tpu.matmul %47, %49, %cst_42 {dimension_numbers = #tpu.dot_dimension_numbers<[1], [0], [0], [1], [0, 0, 1, 1], [], []>} : vector<288x128xbf16>, vector<128x128xbf16>, vector<288x128xf32> -> vector<288x128xf32>
    %51 = arith.addf %46, %50 : vector<288x128xf32>
    %c37 = arith.constant 37 : index
    %c0_43 = arith.constant 0 : index
    %52 = vector.load %arg8[%c37, %c0_43] : memref<342x128xbf16, #tpu.memory_space<vmem>>, vector<288x128xbf16>
    %c7 = arith.constant 7 : index
    %c0_44 = arith.constant 0 : index
    %c0_45 = arith.constant 0 : index
    %53 = vector.load %arg4[%c7, %c0_44, %c0_45] : memref<9x128x128xbf16, #tpu.memory_space<vmem>>, vector<1x128x128xbf16>
    %54 = vector.shape_cast %53 : vector<1x128x128xbf16> to vector<128x128xbf16>
    %cst_46 = arith.constant dense<0.000000e+00> : vector<288x128xf32>
    %55 = tpu.matmul %52, %54, %cst_46 {dimension_numbers = #tpu.dot_dimension_numbers<[1], [0], [0], [1], [0, 0, 1, 1], [], []>} : vector<288x128xbf16>, vector<128x128xbf16>, vector<288x128xf32> -> vector<288x128xf32>
    %56 = arith.addf %51, %55 : vector<288x128xf32>
    %c38 = arith.constant 38 : index
    %c0_47 = arith.constant 0 : index
    %57 = vector.load %arg8[%c38, %c0_47] : memref<342x128xbf16, #tpu.memory_space<vmem>>, vector<288x128xbf16>
    %c8 = arith.constant 8 : index
    %c0_48 = arith.constant 0 : index
    %c0_49 = arith.constant 0 : index
    %58 = vector.load %arg4[%c8, %c0_48, %c0_49] : memref<9x128x128xbf16, #tpu.memory_space<vmem>>, vector<1x128x128xbf16>
    %59 = vector.shape_cast %58 : vector<1x128x128xbf16> to vector<128x128xbf16>
    %cst_50 = arith.constant dense<0.000000e+00> : vector<288x128xf32>
    %60 = tpu.matmul %57, %59, %cst_50 {dimension_numbers = #tpu.dot_dimension_numbers<[1], [0], [0], [1], [0, 0, 1, 1], [], []>} : vector<288x128xbf16>, vector<128x128xbf16>, vector<288x128xf32> -> vector<288x128xf32>
    %61 = arith.addf %56, %60 : vector<288x128xf32>
    %c0_51 = arith.constant 0 : index
    %c0_52 = arith.constant 0 : index
    %62 = vector.load %arg5[%c0_51, %c0_52] : memref<1x128xf32, #tpu.memory_space<vmem>>, vector<1x128xf32>
    %63 = vector.broadcast %62 : vector<1x128xf32> to vector<288x128xf32>
    %64 = arith.addf %61, %63 : vector<288x128xf32>
    %65 = vector.shape_cast %64 : vector<288x128xf32> to vector<16x18x128xf32>
    %66 = vector.extract_strided_slice %65 {offsets = [0, 0, 0], sizes = [16, 16, 128], strides = [1, 1, 1]} : vector<16x18x128xf32> to vector<16x16x128xf32>
    %67 = vector.shape_cast %66 : vector<16x16x128xf32> to vector<256x128xf32>
    %cst_53 = arith.constant dense<0.000000e+00> : vector<128xf32>
    %68 = vector.multi_reduction <add>, %67, %cst_53 [0] : vector<256x128xf32> to vector<128xf32>
    %69 = vector.shape_cast %68 : vector<128xf32> to vector<1x128xf32>
    %70 = arith.mulf %67, %67 : vector<256x128xf32>
    %cst_54 = arith.constant dense<0.000000e+00> : vector<128xf32>
    %71 = vector.multi_reduction <add>, %70, %cst_54 [0] : vector<256x128xf32> to vector<128xf32>
    %72 = vector.shape_cast %71 : vector<128xf32> to vector<1x128xf32>
    %cst_55 = arith.constant 0.000000e+00 : f32
    %73 = vector.broadcast %cst_55 : f32 to vector<6x128xf32>
    %74 = tpu.concatenate %69, %72, %73 in 0 : vector<1x128xf32>, vector<1x128xf32>, vector<6x128xf32> -> vector<8x128xf32>
    %75 = vector.shape_cast %74 : vector<8x128xf32> to vector<1x8x128xf32>
    %c0_56 = arith.constant 0 : index
    %c0_57 = arith.constant 0 : index
    %c0_58 = arith.constant 0 : index
    %76 = vector.load %arg7[%c0_56, %c0_57, %c0_58] : memref<1x8x128xf32, #tpu.memory_space<vmem>>, vector<1x8x128xf32>
    tpu.vector_store %arg7[%c0_56, %c0_57, %c0_58], %75 {strides = array<i32>} : memref<1x8x128xf32, #tpu.memory_space<vmem>>, vector<1x8x128xf32>,
    %77 = vector.shape_cast %66 : vector<16x16x128xf32> to vector<1x16x16x128xf32>
    %78 = arith.truncf %77 : vector<1x16x16x128xf32> to vector<1x16x16x128xbf16>
    %c0_59 = arith.constant 0 : index
    %c0_60 = arith.constant 0 : index
    %c0_61 = arith.constant 0 : index
    %c0_62 = arith.constant 0 : index
    %79 = vector.load %arg6[%c0_59, %c0_60, %c0_61, %c0_62] : memref<1x16x16x128xbf16, #tpu.memory_space<vmem>>, vector<1x16x16x128xbf16>
    tpu.vector_store %arg6[%c0_59, %c0_60, %c0_61, %c0_62], %78 {strides = array<i32>} : memref<1x16x16x128xbf16, #tpu.memory_space<vmem>>, vector<1x16x16x128xbf16>,
    return
  }
  func.func @transform_0(%arg0: i32) -> (i32, i32, i32) {
    %c0_i32 = arith.constant 0 : i32
    %c0_i32_0 = arith.constant 0 : i32
    %c0_i32_1 = arith.constant 0 : i32
    return %arg0, %c0_i32, %c0_i32_0 : i32, i32, i32
  }
  func.func @transform_1(%arg0: i32) -> (i32, i32) {
    %c0_i32 = arith.constant 0 : i32
    %c0_i32_0 = arith.constant 0 : i32
    %c0_i32_1 = arith.constant 0 : i32
    return %c0_i32, %c0_i32_0 : i32, i32
  }
  func.func @transform_2(%arg0: i32) -> (i32, i32) {
    %c0_i32 = arith.constant 0 : i32
    %c0_i32_0 = arith.constant 0 : i32
    %c0_i32_1 = arith.constant 0 : i32
    return %c0_i32, %c0_i32_0 : i32, i32
  }
  func.func @transform_3(%arg0: i32) -> (i32, i32, i32) {
    %c0_i32 = arith.constant 0 : i32
    %c0_i32_0 = arith.constant 0 : i32
    %c0_i32_1 = arith.constant 0 : i32
    %c0_i32_2 = arith.constant 0 : i32
    return %c0_i32, %c0_i32_0, %c0_i32_1 : i32, i32, i32
  }
  func.func @transform_4(%arg0: i32) -> (i32, i32) {
    %c0_i32 = arith.constant 0 : i32
    %c0_i32_0 = arith.constant 0 : i32
    %c0_i32_1 = arith.constant 0 : i32
    return %c0_i32, %c0_i32_0 : i32, i32
  }
  func.func @transform_5(%arg0: i32) -> (i32, i32, i32, i32) {
    %c0_i32 = arith.constant 0 : i32
    %c0_i32_0 = arith.constant 0 : i32
    %c0_i32_1 = arith.constant 0 : i32
    %c0_i32_2 = arith.constant 0 : i32
    return %arg0, %c0_i32, %c0_i32_0, %c0_i32_1 : i32, i32, i32, i32
  }
  func.func @transform_6(%arg0: i32) -> (i32, i32, i32) {
    %c0_i32 = arith.constant 0 : i32
    %c0_i32_0 = arith.constant 0 : i32
    %c0_i32_1 = arith.constant 0 : i32
    return %arg0, %c0_i32, %c0_i32_0 : i32, i32, i32
  }
}

</mosaic_0001>

<llo_original>
// kernel: residual_block_forward.5
$region0: #{residual_block_forward.5}
  #allocation0 [shape = 'u32[]', space=smem, size = 0x4, offset = 0x4, fixed_abs, tag = 'smem constant byte address 0x4 - core index']
  #allocation1 [shape = 'u32[72,128]{1,0:T(1,128)}', space=vmem, size = 0x9000, scoped, tag = 'internal scratch']
  %s0 = inlined_call_operand.vmem [shape: bf16[2,16,16,128], index: 0, kind: input, shape index: {}]
  %s1 = inlined_call_operand.vmem [shape: f32[8,128], index: 1, kind: input, shape index: {}]
  %s2 = inlined_call_operand.vmem [shape: bf16[2,19,18,128], index: 2, kind: input, shape index: {}]
  %s3 = inlined_call_operand.vmem [shape: f32[2,16,16,128], index: 3, kind: output, shape index: {}]
  %s4 = sld [smem:[#allocation0]]
  $region45: #{residual_block_forward.5} parent=0
    _
  %s6 = ssub.s32 1, %s4
  %s7 = scalar_select 0, %s6, %s4
  loop: start=0, step=1, limit=4
  $region2: #{residual_block_forward.5} parent=0 // loop_pre_header
    _
  $region3: #{residual_block_forward.5} parent=0 // loop_header
    %s9 = sphi 0, %s13
    %p10 = scmp.ge.s32.totalorder %s9, 4
    %s19 = sphi 0, %s21
    %s22 = sphi 0, %s19
    %s23 = sphi 0, %s22
    %s39 = sphi 0, %s23
    %s43 = sphi 0, %s43
    %s45 = sphi 0, %s43
    %s46 = sphi 0, %s45
    %s60 = sphi 0, %s46
    %s66 = sphi 0, %s68
    %s69 = sphi 0, %s66
    %s70 = sphi 0, %s69
    %s86 = sphi 0, %s70
    %s92 = sphi 0, %s94
    %s95 = sphi 0, %s92
    %s96 = sphi 0, %s95
    %s112 = sphi 0, %s96
  $region4: #{residual_block_forward.5} parent=0 // loop_header_branch
    %12 = sbr.rel (%p10) target = $region8
  $region5: #{residual_block_forward.5} parent=0 // loop_body
    %s14 = ssub.s32 %s9, 1
    %s15 = ssub.s32 %s9, 2
    %s16 = sadd.s32 %s9, 1
    %s17 = ssub.s32 %s9, %s16
    %p18 = scmp.eq.s32.totalorder %s17, 0
    %s20 = sadd.s32 %s19, 1
    %s21 = scalar_select %p18, %s19, %s20
    %p24 = pneg %p18
    %p25 = scmp.eq.s32.totalorder %s9, 1
    %p26 = por %p24, %p25
    %p27 = scmp.ne.s32.totalorder %s19, %s22
    %p28 = scmp.eq.s32.totalorder %s9, 0
    %p29 = por %p27, %p28
    %p30 = scmp.ne.s32.totalorder %s19, %s22
    %p31 = scmp.eq.s32.totalorder %s14, 1
    %p32 = por %p30, %p31
    %p33 = scmp.ne.s32.totalorder %s22, %s23
    %p34 = scmp.eq.s32.totalorder %s14, 0
    %p35 = por %p33, %p34
    %p36 = scmp.ne.s32.totalorder %s22, %s23
    %p37 = scmp.eq.s32.totalorder %s15, 1
    %p38 = por %p36, %p37
    %p40 = scmp.ne.s32.totalorder %s23, %s39
    %p41 = scmp.eq.s32.totalorder %s15, 0
    %p42 = por %p40, %p41
    %s44 = sadd.s32 %s43, 1
    %p47 = scmp.eq.s32.totalorder %s9, 1
    %p48 = scmp.ne.s32.totalorder %s43, %s45
    %p49 = scmp.eq.s32.totalorder %s9, 0
    %p50 = por %p48, %p49
    %p51 = scmp.ne.s32.totalorder %s43, %s45
    %p52 = scmp.eq.s32.totalorder %s14, 1
    %p53 = por %p51, %p52
    %p54 = scmp.ne.s32.totalorder %s45, %s46
    %p55 = scmp.eq.s32.totalorder %s14, 0
    %p56 = por %p54, %p55
    %p57 = scmp.ne.s32.totalorder %s45, %s46
    %p58 = scmp.eq.s32.totalorder %s15, 1
    %p59 = por %p57, %p58
    %p61 = scmp.ne.s32.totalorder %s46, %s60
    %p62 = scmp.eq.s32.totalorder %s15, 0
    %p63 = por %p61, %p62
    %s64 = ssub.s32 %s9, %s16
    %p65 = scmp.eq.s32.totalorder %s64, 0
    %s67 = sadd.s32 %s66, 1
    %s68 = scalar_select %p65, %s66, %s67
    %p71 = pneg %p65
    %p72 = scmp.eq.s32.totalorder %s9, 1
    %p73 = por %p71, %p72
    %p74 = scmp.ne.s32.totalorder %s66, %s69
    %p75 = scmp.eq.s32.totalorder %s9, 0
    %p76 = por %p74, %p75
    %p77 = scmp.ne.s32.totalorder %s66, %s69
    %p78 = scmp.eq.s32.totalorder %s14, 1
    %p79 = por %p77, %p78
    %p80 = scmp.ne.s32.totalorder %s69, %s70
    %p81 = scmp.eq.s32.totalorder %s14, 0
    %p82 = por %p80, %p81
    %p83 = scmp.ne.s32.totalorder %s69, %s70
    %p84 = scmp.eq.s32.totalorder %s15, 1
    %p85 = por %p83, %p84
    %p87 = scmp.ne.s32.totalorder %s70, %s86
    %p88 = scmp.eq.s32.totalorder %s15, 0
    %p89 = por %p87, %p88
    %s90 = ssub.s32 %s9, %s16
    %p91 = scmp.eq.s32.totalorder %s90, 0
    %s93 = sadd.s32 %s92, 1
    %s94 = scalar_select %p91, %s92, %s93
    %p97 = pneg %p91
    %p98 = scmp.eq.s32.totalorder %s9, 1
    %p99 = por %p97, %p98
    %p100 = scmp.ne.s32.totalorder %s92, %s95
    %p101 = scmp.eq.s32.totalorder %s9, 0
    %p102 = por %p100, %p101
    %p103 = scmp.ne.s32.totalorder %s92, %s95
    %p104 = scmp.eq.s32.totalorder %s14, 1
    %p105 = por %p103, %p104
    %p106 = scmp.ne.s32.totalorder %s95, %s96
    %p107 = scmp.eq.s32.totalorder %s14, 0
    %p108 = por %p106, %p107
    %p109 = scmp.ne.s32.totalorder %s95, %s96
    %p110 = scmp.eq.s32.totalorder %s15, 1
    %p111 = por %p109, %p110
    %p113 = scmp.ne.s32.totalorder %s96, %s112
    %p114 = scmp.eq.s32.totalorder %s15, 0
    %p115 = por %p113, %p114
    %p116 = scmp.le.s32.totalorder 1, %s9
    %p117 = scmp.lt.s32.totalorder %s9, 3
    %p118 = pnand %p116, %p117
    %p119 = pneg %p118
    // Predicated region
    $region9: #{residual_block_forward.5} parent=5 // pred_check
      _
    $region10: #{residual_block_forward.5} parent=5 // pred_check_branch
      %121 = sbr.rel (%p118) target = $region12
    $region11: #{residual_block_forward.5} parent=5 // pred_region
      %s122 = ssub.s32 %s9, 1
      // Predicated region
      $region13: #{residual_block_forward.5} parent=11 // pred_check
        %p123 = pneg %p56
      $region14: #{residual_block_forward.5} parent=11 // pred_check_branch
        %125 = sbr.rel (%p123) target = $region16
      $region15: #{residual_block_forward.5} parent=11 // pred_region
        _
      $region16: #{residual_block_forward.5} parent=11 // pred_fallthru
        _
    $region12: #{residual_block_forward.5} parent=5 // pred_fallthru
      _
    %p126 = scmp.lt.s32.totalorder %s9, 2
    // Predicated region
    $region17: #{residual_block_forward.5} parent=5 // pred_check
      %p127 = pneg %p126
    $region18: #{residual_block_forward.5} parent=5 // pred_check_branch
      %129 = sbr.rel (%p127) target = $region20
    $region19: #{residual_block_forward.5} parent=5 // pred_region
      // Predicated region
      $region21: #{residual_block_forward.5} parent=19 // pred_check
        %p130 = pneg %p29
      $region22: #{residual_block_forward.5} parent=19 // pred_check_branch
        %132 = sbr.rel (%p130) target = $region24
      $region23: #{residual_block_forward.5} parent=19 // pred_region
        %p133 = scmp.lt.s32.totalorder %s9, 1
        %s134 = scalar_select %p133, %s9, 1
        %s135 = smul.addr %s134, 32
        %s136 = smul.addr %s135, 4
        %s137 = scalar_lea.vmem %s0, %s136
      $region24: #{residual_block_forward.5} parent=19 // pred_fallthru
        _
      // Predicated region
      $region25: #{residual_block_forward.5} parent=19 // pred_check
        %p138 = pneg %p76
      $region26: #{residual_block_forward.5} parent=19 // pred_check_branch
        %140 = sbr.rel (%p138) target = $region28
      $region27: #{residual_block_forward.5} parent=19 // pred_region
        %p141 = scmp.lt.s32.totalorder %s9, 1
        %s142 = scalar_select %p141, %s9, 1
        %s143 = smul.addr %s142, 57
        %s144 = smul.addr %s143, 4
        %s145 = scalar_lea.vmem %s2, %s144
      $region28: #{residual_block_forward.5} parent=19 // pred_fallthru
        _
    $region20: #{residual_block_forward.5} parent=5 // pred_fallthru
      _
    %p146 = scmp.le.s32.totalorder 1, %s9
    %p147 = scmp.lt.s32.totalorder %s9, 3
    %p148 = pnand %p146, %p147
    %p149 = pneg %p148
    // Predicated region
    $region29: #{residual_block_forward.5} parent=5 // pred_check
      _
    $region30: #{residual_block_forward.5} parent=5 // pred_check_branch
      %151 = sbr.rel (%p148) target = $region32
    $region31: #{residual_block_forward.5} parent=5 // pred_region
      %s152 = ssub.s32 %s9, 1
      %p153 = scmp.lt.s32.totalorder %s14, 1
      %s154 = scalar_select %p153, %s14, 1
      %s155 = smul.addr %s154, 32
      %s156 = smul.addr %s155, 4
      %s157 = scalar_lea.vmem %s0, %s156
      %p158 = pneg %p35
      %p159 = pneg %p32
      %p160 = pneg %p56
      %p161 = pneg %p53
      %p162 = scmp.lt.s32.totalorder %s14, 1
      %s163 = scalar_select %p162, %s14, 1
      %s164 = smul.addr %s163, 57
      %s165 = smul.addr %s164, 4
      %s166 = scalar_lea.vmem %s2, %s165
      %p167 = pneg %p82
      %p168 = pneg %p79
      %p169 = pneg %p108
      %p170 = pneg %p105
      %p171 = scmp.lt.s32.totalorder %s14, 1
      %s172 = scalar_select %p171, %s14, 1
      %s173 = smul.addr %s172, 32
      %s174 = smul.addr %s173, 8
      %s175 = scalar_lea.vmem %s3, %s174
      %p176 = scmp.lt.s32.totalorder %s14, 1
      %s177 = scalar_select %p176, %s14, 1
      %s178 = smul.addr %s177, 32
      %s179 = smul.addr %s178, 4
      %s180 = scalar_lea.vmem %s0, %s179
      %p181 = scmp.lt.s32.totalorder %s14, 1
      %s182 = scalar_select %p181, %s14, 1
      %s183 = smul.addr %s182, 57
      %s184 = smul.addr %s183, 4
      %s185 = scalar_lea.vmem %s2, %s184
      %p186 = scmp.lt.s32.totalorder %s14, 1
      %s187 = scalar_select %p186, %s14, 1
      %s188 = smul.addr %s187, 32
      %s189 = smul.addr %s188, 8
      %s190 = scalar_lea.vmem %s3, %s189
      %v191 = vld [vmem:[%s1] sm:$0x1]
      %v192 = vld [vmem:[%s1 + $0x1] sm:$0x1]
      %v193 = vld [vmem:[%s180] sm:$0xf]
      %v194 = vld [vmem:[%s180 + $0x4] sm:$0xf]
      %v195 = vld [vmem:[%s180 + $0x8] sm:$0xf]
      %v196 = vld [vmem:[%s180 + $0xc] sm:$0xf]
      %v197 = vld [vmem:[%s180 + $0x10] sm:$0xf]
      %v198 = vld [vmem:[%s180 + $0x14] sm:$0xf]
      %v199 = vld [vmem:[%s180 + $0x18] sm:$0xf]
      %v200 = vld [vmem:[%s180 + $0x1c] sm:$0xf]
      %v201 = vld [vmem:[%s180 + $0x20] sm:$0xf]
      %v202 = vld [vmem:[%s180 + $0x24] sm:$0xf]
      %v203 = vld [vmem:[%s180 + $0x28] sm:$0xf]
      %v204 = vld [vmem:[%s180 + $0x2c] sm:$0xf]
      %v205 = vld [vmem:[%s180 + $0x30] sm:$0xf]
      %v206 = vld [vmem:[%s180 + $0x34] sm:$0xf]
      %v207 = vld [vmem:[%s180 + $0x38] sm:$0xf]
      %v208 = vld [vmem:[%s180 + $0x3c] sm:$0xf]
      %v209 = vld [vmem:[%s180 + $0x40] sm:$0xf]
      %v210 = vld [vmem:[%s180 + $0x44] sm:$0xf]
      %v211 = vld [vmem:[%s180 + $0x48] sm:$0xf]
      %v212 = vld [vmem:[%s180 + $0x4c] sm:$0xf]
      %v213 = vld [vmem:[%s180 + $0x50] sm:$0xf]
      %v214 = vld [vmem:[%s180 + $0x54] sm:$0xf]
      %v215 = vld [vmem:[%s180 + $0x58] sm:$0xf]
      %v216 = vld [vmem:[%s180 + $0x5c] sm:$0xf]
      %v217 = vld [vmem:[%s180 + $0x60] sm:$0xf]
      %v218 = vld [vmem:[%s180 + $0x64] sm:$0xf]
      %v219 = vld [vmem:[%s180 + $0x68] sm:$0xf]
      %v220 = vld [vmem:[%s180 + $0x6c] sm:$0xf]
      %v221 = vld [vmem:[%s180 + $0x70] sm:$0xf]
      %v222 = vld [vmem:[%s180 + $0x74] sm:$0xf]
      %v223 = vld [vmem:[%s180 + $0x78] sm:$0xf]
      %v224 = vld [vmem:[%s180 + $0x7c] sm:$0xf]
      %v225 = vunpack.c.l.bf16 %v193
      %v226 = vunpack.c.l.bf16 %v194
      %v227 = vunpack.c.l.bf16 %v195
      %v228 = vunpack.c.l.bf16 %v196
      %v229 = vunpack.c.l.bf16 %v197
      %v230 = vunpack.c.l.bf16 %v198
      %v231 = vunpack.c.l.bf16 %v199
      %v232 = vunpack.c.l.bf16 %v200
      %v233 = vunpack.c.l.bf16 %v201
      %v234 = vunpack.c.l.bf16 %v202
      %v235 = vunpack.c.l.bf16 %v203
      %v236 = vunpack.c.l.bf16 %v204
      %v237 = vunpack.c.l.bf16 %v205
      %v238 = vunpack.c.l.bf16 %v206
      %v239 = vunpack.c.l.bf16 %v207
      %v240 = vunpack.c.l.bf16 %v208
      %v241 = vunpack.c.l.bf16 %v209
      %v242 = vunpack.c.l.bf16 %v210
      %v243 = vunpack.c.l.bf16 %v211
      %v244 = vunpack.c.l.bf16 %v212
      %v245 = vunpack.c.l.bf16 %v213
      %v246 = vunpack.c.l.bf16 %v214
      %v247 = vunpack.c.l.bf16 %v215
      %v248 = vunpack.c.l.bf16 %v216
      %v249 = vunpack.c.l.bf16 %v217
      %v250 = vunpack.c.l.bf16 %v218
      %v251 = vunpack.c.l.bf16 %v219
      %v252 = vunpack.c.l.bf16 %v220
      %v253 = vunpack.c.l.bf16 %v221
      %v254 = vunpack.c.l.bf16 %v222
      %v255 = vunpack.c.l.bf16 %v223
      %v256 = vunpack.c.l.bf16 %v224
      %s257 = scalar_lea.vmem %s185, 12
      %v258 = vld [vmem:[%s257] sm:$0xf]
      %v259 = vld [vmem:[%s257 + $0x4] sm:$0xf]
      %v260 = vld [vmem:[%s257 + $0x8] sm:$0x1]
      %v261 = vld [vmem:[%s257 + $0xc] sm:$0xf]
      %v262 = vld [vmem:[%s257 + $0x10] sm:$0xf]
      %v263 = vld [vmem:[%s257 + $0x14] sm:$0x1]
      %v264 = vld [vmem:[%s257 + $0x18] sm:$0xf]
      %v265 = vld [vmem:[%s257 + $0x1c] sm:$0xf]
      %v266 = vld [vmem:[%s257 + $0x20] sm:$0x1]
      %v267 = vld [vmem:[%s257 + $0x24] sm:$0xf]
      %v268 = vld [vmem:[%s257 + $0x28] sm:$0xf]
      %v269 = vld [vmem:[%s257 + $0x2c] sm:$0x1]
      %v270 = vld [vmem:[%s257 + $0x30] sm:$0xf]
      %v271 = vld [vmem:[%s257 + $0x34] sm:$0xf]
      %v272 = vld [vmem:[%s257 + $0x38] sm:$0x1]
      %v273 = vld [vmem:[%s257 + $0x3c] sm:$0xf]
      %v274 = vld [vmem:[%s257 + $0x40] sm:$0xf]
      %v275 = vld [vmem:[%s257 + $0x44] sm:$0x1]
      %v276 = vld [vmem:[%s257 + $0x48] sm:$0xf]
      %v277 = vld [vmem:[%s257 + $0x4c] sm:$0xf]
      %v278 = vld [vmem:[%s257 + $0x50] sm:$0x1]
      %v279 = vld [vmem:[%s257 + $0x54] sm:$0xf]
      %v280 = vld [vmem:[%s257 + $0x58] sm:$0xf]
      %v281 = vld [vmem:[%s257 + $0x5c] sm:$0x1]
      %v282 = vld [vmem:[%s257 + $0x60] sm:$0xf]
      %v283 = vld [vmem:[%s257 + $0x64] sm:$0xf]
      %v284 = vld [vmem:[%s257 + $0x68] sm:$0x1]
      %v285 = vld [vmem:[%s257 + $0x6c] sm:$0xf]
      %v286 = vld [vmem:[%s257 + $0x70] sm:$0xf]
      %v287 = vld [vmem:[%s257 + $0x74] sm:$0x1]
      %v288 = vld [vmem:[%s257 + $0x78] sm:$0xf]
      %v289 = vld [vmem:[%s257 + $0x7c] sm:$0xf]
      %v290 = vld [vmem:[%s257 + $0x80] sm:$0x1]
      %v291 = vld [vmem:[%s257 + $0x84] sm:$0xf]
      %v292 = vld [vmem:[%s257 + $0x88] sm:$0xf]
      %v293 = vld [vmem:[%s257 + $0x8c] sm:$0x1]
      %v294 = vld [vmem:[%s257 + $0x90] sm:$0xf]
      %v295 = vld [vmem:[%s257 + $0x94] sm:$0xf]
      %v296 = vld [vmem:[%s257 + $0x98] sm:$0x1]
      %v297 = vld [vmem:[%s257 + $0x9c] sm:$0xf]
      %v298 = vld [vmem:[%s257 + $0xa0] sm:$0xf]
      %v299 = vld [vmem:[%s257 + $0xa4] sm:$0x1]
      %v300 = vld [vmem:[%s257 + $0xa8] sm:$0xf]
      %v301 = vld [vmem:[%s257 + $0xac] sm:$0xf]
      %v302 = vld [vmem:[%s257 + $0xb0] sm:$0x1]
      %v303 = vld [vmem:[%s257 + $0xb4] sm:$0xf]
      %v304 = vld [vmem:[%s257 + $0xb8] sm:$0xf]
      %v305 = vld [vmem:[%s257 + $0xbc] sm:$0x1]
      %vm306 = vsmask.f32 3328
      %vm307 = vsmask.f32 7440
      %vm308 = vmor %vm306, %vm307
      %v310 = vshrl.u32 %v258, 16
      %v312 = vrot.slane %v310, 4
      %v313 = vshll.u32 %v258, 16
      %v315 = vrot.slane %v313, 5
      %v316 = vor.u32 %v312, %v315
      %v317 = vrot.slane %v316, 4
      %v319 = vshll.u32 %v259, 16
      %v321 = vrot.slane %v319, 5
      %v322 = vsel %vm308, %v317, %v321
      %v323 = vshrl.u32 %v259, 16
      %v325 = vrot.slane %v323, 4
      %v326 = vor.u32 %v325, %v321
      %v327 = vrot.slane %v326, 4
      %v329 = vshll.u32 %v260, 16
      %v331 = vrot.slane %v329, 5
      %v332 = vsel %vm308, %v327, %v331
      %v334 = vshrl.u32 %v261, 16
      %v336 = vrot.slane %v334, 4
      %v337 = vshll.u32 %v261, 16
      %v339 = vrot.slane %v337, 5
      %v340 = vor.u32 %v336, %v339
      %v341 = vrot.slane %v340, 4
      %v343 = vshll.u32 %v262, 16
      %v345 = vrot.slane %v343, 5
      %v346 = vsel %vm308, %v341, %v345
      %v347 = vshrl.u32 %v262, 16
      %v349 = vrot.slane %v347, 4
      %v350 = vor.u32 %v349, %v345
      %v351 = vrot.slane %v350, 4
      %v353 = vshll.u32 %v263, 16
      %v355 = vrot.slane %v353, 5
      %v356 = vsel %vm308, %v351, %v355
      %v358 = vshrl.u32 %v264, 16
      %v360 = vrot.slane %v358, 4
      %v361 = vshll.u32 %v264, 16
      %v363 = vrot.slane %v361, 5
      %v364 = vor.u32 %v360, %v363
      %v365 = vrot.slane %v364, 4
      %v367 = vshll.u32 %v265, 16
      %v369 = vrot.slane %v367, 5
      %v370 = vsel %vm308, %v365, %v369
      %v371 = vshrl.u32 %v265, 16
      %v373 = vrot.slane %v371, 4
      %v374 = vor.u32 %v373, %v369
      %v375 = vrot.slane %v374, 4
      %v377 = vshll.u32 %v266, 16
      %v379 = vrot.slane %v377, 5
      %v380 = vsel %vm308, %v375, %v379
      %v382 = vshrl.u32 %v267, 16
      %v384 = vrot.slane %v382, 4
      %v385 = vshll.u32 %v267, 16
      %v387 = vrot.slane %v385, 5
      %v388 = vor.u32 %v384, %v387
      %v389 = vrot.slane %v388, 4
      %v391 = vshll.u32 %v268, 16
      %v393 = vrot.slane %v391, 5
      %v394 = vsel %vm308, %v389, %v393
      %v395 = vshrl.u32 %v268, 16
      %v397 = vrot.slane %v395, 4
      %v398 = vor.u32 %v397, %v393
      %v399 = vrot.slane %v398, 4
      %v401 = vshll.u32 %v269, 16
      %v403 = vrot.slane %v401, 5
      %v404 = vsel %vm308, %v399, %v403
      %v406 = vshrl.u32 %v270, 16
      %v408 = vrot.slane %v406, 4
      %v409 = vshll.u32 %v270, 16
      %v411 = vrot.slane %v409, 5
      %v412 = vor.u32 %v408, %v411
      %v413 = vrot.slane %v412, 4
      %v415 = vshll.u32 %v271, 16
      %v417 = vrot.slane %v415, 5
      %v418 = vsel %vm308, %v413, %v417
      %v419 = vshrl.u32 %v271, 16
      %v421 = vrot.slane %v419, 4
      %v422 = vor.u32 %v421, %v417
      %v423 = vrot.slane %v422, 4
      %v425 = vshll.u32 %v272, 16
      %v427 = vrot.slane %v425, 5
      %v428 = vsel %vm308, %v423, %v427
      %v430 = vshrl.u32 %v273, 16
      %v432 = vrot.slane %v430, 4
      %v433 = vshll.u32 %v273, 16
      %v435 = vrot.slane %v433, 5
      %v436 = vor.u32 %v432, %v435
      %v437 = vrot.slane %v436, 4
      %v439 = vshll.u32 %v274, 16
      %v441 = vrot.slane %v439, 5
      %v442 = vsel %vm308, %v437, %v441
      %v443 = vshrl.u32 %v274, 16
      %v445 = vrot.slane %v443, 4
      %v446 = vor.u32 %v445, %v441
      %v447 = vrot.slane %v446, 4
      %v449 = vshll.u32 %v275, 16
      %v451 = vrot.slane %v449, 5
      %v452 = vsel %vm308, %v447, %v451
      %v454 = vshrl.u32 %v276, 16
      %v456 = vrot.slane %v454, 4
      %v457 = vshll.u32 %v276, 16
      %v459 = vrot.slane %v457, 5
      %v460 = vor.u32 %v456, %v459
      %v461 = vrot.slane %v460, 4
      %v463 = vshll.u32 %v277, 16
      %v465 = vrot.slane %v463, 5
      %v466 = vsel %vm308, %v461, %v465
      %v467 = vshrl.u32 %v277, 16
      %v469 = vrot.slane %v467, 4
      %v470 = vor.u32 %v469, %v465
      %v471 = vrot.slane %v470, 4
      %v473 = vshll.u32 %v278, 16
      %v475 = vrot.slane %v473, 5
      %v476 = vsel %vm308, %v471, %v475
      %v478 = vshrl.u32 %v279, 16
      %v480 = vrot.slane %v478, 4
      %v481 = vshll.u32 %v279, 16
      %v483 = vrot.slane %v481, 5
      %v484 = vor.u32 %v480, %v483
      %v485 = vrot.slane %v484, 4
      %v487 = vshll.u32 %v280, 16
      %v489 = vrot.slane %v487, 5
      %v490 = vsel %vm308, %v485, %v489
      %v491 = vshrl.u32 %v280, 16
      %v493 = vrot.slane %v491, 4
      %v494 = vor.u32 %v493, %v489
      %v495 = vrot.slane %v494, 4
      %v497 = vshll.u32 %v281, 16
      %v499 = vrot.slane %v497, 5
      %v500 = vsel %vm308, %v495, %v499
      %v502 = vshrl.u32 %v282, 16
      %v504 = vrot.slane %v502, 4
      %v505 = vshll.u32 %v282, 16
      %v507 = vrot.slane %v505, 5
      %v508 = vor.u32 %v504, %v507
      %v509 = vrot.slane %v508, 4
      %v511 = vshll.u32 %v283, 16
      %v513 = vrot.slane %v511, 5
      %v514 = vsel %vm308, %v509, %v513
      %v515 = vshrl.u32 %v283, 16
      %v517 = vrot.slane %v515, 4
      %v518 = vor.u32 %v517, %v513
      %v519 = vrot.slane %v518, 4
      %v521 = vshll.u32 %v284, 16
      %v523 = vrot.slane %v521, 5
      %v524 = vsel %vm308, %v519, %v523
      %v526 = vshrl.u32 %v285, 16
      %v528 = vrot.slane %v526, 4
      %v529 = vshll.u32 %v285, 16
      %v531 = vrot.slane %v529, 5
      %v532 = vor.u32 %v528, %v531
      %v533 = vrot.slane %v532, 4
      %v535 = vshll.u32 %v286, 16
      %v537 = vrot.slane %v535, 5
      %v538 = vsel %vm308, %v533, %v537
      %v539 = vshrl.u32 %v286, 16
      %v541 = vrot.slane %v539, 4
      %v542 = vor.u32 %v541, %v537
      %v543 = vrot.slane %v542, 4
      %v545 = vshll.u32 %v287, 16
      %v547 = vrot.slane %v545, 5
      %v548 = vsel %vm308, %v543, %v547
      %v550 = vshrl.u32 %v288, 16
      %v552 = vrot.slane %v550, 4
      %v553 = vshll.u32 %v288, 16
      %v555 = vrot.slane %v553, 5
      %v556 = vor.u32 %v552, %v555
      %v557 = vrot.slane %v556, 4
      %v559 = vshll.u32 %v289, 16
      %v561 = vrot.slane %v559, 5
      %v562 = vsel %vm308, %v557, %v561
      %v563 = vshrl.u32 %v289, 16
      %v565 = vrot.slane %v563, 4
      %v566 = vor.u32 %v565, %v561
      %v567 = vrot.slane %v566, 4
      %v569 = vshll.u32 %v290, 16
      %v571 = vrot.slane %v569, 5
      %v572 = vsel %vm308, %v567, %v571
      %v574 = vshrl.u32 %v291, 16
      %v576 = vrot.slane %v574, 4
      %v577 = vshll.u32 %v291, 16
      %v579 = vrot.slane %v577, 5
      %v580 = vor.u32 %v576, %v579
      %v581 = vrot.slane %v580, 4
      %v583 = vshll.u32 %v292, 16
      %v585 = vrot.slane %v583, 5
      %v586 = vsel %vm308, %v581, %v585
      %v587 = vshrl.u32 %v292, 16
      %v589 = vrot.slane %v587, 4
      %v590 = vor.u32 %v589, %v585
      %v591 = vrot.slane %v590, 4
      %v593 = vshll.u32 %v293, 16
      %v595 = vrot.slane %v593, 5
      %v596 = vsel %vm308, %v591, %v595
      %v598 = vshrl.u32 %v294, 16
      %v600 = vrot.slane %v598, 4
      %v601 = vshll.u32 %v294, 16
      %v603 = vrot.slane %v601, 5
      %v604 = vor.u32 %v600, %v603
      %v605 = vrot.slane %v604, 4
      %v607 = vshll.u32 %v295, 16
      %v609 = vrot.slane %v607, 5
      %v610 = vsel %vm308, %v605, %v609
      %v611 = vshrl.u32 %v295, 16
      %v613 = vrot.slane %v611, 4
      %v614 = vor.u32 %v613, %v609
      %v615 = vrot.slane %v614, 4
      %v617 = vshll.u32 %v296, 16
      %v619 = vrot.slane %v617, 5
      %v620 = vsel %vm308, %v615, %v619
      %v622 = vshrl.u32 %v297, 16
      %v624 = vrot.slane %v622, 4
      %v625 = vshll.u32 %v297, 16
      %v627 = vrot.slane %v625, 5
      %v628 = vor.u32 %v624, %v627
      %v629 = vrot.slane %v628, 4
      %v631 = vshll.u32 %v298, 16
      %v633 = vrot.slane %v631, 5
      %v634 = vsel %vm308, %v629, %v633
      %v635 = vshrl.u32 %v298, 16
      %v637 = vrot.slane %v635, 4
      %v638 = vor.u32 %v637, %v633
      %v639 = vrot.slane %v638, 4
      %v641 = vshll.u32 %v299, 16
      %v643 = vrot.slane %v641, 5
      %v644 = vsel %vm308, %v639, %v643
      %v646 = vshrl.u32 %v300, 16
      %v648 = vrot.slane %v646, 4
      %v649 = vshll.u32 %v300, 16
      %v651 = vrot.slane %v649, 5
      %v652 = vor.u32 %v648, %v651
      %v653 = vrot.slane %v652, 4
      %v655 = vshll.u32 %v301, 16
      %v657 = vrot.slane %v655, 5
      %v658 = vsel %vm308, %v653, %v657
      %v659 = vshrl.u32 %v301, 16
      %v661 = vrot.slane %v659, 4
      %v662 = vor.u32 %v661, %v657
      %v663 = vrot.slane %v662, 4
      %v665 = vshll.u32 %v302, 16
      %v667 = vrot.slane %v665, 5
      %v668 = vsel %vm308, %v663, %v667
      %v670 = vshrl.u32 %v303, 16
      %v672 = vrot.slane %v670, 4
      %v673 = vshll.u32 %v303, 16
      %v675 = vrot.slane %v673, 5
      %v676 = vor.u32 %v672, %v675
      %v677 = vrot.slane %v676, 4
      %v679 = vshll.u32 %v304, 16
      %v681 = vrot.slane %v679, 5
      %v682 = vsel %vm308, %v677, %v681
      %v683 = vshrl.u32 %v304, 16
      %v685 = vrot.slane %v683, 4
      %v686 = vor.u32 %v685, %v681
      %v687 = vrot.slane %v686, 4
      %v689 = vshll.u32 %v305, 16
      %v691 = vrot.slane %v689, 5
      %v692 = vsel %vm308, %v687, %v691
      %v725 = vunpack.c.l.bf16 %v322
      %v726 = vunpack.c.l.bf16 %v332
      %v727 = vunpack.c.l.bf16 %v346
      %v728 = vunpack.c.l.bf16 %v356
      %v729 = vunpack.c.l.bf16 %v370
      %v730 = vunpack.c.l.bf16 %v380
      %v731 = vunpack.c.l.bf16 %v394
      %v732 = vunpack.c.l.bf16 %v404
      %v733 = vunpack.c.l.bf16 %v418
      %v734 = vunpack.c.l.bf16 %v428
      %v735 = vunpack.c.l.bf16 %v442
      %v736 = vunpack.c.l.bf16 %v452
      %v737 = vunpack.c.l.bf16 %v466
      %v738 = vunpack.c.l.bf16 %v476
      %v739 = vunpack.c.l.bf16 %v490
      %v740 = vunpack.c.l.bf16 %v500
      %v741 = vunpack.c.l.bf16 %v514
      %v742 = vunpack.c.l.bf16 %v524
      %v743 = vunpack.c.l.bf16 %v538
      %v744 = vunpack.c.l.bf16 %v548
      %v745 = vunpack.c.l.bf16 %v562
      %v746 = vunpack.c.l.bf16 %v572
      %v747 = vunpack.c.l.bf16 %v586
      %v748 = vunpack.c.l.bf16 %v596
      %v749 = vunpack.c.l.bf16 %v610
      %v750 = vunpack.c.l.bf16 %v620
      %v751 = vunpack.c.l.bf16 %v634
      %v752 = vunpack.c.l.bf16 %v644
      %v753 = vunpack.c.l.bf16 %v658
      %v754 = vunpack.c.l.bf16 %v668
      %v755 = vunpack.c.l.bf16 %v682
      %v756 = vunpack.c.l.bf16 %v692
      %v757 = vperm.slane %v191, 0
      %v758 = vmul.f32 %v225, %v757
      %v759 = vmul.f32 %v226, %v757
      %v760 = vmul.f32 %v227, %v757
      %v761 = vmul.f32 %v228, %v757
      %v762 = vmul.f32 %v229, %v757
      %v763 = vmul.f32 %v230, %v757
      %v764 = vmul.f32 %v231, %v757
      %v765 = vmul.f32 %v232, %v757
      %v766 = vmul.f32 %v233, %v757
      %v767 = vmul.f32 %v234, %v757
      %v768 = vmul.f32 %v235, %v757
      %v769 = vmul.f32 %v236, %v757
      %v770 = vmul.f32 %v237, %v757
      %v771 = vmul.f32 %v238, %v757
      %v772 = vmul.f32 %v239, %v757
      %v773 = vmul.f32 %v240, %v757
      %v774 = vmul.f32 %v241, %v757
      %v775 = vmul.f32 %v242, %v757
      %v776 = vmul.f32 %v243, %v757
      %v777 = vmul.f32 %v244, %v757
      %v778 = vmul.f32 %v245, %v757
      %v779 = vmul.f32 %v246, %v757
      %v780 = vmul.f32 %v247, %v757
      %v781 = vmul.f32 %v248, %v757
      %v782 = vmul.f32 %v249, %v757
      %v783 = vmul.f32 %v250, %v757
      %v784 = vmul.f32 %v251, %v757
      %v785 = vmul.f32 %v252, %v757
      %v786 = vmul.f32 %v253, %v757
      %v787 = vmul.f32 %v254, %v757
      %v788 = vmul.f32 %v255, %v757
      %v789 = vmul.f32 %v256, %v757
      %v790 = vperm.slane %v192, 0
      %v791 = vadd.f32 %v758, %v790
      %v792 = vadd.f32 %v759, %v790
      %v793 = vadd.f32 %v760, %v790
      %v794 = vadd.f32 %v761, %v790
      %v795 = vadd.f32 %v762, %v790
      %v796 = vadd.f32 %v763, %v790
      %v797 = vadd.f32 %v764, %v790
      %v798 = vadd.f32 %v765, %v790
      %v799 = vadd.f32 %v766, %v790
      %v800 = vadd.f32 %v767, %v790
      %v801 = vadd.f32 %v768, %v790
      %v802 = vadd.f32 %v769, %v790
      %v803 = vadd.f32 %v770, %v790
      %v804 = vadd.f32 %v771, %v790
      %v805 = vadd.f32 %v772, %v790
      %v806 = vadd.f32 %v773, %v790
      %v807 = vadd.f32 %v774, %v790
      %v808 = vadd.f32 %v775, %v790
      %v809 = vadd.f32 %v776, %v790
      %v810 = vadd.f32 %v777, %v790
      %v811 = vadd.f32 %v778, %v790
      %v812 = vadd.f32 %v779, %v790
      %v813 = vadd.f32 %v780, %v790
      %v814 = vadd.f32 %v781, %v790
      %v815 = vadd.f32 %v782, %v790
      %v816 = vadd.f32 %v783, %v790
      %v817 = vadd.f32 %v784, %v790
      %v818 = vadd.f32 %v785, %v790
      %v819 = vadd.f32 %v786, %v790
      %v820 = vadd.f32 %v787, %v790
      %v821 = vadd.f32 %v788, %v790
      %v822 = vadd.f32 %v789, %v790
      %v823 = vadd.f32 %v791, %v725
      %v824 = vadd.f32 %v792, %v726
      %v825 = vadd.f32 %v793, %v727
      %v826 = vadd.f32 %v794, %v728
      %v827 = vadd.f32 %v795, %v729
      %v828 = vadd.f32 %v796, %v730
      %v829 = vadd.f32 %v797, %v731
      %v830 = vadd.f32 %v798, %v732
      %v831 = vadd.f32 %v799, %v733
      %v832 = vadd.f32 %v800, %v734
      %v833 = vadd.f32 %v801, %v735
      %v834 = vadd.f32 %v802, %v736
      %v835 = vadd.f32 %v803, %v737
      %v836 = vadd.f32 %v804, %v738
      %v837 = vadd.f32 %v805, %v739
      %v838 = vadd.f32 %v806, %v740
      %v839 = vadd.f32 %v807, %v741
      %v840 = vadd.f32 %v808, %v742
      %v841 = vadd.f32 %v809, %v743
      %v842 = vadd.f32 %v810, %v744
      %v843 = vadd.f32 %v811, %v745
      %v844 = vadd.f32 %v812, %v746
      %v845 = vadd.f32 %v813, %v747
      %v846 = vadd.f32 %v814, %v748
      %v847 = vadd.f32 %v815, %v749
      %v848 = vadd.f32 %v816, %v750
      %v849 = vadd.f32 %v817, %v751
      %v850 = vadd.f32 %v818, %v752
      %v851 = vadd.f32 %v819, %v753
      %v852 = vadd.f32 %v820, %v754
      %v853 = vadd.f32 %v821, %v755
      %v854 = vadd.f32 %v822, %v756
      %v855 = vmax.f32 %v823, 0.0
      %v856 = vmax.f32 %v824, 0.0
      %v857 = vmax.f32 %v825, 0.0
      %v858 = vmax.f32 %v826, 0.0
      %v859 = vmax.f32 %v827, 0.0
      %v860 = vmax.f32 %v828, 0.0
      %v861 = vmax.f32 %v829, 0.0
      %v862 = vmax.f32 %v830, 0.0
      %v863 = vmax.f32 %v831, 0.0
      %v864 = vmax.f32 %v832, 0.0
      %v865 = vmax.f32 %v833, 0.0
      %v866 = vmax.f32 %v834, 0.0
      %v867 = vmax.f32 %v835, 0.0
      %v868 = vmax.f32 %v836, 0.0
      %v869 = vmax.f32 %v837, 0.0
      %v870 = vmax.f32 %v838, 0.0
      %v871 = vmax.f32 %v839, 0.0
      %v872 = vmax.f32 %v840, 0.0
      %v873 = vmax.f32 %v841, 0.0
      %v874 = vmax.f32 %v842, 0.0
      %v875 = vmax.f32 %v843, 0.0
      %v876 = vmax.f32 %v844, 0.0
      %v877 = vmax.f32 %v845, 0.0
      %v878 = vmax.f32 %v846, 0.0
      %v879 = vmax.f32 %v847, 0.0
      %v880 = vmax.f32 %v848, 0.0
      %v881 = vmax.f32 %v849, 0.0
      %v882 = vmax.f32 %v850, 0.0
      %v883 = vmax.f32 %v851, 0.0
      %v884 = vmax.f32 %v852, 0.0
      %v885 = vmax.f32 %v853, 0.0
      %v886 = vmax.f32 %v854, 0.0
      %887 = vst [vmem:[%s190] sm:$0xff] %v855
      %888 = vst [vmem:[%s190 + $0x8] sm:$0xff] %v856
      %889 = vst [vmem:[%s190 + $0x10] sm:$0xff] %v857
      %890 = vst [vmem:[%s190 + $0x18] sm:$0xff] %v858
      %891 = vst [vmem:[%s190 + $0x20] sm:$0xff] %v859
      %892 = vst [vmem:[%s190 + $0x28] sm:$0xff] %v860
      %893 = vst [vmem:[%s190 + $0x30] sm:$0xff] %v861
      %894 = vst [vmem:[%s190 + $0x38] sm:$0xff] %v862
      %895 = vst [vmem:[%s190 + $0x40] sm:$0xff] %v863
      %896 = vst [vmem:[%s190 + $0x48] sm:$0xff] %v864
      %897 = vst [vmem:[%s190 + $0x50] sm:$0xff] %v865
      %898 = vst [vmem:[%s190 + $0x58] sm:$0xff] %v866
      %899 = vst [vmem:[%s190 + $0x60] sm:$0xff] %v867
      %900 = vst [vmem:[%s190 + $0x68] sm:$0xff] %v868
      %901 = vst [vmem:[%s190 + $0x70] sm:$0xff] %v869
      %902 = vst [vmem:[%s190 + $0x78] sm:$0xff] %v870
      %903 = vst [vmem:[%s190 + $0x80] sm:$0xff] %v871
      %904 = vst [vmem:[%s190 + $0x88] sm:$0xff] %v872
      %905 = vst [vmem:[%s190 + $0x90] sm:$0xff] %v873
      %906 = vst [vmem:[%s190 + $0x98] sm:$0xff] %v874
      %907 = vst [vmem:[%s190 + $0xa0] sm:$0xff] %v875
      %908 = vst [vmem:[%s190 + $0xa8] sm:$0xff] %v876
      %909 = vst [vmem:[%s190 + $0xb0] sm:$0xff] %v877
      %910 = vst [vmem:[%s190 + $0xb8] sm:$0xff] %v878
      %911 = vst [vmem:[%s190 + $0xc0] sm:$0xff] %v879
      %912 = vst [vmem:[%s190 + $0xc8] sm:$0xff] %v880
      %913 = vst [vmem:[%s190 + $0xd0] sm:$0xff] %v881
      %914 = vst [vmem:[%s190 + $0xd8] sm:$0xff] %v882
      %915 = vst [vmem:[%s190 + $0xe0] sm:$0xff] %v883
      %916 = vst [vmem:[%s190 + $0xe8] sm:$0xff] %v884
      %917 = vst [vmem:[%s190 + $0xf0] sm:$0xff] %v885
      %918 = vst [vmem:[%s190 + $0xf8] sm:$0xff] %v886
      %p919 = scmp.lt.s32.totalorder %s14, 1
      %s920 = scalar_select %p919, %s14, 1
      %s921 = smul.addr %s920, 32
      %s922 = smul.addr %s921, 8
      %s923 = scalar_lea.vmem %s3, %s922
      // Predicated region
      $region33: #{residual_block_forward.5} parent=31 // pred_check
        %p924 = pneg %p105
      $region34: #{residual_block_forward.5} parent=31 // pred_check_branch
        %926 = sbr.rel (%p924) target = $region36
      $region35: #{residual_block_forward.5} parent=31 // pred_region
        _
      $region36: #{residual_block_forward.5} parent=31 // pred_fallthru
        _
    $region32: #{residual_block_forward.5} parent=5 // pred_fallthru
      _
    %p927 = scmp.le.s32.totalorder 2, %s9
    // Predicated region
    $region37: #{residual_block_forward.5} parent=5 // pred_check
      %p928 = pneg %p927
    $region38: #{residual_block_forward.5} parent=5 // pred_check_branch
      %930 = sbr.rel (%p928) target = $region40
    $region39: #{residual_block_forward.5} parent=5 // pred_region
      %s931 = ssub.s32 %s9, 2
      // Predicated region
      $region41: #{residual_block_forward.5} parent=39 // pred_check
        %p932 = pneg %p111
      $region42: #{residual_block_forward.5} parent=39 // pred_check_branch
        %934 = sbr.rel (%p932) target = $region44
      $region43: #{residual_block_forward.5} parent=39 // pred_region
        %p935 = scmp.lt.s32.totalorder %s15, 1
        %s936 = scalar_select %p935, %s15, 1
        %s937 = smul.addr %s936, 32
        %s938 = smul.addr %s937, 8
        %s939 = scalar_lea.vmem %s3, %s938
      $region44: #{residual_block_forward.5} parent=39 // pred_fallthru
        _
    $region40: #{residual_block_forward.5} parent=5 // pred_fallthru
      _
  $region6: #{residual_block_forward.5} parent=0 // loop_footer
    %s13 = sadd.s32 1, %s9
  $region7: #{residual_block_forward.5} parent=0 // loop_footer_branch
    %8 = sbr.rel target = $region3
  $region8: #{residual_block_forward.5} parent=0 // loop_exit
    _

// kernel: residual_block_forward.3
$region0: #{residual_block_forward.3}
  #allocation0 [shape = 'u32[]', space=smem, size = 0x4, offset = 0x4, fixed_abs, tag = 'smem constant byte address 0x4 - core index']
  #allocation1 [shape = 'u32[72,128]{1,0:T(1,128)}', space=vmem, size = 0x9000, scoped, tag = 'internal scratch']
  %s0 = inlined_call_operand.vmem [shape: bf16[2,342,128], index: 0, kind: input, shape index: {}]
  %s1 = inlined_call_operand.vmem [shape: bf16[9,128,128], index: 1, kind: input, shape index: {}]
  %s2 = inlined_call_operand.vmem [shape: f32[1,128], index: 2, kind: input, shape index: {}]
  %s3 = inlined_call_operand.vmem [shape: bf16[2,16,16,128], index: 3, kind: output, shape index: {0}]
  %s4 = inlined_call_operand.vmem [shape: f32[2,8,128], index: 4, kind: output, shape index: {1}]
  %5 = xla_tuple %s3, %s4
  %s6 = sld [smem:[#allocation0]]
  $region53: #{residual_block_forward.3} parent=0
    _
  %s8 = ssub.s32 1, %s6
  %s9 = scalar_select 0, %s8, %s6
  loop: start=0, step=1, limit=4
  $region2: #{residual_block_forward.3} parent=0 // loop_pre_header
    _
  $region3: #{residual_block_forward.3} parent=0 // loop_header
    %s11 = sphi 0, %s15
    %p12 = scmp.ge.s32.totalorder %s11, 4
    %s21 = sphi 0, %s23
    %s24 = sphi 0, %s21
    %s25 = sphi 0, %s24
    %s41 = sphi 0, %s25
    %s45 = sphi 0, %s45
    %s47 = sphi 0, %s45
    %s48 = sphi 0, %s47
    %s62 = sphi 0, %s48
    %s66 = sphi 0, %s66
    %s68 = sphi 0, %s66
    %s69 = sphi 0, %s68
    %s83 = sphi 0, %s69
    %s89 = sphi 0, %s91
    %s92 = sphi 0, %s89
    %s93 = sphi 0, %s92
    %s109 = sphi 0, %s93
    %s115 = sphi 0, %s117
    %s118 = sphi 0, %s115
    %s119 = sphi 0, %s118
    %s135 = sphi 0, %s119
  $region4: #{residual_block_forward.3} parent=0 // loop_header_branch
    %14 = sbr.rel (%p12) target = $region8
  $region5: #{residual_block_forward.3} parent=0 // loop_body
    %s16 = ssub.s32 %s11, 1
    %s17 = ssub.s32 %s11, 2
    %s18 = sadd.s32 %s11, 1
    %s19 = ssub.s32 %s11, %s18
    %p20 = scmp.eq.s32.totalorder %s19, 0
    %s22 = sadd.s32 %s21, 1
    %s23 = scalar_select %p20, %s21, %s22
    %p26 = pneg %p20
    %p27 = scmp.eq.s32.totalorder %s11, 1
    %p28 = por %p26, %p27
    %p29 = scmp.ne.s32.totalorder %s21, %s24
    %p30 = scmp.eq.s32.totalorder %s11, 0
    %p31 = por %p29, %p30
    %p32 = scmp.ne.s32.totalorder %s21, %s24
    %p33 = scmp.eq.s32.totalorder %s16, 1
    %p34 = por %p32, %p33
    %p35 = scmp.ne.s32.totalorder %s24, %s25
    %p36 = scmp.eq.s32.totalorder %s16, 0
    %p37 = por %p35, %p36
    %p38 = scmp.ne.s32.totalorder %s24, %s25
    %p39 = scmp.eq.s32.totalorder %s17, 1
    %p40 = por %p38, %p39
    %p42 = scmp.ne.s32.totalorder %s25, %s41
    %p43 = scmp.eq.s32.totalorder %s17, 0
    %p44 = por %p42, %p43
    %s46 = sadd.s32 %s45, 1
    %p49 = scmp.eq.s32.totalorder %s11, 1
    %p50 = scmp.ne.s32.totalorder %s45, %s47
    %p51 = scmp.eq.s32.totalorder %s11, 0
    %p52 = por %p50, %p51
    %p53 = scmp.ne.s32.totalorder %s45, %s47
    %p54 = scmp.eq.s32.totalorder %s16, 1
    %p55 = por %p53, %p54
    %p56 = scmp.ne.s32.totalorder %s47, %s48
    %p57 = scmp.eq.s32.totalorder %s16, 0
    %p58 = por %p56, %p57
    %p59 = scmp.ne.s32.totalorder %s47, %s48
    %p60 = scmp.eq.s32.totalorder %s17, 1
    %p61 = por %p59, %p60
    %p63 = scmp.ne.s32.totalorder %s48, %s62
    %p64 = scmp.eq.s32.totalorder %s17, 0
    %p65 = por %p63, %p64
    %s67 = sadd.s32 %s66, 1
    %p70 = scmp.eq.s32.totalorder %s11, 1
    %p71 = scmp.ne.s32.totalorder %s66, %s68
    %p72 = scmp.eq.s32.totalorder %s11, 0
    %p73 = por %p71, %p72
    %p74 = scmp.ne.s32.totalorder %s66, %s68
    %p75 = scmp.eq.s32.totalorder %s16, 1
    %p76 = por %p74, %p75
    %p77 = scmp.ne.s32.totalorder %s68, %s69
    %p78 = scmp.eq.s32.totalorder %s16, 0
    %p79 = por %p77, %p78
    %p80 = scmp.ne.s32.totalorder %s68, %s69
    %p81 = scmp.eq.s32.totalorder %s17, 1
    %p82 = por %p80, %p81
    %p84 = scmp.ne.s32.totalorder %s69, %s83
    %p85 = scmp.eq.s32.totalorder %s17, 0
    %p86 = por %p84, %p85
    %s87 = ssub.s32 %s11, %s18
    %p88 = scmp.eq.s32.totalorder %s87, 0
    %s90 = sadd.s32 %s89, 1
    %s91 = scalar_select %p88, %s89, %s90
    %p94 = pneg %p88
    %p95 = scmp.eq.s32.totalorder %s11, 1
    %p96 = por %p94, %p95
    %p97 = scmp.ne.s32.totalorder %s89, %s92
    %p98 = scmp.eq.s32.totalorder %s11, 0
    %p99 = por %p97, %p98
    %p100 = scmp.ne.s32.totalorder %s89, %s92
    %p101 = scmp.eq.s32.totalorder %s16, 1
    %p102 = por %p100, %p101
    %p103 = scmp.ne.s32.totalorder %s92, %s93
    %p104 = scmp.eq.s32.totalorder %s16, 0
    %p105 = por %p103, %p104
    %p106 = scmp.ne.s32.totalorder %s92, %s93
    %p107 = scmp.eq.s32.totalorder %s17, 1
    %p108 = por %p106, %p107
    %p110 = scmp.ne.s32.totalorder %s93, %s109
    %p111 = scmp.eq.s32.totalorder %s17, 0
    %p112 = por %p110, %p111
    %s113 = ssub.s32 %s11, %s18
    %p114 = scmp.eq.s32.totalorder %s113, 0
    %s116 = sadd.s32 %s115, 1
    %s117 = scalar_select %p114, %s115, %s116
    %p120 = pneg %p114
    %p121 = scmp.eq.s32.totalorder %s11, 1
    %p122 = por %p120, %p121
    %p123 = scmp.ne.s32.totalorder %s115, %s118
    %p124 = scmp.eq.s32.totalorder %s11, 0
    %p125 = por %p123, %p124
    %p126 = scmp.ne.s32.totalorder %s115, %s118
    %p127 = scmp.eq.s32.totalorder %s16, 1
    %p128 = por %p126, %p127
    %p129 = scmp.ne.s32.totalorder %s118, %s119
    %p130 = scmp.eq.s32.totalorder %s16, 0
    %p131 = por %p129, %p130
    %p132 = scmp.ne.s32.totalorder %s118, %s119
    %p133 = scmp.eq.s32.totalorder %s17, 1
    %p134 = por %p132, %p133
    %p136 = scmp.ne.s32.totalorder %s119, %s135
    %p137 = scmp.eq.s32.totalorder %s17, 0
    %p138 = por %p136, %p137
    %p139 = scmp.le.s32.totalorder 1, %s11
    %p140 = scmp.lt.s32.totalorder %s11, 3
    %p141 = pnand %p139, %p140
    %p142 = pneg %p141
    // Predicated region
    $region9: #{residual_block_forward.3} parent=5 // pred_check
      _
    $region10: #{residual_block_forward.3} parent=5 // pred_check_branch
      %144 = sbr.rel (%p141) target = $region12
    $region11: #{residual_block_forward.3} parent=5 // pred_region
      %s145 = ssub.s32 %s11, 1
      // Predicated region
      $region13: #{residual_block_forward.3} parent=11 // pred_check
        %p146 = pneg %p58
      $region14: #{residual_block_forward.3} parent=11 // pred_check_branch
        %148 = sbr.rel (%p146) target = $region16
      $region15: #{residual_block_forward.3} parent=11 // pred_region
        _
      $region16: #{residual_block_forward.3} parent=11 // pred_fallthru
        _
      // Predicated region
      $region17: #{residual_block_forward.3} parent=11 // pred_check
        %p149 = pneg %p79
      $region18: #{residual_block_forward.3} parent=11 // pred_check_branch
        %151 = sbr.rel (%p149) target = $region20
      $region19: #{residual_block_forward.3} parent=11 // pred_region
        _
      $region20: #{residual_block_forward.3} parent=11 // pred_fallthru
        _
    $region12: #{residual_block_forward.3} parent=5 // pred_fallthru
      _
    %p152 = scmp.lt.s32.totalorder %s11, 2
    // Predicated region
    $region21: #{residual_block_forward.3} parent=5 // pred_check
      %p153 = pneg %p152
    $region22: #{residual_block_forward.3} parent=5 // pred_check_branch
      %155 = sbr.rel (%p153) target = $region24
    $region23: #{residual_block_forward.3} parent=5 // pred_region
      // Predicated region
      $region25: #{residual_block_forward.3} parent=23 // pred_check
        %p156 = pneg %p31
      $region26: #{residual_block_forward.3} parent=23 // pred_check_branch
        %158 = sbr.rel (%p156) target = $region28
      $region27: #{residual_block_forward.3} parent=23 // pred_region
        %p159 = scmp.lt.s32.totalorder %s11, 1
        %s160 = scalar_select %p159, %s11, 1
        %s161 = smul.addr %s160, 43
        %s162 = smul.addr %s161, 4
        %s163 = scalar_lea.vmem %s0, %s162
      $region28: #{residual_block_forward.3} parent=23 // pred_fallthru
        _
    $region24: #{residual_block_forward.3} parent=5 // pred_fallthru
      _
    %p164 = scmp.le.s32.totalorder 1, %s11
    %p165 = scmp.lt.s32.totalorder %s11, 3
    %p166 = pnand %p164, %p165
    %p167 = pneg %p166
    // Predicated region
    $region29: #{residual_block_forward.3} parent=5 // pred_check
      _
    $region30: #{residual_block_forward.3} parent=5 // pred_check_branch
      %169 = sbr.rel (%p166) target = $region32
    $region31: #{residual_block_forward.3} parent=5 // pred_region
      %s170 = ssub.s32 %s11, 1
      %p171 = scmp.lt.s32.totalorder %s16, 1
      %s172 = scalar_select %p171, %s16, 1
      %s173 = smul.addr %s172, 43
      %s174 = smul.addr %s173, 4
      %s175 = scalar_lea.vmem %s0, %s174
      %p176 = pneg %p37
      %p177 = pneg %p34
      %p178 = pneg %p58
      %p179 = pneg %p55
      %p180 = pneg %p79
      %p181 = pneg %p76
      %p182 = pneg %p105
      %p183 = pneg %p102
      %p184 = scmp.lt.s32.totalorder %s16, 1
      %s185 = scalar_select %p184, %s16, 1
      %s186 = smul.addr %s185, 32
      %s187 = smul.addr %s186, 4
      %s188 = scalar_lea.vmem %s3, %s187
      %p189 = pneg %p131
      %p190 = pneg %p128
      %p191 = scmp.lt.s32.totalorder %s16, 1
      %s192 = scalar_select %p191, %s16, 1
      %s193 = smul.addr %s192, 8
      %s194 = scalar_lea.vmem %s4, %s193
      %p195 = scmp.lt.s32.totalorder %s16, 1
      %s196 = scalar_select %p195, %s16, 1
      %s197 = smul.addr %s196, 43
      %s198 = smul.addr %s197, 4
      %s199 = scalar_lea.vmem %s0, %s198
      %p200 = scmp.lt.s32.totalorder %s16, 1
      %s201 = scalar_select %p200, %s16, 1
      %s202 = smul.addr %s201, 32
      %s203 = smul.addr %s202, 4
      %s204 = scalar_lea.vmem %s3, %s203
      %p205 = scmp.lt.s32.totalorder %s16, 1
      %s206 = scalar_select %p205, %s16, 1
      %s207 = smul.addr %s206, 8
      %s208 = scalar_lea.vmem %s4, %s207
      %v209 = vld [vmem:[%s199] sm:$0xf]
      %v210 = vld [vmem:[%s199 + $0x4] sm:$0xf]
      %v211 = vld [vmem:[%s199 + $0x8] sm:$0xf]
      %v212 = vld [vmem:[%s199 + $0xc] sm:$0xf]
      %v213 = vld [vmem:[%s199 + $0x10] sm:$0xf]
      %v214 = vld [vmem:[%s199 + $0x14] sm:$0xf]
      %v215 = vld [vmem:[%s199 + $0x18] sm:$0xf]
      %v216 = vld [vmem:[%s199 + $0x1c] sm:$0xf]
      %v217 = vld [vmem:[%s199 + $0x20] sm:$0xf]
      %v218 = vld [vmem:[%s199 + $0x24] sm:$0xf]
      %v219 = vld [vmem:[%s199 + $0x28] sm:$0xf]
      %v220 = vld [vmem:[%s199 + $0x2c] sm:$0xf]
      %v221 = vld [vmem:[%s199 + $0x30] sm:$0xf]
      %v222 = vld [vmem:[%s199 + $0x34] sm:$0xf]
      %v223 = vld [vmem:[%s199 + $0x38] sm:$0xf]
      %v224 = vld [vmem:[%s199 + $0x3c] sm:$0xf]
      %v225 = vld [vmem:[%s199 + $0x40] sm:$0xf]
      %v226 = vld [vmem:[%s199 + $0x44] sm:$0xf]
      %v227 = vld [vmem:[%s199 + $0x48] sm:$0xf]
      %v228 = vld [vmem:[%s199 + $0x4c] sm:$0xf]
      %v229 = vld [vmem:[%s199 + $0x50] sm:$0xf]
      %v230 = vld [vmem:[%s199 + $0x54] sm:$0xf]
      %v231 = vld [vmem:[%s199 + $0x58] sm:$0xf]
      %v232 = vld [vmem:[%s199 + $0x5c] sm:$0xf]
      %v233 = vld [vmem:[%s199 + $0x60] sm:$0xf]
      %v234 = vld [vmem:[%s199 + $0x64] sm:$0xf]
      %v235 = vld [vmem:[%s199 + $0x68] sm:$0xf]
      %v236 = vld [vmem:[%s199 + $0x6c] sm:$0xf]
      %v237 = vld [vmem:[%s199 + $0x70] sm:$0xf]
      %v238 = vld [vmem:[%s199 + $0x74] sm:$0xf]
      %v239 = vld [vmem:[%s199 + $0x78] sm:$0xf]
      %v240 = vld [vmem:[%s199 + $0x7c] sm:$0xf]
      %v241 = vld [vmem:[%s199 + $0x80] sm:$0xf]
      %v242 = vld [vmem:[%s199 + $0x84] sm:$0xf]
      %v243 = vld [vmem:[%s199 + $0x88] sm:$0xf]
      %v244 = vld [vmem:[%s199 + $0x8c] sm:$0xf]
      %v245 = vld [vmem:[%s1] sm:$0xf]
      %v246 = vld [vmem:[%s1 + $0x4] sm:$0xf]
      %v247 = vld [vmem:[%s1 + $0x8] sm:$0xf]
      %v248 = vld [vmem:[%s1 + $0xc] sm:$0xf]
      %v249 = vld [vmem:[%s1 + $0x10] sm:$0xf]
      %v250 = vld [vmem:[%s1 + $0x14] sm:$0xf]
      %v251 = vld [vmem:[%s1 + $0x18] sm:$0xf]
      %v252 = vld [vmem:[%s1 + $0x1c] sm:$0xf]
      %v253 = vld [vmem:[%s1 + $0x20] sm:$0xf]
      %v254 = vld [vmem:[%s1 + $0x24] sm:$0xf]
      %v255 = vld [vmem:[%s1 + $0x28] sm:$0xf]
      %v256 = vld [vmem:[%s1 + $0x2c] sm:$0xf]
      %v257 = vld [vmem:[%s1 + $0x30] sm:$0xf]
      %v258 = vld [vmem:[%s1 + $0x34] sm:$0xf]
      %v259 = vld [vmem:[%s1 + $0x38] sm:$0xf]
      %v260 = vld [vmem:[%s1 + $0x3c] sm:$0xf]
      %v261 = vld [vmem:[%s199 + $0x90] sm:$0x1]
      %s262 = scalar_lea.vmem %s1, 64
      %v263 = vld [vmem:[%s262] sm:$0xf]
      %v264 = vld [vmem:[%s262 + $0x4] sm:$0xf]
      %v265 = vld [vmem:[%s262 + $0x8] sm:$0xf]
      %v266 = vld [vmem:[%s262 + $0xc] sm:$0xf]
      %v267 = vld [vmem:[%s262 + $0x10] sm:$0xf]
      %v268 = vld [vmem:[%s262 + $0x14] sm:$0xf]
      %v269 = vld [vmem:[%s262 + $0x18] sm:$0xf]
      %v270 = vld [vmem:[%s262 + $0x1c] sm:$0xf]
      %v271 = vld [vmem:[%s262 + $0x20] sm:$0xf]
      %v272 = vld [vmem:[%s262 + $0x24] sm:$0xf]
      %v273 = vld [vmem:[%s262 + $0x28] sm:$0xf]
      %v274 = vld [vmem:[%s262 + $0x2c] sm:$0xf]
      %v275 = vld [vmem:[%s262 + $0x30] sm:$0xf]
      %v276 = vld [vmem:[%s262 + $0x34] sm:$0xf]
      %v277 = vld [vmem:[%s262 + $0x38] sm:$0xf]
      %v278 = vld [vmem:[%s262 + $0x3c] sm:$0xf]
      %v316 = vunpack.c.l.b16 %v209
      %v317 = vunpack.c.l.b16 %v210
      %v318 = vunpack.c.l.b16 %v211
      %v319 = vunpack.c.l.b16 %v212
      %v320 = vunpack.c.l.b16 %v213
      %v321 = vunpack.c.l.b16 %v214
      %v322 = vunpack.c.l.b16 %v215
      %v323 = vunpack.c.l.b16 %v216
      %v324 = vunpack.c.l.b16 %v217
      %v325 = vunpack.c.l.b16 %v218
      %v326 = vunpack.c.l.b16 %v219
      %v327 = vunpack.c.l.b16 %v220
      %v328 = vunpack.c.l.b16 %v221
      %v329 = vunpack.c.l.b16 %v222
      %v330 = vunpack.c.l.b16 %v223
      %v331 = vunpack.c.l.b16 %v224
      %v332 = vunpack.c.l.b16 %v225
      %v333 = vunpack.c.l.b16 %v226
      %v334 = vunpack.c.l.b16 %v227
      %v335 = vunpack.c.l.b16 %v228
      %v336 = vunpack.c.l.b16 %v229
      %v337 = vunpack.c.l.b16 %v230
      %v338 = vunpack.c.l.b16 %v231
      %v339 = vunpack.c.l.b16 %v232
      %v340 = vunpack.c.l.b16 %v233
      %v341 = vunpack.c.l.b16 %v234
      %v342 = vunpack.c.l.b16 %v235
      %v343 = vunpack.c.l.b16 %v236
      %v344 = vunpack.c.l.b16 %v237
      %v345 = vunpack.c.l.b16 %v238
      %v346 = vunpack.c.l.b16 %v239
      %v347 = vunpack.c.l.b16 %v240
      %v348 = vunpack.c.l.b16 %v241
      %v349 = vunpack.c.l.b16 %v242
      %v350 = vunpack.c.l.b16 %v243
      %v351 = vunpack.c.l.b16 %v244
      %v352 = vunpack.c.l.b16 %v261
      %v353 = vpack.c.b16 %v317, %v316
      %v354 = vpack.c.b16 %v319, %v318
      %v355 = vpack.c.b16 %v321, %v320
      %v356 = vpack.c.b16 %v323, %v322
      %v357 = vpack.c.b16 %v325, %v324
      %v358 = vpack.c.b16 %v327, %v326
      %v359 = vpack.c.b16 %v329, %v328
      %v360 = vpack.c.b16 %v331, %v330
      %v361 = vpack.c.b16 %v333, %v332
      %v362 = vpack.c.b16 %v335, %v334
      %v363 = vpack.c.b16 %v337, %v336
      %v364 = vpack.c.b16 %v339, %v338
      %v365 = vpack.c.b16 %v341, %v340
      %v366 = vpack.c.b16 %v343, %v342
      %v367 = vpack.c.b16 %v345, %v344
      %v368 = vpack.c.b16 %v347, %v346
      %v369 = vpack.c.b16 %v349, %v348
      %v370 = vpack.c.b16 %v351, %v350
      %v371 = vpack.c.b16 %v352, %v352
      %vm372 = vsmask.f32 7424
      %v374 = vshrl.u32 %v353, 16
      %v376 = vshll.u32 %v353, 16
      %v378 = vrot.slane %v376, 1
      %v379 = vor.u32 %v374, %v378
      %v381 = vshll.u32 %v354, 16
      %v383 = vrot.slane %v381, 1
      %v384 = vsel %vm372, %v379, %v383
      %v385 = vshrl.u32 %v354, 16
      %v387 = vor.u32 %v385, %v383
      %v389 = vshll.u32 %v355, 16
      %v391 = vrot.slane %v389, 1
      %v392 = vsel %vm372, %v387, %v391
      %v393 = vshrl.u32 %v355, 16
      %v395 = vor.u32 %v393, %v391
      %v397 = vshll.u32 %v356, 16
      %v399 = vrot.slane %v397, 1
      %v400 = vsel %vm372, %v395, %v399
      %v401 = vshrl.u32 %v356, 16
      %v403 = vor.u32 %v401, %v399
      %v405 = vshll.u32 %v357, 16
      %v407 = vrot.slane %v405, 1
      %v408 = vsel %vm372, %v403, %v407
      %v409 = vshrl.u32 %v357, 16
      %v411 = vor.u32 %v409, %v407
      %v413 = vshll.u32 %v358, 16
      %v415 = vrot.slane %v413, 1
      %v416 = vsel %vm372, %v411, %v415
      %v417 = vshrl.u32 %v358, 16
      %v419 = vor.u32 %v417, %v415
      %v421 = vshll.u32 %v359, 16
      %v423 = vrot.slane %v421, 1
      %v424 = vsel %vm372, %v419, %v423
      %v425 = vshrl.u32 %v359, 16
      %v427 = vor.u32 %v425, %v423
      %v429 = vshll.u32 %v360, 16
      %v431 = vrot.slane %v429, 1
      %v432 = vsel %vm372, %v427, %v431
      %v433 = vshrl.u32 %v360, 16
      %v435 = vor.u32 %v433, %v431
      %v437 = vshll.u32 %v361, 16
      %v439 = vrot.slane %v437, 1
      %v440 = vsel %vm372, %v435, %v439
      %v441 = vshrl.u32 %v361, 16
      %v443 = vor.u32 %v441, %v439
      %v445 = vshll.u32 %v362, 16
      %v447 = vrot.slane %v445, 1
      %v448 = vsel %vm372, %v443, %v447
      %v449 = vshrl.u32 %v362, 16
      %v451 = vor.u32 %v449, %v447
      %v453 = vshll.u32 %v363, 16
      %v455 = vrot.slane %v453, 1
      %v456 = vsel %vm372, %v451, %v455
      %v457 = vshrl.u32 %v363, 16
      %v459 = vor.u32 %v457, %v455
      %v461 = vshll.u32 %v364, 16
      %v463 = vrot.slane %v461, 1
      %v464 = vsel %vm372, %v459, %v463
      %v465 = vshrl.u32 %v364, 16
      %v467 = vor.u32 %v465, %v463
      %v469 = vshll.u32 %v365, 16
      %v471 = vrot.slane %v469, 1
      %v472 = vsel %vm372, %v467, %v471
      %v473 = vshrl.u32 %v365, 16
      %v475 = vor.u32 %v473, %v471
      %v477 = vshll.u32 %v366, 16
      %v479 = vrot.slane %v477, 1
      %v480 = vsel %vm372, %v475, %v479
      %v481 = vshrl.u32 %v366, 16
      %v483 = vor.u32 %v481, %v479
      %v485 = vshll.u32 %v367, 16
      %v487 = vrot.slane %v485, 1
      %v488 = vsel %vm372, %v483, %v487
      %v489 = vshrl.u32 %v367, 16
      %v491 = vor.u32 %v489, %v487
      %v493 = vshll.u32 %v368, 16
      %v495 = vrot.slane %v493, 1
      %v496 = vsel %vm372, %v491, %v495
      %v497 = vshrl.u32 %v368, 16
      %v499 = vor.u32 %v497, %v495
      %v501 = vshll.u32 %v369, 16
      %v503 = vrot.slane %v501, 1
      %v504 = vsel %vm372, %v499, %v503
      %v505 = vshrl.u32 %v369, 16
      %v507 = vor.u32 %v505, %v503
      %v509 = vshll.u32 %v370, 16
      %v511 = vrot.slane %v509, 1
      %v512 = vsel %vm372, %v507, %v511
      %v513 = vshrl.u32 %v370, 16
      %v515 = vor.u32 %v513, %v511
      %v517 = vshll.u32 %v371, 16
      %v519 = vrot.slane %v517, 1
      %v520 = vsel %vm372, %v515, %v519
      %v555 = vunpack.c.l.b16 %v263
      %v556 = vunpack.c.l.b16 %v264
      %v557 = vunpack.c.l.b16 %v265
      %v558 = vunpack.c.l.b16 %v266
      %v559 = vunpack.c.l.b16 %v267
      %v560 = vunpack.c.l.b16 %v268
      %v561 = vunpack.c.l.b16 %v269
      %v562 = vunpack.c.l.b16 %v270
      %v563 = vunpack.c.l.b16 %v271
      %v564 = vunpack.c.l.b16 %v272
      %v565 = vunpack.c.l.b16 %v273
      %v566 = vunpack.c.l.b16 %v274
      %v567 = vunpack.c.l.b16 %v275
      %v568 = vunpack.c.l.b16 %v276
      %v569 = vunpack.c.l.b16 %v277
      %v570 = vunpack.c.l.b16 %v278
      %v571 = vpack.c.b16 %v556, %v555
      %v572 = vpack.c.b16 %v558, %v557
      %v573 = vpack.c.b16 %v560, %v559
      %v574 = vpack.c.b16 %v562, %v561
      %v575 = vpack.c.b16 %v564, %v563
      %v576 = vpack.c.b16 %v566, %v565
      %v577 = vpack.c.b16 %v568, %v567
      %v578 = vpack.c.b16 %v570, %v569
      %587 = vmatpush.bf16.msra.mxu0 %v578
      %588 = vmatpush.bf16.msra.mxu0 %v577
      %589 = vmatpush.bf16.msra.mxu0 %v576
      %590 = vmatpush.bf16.msra.mxu0 %v575
      %591 = vmatpush.bf16.msra.mxu0 %v574
      %592 = vmatpush.bf16.msra.mxu0 %v573
      %593 = vmatpush.bf16.msra.mxu0 %v572
      %594 = vmatpush.bf16.msra.mxu0 %v571
      %595 = vmatmul.bf16.gmra.mxu0 %v384
      %v596 = vpop.f32.mrf.mxu0
      %v597 = vadd.f32 0.0, %v596
      %v598 = vpop.f32.mrf.mxu0
      %v599 = vadd.f32 0.0, %v598
      %600 = vmatmul.bf16.gmra.mxu0 %v392
      %v601 = vpop.f32.mrf.mxu0
      %v602 = vadd.f32 0.0, %v601
      %v603 = vpop.f32.mrf.mxu0
      %v604 = vadd.f32 0.0, %v603
      %605 = vmatmul.bf16.gmra.mxu0 %v400
      %v606 = vpop.f32.mrf.mxu0
      %v607 = vadd.f32 0.0, %v606
      %v608 = vpop.f32.mrf.mxu0
      %v609 = vadd.f32 0.0, %v608
      %610 = vmatmul.bf16.gmra.mxu0 %v408
      %v611 = vpop.f32.mrf.mxu0
      %v612 = vadd.f32 0.0, %v611
      %v613 = vpop.f32.mrf.mxu0
      %v614 = vadd.f32 0.0, %v613
      %615 = vmatmul.bf16.gmra.mxu0 %v416
      %v616 = vpop.f32.mrf.mxu0
      %v617 = vadd.f32 0.0, %v616
      %v618 = vpop.f32.mrf.mxu0
      %v619 = vadd.f32 0.0, %v618
      %620 = vmatmul.bf16.gmra.mxu0 %v424
      %v621 = vpop.f32.mrf.mxu0
      %v622 = vadd.f32 0.0, %v621
      %v623 = vpop.f32.mrf.mxu0
      %v624 = vadd.f32 0.0, %v623
      %625 = vmatmul.bf16.gmra.mxu0 %v432
      %v626 = vpop.f32.mrf.mxu0
      %v627 = vadd.f32 0.0, %v626
      %v628 = vpop.f32.mrf.mxu0
      %v629 = vadd.f32 0.0, %v628
      %630 = vmatmul.bf16.gmra.mxu0 %v440
      %v631 = vpop.f32.mrf.mxu0
      %v632 = vadd.f32 0.0, %v631
      %v633 = vpop.f32.mrf.mxu0
      %v634 = vadd.f32 0.0, %v633
      %635 = vmatmul.bf16.gmra.mxu0 %v448
      %v636 = vpop.f32.mrf.mxu0
      %v637 = vadd.f32 0.0, %v636
      %v638 = vpop.f32.mrf.mxu0
      %v639 = vadd.f32 0.0, %v638
      %640 = vmatmul.bf16.gmra.mxu0 %v456
      %v641 = vpop.f32.mrf.mxu0
      %v642 = vadd.f32 0.0, %v641
      %v643 = vpop.f32.mrf.mxu0
      %v644 = vadd.f32 0.0, %v643
      %645 = vmatmul.bf16.gmra.mxu0 %v464
      %v646 = vpop.f32.mrf.mxu0
      %v647 = vadd.f32 0.0, %v646
      %v648 = vpop.f32.mrf.mxu0
      %v649 = vadd.f32 0.0, %v648
      %650 = vmatmul.bf16.gmra.mxu0 %v472
      %v651 = vpop.f32.mrf.mxu0
      %v652 = vadd.f32 0.0, %v651
      %v653 = vpop.f32.mrf.mxu0
      %v654 = vadd.f32 0.0, %v653
      %655 = vmatmul.bf16.gmra.mxu0 %v480
      %v656 = vpop.f32.mrf.mxu0
      %v657 = vadd.f32 0.0, %v656
      %v658 = vpop.f32.mrf.mxu0
      %v659 = vadd.f32 0.0, %v658
      %660 = vmatmul.bf16.gmra.mxu0 %v488
      %v661 = vpop.f32.mrf.mxu0
      %v662 = vadd.f32 0.0, %v661
      %v663 = vpop.f32.mrf.mxu0
      %v664 = vadd.f32 0.0, %v663
      %665 = vmatmul.bf16.gmra.mxu0 %v496
      %v666 = vpop.f32.mrf.mxu0
      %v667 = vadd.f32 0.0, %v666
      %v668 = vpop.f32.mrf.mxu0
      %v669 = vadd.f32 0.0, %v668
      %670 = vmatmul.bf16.gmra.mxu0 %v504
      %v671 = vpop.f32.mrf.mxu0
      %v672 = vadd.f32 0.0, %v671
      %v673 = vpop.f32.mrf.mxu0
      %v674 = vadd.f32 0.0, %v673
      %675 = vmatmul.bf16.gmra.mxu0 %v512
      %v676 = vpop.f32.mrf.mxu0
      %v677 = vadd.f32 0.0, %v676
      %v678 = vpop.f32.mrf.mxu0
      %v679 = vadd.f32 0.0, %v678
      %680 = vmatmul.bf16.gmra.mxu0 %v520
      %v681 = vpop.f32.mrf.mxu0
      %v682 = vadd.f32 0.0, %v681
      %v683 = vpop.f32.mrf.mxu0
      %v684 = vadd.f32 0.0, %v683
      %685 = vdwg.mxu0
      %v720 = vunpack.c.l.b16 %v245
      %v721 = vunpack.c.l.b16 %v246
      %v722 = vunpack.c.l.b16 %v247
      %v723 = vunpack.c.l.b16 %v248
      %v724 = vunpack.c.l.b16 %v249
      %v725 = vunpack.c.l.b16 %v250
      %v726 = vunpack.c.l.b16 %v251
      %v727 = vunpack.c.l.b16 %v252
      %v728 = vunpack.c.l.b16 %v253
      %v729 = vunpack.c.l.b16 %v254
      %v730 = vunpack.c.l.b16 %v255
      %v731 = vunpack.c.l.b16 %v256
      %v732 = vunpack.c.l.b16 %v257
      %v733 = vunpack.c.l.b16 %v258
      %v734 = vunpack.c.l.b16 %v259
      %v735 = vunpack.c.l.b16 %v260
      %v736 = vpack.c.b16 %v721, %v720
      %v737 = vpack.c.b16 %v723, %v722
      %v738 = vpack.c.b16 %v725, %v724
      %v739 = vpack.c.b16 %v727, %v726
      %v740 = vpack.c.b16 %v729, %v728
      %v741 = vpack.c.b16 %v731, %v730
      %v742 = vpack.c.b16 %v733, %v732
      %v743 = vpack.c.b16 %v735, %v734
      %752 = vmatpush.bf16.msra.mxu0 %v743
      %753 = vmatpush.bf16.msra.mxu0 %v742
      %754 = vmatpush.bf16.msra.mxu0 %v741
      %755 = vmatpush.bf16.msra.mxu0 %v740
      %756 = vmatpush.bf16.msra.mxu0 %v739
      %757 = vmatpush.bf16.msra.mxu0 %v738
      %758 = vmatpush.bf16.msra.mxu0 %v737
      %759 = vmatpush.bf16.msra.mxu0 %v736
      %760 = vmatmul.bf16.gmra.mxu0 %v353
      %v761 = vpop.f32.mrf.mxu0
      %v762 = vadd.f32 %v597, %v761
      %v763 = vpop.f32.mrf.mxu0
      %v764 = vadd.f32 %v599, %v763
      %765 = vmatmul.bf16.gmra.mxu0 %v354
      %v766 = vpop.f32.mrf.mxu0
      %v767 = vadd.f32 %v602, %v766
      %v768 = vpop.f32.mrf.mxu0
      %v769 = vadd.f32 %v604, %v768
      %770 = vmatmul.bf16.gmra.mxu0 %v355
      %v771 = vpop.f32.mrf.mxu0
      %v772 = vadd.f32 %v607, %v771
      %v773 = vpop.f32.mrf.mxu0
      %v774 = vadd.f32 %v609, %v773
      %775 = vmatmul.bf16.gmra.mxu0 %v356
      %v776 = vpop.f32.mrf.mxu0
      %v777 = vadd.f32 %v612, %v776
      %v778 = vpop.f32.mrf.mxu0
      %v779 = vadd.f32 %v614, %v778
      %780 = vmatmul.bf16.gmra.mxu0 %v357
      %v781 = vpop.f32.mrf.mxu0
      %v782 = vadd.f32 %v617, %v781
      %v783 = vpop.f32.mrf.mxu0
      %v784 = vadd.f32 %v619, %v783
      %785 = vmatmul.bf16.gmra.mxu0 %v358
      %v786 = vpop.f32.mrf.mxu0
      %v787 = vadd.f32 %v622, %v786
      %v788 = vpop.f32.mrf.mxu0
      %v789 = vadd.f32 %v624, %v788
      %790 = vmatmul.bf16.gmra.mxu0 %v359
      %v791 = vpop.f32.mrf.mxu0
      %v792 = vadd.f32 %v627, %v791
      %v793 = vpop.f32.mrf.mxu0
      %v794 = vadd.f32 %v629, %v793
      %795 = vmatmul.bf16.gmra.mxu0 %v360
      %v796 = vpop.f32.mrf.mxu0
      %v797 = vadd.f32 %v632, %v796
      %v798 = vpop.f32.mrf.mxu0
      %v799 = vadd.f32 %v634, %v798
      %800 = vmatmul.bf16.gmra.mxu0 %v361
      %v801 = vpop.f32.mrf.mxu0
      %v802 = vadd.f32 %v637, %v801
      %v803 = vpop.f32.mrf.mxu0
      %v804 = vadd.f32 %v639, %v803
      %805 = vmatmul.bf16.gmra.mxu0 %v362
      %v806 = vpop.f32.mrf.mxu0
      %v807 = vadd.f32 %v642, %v806
      %v808 = vpop.f32.mrf.mxu0
      %v809 = vadd.f32 %v644, %v808
      %810 = vmatmul.bf16.gmra.mxu0 %v363
      %v811 = vpop.f32.mrf.mxu0
      %v812 = vadd.f32 %v647, %v811
      %v813 = vpop.f32.mrf.mxu0
      %v814 = vadd.f32 %v649, %v813
      %815 = vmatmul.bf16.gmra.mxu0 %v364
      %v816 = vpop.f32.mrf.mxu0
      %v817 = vadd.f32 %v652, %v816
      %v818 = vpop.f32.mrf.mxu0
      %v819 = vadd.f32 %v654, %v818
      %820 = vmatmul.bf16.gmra.mxu0 %v365
      %v821 = vpop.f32.mrf.mxu0
      %v822 = vadd.f32 %v657, %v821
      %v823 = vpop.f32.mrf.mxu0
      %v824 = vadd.f32 %v659, %v823
      %825 = vmatmul.bf16.gmra.mxu0 %v366
      %v826 = vpop.f32.mrf.mxu0
      %v827 = vadd.f32 %v662, %v826
      %v828 = vpop.f32.mrf.mxu0
      %v829 = vadd.f32 %v664, %v828
      %830 = vmatmul.bf16.gmra.mxu0 %v367
      %v831 = vpop.f32.mrf.mxu0
      %v832 = vadd.f32 %v667, %v831
      %v833 = vpop.f32.mrf.mxu0
      %v834 = vadd.f32 %v669, %v833
      %835 = vmatmul.bf16.gmra.mxu0 %v368
      %v836 = vpop.f32.mrf.mxu0
      %v837 = vadd.f32 %v672, %v836
      %v838 = vpop.f32.mrf.mxu0
      %v839 = vadd.f32 %v674, %v838
      %840 = vmatmul.bf16.gmra.mxu0 %v369
      %v841 = vpop.f32.mrf.mxu0
      %v842 = vadd.f32 %v677, %v841
      %v843 = vpop.f32.mrf.mxu0
      %v844 = vadd.f32 %v679, %v843
      %845 = vmatmul.bf16.gmra.mxu0 %v370
      %v846 = vpop.f32.mrf.mxu0
      %v847 = vadd.f32 %v682, %v846
      %v848 = vpop.f32.mrf.mxu0
      %v849 = vadd.f32 %v684, %v848
      %850 = vdwg.mxu0
      %v851 = vld [vmem:[%s199] sm:$0xe]
      %s852 = scalar_lea.vmem %s1, 128
      %v853 = vld [vmem:[%s852] sm:$0xf]
      %v854 = vld [vmem:[%s852 + $0x4] sm:$0xf]
      %v855 = vld [vmem:[%s852 + $0x8] sm:$0xf]
      %v856 = vld [vmem:[%s852 + $0xc] sm:$0xf]
      %v857 = vld [vmem:[%s852 + $0x10] sm:$0xf]
      %v858 = vld [vmem:[%s852 + $0x14] sm:$0xf]
      %v859 = vld [vmem:[%s852 + $0x18] sm:$0xf]
      %v860 = vld [vmem:[%s852 + $0x1c] sm:$0xf]
      %v861 = vld [vmem:[%s852 + $0x20] sm:$0xf]
      %v862 = vld [vmem:[%s852 + $0x24] sm:$0xf]
      %v863 = vld [vmem:[%s852 + $0x28] sm:$0xf]
      %v864 = vld [vmem:[%s852 + $0x2c] sm:$0xf]
      %v865 = vld [vmem:[%s852 + $0x30] sm:$0xf]
      %v866 = vld [vmem:[%s852 + $0x34] sm:$0xf]
      %v867 = vld [vmem:[%s852 + $0x38] sm:$0xf]
      %v868 = vld [vmem:[%s852 + $0x3c] sm:$0xf]
      %v870 = vunpack.c.l.b16 %v851
      %v871 = vpack.c.b16 %v317, %v870
      %vm872 = vcmask 1046528
      %v873 = vrot.slane %v871, 1
      %v874 = vrot.slane %v354, 1
      %v875 = vsel %vm872, %v873, %v874
      %v876 = vrot.slane %v355, 1
      %v877 = vsel %vm872, %v874, %v876
      %v878 = vrot.slane %v356, 1
      %v879 = vsel %vm872, %v876, %v878
      %v880 = vrot.slane %v357, 1
      %v881 = vsel %vm872, %v878, %v880
      %v882 = vrot.slane %v358, 1
      %v883 = vsel %vm872, %v880, %v882
      %v884 = vrot.slane %v359, 1
      %v885 = vsel %vm872, %v882, %v884
      %v886 = vrot.slane %v360, 1
      %v887 = vsel %vm872, %v884, %v886
      %v888 = vrot.slane %v361, 1
      %v889 = vsel %vm872, %v886, %v888
      %v890 = vrot.slane %v362, 1
      %v891 = vsel %vm872, %v888, %v890
      %v892 = vrot.slane %v363, 1
      %v893 = vsel %vm872, %v890, %v892
      %v894 = vrot.slane %v364, 1
      %v895 = vsel %vm872, %v892, %v894
      %v896 = vrot.slane %v365, 1
      %v897 = vsel %vm872, %v894, %v896
      %v898 = vrot.slane %v366, 1
      %v899 = vsel %vm872, %v896, %v898
      %v900 = vrot.slane %v367, 1
      %v901 = vsel %vm872, %v898, %v900
      %v902 = vrot.slane %v368, 1
      %v903 = vsel %vm872, %v900, %v902
      %v904 = vrot.slane %v369, 1
      %v905 = vsel %vm872, %v902, %v904
      %v906 = vrot.slane %v370, 1
      %v907 = vsel %vm872, %v904, %v906
      %v908 = vrot.slane %v371, 1
      %v909 = vsel %vm872, %v906, %v908
      %v944 = vunpack.c.l.b16 %v853
      %v945 = vunpack.c.l.b16 %v854
      %v946 = vunpack.c.l.b16 %v855
      %v947 = vunpack.c.l.b16 %v856
      %v948 = vunpack.c.l.b16 %v857
      %v949 = vunpack.c.l.b16 %v858
      %v950 = vunpack.c.l.b16 %v859
      %v951 = vunpack.c.l.b16 %v860
      %v952 = vunpack.c.l.b16 %v861
      %v953 = vunpack.c.l.b16 %v862
      %v954 = vunpack.c.l.b16 %v863
      %v955 = vunpack.c.l.b16 %v864
      %v956 = vunpack.c.l.b16 %v865
      %v957 = vunpack.c.l.b16 %v866
      %v958 = vunpack.c.l.b16 %v867
      %v959 = vunpack.c.l.b16 %v868
      %v960 = vpack.c.b16 %v945, %v944
      %v961 = vpack.c.b16 %v947, %v946
      %v962 = vpack.c.b16 %v949, %v948
      %v963 = vpack.c.b16 %v951, %v950
      %v964 = vpack.c.b16 %v953, %v952
      %v965 = vpack.c.b16 %v955, %v954
      %v966 = vpack.c.b16 %v957, %v956
      %v967 = vpack.c.b16 %v959, %v958
      %976 = vmatpush.bf16.msra.mxu0 %v967
      %977 = vmatpush.bf16.msra.mxu0 %v966
      %978 = vmatpush.bf16.msra.mxu0 %v965
      %979 = vmatpush.bf16.msra.mxu0 %v964
      %980 = vmatpush.bf16.msra.mxu0 %v963
      %981 = vmatpush.bf16.msra.mxu0 %v962
      %982 = vmatpush.bf16.msra.mxu0 %v961
      %983 = vmatpush.bf16.msra.mxu0 %v960
      %984 = vmatmul.bf16.gmra.mxu0 %v875
      %v985 = vpop.f32.mrf.mxu0
      %v986 = vadd.f32 0.0, %v985
      %v987 = vpop.f32.mrf.mxu0
      %v988 = vadd.f32 0.0, %v987
      %989 = vmatmul.bf16.gmra.mxu0 %v877
      %v990 = vpop.f32.mrf.mxu0
      %v991 = vadd.f32 0.0, %v990
      %v992 = vpop.f32.mrf.mxu0
      %v993 = vadd.f32 0.0, %v992
      %994 = vmatmul.bf16.gmra.mxu0 %v879
      %v995 = vpop.f32.mrf.mxu0
      %v996 = vadd.f32 0.0, %v995
      %v997 = vpop.f32.mrf.mxu0
      %v998 = vadd.f32 0.0, %v997
      %999 = vmatmul.bf16.gmra.mxu0 %v881
      %v1000 = vpop.f32.mrf.mxu0
      %v1001 = vadd.f32 0.0, %v1000
      %v1002 = vpop.f32.mrf.mxu0
      %v1003 = vadd.f32 0.0, %v1002
      %1004 = vmatmul.bf16.gmra.mxu0 %v883
      %v1005 = vpop.f32.mrf.mxu0
      %v1006 = vadd.f32 0.0, %v1005
      %v1007 = vpop.f32.mrf.mxu0
      %v1008 = vadd.f32 0.0, %v1007
      %1009 = vmatmul.bf16.gmra.mxu0 %v885
      %v1010 = vpop.f32.mrf.mxu0
      %v1011 = vadd.f32 0.0, %v1010
      %v1012 = vpop.f32.mrf.mxu0
      %v1013 = vadd.f32 0.0, %v1012
      %1014 = vmatmul.bf16.gmra.mxu0 %v887
      %v1015 = vpop.f32.mrf.mxu0
      %v1016 = vadd.f32 0.0, %v1015
      %v1017 = vpop.f32.mrf.mxu0
      %v1018 = vadd.f32 0.0, %v1017
      %1019 = vmatmul.bf16.gmra.mxu0 %v889
      %v1020 = vpop.f32.mrf.mxu0
      %v1021 = vadd.f32 0.0, %v1020
      %v1022 = vpop.f32.mrf.mxu0
      %v1023 = vadd.f32 0.0, %v1022
      %1024 = vmatmul.bf16.gmra.mxu0 %v891
      %v1025 = vpop.f32.mrf.mxu0
      %v1026 = vadd.f32 0.0, %v1025
      %v1027 = vpop.f32.mrf.mxu0
      %v1028 = vadd.f32 0.0, %v1027
      %1029 = vmatmul.bf16.gmra.mxu0 %v893
      %v1030 = vpop.f32.mrf.mxu0
      %v1031 = vadd.f32 0.0, %v1030
      %v1032 = vpop.f32.mrf.mxu0
      %v1033 = vadd.f32 0.0, %v1032
      %1034 = vmatmul.bf16.gmra.mxu0 %v895
      %v1035 = vpop.f32.mrf.mxu0
      %v1036 = vadd.f32 0.0, %v1035
      %v1037 = vpop.f32.mrf.mxu0
      %v1038 = vadd.f32 0.0, %v1037
      %1039 = vmatmul.bf16.gmra.mxu0 %v897
      %v1040 = vpop.f32.mrf.mxu0
      %v1041 = vadd.f32 0.0, %v1040
      %v1042 = vpop.f32.mrf.mxu0
      %v1043 = vadd.f32 0.0, %v1042
      %1044 = vmatmul.bf16.gmra.mxu0 %v899
      %v1045 = vpop.f32.mrf.mxu0
      %v1046 = vadd.f32 0.0, %v1045
      %v1047 = vpop.f32.mrf.mxu0
      %v1048 = vadd.f32 0.0, %v1047
      %1049 = vmatmul.bf16.gmra.mxu0 %v901
      %v1050 = vpop.f32.mrf.mxu0
      %v1051 = vadd.f32 0.0, %v1050
      %v1052 = vpop.f32.mrf.mxu0
      %v1053 = vadd.f32 0.0, %v1052
      %1054 = vmatmul.bf16.gmra.mxu0 %v903
      %v1055 = vpop.f32.mrf.mxu0
      %v1056 = vadd.f32 0.0, %v1055
      %v1057 = vpop.f32.mrf.mxu0
      %v1058 = vadd.f32 0.0, %v1057
      %1059 = vmatmul.bf16.gmra.mxu0 %v905
      %v1060 = vpop.f32.mrf.mxu0
      %v1061 = vadd.f32 0.0, %v1060
      %v1062 = vpop.f32.mrf.mxu0
      %v1063 = vadd.f32 0.0, %v1062
      %1064 = vmatmul.bf16.gmra.mxu0 %v907
      %v1065 = vpop.f32.mrf.mxu0
      %v1066 = vadd.f32 0.0, %v1065
      %v1067 = vpop.f32.mrf.mxu0
      %v1068 = vadd.f32 0.0, %v1067
      %1069 = vmatmul.bf16.gmra.mxu0 %v909
      %v1070 = vpop.f32.mrf.mxu0
      %v1071 = vadd.f32 0.0, %v1070
      %v1072 = vpop.f32.mrf.mxu0
      %v1073 = vadd.f32 0.0, %v1072
      %1074 = vdwg.mxu0
      %v1075 = vadd.f32 %v762, %v986
      %v1076 = vadd.f32 %v764, %v988
      %v1077 = vadd.f32 %v767, %v991
      %v1078 = vadd.f32 %v769, %v993
      %v1079 = vadd.f32 %v772, %v996
      %v1080 = vadd.f32 %v774, %v998
      %v1081 = vadd.f32 %v777, %v1001
      %v1082 = vadd.f32 %v779, %v1003
      %v1083 = vadd.f32 %v782, %v1006
      %v1084 = vadd.f32 %v784, %v1008
      %v1085 = vadd.f32 %v787, %v1011
      %v1086 = vadd.f32 %v789, %v1013
      %v1087 = vadd.f32 %v792, %v1016
      %v1088 = vadd.f32 %v794, %v1018
      %v1089 = vadd.f32 %v797, %v1021
      %v1090 = vadd.f32 %v799, %v1023
      %v1091 = vadd.f32 %v802, %v1026
      %v1092 = vadd.f32 %v804, %v1028
      %v1093 = vadd.f32 %v807, %v1031
      %v1094 = vadd.f32 %v809, %v1033
      %v1095 = vadd.f32 %v812, %v1036
      %v1096 = vadd.f32 %v814, %v1038
      %v1097 = vadd.f32 %v817, %v1041
      %v1098 = vadd.f32 %v819, %v1043
      %v1099 = vadd.f32 %v822, %v1046
      %v1100 = vadd.f32 %v824, %v1048
      %v1101 = vadd.f32 %v827, %v1051
      %v1102 = vadd.f32 %v829, %v1053
      %v1103 = vadd.f32 %v832, %v1056
      %v1104 = vadd.f32 %v834, %v1058
      %v1105 = vadd.f32 %v837, %v1061
      %v1106 = vadd.f32 %v839, %v1063
      %v1107 = vadd.f32 %v842, %v1066
      %v1108 = vadd.f32 %v844, %v1068
      %v1109 = vadd.f32 %v847, %v1071
      %v1110 = vadd.f32 %v849, %v1073
      %v1111 = vld [vmem:[%s199 + $0x8] sm:$0xe]
      %v1112 = vld [vmem:[%s199 + $0xc] sm:$0xf]
      %v1113 = vld [vmem:[%s199 + $0x10] sm:$0xf]
      %v1114 = vld [vmem:[%s199 + $0x14] sm:$0xf]
      %v1115 = vld [vmem:[%s199 + $0x18] sm:$0xf]
      %v1116 = vld [vmem:[%s199 + $0x1c] sm:$0xf]
      %v1117 = vld [vmem:[%s199 + $0x20] sm:$0xf]
      %v1118 = vld [vmem:[%s199 + $0x24] sm:$0xf]
      %v1119 = vld [vmem:[%s199 + $0x28] sm:$0xf]
      %v1120 = vld [vmem:[%s199 + $0x2c] sm:$0xf]
      %v1121 = vld [vmem:[%s199 + $0x30] sm:$0xf]
      %v1122 = vld [vmem:[%s199 + $0x34] sm:$0xf]
      %v1123 = vld [vmem:[%s199 + $0x38] sm:$0xf]
      %v1124 = vld [vmem:[%s199 + $0x3c] sm:$0xf]
      %v1125 = vld [vmem:[%s199 + $0x40] sm:$0xf]
      %v1126 = vld [vmem:[%s199 + $0x44] sm:$0xf]
      %v1127 = vld [vmem:[%s199 + $0x48] sm:$0xf]
      %v1128 = vld [vmem:[%s199 + $0x4c] sm:$0xf]
      %v1129 = vld [vmem:[%s199 + $0x50] sm:$0xf]
      %v1130 = vld [vmem:[%s199 + $0x54] sm:$0xf]
      %v1131 = vld [vmem:[%s199 + $0x58] sm:$0xf]
      %v1132 = vld [vmem:[%s199 + $0x5c] sm:$0xf]
      %v1133 = vld [vmem:[%s199 + $0x60] sm:$0xf]
      %v1134 = vld [vmem:[%s199 + $0x64] sm:$0xf]
      %v1135 = vld [vmem:[%s199 + $0x68] sm:$0xf]
      %v1136 = vld [vmem:[%s199 + $0x6c] sm:$0xf]
      %v1137 = vld [vmem:[%s199 + $0x70] sm:$0xf]
      %v1138 = vld [vmem:[%s199 + $0x74] sm:$0xf]
      %v1139 = vld [vmem:[%s199 + $0x78] sm:$0xf]
      %v1140 = vld [vmem:[%s199 + $0x7c] sm:$0xf]
      %v1141 = vld [vmem:[%s199 + $0x80] sm:$0xf]
      %v1142 = vld [vmem:[%s199 + $0x84] sm:$0xf]
      %v1143 = vld [vmem:[%s199 + $0x88] sm:$0xf]
      %v1144 = vld [vmem:[%s199 + $0x8c] sm:$0xf]
      %v1145 = vld [vmem:[%s199 + $0x90] sm:$0xf]
      %v1146 = vld [vmem:[%s199 + $0x94] sm:$0xf]
      %v1147 = vld [vmem:[%s199 + $0x98] sm:$0x1]
      %s1148 = scalar_lea.vmem %s1, 192
      %v1149 = vld [vmem:[%s1148] sm:$0xf]
      %v1150 = vld [vmem:[%s1148 + $0x4] sm:$0xf]
      %v1151 = vld [vmem:[%s1148 + $0x8] sm:$0xf]
      %v1152 = vld [vmem:[%s1148 + $0xc] sm:$0xf]
      %v1153 = vld [vmem:[%s1148 + $0x10] sm:$0xf]
      %v1154 = vld [vmem:[%s1148 + $0x14] sm:$0xf]
      %v1155 = vld [vmem:[%s1148 + $0x18] sm:$0xf]
      %v1156 = vld [vmem:[%s1148 + $0x1c] sm:$0xf]
      %v1157 = vld [vmem:[%s1148 + $0x20] sm:$0xf]
      %v1158 = vld [vmem:[%s1148 + $0x24] sm:$0xf]
      %v1159 = vld [vmem:[%s1148 + $0x28] sm:$0xf]
      %v1160 = vld [vmem:[%s1148 + $0x2c] sm:$0xf]
      %v1161 = vld [vmem:[%s1148 + $0x30] sm:$0xf]
      %v1162 = vld [vmem:[%s1148 + $0x34] sm:$0xf]
      %v1163 = vld [vmem:[%s1148 + $0x38] sm:$0xf]
      %v1164 = vld [vmem:[%s1148 + $0x3c] sm:$0xf]
      %v1202 = vunpack.c.l.b16 %v1111
      %v1203 = vunpack.c.l.b16 %v1112
      %v1204 = vunpack.c.l.b16 %v1113
      %v1205 = vunpack.c.l.b16 %v1114
      %v1206 = vunpack.c.l.b16 %v1115
      %v1207 = vunpack.c.l.b16 %v1116
      %v1208 = vunpack.c.l.b16 %v1117
      %v1209 = vunpack.c.l.b16 %v1118
      %v1210 = vunpack.c.l.b16 %v1119
      %v1211 = vunpack.c.l.b16 %v1120
      %v1212 = vunpack.c.l.b16 %v1121
      %v1213 = vunpack.c.l.b16 %v1122
      %v1214 = vunpack.c.l.b16 %v1123
      %v1215 = vunpack.c.l.b16 %v1124
      %v1216 = vunpack.c.l.b16 %v1125
      %v1217 = vunpack.c.l.b16 %v1126
      %v1218 = vunpack.c.l.b16 %v1127
      %v1219 = vunpack.c.l.b16 %v1128
      %v1220 = vunpack.c.l.b16 %v1129
      %v1221 = vunpack.c.l.b16 %v1130
      %v1222 = vunpack.c.l.b16 %v1131
      %v1223 = vunpack.c.l.b16 %v1132
      %v1224 = vunpack.c.l.b16 %v1133
      %v1225 = vunpack.c.l.b16 %v1134
      %v1226 = vunpack.c.l.b16 %v1135
      %v1227 = vunpack.c.l.b16 %v1136
      %v1228 = vunpack.c.l.b16 %v1137
      %v1229 = vunpack.c.l.b16 %v1138
      %v1230 = vunpack.c.l.b16 %v1139
      %v1231 = vunpack.c.l.b16 %v1140
      %v1232 = vunpack.c.l.b16 %v1141
      %v1233 = vunpack.c.l.b16 %v1142
      %v1234 = vunpack.c.l.b16 %v1143
      %v1235 = vunpack.c.l.b16 %v1144
      %v1236 = vunpack.c.l.b16 %v1145
      %v1237 = vunpack.c.l.b16 %v1146
      %v1238 = vunpack.c.l.b16 %v1147
      %v1239 = vpack.c.b16 %v1203, %v1202
      %v1240 = vpack.c.b16 %v1205, %v1204
      %v1241 = vpack.c.b16 %v1207, %v1206
      %v1242 = vpack.c.b16 %v1209, %v1208
      %v1243 = vpack.c.b16 %v1211, %v1210
      %v1244 = vpack.c.b16 %v1213, %v1212
      %v1245 = vpack.c.b16 %v1215, %v1214
      %v1246 = vpack.c.b16 %v1217, %v1216
      %v1247 = vpack.c.b16 %v1219, %v1218
      %v1248 = vpack.c.b16 %v1221, %v1220
      %v1249 = vpack.c.b16 %v1223, %v1222
      %v1250 = vpack.c.b16 %v1225, %v1224
      %v1251 = vpack.c.b16 %v1227, %v1226
      %v1252 = vpack.c.b16 %v1229, %v1228
      %v1253 = vpack.c.b16 %v1231, %v1230
      %v1254 = vpack.c.b16 %v1233, %v1232
      %v1255 = vpack.c.b16 %v1235, %v1234
      %v1256 = vpack.c.b16 %v1237, %v1236
      %v1257 = vpack.c.b16 %v1238, %v1238
      %v1258 = vrot.slane %v1239, 1
      %v1259 = vrot.slane %v1240, 1
      %v1260 = vsel %vm872, %v1258, %v1259
      %v1261 = vrot.slane %v1241, 1
      %v1262 = vsel %vm872, %v1259, %v1261
      %v1263 = vrot.slane %v1242, 1
      %v1264 = vsel %vm872, %v1261, %v1263
      %v1265 = vrot.slane %v1243, 1
      %v1266 = vsel %vm872, %v1263, %v1265
      %v1267 = vrot.slane %v1244, 1
      %v1268 = vsel %vm872, %v1265, %v1267
      %v1269 = vrot.slane %v1245, 1
      %v1270 = vsel %vm872, %v1267, %v1269
      %v1271 = vrot.slane %v1246, 1
      %v1272 = vsel %vm872, %v1269, %v1271
      %v1273 = vrot.slane %v1247, 1
      %v1274 = vsel %vm872, %v1271, %v1273
      %v1275 = vrot.slane %v1248, 1
      %v1276 = vsel %vm872, %v1273, %v1275
      %v1277 = vrot.slane %v1249, 1
      %v1278 = vsel %vm872, %v1275, %v1277
      %v1279 = vrot.slane %v1250, 1
      %v1280 = vsel %vm872, %v1277, %v1279
      %v1281 = vrot.slane %v1251, 1
      %v1282 = vsel %vm872, %v1279, %v1281
      %v1283 = vrot.slane %v1252, 1
      %v1284 = vsel %vm872, %v1281, %v1283
      %v1285 = vrot.slane %v1253, 1
      %v1286 = vsel %vm872, %v1283, %v1285
      %v1287 = vrot.slane %v1254, 1
      %v1288 = vsel %vm872, %v1285, %v1287
      %v1289 = vrot.slane %v1255, 1
      %v1290 = vsel %vm872, %v1287, %v1289
      %v1291 = vrot.slane %v1256, 1
      %v1292 = vsel %vm872, %v1289, %v1291
      %v1293 = vrot.slane %v1257, 1
      %v1294 = vsel %vm872, %v1291, %v1293
      %v1329 = vunpack.c.l.b16 %v1149
      %v1330 = vunpack.c.l.b16 %v1150
      %v1331 = vunpack.c.l.b16 %v1151
      %v1332 = vunpack.c.l.b16 %v1152
      %v1333 = vunpack.c.l.b16 %v1153
      %v1334 = vunpack.c.l.b16 %v1154
      %v1335 = vunpack.c.l.b16 %v1155
      %v1336 = vunpack.c.l.b16 %v1156
      %v1337 = vunpack.c.l.b16 %v1157
      %v1338 = vunpack.c.l.b16 %v1158
      %v1339 = vunpack.c.l.b16 %v1159
      %v1340 = vunpack.c.l.b16 %v1160
      %v1341 = vunpack.c.l.b16 %v1161
      %v1342 = vunpack.c.l.b16 %v1162
      %v1343 = vunpack.c.l.b16 %v1163
      %v1344 = vunpack.c.l.b16 %v1164
      %v1345 = vpack.c.b16 %v1330, %v1329
      %v1346 = vpack.c.b16 %v1332, %v1331
      %v1347 = vpack.c.b16 %v1334, %v1333
      %v1348 = vpack.c.b16 %v1336, %v1335
      %v1349 = vpack.c.b16 %v1338, %v1337
      %v1350 = vpack.c.b16 %v1340, %v1339
      %v1351 = vpack.c.b16 %v1342, %v1341
      %v1352 = vpack.c.b16 %v1344, %v1343
      %1361 = vmatpush.bf16.msra.mxu0 %v1352
      %1362 = vmatpush.bf16.msra.mxu0 %v1351
      %1363 = vmatpush.bf16.msra.mxu0 %v1350
      %1364 = vmatpush.bf16.msra.mxu0 %v1349
      %1365 = vmatpush.bf16.msra.mxu0 %v1348
      %1366 = vmatpush.bf16.msra.mxu0 %v1347
      %1367 = vmatpush.bf16.msra.mxu0 %v1346
      %1368 = vmatpush.bf16.msra.mxu0 %v1345
      %1369 = vmatmul.bf16.gmra.mxu0 %v1260
      %v1370 = vpop.f32.mrf.mxu0
      %v1371 = vadd.f32 0.0, %v1370
      %v1372 = vpop.f32.mrf.mxu0
      %v1373 = vadd.f32 0.0, %v1372
      %1374 = vmatmul.bf16.gmra.mxu0 %v1262
      %v1375 = vpop.f32.mrf.mxu0
      %v1376 = vadd.f32 0.0, %v1375
      %v1377 = vpop.f32.mrf.mxu0
      %v1378 = vadd.f32 0.0, %v1377
      %1379 = vmatmul.bf16.gmra.mxu0 %v1264
      %v1380 = vpop.f32.mrf.mxu0
      %v1381 = vadd.f32 0.0, %v1380
      %v1382 = vpop.f32.mrf.mxu0
      %v1383 = vadd.f32 0.0, %v1382
      %1384 = vmatmul.bf16.gmra.mxu0 %v1266
      %v1385 = vpop.f32.mrf.mxu0
      %v1386 = vadd.f32 0.0, %v1385
      %v1387 = vpop.f32.mrf.mxu0
      %v1388 = vadd.f32 0.0, %v1387
      %1389 = vmatmul.bf16.gmra.mxu0 %v1268
      %v1390 = vpop.f32.mrf.mxu0
      %v1391 = vadd.f32 0.0, %v1390
      %v1392 = vpop.f32.mrf.mxu0
      %v1393 = vadd.f32 0.0, %v1392
      %1394 = vmatmul.bf16.gmra.mxu0 %v1270
      %v1395 = vpop.f32.mrf.mxu0
      %v1396 = vadd.f32 0.0, %v1395
      %v1397 = vpop.f32.mrf.mxu0
      %v1398 = vadd.f32 0.0, %v1397
      %1399 = vmatmul.bf16.gmra.mxu0 %v1272
      %v1400 = vpop.f32.mrf.mxu0
      %v1401 = vadd.f32 0.0, %v1400
      %v1402 = vpop.f32.mrf.mxu0
      %v1403 = vadd.f32 0.0, %v1402
      %1404 = vmatmul.bf16.gmra.mxu0 %v1274
      %v1405 = vpop.f32.mrf.mxu0
      %v1406 = vadd.f32 0.0, %v1405
      %v1407 = vpop.f32.mrf.mxu0
      %v1408 = vadd.f32 0.0, %v1407
      %1409 = vmatmul.bf16.gmra.mxu0 %v1276
      %v1410 = vpop.f32.mrf.mxu0
      %v1411 = vadd.f32 0.0, %v1410
      %v1412 = vpop.f32.mrf.mxu0
      %v1413 = vadd.f32 0.0, %v1412
      %1414 = vmatmul.bf16.gmra.mxu0 %v1278
      %v1415 = vpop.f32.mrf.mxu0
      %v1416 = vadd.f32 0.0, %v1415
      %v1417 = vpop.f32.mrf.mxu0
      %v1418 = vadd.f32 0.0, %v1417
      %1419 = vmatmul.bf16.gmra.mxu0 %v1280
      %v1420 = vpop.f32.mrf.mxu0
      %v1421 = vadd.f32 0.0, %v1420
      %v1422 = vpop.f32.mrf.mxu0
      %v1423 = vadd.f32 0.0, %v1422
      %1424 = vmatmul.bf16.gmra.mxu0 %v1282
      %v1425 = vpop.f32.mrf.mxu0
      %v1426 = vadd.f32 0.0, %v1425
      %v1427 = vpop.f32.mrf.mxu0
      %v1428 = vadd.f32 0.0, %v1427
      %1429 = vmatmul.bf16.gmra.mxu0 %v1284
      %v1430 = vpop.f32.mrf.mxu0
      %v1431 = vadd.f32 0.0, %v1430
      %v1432 = vpop.f32.mrf.mxu0
      %v1433 = vadd.f32 0.0, %v1432
      %1434 = vmatmul.bf16.gmra.mxu0 %v1286
      %v1435 = vpop.f32.mrf.mxu0
      %v1436 = vadd.f32 0.0, %v1435
      %v1437 = vpop.f32.mrf.mxu0
      %v1438 = vadd.f32 0.0, %v1437
      %1439 = vmatmul.bf16.gmra.mxu0 %v1288
      %v1440 = vpop.f32.mrf.mxu0
      %v1441 = vadd.f32 0.0, %v1440
      %v1442 = vpop.f32.mrf.mxu0
      %v1443 = vadd.f32 0.0, %v1442
      %1444 = vmatmul.bf16.gmra.mxu0 %v1290
      %v1445 = vpop.f32.mrf.mxu0
      %v1446 = vadd.f32 0.0, %v1445
      %v1447 = vpop.f32.mrf.mxu0
      %v1448 = vadd.f32 0.0, %v1447
      %1449 = vmatmul.bf16.gmra.mxu0 %v1292
      %v1450 = vpop.f32.mrf.mxu0
      %v1451 = vadd.f32 0.0, %v1450
      %v1452 = vpop.f32.mrf.mxu0
      %v1453 = vadd.f32 0.0, %v1452
      %1454 = vmatmul.bf16.gmra.mxu0 %v1294
      %v1455 = vpop.f32.mrf.mxu0
      %v1456 = vadd.f32 0.0, %v1455
      %v1457 = vpop.f32.mrf.mxu0
      %v1458 = vadd.f32 0.0, %v1457
      %1459 = vdwg.mxu0
      %v1460 = vadd.f32 %v1075, %v1371
      %v1461 = vadd.f32 %v1076, %v1373
      %v1462 = vadd.f32 %v1077, %v1376
      %v1463 = vadd.f32 %v1078, %v1378
      %v1464 = vadd.f32 %v1079, %v1381
      %v1465 = vadd.f32 %v1080, %v1383
      %v1466 = vadd.f32 %v1081, %v1386
      %v1467 = vadd.f32 %v1082, %v1388
      %v1468 = vadd.f32 %v1083, %v1391
      %v1469 = vadd.f32 %v1084, %v1393
      %v1470 = vadd.f32 %v1085, %v1396
      %v1471 = vadd.f32 %v1086, %v1398
      %v1472 = vadd.f32 %v1087, %v1401
      %v1473 = vadd.f32 %v1088, %v1403
      %v1474 = vadd.f32 %v1089, %v1406
      %v1475 = vadd.f32 %v1090, %v1408
      %v1476 = vadd.f32 %v1091, %v1411
      %v1477 = vadd.f32 %v1092, %v1413
      %v1478 = vadd.f32 %v1093, %v1416
      %v1479 = vadd.f32 %v1094, %v1418
      %v1480 = vadd.f32 %v1095, %v1421
      %v1481 = vadd.f32 %v1096, %v1423
      %v1482 = vadd.f32 %v1097, %v1426
      %v1483 = vadd.f32 %v1098, %v1428
      %v1484 = vadd.f32 %v1099, %v1431
      %v1485 = vadd.f32 %v1100, %v1433
      %v1486 = vadd.f32 %v1101, %v1436
      %v1487 = vadd.f32 %v1102, %v1438
      %v1488 = vadd.f32 %v1103, %v1441
      %v1489 = vadd.f32 %v1104, %v1443
      %v1490 = vadd.f32 %v1105, %v1446
      %v1491 = vadd.f32 %v1106, %v1448
      %v1492 = vadd.f32 %v1107, %v1451
      %v1493 = vadd.f32 %v1108, %v1453
      %v1494 = vadd.f32 %v1109, %v1456
      %v1495 = vadd.f32 %v1110, %v1458
      %v1496 = vld [vmem:[%s199 + $0x98] sm:$0x3]
      %s1497 = scalar_lea.vmem %s1, 256
      %v1498 = vld [vmem:[%s1497] sm:$0xf]
      %v1499 = vld [vmem:[%s1497 + $0x4] sm:$0xf]
      %v1500 = vld [vmem:[%s1497 + $0x8] sm:$0xf]
      %v1501 = vld [vmem:[%s1497 + $0xc] sm:$0xf]
      %v1502 = vld [vmem:[%s1497 + $0x10] sm:$0xf]
      %v1503 = vld [vmem:[%s1497 + $0x14] sm:$0xf]
      %v1504 = vld [vmem:[%s1497 + $0x18] sm:$0xf]
      %v1505 = vld [vmem:[%s1497 + $0x1c] sm:$0xf]
      %v1506 = vld [vmem:[%s1497 + $0x20] sm:$0xf]
      %v1507 = vld [vmem:[%s1497 + $0x24] sm:$0xf]
      %v1508 = vld [vmem:[%s1497 + $0x28] sm:$0xf]
      %v1509 = vld [vmem:[%s1497 + $0x2c] sm:$0xf]
      %v1510 = vld [vmem:[%s1497 + $0x30] sm:$0xf]
      %v1511 = vld [vmem:[%s1497 + $0x34] sm:$0xf]
      %v1512 = vld [vmem:[%s1497 + $0x38] sm:$0xf]
      %v1513 = vld [vmem:[%s1497 + $0x3c] sm:$0xf]
      %v1515 = vunpack.c.l.b16 %v1496
      %v1516 = vpack.c.b16 %v1515, %v1515
      %vm1517 = vsmask.f32 6400
      %v1519 = vshrl.u32 %v1239, 16
      %v1521 = vrot.slane %v1519, 1
      %v1522 = vshll.u32 %v1239, 16
      %v1524 = vrot.slane %v1522, 2
      %v1525 = vor.u32 %v1521, %v1524
      %v1527 = vshrl.u32 %v1240, 16
      %v1529 = vrot.slane %v1527, 1
      %v1530 = vshll.u32 %v1240, 16
      %v1532 = vrot.slane %v1530, 2
      %v1533 = vor.u32 %v1529, %v1532
      %v1534 = vsel %vm1517, %v1525, %v1533
      %v1536 = vshrl.u32 %v1241, 16
      %v1538 = vrot.slane %v1536, 1
      %v1539 = vshll.u32 %v1241, 16
      %v1541 = vrot.slane %v1539, 2
      %v1542 = vor.u32 %v1538, %v1541
      %v1543 = vsel %vm1517, %v1533, %v1542
      %v1545 = vshrl.u32 %v1242, 16
      %v1547 = vrot.slane %v1545, 1
      %v1548 = vshll.u32 %v1242, 16
      %v1550 = vrot.slane %v1548, 2
      %v1551 = vor.u32 %v1547, %v1550
      %v1552 = vsel %vm1517, %v1542, %v1551
      %v1554 = vshrl.u32 %v1243, 16
      %v1556 = vrot.slane %v1554, 1
      %v1557 = vshll.u32 %v1243, 16
      %v1559 = vrot.slane %v1557, 2
      %v1560 = vor.u32 %v1556, %v1559
      %v1561 = vsel %vm1517, %v1551, %v1560
      %v1563 = vshrl.u32 %v1244, 16
      %v1565 = vrot.slane %v1563, 1
      %v1566 = vshll.u32 %v1244, 16
      %v1568 = vrot.slane %v1566, 2
      %v1569 = vor.u32 %v1565, %v1568
      %v1570 = vsel %vm1517, %v1560, %v1569
      %v1572 = vshrl.u32 %v1245, 16
      %v1574 = vrot.slane %v1572, 1
      %v1575 = vshll.u32 %v1245, 16
      %v1577 = vrot.slane %v1575, 2
      %v1578 = vor.u32 %v1574, %v1577
      %v1579 = vsel %vm1517, %v1569, %v1578
      %v1581 = vshrl.u32 %v1246, 16
      %v1583 = vrot.slane %v1581, 1
      %v1584 = vshll.u32 %v1246, 16
      %v1586 = vrot.slane %v1584, 2
      %v1587 = vor.u32 %v1583, %v1586
      %v1588 = vsel %vm1517, %v1578, %v1587
      %v1590 = vshrl.u32 %v1247, 16
      %v1592 = vrot.slane %v1590, 1
      %v1593 = vshll.u32 %v1247, 16
      %v1595 = vrot.slane %v1593, 2
      %v1596 = vor.u32 %v1592, %v1595
      %v1597 = vsel %vm1517, %v1587, %v1596
      %v1599 = vshrl.u32 %v1248, 16
      %v1601 = vrot.slane %v1599, 1
      %v1602 = vshll.u32 %v1248, 16
      %v1604 = vrot.slane %v1602, 2
      %v1605 = vor.u32 %v1601, %v1604
      %v1606 = vsel %vm1517, %v1596, %v1605
      %v1608 = vshrl.u32 %v1249, 16
      %v1610 = vrot.slane %v1608, 1
      %v1611 = vshll.u32 %v1249, 16
      %v1613 = vrot.slane %v1611, 2
      %v1614 = vor.u32 %v1610, %v1613
      %v1615 = vsel %vm1517, %v1605, %v1614
      %v1617 = vshrl.u32 %v1250, 16
      %v1619 = vrot.slane %v1617, 1
      %v1620 = vshll.u32 %v1250, 16
      %v1622 = vrot.slane %v1620, 2
      %v1623 = vor.u32 %v1619, %v1622
      %v1624 = vsel %vm1517, %v1614, %v1623
      %v1626 = vshrl.u32 %v1251, 16
      %v1628 = vrot.slane %v1626, 1
      %v1629 = vshll.u32 %v1251, 16
      %v1631 = vrot.slane %v1629, 2
      %v1632 = vor.u32 %v1628, %v1631
      %v1633 = vsel %vm1517, %v1623, %v1632
      %v1635 = vshrl.u32 %v1252, 16
      %v1637 = vrot.slane %v1635, 1
      %v1638 = vshll.u32 %v1252, 16
      %v1640 = vrot.slane %v1638, 2
      %v1641 = vor.u32 %v1637, %v1640
      %v1642 = vsel %vm1517, %v1632, %v1641
      %v1644 = vshrl.u32 %v1253, 16
      %v1646 = vrot.slane %v1644, 1
      %v1647 = vshll.u32 %v1253, 16
      %v1649 = vrot.slane %v1647, 2
      %v1650 = vor.u32 %v1646, %v1649
      %v1651 = vsel %vm1517, %v1641, %v1650
      %v1653 = vshrl.u32 %v1254, 16
      %v1655 = vrot.slane %v1653, 1
      %v1656 = vshll.u32 %v1254, 16
      %v1658 = vrot.slane %v1656, 2
      %v1659 = vor.u32 %v1655, %v1658
      %v1660 = vsel %vm1517, %v1650, %v1659
      %v1662 = vshrl.u32 %v1255, 16
      %v1664 = vrot.slane %v1662, 1
      %v1665 = vshll.u32 %v1255, 16
      %v1667 = vrot.slane %v1665, 2
      %v1668 = vor.u32 %v1664, %v1667
      %v1669 = vsel %vm1517, %v1659, %v1668
      %v1671 = vshrl.u32 %v1256, 16
      %v1673 = vrot.slane %v1671, 1
      %v1674 = vshll.u32 %v1256, 16
      %v1676 = vrot.slane %v1674, 2
      %v1677 = vor.u32 %v1673, %v1676
      %v1678 = vsel %vm1517, %v1668, %v1677
      %v1680 = vshrl.u32 %v1516, 16
      %v1682 = vrot.slane %v1680, 1
      %v1683 = vshll.u32 %v1516, 16
      %v1685 = vrot.slane %v1683, 2
      %v1686 = vor.u32 %v1682, %v1685
      %v1687 = vsel %vm1517, %v1677, %v1686
      %v1722 = vunpack.c.l.b16 %v1498
      %v1723 = vunpack.c.l.b16 %v1499
      %v1724 = vunpack.c.l.b16 %v1500
      %v1725 = vunpack.c.l.b16 %v1501
      %v1726 = vunpack.c.l.b16 %v1502
      %v1727 = vunpack.c.l.b16 %v1503
      %v1728 = vunpack.c.l.b16 %v1504
      %v1729 = vunpack.c.l.b16 %v1505
      %v1730 = vunpack.c.l.b16 %v1506
      %v1731 = vunpack.c.l.b16 %v1507
      %v1732 = vunpack.c.l.b16 %v1508
      %v1733 = vunpack.c.l.b16 %v1509
      %v1734 = vunpack.c.l.b16 %v1510
      %v1735 = vunpack.c.l.b16 %v1511
      %v1736 = vunpack.c.l.b16 %v1512
      %v1737 = vunpack.c.l.b16 %v1513
      %v1738 = vpack.c.b16 %v1723, %v1722
      %v1739 = vpack.c.b16 %v1725, %v1724
      %v1740 = vpack.c.b16 %v1727, %v1726
      %v1741 = vpack.c.b16 %v1729, %v1728
      %v1742 = vpack.c.b16 %v1731, %v1730
      %v1743 = vpack.c.b16 %v1733, %v1732
      %v1744 = vpack.c.b16 %v1735, %v1734
      %v1745 = vpack.c.b16 %v1737, %v1736
      %1754 = vmatpush.bf16.msra.mxu0 %v1745
      %1755 = vmatpush.bf16.msra.mxu0 %v1744
      %1756 = vmatpush.bf16.msra.mxu0 %v1743
      %1757 = vmatpush.bf16.msra.mxu0 %v1742
      %1758 = vmatpush.bf16.msra.mxu0 %v1741
      %1759 = vmatpush.bf16.msra.mxu0 %v1740
      %1760 = vmatpush.bf16.msra.mxu0 %v1739
      %1761 = vmatpush.bf16.msra.mxu0 %v1738
      %1762 = vmatmul.bf16.gmra.mxu0 %v1534
      %v1763 = vpop.f32.mrf.mxu0
      %v1764 = vadd.f32 0.0, %v1763
      %v1765 = vpop.f32.mrf.mxu0
      %v1766 = vadd.f32 0.0, %v1765
      %1767 = vmatmul.bf16.gmra.mxu0 %v1543
      %v1768 = vpop.f32.mrf.mxu0
      %v1769 = vadd.f32 0.0, %v1768
      %v1770 = vpop.f32.mrf.mxu0
      %v1771 = vadd.f32 0.0, %v1770
      %1772 = vmatmul.bf16.gmra.mxu0 %v1552
      %v1773 = vpop.f32.mrf.mxu0
      %v1774 = vadd.f32 0.0, %v1773
      %v1775 = vpop.f32.mrf.mxu0
      %v1776 = vadd.f32 0.0, %v1775
      %1777 = vmatmul.bf16.gmra.mxu0 %v1561
      %v1778 = vpop.f32.mrf.mxu0
      %v1779 = vadd.f32 0.0, %v1778
      %v1780 = vpop.f32.mrf.mxu0
      %v1781 = vadd.f32 0.0, %v1780
      %1782 = vmatmul.bf16.gmra.mxu0 %v1570
      %v1783 = vpop.f32.mrf.mxu0
      %v1784 = vadd.f32 0.0, %v1783
      %v1785 = vpop.f32.mrf.mxu0
      %v1786 = vadd.f32 0.0, %v1785
      %1787 = vmatmul.bf16.gmra.mxu0 %v1579
      %v1788 = vpop.f32.mrf.mxu0
      %v1789 = vadd.f32 0.0, %v1788
      %v1790 = vpop.f32.mrf.mxu0
      %v1791 = vadd.f32 0.0, %v1790
      %1792 = vmatmul.bf16.gmra.mxu0 %v1588
      %v1793 = vpop.f32.mrf.mxu0
      %v1794 = vadd.f32 0.0, %v1793
      %v1795 = vpop.f32.mrf.mxu0
      %v1796 = vadd.f32 0.0, %v1795
      %1797 = vmatmul.bf16.gmra.mxu0 %v1597
      %v1798 = vpop.f32.mrf.mxu0
      %v1799 = vadd.f32 0.0, %v1798
      %v1800 = vpop.f32.mrf.mxu0
      %v1801 = vadd.f32 0.0, %v1800
      %1802 = vmatmul.bf16.gmra.mxu0 %v1606
      %v1803 = vpop.f32.mrf.mxu0
      %v1804 = vadd.f32 0.0, %v1803
      %v1805 = vpop.f32.mrf.mxu0
      %v1806 = vadd.f32 0.0, %v1805
      %1807 = vmatmul.bf16.gmra.mxu0 %v1615
      %v1808 = vpop.f32.mrf.mxu0
      %v1809 = vadd.f32 0.0, %v1808
      %v1810 = vpop.f32.mrf.mxu0
      %v1811 = vadd.f32 0.0, %v1810
      %1812 = vmatmul.bf16.gmra.mxu0 %v1624
      %v1813 = vpop.f32.mrf.mxu0
      %v1814 = vadd.f32 0.0, %v1813
      %v1815 = vpop.f32.mrf.mxu0
      %v1816 = vadd.f32 0.0, %v1815
      %1817 = vmatmul.bf16.gmra.mxu0 %v1633
      %v1818 = vpop.f32.mrf.mxu0
      %v1819 = vadd.f32 0.0, %v1818
      %v1820 = vpop.f32.mrf.mxu0
      %v1821 = vadd.f32 0.0, %v1820
      %1822 = vmatmul.bf16.gmra.mxu0 %v1642
      %v1823 = vpop.f32.mrf.mxu0
      %v1824 = vadd.f32 0.0, %v1823
      %v1825 = vpop.f32.mrf.mxu0
      %v1826 = vadd.f32 0.0, %v1825
      %1827 = vmatmul.bf16.gmra.mxu0 %v1651
      %v1828 = vpop.f32.mrf.mxu0
      %v1829 = vadd.f32 0.0, %v1828
      %v1830 = vpop.f32.mrf.mxu0
      %v1831 = vadd.f32 0.0, %v1830
      %1832 = vmatmul.bf16.gmra.mxu0 %v1660
      %v1833 = vpop.f32.mrf.mxu0
      %v1834 = vadd.f32 0.0, %v1833
      %v1835 = vpop.f32.mrf.mxu0
      %v1836 = vadd.f32 0.0, %v1835
      %1837 = vmatmul.bf16.gmra.mxu0 %v1669
      %v1838 = vpop.f32.mrf.mxu0
      %v1839 = vadd.f32 0.0, %v1838
      %v1840 = vpop.f32.mrf.mxu0
      %v1841 = vadd.f32 0.0, %v1840
      %1842 = vmatmul.bf16.gmra.mxu0 %v1678
      %v1843 = vpop.f32.mrf.mxu0
      %v1844 = vadd.f32 0.0, %v1843
      %v1845 = vpop.f32.mrf.mxu0
      %v1846 = vadd.f32 0.0, %v1845
      %1847 = vmatmul.bf16.gmra.mxu0 %v1687
      %v1848 = vpop.f32.mrf.mxu0
      %v1849 = vadd.f32 0.0, %v1848
      %v1850 = vpop.f32.mrf.mxu0
      %v1851 = vadd.f32 0.0, %v1850
      %1852 = vdwg.mxu0
      %v1853 = vadd.f32 %v1460, %v1764
      %v1854 = vadd.f32 %v1461, %v1766
      %v1855 = vadd.f32 %v1462, %v1769
      %v1856 = vadd.f32 %v1463, %v1771
      %v1857 = vadd.f32 %v1464, %v1774
      %v1858 = vadd.f32 %v1465, %v1776
      %v1859 = vadd.f32 %v1466, %v1779
      %v1860 = vadd.f32 %v1467, %v1781
      %v1861 = vadd.f32 %v1468, %v1784
      %v1862 = vadd.f32 %v1469, %v1786
      %v1863 = vadd.f32 %v1470, %v1789
      %v1864 = vadd.f32 %v1471, %v1791
      %v1865 = vadd.f32 %v1472, %v1794
      %v1866 = vadd.f32 %v1473, %v1796
      %v1867 = vadd.f32 %v1474, %v1799
      %v1868 = vadd.f32 %v1475, %v1801
      %v1869 = vadd.f32 %v1476, %v1804
      %v1870 = vadd.f32 %v1477, %v1806
      %v1871 = vadd.f32 %v1478, %v1809
      %v1872 = vadd.f32 %v1479, %v1811
      %v1873 = vadd.f32 %v1480, %v1814
      %v1874 = vadd.f32 %v1481, %v1816
      %v1875 = vadd.f32 %v1482, %v1819
      %v1876 = vadd.f32 %v1483, %v1821
      %v1877 = vadd.f32 %v1484, %v1824
      %v1878 = vadd.f32 %v1485, %v1826
      %v1879 = vadd.f32 %v1486, %v1829
      %v1880 = vadd.f32 %v1487, %v1831
      %v1881 = vadd.f32 %v1488, %v1834
      %v1882 = vadd.f32 %v1489, %v1836
      %v1883 = vadd.f32 %v1490, %v1839
      %v1884 = vadd.f32 %v1491, %v1841
      %v1885 = vadd.f32 %v1492, %v1844
      %v1886 = vadd.f32 %v1493, %v1846
      %v1887 = vadd.f32 %v1494, %v1849
      %v1888 = vadd.f32 %v1495, %v1851
      %v1889 = vld [vmem:[%s199 + $0x8] sm:$0xc]
      %s1890 = scalar_lea.vmem %s1, 320
      %v1891 = vld [vmem:[%s1890] sm:$0xf]
      %v1892 = vld [vmem:[%s1890 + $0x4] sm:$0xf]
      %v1893 = vld [vmem:[%s1890 + $0x8] sm:$0xf]
      %v1894 = vld [vmem:[%s1890 + $0xc] sm:$0xf]
      %v1895 = vld [vmem:[%s1890 + $0x10] sm:$0xf]
      %v1896 = vld [vmem:[%s1890 + $0x14] sm:$0xf]
      %v1897 = vld [vmem:[%s1890 + $0x18] sm:$0xf]
      %v1898 = vld [vmem:[%s1890 + $0x1c] sm:$0xf]
      %v1899 = vld [vmem:[%s1890 + $0x20] sm:$0xf]
      %v1900 = vld [vmem:[%s1890 + $0x24] sm:$0xf]
      %v1901 = vld [vmem:[%s1890 + $0x28] sm:$0xf]
      %v1902 = vld [vmem:[%s1890 + $0x2c] sm:$0xf]
      %v1903 = vld [vmem:[%s1890 + $0x30] sm:$0xf]
      %v1904 = vld [vmem:[%s1890 + $0x34] sm:$0xf]
      %v1905 = vld [vmem:[%s1890 + $0x38] sm:$0xf]
      %v1906 = vld [vmem:[%s1890 + $0x3c] sm:$0xf]
      %v1908 = vunpack.c.l.b16 %v1889
      %v1909 = vpack.c.b16 %v1203, %v1908
      %vm1910 = vcmask 1045504
      %v1911 = vrot.slane %v1909, 2
      %v1912 = vrot.slane %v1240, 2
      %v1913 = vsel %vm1910, %v1911, %v1912
      %v1914 = vrot.slane %v1241, 2
      %v1915 = vsel %vm1910, %v1912, %v1914
      %v1916 = vrot.slane %v1242, 2
      %v1917 = vsel %vm1910, %v1914, %v1916
      %v1918 = vrot.slane %v1243, 2
      %v1919 = vsel %vm1910, %v1916, %v1918
      %v1920 = vrot.slane %v1244, 2
      %v1921 = vsel %vm1910, %v1918, %v1920
      %v1922 = vrot.slane %v1245, 2
      %v1923 = vsel %vm1910, %v1920, %v1922
      %v1924 = vrot.slane %v1246, 2
      %v1925 = vsel %vm1910, %v1922, %v1924
      %v1926 = vrot.slane %v1247, 2
      %v1927 = vsel %vm1910, %v1924, %v1926
      %v1928 = vrot.slane %v1248, 2
      %v1929 = vsel %vm1910, %v1926, %v1928
      %v1930 = vrot.slane %v1249, 2
      %v1931 = vsel %vm1910, %v1928, %v1930
      %v1932 = vrot.slane %v1250, 2
      %v1933 = vsel %vm1910, %v1930, %v1932
      %v1934 = vrot.slane %v1251, 2
      %v1935 = vsel %vm1910, %v1932, %v1934
      %v1936 = vrot.slane %v1252, 2
      %v1937 = vsel %vm1910, %v1934, %v1936
      %v1938 = vrot.slane %v1253, 2
      %v1939 = vsel %vm1910, %v1936, %v1938
      %v1940 = vrot.slane %v1254, 2
      %v1941 = vsel %vm1910, %v1938, %v1940
      %v1942 = vrot.slane %v1255, 2
      %v1943 = vsel %vm1910, %v1940, %v1942
      %v1944 = vrot.slane %v1256, 2
      %v1945 = vsel %vm1910, %v1942, %v1944
      %v1946 = vrot.slane %v1516, 2
      %v1947 = vsel %vm1910, %v1944, %v1946
      %v1982 = vunpack.c.l.b16 %v1891
      %v1983 = vunpack.c.l.b16 %v1892
      %v1984 = vunpack.c.l.b16 %v1893
      %v1985 = vunpack.c.l.b16 %v1894
      %v1986 = vunpack.c.l.b16 %v1895
      %v1987 = vunpack.c.l.b16 %v1896
      %v1988 = vunpack.c.l.b16 %v1897
      %v1989 = vunpack.c.l.b16 %v1898
      %v1990 = vunpack.c.l.b16 %v1899
      %v1991 = vunpack.c.l.b16 %v1900
      %v1992 = vunpack.c.l.b16 %v1901
      %v1993 = vunpack.c.l.b16 %v1902
      %v1994 = vunpack.c.l.b16 %v1903
      %v1995 = vunpack.c.l.b16 %v1904
      %v1996 = vunpack.c.l.b16 %v1905
      %v1997 = vunpack.c.l.b16 %v1906
      %v1998 = vpack.c.b16 %v1983, %v1982
      %v1999 = vpack.c.b16 %v1985, %v1984
      %v2000 = vpack.c.b16 %v1987, %v1986
      %v2001 = vpack.c.b16 %v1989, %v1988
      %v2002 = vpack.c.b16 %v1991, %v1990
      %v2003 = vpack.c.b16 %v1993, %v1992
      %v2004 = vpack.c.b16 %v1995, %v1994
      %v2005 = vpack.c.b16 %v1997, %v1996
      %2014 = vmatpush.bf16.msra.mxu0 %v2005
      %2015 = vmatpush.bf16.msra.mxu0 %v2004
      %2016 = vmatpush.bf16.msra.mxu0 %v2003
      %2017 = vmatpush.bf16.msra.mxu0 %v2002
      %2018 = vmatpush.bf16.msra.mxu0 %v2001
      %2019 = vmatpush.bf16.msra.mxu0 %v2000
      %2020 = vmatpush.bf16.msra.mxu0 %v1999
      %2021 = vmatpush.bf16.msra.mxu0 %v1998
      %2022 = vmatmul.bf16.gmra.mxu0 %v1913
      %v2023 = vpop.f32.mrf.mxu0
      %v2024 = vadd.f32 0.0, %v2023
      %v2025 = vpop.f32.mrf.mxu0
      %v2026 = vadd.f32 0.0, %v2025
      %2027 = vmatmul.bf16.gmra.mxu0 %v1915
      %v2028 = vpop.f32.mrf.mxu0
      %v2029 = vadd.f32 0.0, %v2028
      %v2030 = vpop.f32.mrf.mxu0
      %v2031 = vadd.f32 0.0, %v2030
      %2032 = vmatmul.bf16.gmra.mxu0 %v1917
      %v2033 = vpop.f32.mrf.mxu0
      %v2034 = vadd.f32 0.0, %v2033
      %v2035 = vpop.f32.mrf.mxu0
      %v2036 = vadd.f32 0.0, %v2035
      %2037 = vmatmul.bf16.gmra.mxu0 %v1919
      %v2038 = vpop.f32.mrf.mxu0
      %v2039 = vadd.f32 0.0, %v2038
      %v2040 = vpop.f32.mrf.mxu0
      %v2041 = vadd.f32 0.0, %v2040
      %2042 = vmatmul.bf16.gmra.mxu0 %v1921
      %v2043 = vpop.f32.mrf.mxu0
      %v2044 = vadd.f32 0.0, %v2043
      %v2045 = vpop.f32.mrf.mxu0
      %v2046 = vadd.f32 0.0, %v2045
      %2047 = vmatmul.bf16.gmra.mxu0 %v1923
      %v2048 = vpop.f32.mrf.mxu0
      %v2049 = vadd.f32 0.0, %v2048
      %v2050 = vpop.f32.mrf.mxu0
      %v2051 = vadd.f32 0.0, %v2050
      %2052 = vmatmul.bf16.gmra.mxu0 %v1925
      %v2053 = vpop.f32.mrf.mxu0
      %v2054 = vadd.f32 0.0, %v2053
      %v2055 = vpop.f32.mrf.mxu0
      %v2056 = vadd.f32 0.0, %v2055
      %2057 = vmatmul.bf16.gmra.mxu0 %v1927
      %v2058 = vpop.f32.mrf.mxu0
      %v2059 = vadd.f32 0.0, %v2058
      %v2060 = vpop.f32.mrf.mxu0
      %v2061 = vadd.f32 0.0, %v2060
      %2062 = vmatmul.bf16.gmra.mxu0 %v1929
      %v2063 = vpop.f32.mrf.mxu0
      %v2064 = vadd.f32 0.0, %v2063
      %v2065 = vpop.f32.mrf.mxu0
      %v2066 = vadd.f32 0.0, %v2065
      %2067 = vmatmul.bf16.gmra.mxu0 %v1931
      %v2068 = vpop.f32.mrf.mxu0
      %v2069 = vadd.f32 0.0, %v2068
      %v2070 = vpop.f32.mrf.mxu0
      %v2071 = vadd.f32 0.0, %v2070
      %2072 = vmatmul.bf16.gmra.mxu0 %v1933
      %v2073 = vpop.f32.mrf.mxu0
      %v2074 = vadd.f32 0.0, %v2073
      %v2075 = vpop.f32.mrf.mxu0
      %v2076 = vadd.f32 0.0, %v2075
      %2077 = vmatmul.bf16.gmra.mxu0 %v1935
      %v2078 = vpop.f32.mrf.mxu0
      %v2079 = vadd.f32 0.0, %v2078
      %v2080 = vpop.f32.mrf.mxu0
      %v2081 = vadd.f32 0.0, %v2080
      %2082 = vmatmul.bf16.gmra.mxu0 %v1937
      %v2083 = vpop.f32.mrf.mxu0
      %v2084 = vadd.f32 0.0, %v2083
      %v2085 = vpop.f32.mrf.mxu0
      %v2086 = vadd.f32 0.0, %v2085
      %2087 = vmatmul.bf16.gmra.mxu0 %v1939
      %v2088 = vpop.f32.mrf.mxu0
      %v2089 = vadd.f32 0.0, %v2088
      %v2090 = vpop.f32.mrf.mxu0
      %v2091 = vadd.f32 0.0, %v2090
      %2092 = vmatmul.bf16.gmra.mxu0 %v1941
      %v2093 = vpop.f32.mrf.mxu0
      %v2094 = vadd.f32 0.0, %v2093
      %v2095 = vpop.f32.mrf.mxu0
      %v2096 = vadd.f32 0.0, %v2095
      %2097 = vmatmul.bf16.gmra.mxu0 %v1943
      %v2098 = vpop.f32.mrf.mxu0
      %v2099 = vadd.f32 0.0, %v2098
      %v2100 = vpop.f32.mrf.mxu0
      %v2101 = vadd.f32 0.0, %v2100
      %2102 = vmatmul.bf16.gmra.mxu0 %v1945
      %v2103 = vpop.f32.mrf.mxu0
      %v2104 = vadd.f32 0.0, %v2103
      %v2105 = vpop.f32.mrf.mxu0
      %v2106 = vadd.f32 0.0, %v2105
      %2107 = vmatmul.bf16.gmra.mxu0 %v1947
      %v2108 = vpop.f32.mrf.mxu0
      %v2109 = vadd.f32 0.0, %v2108
      %v2110 = vpop.f32.mrf.mxu0
      %v2111 = vadd.f32 0.0, %v2110
      %2112 = vdwg.mxu0
      %v2113 = vadd.f32 %v1853, %v2024
      %v2114 = vadd.f32 %v1854, %v2026
      %v2115 = vadd.f32 %v1855, %v2029
      %v2116 = vadd.f32 %v1856, %v2031
      %v2117 = vadd.f32 %v1857, %v2034
      %v2118 = vadd.f32 %v1858, %v2036
      %v2119 = vadd.f32 %v1859, %v2039
      %v2120 = vadd.f32 %v1860, %v2041
      %v2121 = vadd.f32 %v1861, %v2044
      %v2122 = vadd.f32 %v1862, %v2046
      %v2123 = vadd.f32 %v1863, %v2049
      %v2124 = vadd.f32 %v1864, %v2051
      %v2125 = vadd.f32 %v1865, %v2054
      %v2126 = vadd.f32 %v1866, %v2056
      %v2127 = vadd.f32 %v1867, %v2059
      %v2128 = vadd.f32 %v1868, %v2061
      %v2129 = vadd.f32 %v1869, %v2064
      %v2130 = vadd.f32 %v1870, %v2066
      %v2131 = vadd.f32 %v1871, %v2069
      %v2132 = vadd.f32 %v1872, %v2071
      %v2133 = vadd.f32 %v1873, %v2074
      %v2134 = vadd.f32 %v1874, %v2076
      %v2135 = vadd.f32 %v1875, %v2079
      %v2136 = vadd.f32 %v1876, %v2081
      %v2137 = vadd.f32 %v1877, %v2084
      %v2138 = vadd.f32 %v1878, %v2086
      %v2139 = vadd.f32 %v1879, %v2089
      %v2140 = vadd.f32 %v1880, %v2091
      %v2141 = vadd.f32 %v1881, %v2094
      %v2142 = vadd.f32 %v1882, %v2096
      %v2143 = vadd.f32 %v1883, %v2099
      %v2144 = vadd.f32 %v1884, %v2101
      %v2145 = vadd.f32 %v1885, %v2104
      %v2146 = vadd.f32 %v1886, %v2106
      %v2147 = vadd.f32 %v1887, %v2109
      %v2148 = vadd.f32 %v1888, %v2111
      %v2149 = vld [vmem:[%s199 + $0x10] sm:$0xc]
      %v2150 = vld [vmem:[%s199 + $0x14] sm:$0xf]
      %v2151 = vld [vmem:[%s199 + $0x18] sm:$0xf]
      %v2152 = vld [vmem:[%s199 + $0x1c] sm:$0xf]
      %v2153 = vld [vmem:[%s199 + $0x20] sm:$0xf]
      %v2154 = vld [vmem:[%s199 + $0x24] sm:$0xf]
      %v2155 = vld [vmem:[%s199 + $0x28] sm:$0xf]
      %v2156 = vld [vmem:[%s199 + $0x2c] sm:$0xf]
      %v2157 = vld [vmem:[%s199 + $0x30] sm:$0xf]
      %v2158 = vld [vmem:[%s199 + $0x34] sm:$0xf]
      %v2159 = vld [vmem:[%s199 + $0x38] sm:$0xf]
      %v2160 = vld [vmem:[%s199 + $0x3c] sm:$0xf]
      %v2161 = vld [vmem:[%s199 + $0x40] sm:$0xf]
      %v2162 = vld [vmem:[%s199 + $0x44] sm:$0xf]
      %v2163 = vld [vmem:[%s199 + $0x48] sm:$0xf]
      %v2164 = vld [vmem:[%s199 + $0x4c] sm:$0xf]
      %v2165 = vld [vmem:[%s199 + $0x50] sm:$0xf]
      %v2166 = vld [vmem:[%s199 + $0x54] sm:$0xf]
      %v2167 = vld [vmem:[%s199 + $0x58] sm:$0xf]
      %v2168 = vld [vmem:[%s199 + $0x5c] sm:$0xf]
      %v2169 = vld [vmem:[%s199 + $0x60] sm:$0xf]
      %v2170 = vld [vmem:[%s199 + $0x64] sm:$0xf]
      %v2171 = vld [vmem:[%s199 + $0x68] sm:$0xf]
      %v2172 = vld [vmem:[%s199 + $0x6c] sm:$0xf]
      %v2173 = vld [vmem:[%s199 + $0x70] sm:$0xf]
      %v2174 = vld [vmem:[%s199 + $0x74] sm:$0xf]
      %v2175 = vld [vmem:[%s199 + $0x78] sm:$0xf]
      %v2176 = vld [vmem:[%s199 + $0x7c] sm:$0xf]
      %v2177 = vld [vmem:[%s199 + $0x80] sm:$0xf]
      %v2178 = vld [vmem:[%s199 + $0x84] sm:$0xf]
      %v2179 = vld [vmem:[%s199 + $0x88] sm:$0xf]
      %v2180 = vld [vmem:[%s199 + $0x8c] sm:$0xf]
      %v2181 = vld [vmem:[%s199 + $0x90] sm:$0xf]
      %v2182 = vld [vmem:[%s199 + $0x94] sm:$0xf]
      %v2183 = vld [vmem:[%s199 + $0x98] sm:$0xf]
      %v2184 = vld [vmem:[%s199 + $0x9c] sm:$0xf]
      %v2185 = vld [vmem:[%s199 + $0xa0] sm:$0x3]
      %s2186 = scalar_lea.vmem %s1, 384
      %v2187 = vld [vmem:[%s2186] sm:$0xf]
      %v2188 = vld [vmem:[%s2186 + $0x4] sm:$0xf]
      %v2189 = vld [vmem:[%s2186 + $0x8] sm:$0xf]
      %v2190 = vld [vmem:[%s2186 + $0xc] sm:$0xf]
      %v2191 = vld [vmem:[%s2186 + $0x10] sm:$0xf]
      %v2192 = vld [vmem:[%s2186 + $0x14] sm:$0xf]
      %v2193 = vld [vmem:[%s2186 + $0x18] sm:$0xf]
      %v2194 = vld [vmem:[%s2186 + $0x1c] sm:$0xf]
      %v2195 = vld [vmem:[%s2186 + $0x20] sm:$0xf]
      %v2196 = vld [vmem:[%s2186 + $0x24] sm:$0xf]
      %v2197 = vld [vmem:[%s2186 + $0x28] sm:$0xf]
      %v2198 = vld [vmem:[%s2186 + $0x2c] sm:$0xf]
      %v2199 = vld [vmem:[%s2186 + $0x30] sm:$0xf]
      %v2200 = vld [vmem:[%s2186 + $0x34] sm:$0xf]
      %v2201 = vld [vmem:[%s2186 + $0x38] sm:$0xf]
      %v2202 = vld [vmem:[%s2186 + $0x3c] sm:$0xf]
      %v2240 = vunpack.c.l.b16 %v2149
      %v2241 = vunpack.c.l.b16 %v2150
      %v2242 = vunpack.c.l.b16 %v2151
      %v2243 = vunpack.c.l.b16 %v2152
      %v2244 = vunpack.c.l.b16 %v2153
      %v2245 = vunpack.c.l.b16 %v2154
      %v2246 = vunpack.c.l.b16 %v2155
      %v2247 = vunpack.c.l.b16 %v2156
      %v2248 = vunpack.c.l.b16 %v2157
      %v2249 = vunpack.c.l.b16 %v2158
      %v2250 = vunpack.c.l.b16 %v2159
      %v2251 = vunpack.c.l.b16 %v2160
      %v2252 = vunpack.c.l.b16 %v2161
      %v2253 = vunpack.c.l.b16 %v2162
      %v2254 = vunpack.c.l.b16 %v2163
      %v2255 = vunpack.c.l.b16 %v2164
      %v2256 = vunpack.c.l.b16 %v2165
      %v2257 = vunpack.c.l.b16 %v2166
      %v2258 = vunpack.c.l.b16 %v2167
      %v2259 = vunpack.c.l.b16 %v2168
      %v2260 = vunpack.c.l.b16 %v2169
      %v2261 = vunpack.c.l.b16 %v2170
      %v2262 = vunpack.c.l.b16 %v2171
      %v2263 = vunpack.c.l.b16 %v2172
      %v2264 = vunpack.c.l.b16 %v2173
      %v2265 = vunpack.c.l.b16 %v2174
      %v2266 = vunpack.c.l.b16 %v2175
      %v2267 = vunpack.c.l.b16 %v2176
      %v2268 = vunpack.c.l.b16 %v2177
      %v2269 = vunpack.c.l.b16 %v2178
      %v2270 = vunpack.c.l.b16 %v2179
      %v2271 = vunpack.c.l.b16 %v2180
      %v2272 = vunpack.c.l.b16 %v2181
      %v2273 = vunpack.c.l.b16 %v2182
      %v2274 = vunpack.c.l.b16 %v2183
      %v2275 = vunpack.c.l.b16 %v2184
      %v2276 = vunpack.c.l.b16 %v2185
      %v2277 = vpack.c.b16 %v2241, %v2240
      %v2278 = vpack.c.b16 %v2243, %v2242
      %v2279 = vpack.c.b16 %v2245, %v2244
      %v2280 = vpack.c.b16 %v2247, %v2246
      %v2281 = vpack.c.b16 %v2249, %v2248
      %v2282 = vpack.c.b16 %v2251, %v2250
      %v2283 = vpack.c.b16 %v2253, %v2252
      %v2284 = vpack.c.b16 %v2255, %v2254
      %v2285 = vpack.c.b16 %v2257, %v2256
      %v2286 = vpack.c.b16 %v2259, %v2258
      %v2287 = vpack.c.b16 %v2261, %v2260
      %v2288 = vpack.c.b16 %v2263, %v2262
      %v2289 = vpack.c.b16 %v2265, %v2264
      %v2290 = vpack.c.b16 %v2267, %v2266
      %v2291 = vpack.c.b16 %v2269, %v2268
      %v2292 = vpack.c.b16 %v2271, %v2270
      %v2293 = vpack.c.b16 %v2273, %v2272
      %v2294 = vpack.c.b16 %v2275, %v2274
      %v2295 = vpack.c.b16 %v2276, %v2276
      %v2296 = vrot.slane %v2277, 2
      %v2297 = vrot.slane %v2278, 2
      %v2298 = vsel %vm1910, %v2296, %v2297
      %v2299 = vrot.slane %v2279, 2
      %v2300 = vsel %vm1910, %v2297, %v2299
      %v2301 = vrot.slane %v2280, 2
      %v2302 = vsel %vm1910, %v2299, %v2301
      %v2303 = vrot.slane %v2281, 2
      %v2304 = vsel %vm1910, %v2301, %v2303
      %v2305 = vrot.slane %v2282, 2
      %v2306 = vsel %vm1910, %v2303, %v2305
      %v2307 = vrot.slane %v2283, 2
      %v2308 = vsel %vm1910, %v2305, %v2307
      %v2309 = vrot.slane %v2284, 2
      %v2310 = vsel %vm1910, %v2307, %v2309
      %v2311 = vrot.slane %v2285, 2
      %v2312 = vsel %vm1910, %v2309, %v2311
      %v2313 = vrot.slane %v2286, 2
      %v2314 = vsel %vm1910, %v2311, %v2313
      %v2315 = vrot.slane %v2287, 2
      %v2316 = vsel %vm1910, %v2313, %v2315
      %v2317 = vrot.slane %v2288, 2
      %v2318 = vsel %vm1910, %v2315, %v2317
      %v2319 = vrot.slane %v2289, 2
      %v2320 = vsel %vm1910, %v2317, %v2319
      %v2321 = vrot.slane %v2290, 2
      %v2322 = vsel %vm1910, %v2319, %v2321
      %v2323 = vrot.slane %v2291, 2
      %v2324 = vsel %vm1910, %v2321, %v2323
      %v2325 = vrot.slane %v2292, 2
      %v2326 = vsel %vm1910, %v2323, %v2325
      %v2327 = vrot.slane %v2293, 2
      %v2328 = vsel %vm1910, %v2325, %v2327
      %v2329 = vrot.slane %v2294, 2
      %v2330 = vsel %vm1910, %v2327, %v2329
      %v2331 = vrot.slane %v2295, 2
      %v2332 = vsel %vm1910, %v2329, %v2331
      %v2367 = vunpack.c.l.b16 %v2187
      %v2368 = vunpack.c.l.b16 %v2188
      %v2369 = vunpack.c.l.b16 %v2189
      %v2370 = vunpack.c.l.b16 %v2190
      %v2371 = vunpack.c.l.b16 %v2191
      %v2372 = vunpack.c.l.b16 %v2192
      %v2373 = vunpack.c.l.b16 %v2193
      %v2374 = vunpack.c.l.b16 %v2194
      %v2375 = vunpack.c.l.b16 %v2195
      %v2376 = vunpack.c.l.b16 %v2196
      %v2377 = vunpack.c.l.b16 %v2197
      %v2378 = vunpack.c.l.b16 %v2198
      %v2379 = vunpack.c.l.b16 %v2199
      %v2380 = vunpack.c.l.b16 %v2200
      %v2381 = vunpack.c.l.b16 %v2201
      %v2382 = vunpack.c.l.b16 %v2202
      %v2383 = vpack.c.b16 %v2368, %v2367
      %v2384 = vpack.c.b16 %v2370, %v2369
      %v2385 = vpack.c.b16 %v2372, %v2371
      %v2386 = vpack.c.b16 %v2374, %v2373
      %v2387 = vpack.c.b16 %v2376, %v2375
      %v2388 = vpack.c.b16 %v2378, %v2377
      %v2389 = vpack.c.b16 %v2380, %v2379
      %v2390 = vpack.c.b16 %v2382, %v2381
      %2399 = vmatpush.bf16.msra.mxu0 %v2390
      %2400 = vmatpush.bf16.msra.mxu0 %v2389
      %2401 = vmatpush.bf16.msra.mxu0 %v2388
      %2402 = vmatpush.bf16.msra.mxu0 %v2387
      %2403 = vmatpush.bf16.msra.mxu0 %v2386
      %2404 = vmatpush.bf16.msra.mxu0 %v2385
      %2405 = vmatpush.bf16.msra.mxu0 %v2384
      %2406 = vmatpush.bf16.msra.mxu0 %v2383
      %2407 = vmatmul.bf16.gmra.mxu0 %v2298
      %v2408 = vpop.f32.mrf.mxu0
      %v2409 = vadd.f32 0.0, %v2408
      %v2410 = vpop.f32.mrf.mxu0
      %v2411 = vadd.f32 0.0, %v2410
      %2412 = vmatmul.bf16.gmra.mxu0 %v2300
      %v2413 = vpop.f32.mrf.mxu0
      %v2414 = vadd.f32 0.0, %v2413
      %v2415 = vpop.f32.mrf.mxu0
      %v2416 = vadd.f32 0.0, %v2415
      %2417 = vmatmul.bf16.gmra.mxu0 %v2302
      %v2418 = vpop.f32.mrf.mxu0
      %v2419 = vadd.f32 0.0, %v2418
      %v2420 = vpop.f32.mrf.mxu0
      %v2421 = vadd.f32 0.0, %v2420
      %2422 = vmatmul.bf16.gmra.mxu0 %v2304
      %v2423 = vpop.f32.mrf.mxu0
      %v2424 = vadd.f32 0.0, %v2423
      %v2425 = vpop.f32.mrf.mxu0
      %v2426 = vadd.f32 0.0, %v2425
      %2427 = vmatmul.bf16.gmra.mxu0 %v2306
      %v2428 = vpop.f32.mrf.mxu0
      %v2429 = vadd.f32 0.0, %v2428
      %v2430 = vpop.f32.mrf.mxu0
      %v2431 = vadd.f32 0.0, %v2430
      %2432 = vmatmul.bf16.gmra.mxu0 %v2308
      %v2433 = vpop.f32.mrf.mxu0
      %v2434 = vadd.f32 0.0, %v2433
      %v2435 = vpop.f32.mrf.mxu0
      %v2436 = vadd.f32 0.0, %v2435
      %2437 = vmatmul.bf16.gmra.mxu0 %v2310
      %v2438 = vpop.f32.mrf.mxu0
      %v2439 = vadd.f32 0.0, %v2438
      %v2440 = vpop.f32.mrf.mxu0
      %v2441 = vadd.f32 0.0, %v2440
      %2442 = vmatmul.bf16.gmra.mxu0 %v2312
      %v2443 = vpop.f32.mrf.mxu0
      %v2444 = vadd.f32 0.0, %v2443
      %v2445 = vpop.f32.mrf.mxu0
      %v2446 = vadd.f32 0.0, %v2445
      %2447 = vmatmul.bf16.gmra.mxu0 %v2314
      %v2448 = vpop.f32.mrf.mxu0
      %v2449 = vadd.f32 0.0, %v2448
      %v2450 = vpop.f32.mrf.mxu0
      %v2451 = vadd.f32 0.0, %v2450
      %2452 = vmatmul.bf16.gmra.mxu0 %v2316
      %v2453 = vpop.f32.mrf.mxu0
      %v2454 = vadd.f32 0.0, %v2453
      %v2455 = vpop.f32.mrf.mxu0
      %v2456 = vadd.f32 0.0, %v2455
      %2457 = vmatmul.bf16.gmra.mxu0 %v2318
      %v2458 = vpop.f32.mrf.mxu0
      %v2459 = vadd.f32 0.0, %v2458
      %v2460 = vpop.f32.mrf.mxu0
      %v2461 = vadd.f32 0.0, %v2460
      %2462 = vmatmul.bf16.gmra.mxu0 %v2320
      %v2463 = vpop.f32.mrf.mxu0
      %v2464 = vadd.f32 0.0, %v2463
      %v2465 = vpop.f32.mrf.mxu0
      %v2466 = vadd.f32 0.0, %v2465
      %2467 = vmatmul.bf16.gmra.mxu0 %v2322
      %v2468 = vpop.f32.mrf.mxu0
      %v2469 = vadd.f32 0.0, %v2468
      %v2470 = vpop.f32.mrf.mxu0
      %v2471 = vadd.f32 0.0, %v2470
      %2472 = vmatmul.bf16.gmra.mxu0 %v2324
      %v2473 = vpop.f32.mrf.mxu0
      %v2474 = vadd.f32 0.0, %v2473
      %v2475 = vpop.f32.mrf.mxu0
      %v2476 = vadd.f32 0.0, %v2475
      %2477 = vmatmul.bf16.gmra.mxu0 %v2326
      %v2478 = vpop.f32.mrf.mxu0
      %v2479 = vadd.f32 0.0, %v2478
      %v2480 = vpop.f32.mrf.mxu0
      %v2481 = vadd.f32 0.0, %v2480
      %2482 = vmatmul.bf16.gmra.mxu0 %v2328
      %v2483 = vpop.f32.mrf.mxu0
      %v2484 = vadd.f32 0.0, %v2483
      %v2485 = vpop.f32.mrf.mxu0
      %v2486 = vadd.f32 0.0, %v2485
      %2487 = vmatmul.bf16.gmra.mxu0 %v2330
      %v2488 = vpop.f32.mrf.mxu0
      %v2489 = vadd.f32 0.0, %v2488
      %v2490 = vpop.f32.mrf.mxu0
      %v2491 = vadd.f32 0.0, %v2490
      %2492 = vmatmul.bf16.gmra.mxu0 %v2332
      %v2493 = vpop.f32.mrf.mxu0
      %v2494 = vadd.f32 0.0, %v2493
      %v2495 = vpop.f32.mrf.mxu0
      %v2496 = vadd.f32 0.0, %v2495
      %2497 = vdwg.mxu0
      %v2498 = vadd.f32 %v2113, %v2409
      %v2499 = vadd.f32 %v2114, %v2411
      %v2500 = vadd.f32 %v2115, %v2414
      %v2501 = vadd.f32 %v2116, %v2416
      %v2502 = vadd.f32 %v2117, %v2419
      %v2503 = vadd.f32 %v2118, %v2421
      %v2504 = vadd.f32 %v2119, %v2424
      %v2505 = vadd.f32 %v2120, %v2426
      %v2506 = vadd.f32 %v2121, %v2429
      %v2507 = vadd.f32 %v2122, %v2431
      %v2508 = vadd.f32 %v2123, %v2434
      %v2509 = vadd.f32 %v2124, %v2436
      %v2510 = vadd.f32 %v2125, %v2439
      %v2511 = vadd.f32 %v2126, %v2441
      %v2512 = vadd.f32 %v2127, %v2444
      %v2513 = vadd.f32 %v2128, %v2446
      %v2514 = vadd.f32 %v2129, %v2449
      %v2515 = vadd.f32 %v2130, %v2451
      %v2516 = vadd.f32 %v2131, %v2454
      %v2517 = vadd.f32 %v2132, %v2456
      %v2518 = vadd.f32 %v2133, %v2459
      %v2519 = vadd.f32 %v2134, %v2461
      %v2520 = vadd.f32 %v2135, %v2464
      %v2521 = vadd.f32 %v2136, %v2466
      %v2522 = vadd.f32 %v2137, %v2469
      %v2523 = vadd.f32 %v2138, %v2471
      %v2524 = vadd.f32 %v2139, %v2474
      %v2525 = vadd.f32 %v2140, %v2476
      %v2526 = vadd.f32 %v2141, %v2479
      %v2527 = vadd.f32 %v2142, %v2481
      %v2528 = vadd.f32 %v2143, %v2484
      %v2529 = vadd.f32 %v2144, %v2486
      %v2530 = vadd.f32 %v2145, %v2489
      %v2531 = vadd.f32 %v2146, %v2491
      %v2532 = vadd.f32 %v2147, %v2494
      %v2533 = vadd.f32 %v2148, %v2496
      %v2534 = vld [vmem:[%s199 + $0xa0] sm:$0x7]
      %s2535 = scalar_lea.vmem %s1, 448
      %v2536 = vld [vmem:[%s2535] sm:$0xf]
      %v2537 = vld [vmem:[%s2535 + $0x4] sm:$0xf]
      %v2538 = vld [vmem:[%s2535 + $0x8] sm:$0xf]
      %v2539 = vld [vmem:[%s2535 + $0xc] sm:$0xf]
      %v2540 = vld [vmem:[%s2535 + $0x10] sm:$0xf]
      %v2541 = vld [vmem:[%s2535 + $0x14] sm:$0xf]
      %v2542 = vld [vmem:[%s2535 + $0x18] sm:$0xf]
      %v2543 = vld [vmem:[%s2535 + $0x1c] sm:$0xf]
      %v2544 = vld [vmem:[%s2535 + $0x20] sm:$0xf]
      %v2545 = vld [vmem:[%s2535 + $0x24] sm:$0xf]
      %v2546 = vld [vmem:[%s2535 + $0x28] sm:$0xf]
      %v2547 = vld [vmem:[%s2535 + $0x2c] sm:$0xf]
      %v2548 = vld [vmem:[%s2535 + $0x30] sm:$0xf]
      %v2549 = vld [vmem:[%s2535 + $0x34] sm:$0xf]
      %v2550 = vld [vmem:[%s2535 + $0x38] sm:$0xf]
      %v2551 = vld [vmem:[%s2535 + $0x3c] sm:$0xf]
      %v2553 = vunpack.c.l.b16 %v2534
      %v2554 = vpack.c.b16 %v2553, %v2553
      %vm2555 = vsmask.f32 5376
      %v2557 = vshrl.u32 %v2277, 16
      %v2559 = vrot.slane %v2557, 2
      %v2560 = vshll.u32 %v2277, 16
      %v2562 = vrot.slane %v2560, 3
      %v2563 = vor.u32 %v2559, %v2562
      %v2565 = vshrl.u32 %v2278, 16
      %v2567 = vrot.slane %v2565, 2
      %v2568 = vshll.u32 %v2278, 16
      %v2570 = vrot.slane %v2568, 3
      %v2571 = vor.u32 %v2567, %v2570
      %v2572 = vsel %vm2555, %v2563, %v2571
      %v2574 = vshrl.u32 %v2279, 16
      %v2576 = vrot.slane %v2574, 2
      %v2577 = vshll.u32 %v2279, 16
      %v2579 = vrot.slane %v2577, 3
      %v2580 = vor.u32 %v2576, %v2579
      %v2581 = vsel %vm2555, %v2571, %v2580
      %v2583 = vshrl.u32 %v2280, 16
      %v2585 = vrot.slane %v2583, 2
      %v2586 = vshll.u32 %v2280, 16
      %v2588 = vrot.slane %v2586, 3
      %v2589 = vor.u32 %v2585, %v2588
      %v2590 = vsel %vm2555, %v2580, %v2589
      %v2592 = vshrl.u32 %v2281, 16
      %v2594 = vrot.slane %v2592, 2
      %v2595 = vshll.u32 %v2281, 16
      %v2597 = vrot.slane %v2595, 3
      %v2598 = vor.u32 %v2594, %v2597
      %v2599 = vsel %vm2555, %v2589, %v2598
      %v2601 = vshrl.u32 %v2282, 16
      %v2603 = vrot.slane %v2601, 2
      %v2604 = vshll.u32 %v2282, 16
      %v2606 = vrot.slane %v2604, 3
      %v2607 = vor.u32 %v2603, %v2606
      %v2608 = vsel %vm2555, %v2598, %v2607
      %v2610 = vshrl.u32 %v2283, 16
      %v2612 = vrot.slane %v2610, 2
      %v2613 = vshll.u32 %v2283, 16
      %v2615 = vrot.slane %v2613, 3
      %v2616 = vor.u32 %v2612, %v2615
      %v2617 = vsel %vm2555, %v2607, %v2616
      %v2619 = vshrl.u32 %v2284, 16
      %v2621 = vrot.slane %v2619, 2
      %v2622 = vshll.u32 %v2284, 16
      %v2624 = vrot.slane %v2622, 3
      %v2625 = vor.u32 %v2621, %v2624
      %v2626 = vsel %vm2555, %v2616, %v2625
      %v2628 = vshrl.u32 %v2285, 16
      %v2630 = vrot.slane %v2628, 2
      %v2631 = vshll.u32 %v2285, 16
      %v2633 = vrot.slane %v2631, 3
      %v2634 = vor.u32 %v2630, %v2633
      %v2635 = vsel %vm2555, %v2625, %v2634
      %v2637 = vshrl.u32 %v2286, 16
      %v2639 = vrot.slane %v2637, 2
      %v2640 = vshll.u32 %v2286, 16
      %v2642 = vrot.slane %v2640, 3
      %v2643 = vor.u32 %v2639, %v2642
      %v2644 = vsel %vm2555, %v2634, %v2643
      %v2646 = vshrl.u32 %v2287, 16
      %v2648 = vrot.slane %v2646, 2
      %v2649 = vshll.u32 %v2287, 16
      %v2651 = vrot.slane %v2649, 3
      %v2652 = vor.u32 %v2648, %v2651
      %v2653 = vsel %vm2555, %v2643, %v2652
      %v2655 = vshrl.u32 %v2288, 16
      %v2657 = vrot.slane %v2655, 2
      %v2658 = vshll.u32 %v2288, 16
      %v2660 = vrot.slane %v2658, 3
      %v2661 = vor.u32 %v2657, %v2660
      %v2662 = vsel %vm2555, %v2652, %v2661
      %v2664 = vshrl.u32 %v2289, 16
      %v2666 = vrot.slane %v2664, 2
      %v2667 = vshll.u32 %v2289, 16
      %v2669 = vrot.slane %v2667, 3
      %v2670 = vor.u32 %v2666, %v2669
      %v2671 = vsel %vm2555, %v2661, %v2670
      %v2673 = vshrl.u32 %v2290, 16
      %v2675 = vrot.slane %v2673, 2
      %v2676 = vshll.u32 %v2290, 16
      %v2678 = vrot.slane %v2676, 3
      %v2679 = vor.u32 %v2675, %v2678
      %v2680 = vsel %vm2555, %v2670, %v2679
      %v2682 = vshrl.u32 %v2291, 16
      %v2684 = vrot.slane %v2682, 2
      %v2685 = vshll.u32 %v2291, 16
      %v2687 = vrot.slane %v2685, 3
      %v2688 = vor.u32 %v2684, %v2687
      %v2689 = vsel %vm2555, %v2679, %v2688
      %v2691 = vshrl.u32 %v2292, 16
      %v2693 = vrot.slane %v2691, 2
      %v2694 = vshll.u32 %v2292, 16
      %v2696 = vrot.slane %v2694, 3
      %v2697 = vor.u32 %v2693, %v2696
      %v2698 = vsel %vm2555, %v2688, %v2697
      %v2700 = vshrl.u32 %v2293, 16
      %v2702 = vrot.slane %v2700, 2
      %v2703 = vshll.u32 %v2293, 16
      %v2705 = vrot.slane %v2703, 3
      %v2706 = vor.u32 %v2702, %v2705
      %v2707 = vsel %vm2555, %v2697, %v2706
      %v2709 = vshrl.u32 %v2294, 16
      %v2711 = vrot.slane %v2709, 2
      %v2712 = vshll.u32 %v2294, 16
      %v2714 = vrot.slane %v2712, 3
      %v2715 = vor.u32 %v2711, %v2714
      %v2716 = vsel %vm2555, %v2706, %v2715
      %v2718 = vshrl.u32 %v2554, 16
      %v2720 = vrot.slane %v2718, 2
      %v2721 = vshll.u32 %v2554, 16
      %v2723 = vrot.slane %v2721, 3
      %v2724 = vor.u32 %v2720, %v2723
      %v2725 = vsel %vm2555, %v2715, %v2724
      %v2760 = vunpack.c.l.b16 %v2536
      %v2761 = vunpack.c.l.b16 %v2537
      %v2762 = vunpack.c.l.b16 %v2538
      %v2763 = vunpack.c.l.b16 %v2539
      %v2764 = vunpack.c.l.b16 %v2540
      %v2765 = vunpack.c.l.b16 %v2541
      %v2766 = vunpack.c.l.b16 %v2542
      %v2767 = vunpack.c.l.b16 %v2543
      %v2768 = vunpack.c.l.b16 %v2544
      %v2769 = vunpack.c.l.b16 %v2545
      %v2770 = vunpack.c.l.b16 %v2546
      %v2771 = vunpack.c.l.b16 %v2547
      %v2772 = vunpack.c.l.b16 %v2548
      %v2773 = vunpack.c.l.b16 %v2549
      %v2774 = vunpack.c.l.b16 %v2550
      %v2775 = vunpack.c.l.b16 %v2551
      %v2776 = vpack.c.b16 %v2761, %v2760
      %v2777 = vpack.c.b16 %v2763, %v2762
      %v2778 = vpack.c.b16 %v2765, %v2764
      %v2779 = vpack.c.b16 %v2767, %v2766
      %v2780 = vpack.c.b16 %v2769, %v2768
      %v2781 = vpack.c.b16 %v2771, %v2770
      %v2782 = vpack.c.b16 %v2773, %v2772
      %v2783 = vpack.c.b16 %v2775, %v2774
      %2792 = vmatpush.bf16.msra.mxu0 %v2783
      %2793 = vmatpush.bf16.msra.mxu0 %v2782
      %2794 = vmatpush.bf16.msra.mxu0 %v2781
      %2795 = vmatpush.bf16.msra.mxu0 %v2780
      %2796 = vmatpush.bf16.msra.mxu0 %v2779
      %2797 = vmatpush.bf16.msra.mxu0 %v2778
      %2798 = vmatpush.bf16.msra.mxu0 %v2777
      %2799 = vmatpush.bf16.msra.mxu0 %v2776
      %2800 = vmatmul.bf16.gmra.mxu0 %v2572
      %v2801 = vpop.f32.mrf.mxu0
      %v2802 = vadd.f32 0.0, %v2801
      %v2803 = vpop.f32.mrf.mxu0
      %v2804 = vadd.f32 0.0, %v2803
      %2805 = vmatmul.bf16.gmra.mxu0 %v2581
      %v2806 = vpop.f32.mrf.mxu0
      %v2807 = vadd.f32 0.0, %v2806
      %v2808 = vpop.f32.mrf.mxu0
      %v2809 = vadd.f32 0.0, %v2808
      %2810 = vmatmul.bf16.gmra.mxu0 %v2590
      %v2811 = vpop.f32.mrf.mxu0
      %v2812 = vadd.f32 0.0, %v2811
      %v2813 = vpop.f32.mrf.mxu0
      %v2814 = vadd.f32 0.0, %v2813
      %2815 = vmatmul.bf16.gmra.mxu0 %v2599
      %v2816 = vpop.f32.mrf.mxu0
      %v2817 = vadd.f32 0.0, %v2816
      %v2818 = vpop.f32.mrf.mxu0
      %v2819 = vadd.f32 0.0, %v2818
      %2820 = vmatmul.bf16.gmra.mxu0 %v2608
      %v2821 = vpop.f32.mrf.mxu0
      %v2822 = vadd.f32 0.0, %v2821
      %v2823 = vpop.f32.mrf.mxu0
      %v2824 = vadd.f32 0.0, %v2823
      %2825 = vmatmul.bf16.gmra.mxu0 %v2617
      %v2826 = vpop.f32.mrf.mxu0
      %v2827 = vadd.f32 0.0, %v2826
      %v2828 = vpop.f32.mrf.mxu0
      %v2829 = vadd.f32 0.0, %v2828
      %2830 = vmatmul.bf16.gmra.mxu0 %v2626
      %v2831 = vpop.f32.mrf.mxu0
      %v2832 = vadd.f32 0.0, %v2831
      %v2833 = vpop.f32.mrf.mxu0
      %v2834 = vadd.f32 0.0, %v2833
      %2835 = vmatmul.bf16.gmra.mxu0 %v2635
      %v2836 = vpop.f32.mrf.mxu0
      %v2837 = vadd.f32 0.0, %v2836
      %v2838 = vpop.f32.mrf.mxu0
      %v2839 = vadd.f32 0.0, %v2838
      %2840 = vmatmul.bf16.gmra.mxu0 %v2644
      %v2841 = vpop.f32.mrf.mxu0
      %v2842 = vadd.f32 0.0, %v2841
      %v2843 = vpop.f32.mrf.mxu0
      %v2844 = vadd.f32 0.0, %v2843
      %2845 = vmatmul.bf16.gmra.mxu0 %v2653
      %v2846 = vpop.f32.mrf.mxu0
      %v2847 = vadd.f32 0.0, %v2846
      %v2848 = vpop.f32.mrf.mxu0
      %v2849 = vadd.f32 0.0, %v2848
      %2850 = vmatmul.bf16.gmra.mxu0 %v2662
      %v2851 = vpop.f32.mrf.mxu0
      %v2852 = vadd.f32 0.0, %v2851
      %v2853 = vpop.f32.mrf.mxu0
      %v2854 = vadd.f32 0.0, %v2853
      %2855 = vmatmul.bf16.gmra.mxu0 %v2671
      %v2856 = vpop.f32.mrf.mxu0
      %v2857 = vadd.f32 0.0, %v2856
      %v2858 = vpop.f32.mrf.mxu0
      %v2859 = vadd.f32 0.0, %v2858
      %2860 = vmatmul.bf16.gmra.mxu0 %v2680
      %v2861 = vpop.f32.mrf.mxu0
      %v2862 = vadd.f32 0.0, %v2861
      %v2863 = vpop.f32.mrf.mxu0
      %v2864 = vadd.f32 0.0, %v2863
      %2865 = vmatmul.bf16.gmra.mxu0 %v2689
      %v2866 = vpop.f32.mrf.mxu0
      %v2867 = vadd.f32 0.0, %v2866
      %v2868 = vpop.f32.mrf.mxu0
      %v2869 = vadd.f32 0.0, %v2868
      %2870 = vmatmul.bf16.gmra.mxu0 %v2698
      %v2871 = vpop.f32.mrf.mxu0
      %v2872 = vadd.f32 0.0, %v2871
      %v2873 = vpop.f32.mrf.mxu0
      %v2874 = vadd.f32 0.0, %v2873
      %2875 = vmatmul.bf16.gmra.mxu0 %v2707
      %v2876 = vpop.f32.mrf.mxu0
      %v2877 = vadd.f32 0.0, %v2876
      %v2878 = vpop.f32.mrf.mxu0
      %v2879 = vadd.f32 0.0, %v2878
      %2880 = vmatmul.bf16.gmra.mxu0 %v2716
      %v2881 = vpop.f32.mrf.mxu0
      %v2882 = vadd.f32 0.0, %v2881
      %v2883 = vpop.f32.mrf.mxu0
      %v2884 = vadd.f32 0.0, %v2883
      %2885 = vmatmul.bf16.gmra.mxu0 %v2725
      %v2886 = vpop.f32.mrf.mxu0
      %v2887 = vadd.f32 0.0, %v2886
      %v2888 = vpop.f32.mrf.mxu0
      %v2889 = vadd.f32 0.0, %v2888
      %2890 = vdwg.mxu0
      %v2891 = vadd.f32 %v2498, %v2802
      %v2892 = vadd.f32 %v2499, %v2804
      %v2893 = vadd.f32 %v2500, %v2807
      %v2894 = vadd.f32 %v2501, %v2809
      %v2895 = vadd.f32 %v2502, %v2812
      %v2896 = vadd.f32 %v2503, %v2814
      %v2897 = vadd.f32 %v2504, %v2817
      %v2898 = vadd.f32 %v2505, %v2819
      %v2899 = vadd.f32 %v2506, %v2822
      %v2900 = vadd.f32 %v2507, %v2824
      %v2901 = vadd.f32 %v2508, %v2827
      %v2902 = vadd.f32 %v2509, %v2829
      %v2903 = vadd.f32 %v2510, %v2832
      %v2904 = vadd.f32 %v2511, %v2834
      %v2905 = vadd.f32 %v2512, %v2837
      %v2906 = vadd.f32 %v2513, %v2839
      %v2907 = vadd.f32 %v2514, %v2842
      %v2908 = vadd.f32 %v2515, %v2844
      %v2909 = vadd.f32 %v2516, %v2847
      %v2910 = vadd.f32 %v2517, %v2849
      %v2911 = vadd.f32 %v2518, %v2852
      %v2912 = vadd.f32 %v2519, %v2854
      %v2913 = vadd.f32 %v2520, %v2857
      %v2914 = vadd.f32 %v2521, %v2859
      %v2915 = vadd.f32 %v2522, %v2862
      %v2916 = vadd.f32 %v2523, %v2864
      %v2917 = vadd.f32 %v2524, %v2867
      %v2918 = vadd.f32 %v2525, %v2869
      %v2919 = vadd.f32 %v2526, %v2872
      %v2920 = vadd.f32 %v2527, %v2874
      %v2921 = vadd.f32 %v2528, %v2877
      %v2922 = vadd.f32 %v2529, %v2879
      %v2923 = vadd.f32 %v2530, %v2882
      %v2924 = vadd.f32 %v2531, %v2884
      %v2925 = vadd.f32 %v2532, %v2887
      %v2926 = vadd.f32 %v2533, %v2889
      %v2927 = vld [vmem:[%s199 + $0x10] sm:$0x8]
      %s2928 = scalar_lea.vmem %s1, 512
      %v2929 = vld [vmem:[%s2928] sm:$0xf]
      %v2930 = vld [vmem:[%s2928 + $0x4] sm:$0xf]
      %v2931 = vld [vmem:[%s2928 + $0x8] sm:$0xf]
      %v2932 = vld [vmem:[%s2928 + $0xc] sm:$0xf]
      %v2933 = vld [vmem:[%s2928 + $0x10] sm:$0xf]
      %v2934 = vld [vmem:[%s2928 + $0x14] sm:$0xf]
      %v2935 = vld [vmem:[%s2928 + $0x18] sm:$0xf]
      %v2936 = vld [vmem:[%s2928 + $0x1c] sm:$0xf]
      %v2937 = vld [vmem:[%s2928 + $0x20] sm:$0xf]
      %v2938 = vld [vmem:[%s2928 + $0x24] sm:$0xf]
      %v2939 = vld [vmem:[%s2928 + $0x28] sm:$0xf]
      %v2940 = vld [vmem:[%s2928 + $0x2c] sm:$0xf]
      %v2941 = vld [vmem:[%s2928 + $0x30] sm:$0xf]
      %v2942 = vld [vmem:[%s2928 + $0x34] sm:$0xf]
      %v2943 = vld [vmem:[%s2928 + $0x38] sm:$0xf]
      %v2944 = vld [vmem:[%s2928 + $0x3c] sm:$0xf]
      %v2946 = vunpack.c.l.b16 %v2927
      %v2947 = vpack.c.b16 %v2241, %v2946
      %vm2948 = vcmask 1044480
      %v2949 = vrot.slane %v2947, 3
      %v2950 = vrot.slane %v2278, 3
      %v2951 = vsel %vm2948, %v2949, %v2950
      %v2952 = vrot.slane %v2279, 3
      %v2953 = vsel %vm2948, %v2950, %v2952
      %v2954 = vrot.slane %v2280, 3
      %v2955 = vsel %vm2948, %v2952, %v2954
      %v2956 = vrot.slane %v2281, 3
      %v2957 = vsel %vm2948, %v2954, %v2956
      %v2958 = vrot.slane %v2282, 3
      %v2959 = vsel %vm2948, %v2956, %v2958
      %v2960 = vrot.slane %v2283, 3
      %v2961 = vsel %vm2948, %v2958, %v2960
      %v2962 = vrot.slane %v2284, 3
      %v2963 = vsel %vm2948, %v2960, %v2962
      %v2964 = vrot.slane %v2285, 3
      %v2965 = vsel %vm2948, %v2962, %v2964
      %v2966 = vrot.slane %v2286, 3
      %v2967 = vsel %vm2948, %v2964, %v2966
      %v2968 = vrot.slane %v2287, 3
      %v2969 = vsel %vm2948, %v2966, %v2968
      %v2970 = vrot.slane %v2288, 3
      %v2971 = vsel %vm2948, %v2968, %v2970
      %v2972 = vrot.slane %v2289, 3
      %v2973 = vsel %vm2948, %v2970, %v2972
      %v2974 = vrot.slane %v2290, 3
      %v2975 = vsel %vm2948, %v2972, %v2974
      %v2976 = vrot.slane %v2291, 3
      %v2977 = vsel %vm2948, %v2974, %v2976
      %v2978 = vrot.slane %v2292, 3
      %v2979 = vsel %vm2948, %v2976, %v2978
      %v2980 = vrot.slane %v2293, 3
      %v2981 = vsel %vm2948, %v2978, %v2980
      %v2982 = vrot.slane %v2294, 3
      %v2983 = vsel %vm2948, %v2980, %v2982
      %v2984 = vrot.slane %v2554, 3
      %v2985 = vsel %vm2948, %v2982, %v2984
      %v3020 = vunpack.c.l.b16 %v2929
      %v3021 = vunpack.c.l.b16 %v2930
      %v3022 = vunpack.c.l.b16 %v2931
      %v3023 = vunpack.c.l.b16 %v2932
      %v3024 = vunpack.c.l.b16 %v2933
      %v3025 = vunpack.c.l.b16 %v2934
      %v3026 = vunpack.c.l.b16 %v2935
      %v3027 = vunpack.c.l.b16 %v2936
      %v3028 = vunpack.c.l.b16 %v2937
      %v3029 = vunpack.c.l.b16 %v2938
      %v3030 = vunpack.c.l.b16 %v2939
      %v3031 = vunpack.c.l.b16 %v2940
      %v3032 = vunpack.c.l.b16 %v2941
      %v3033 = vunpack.c.l.b16 %v2942
      %v3034 = vunpack.c.l.b16 %v2943
      %v3035 = vunpack.c.l.b16 %v2944
      %v3036 = vpack.c.b16 %v3021, %v3020
      %v3037 = vpack.c.b16 %v3023, %v3022
      %v3038 = vpack.c.b16 %v3025, %v3024
      %v3039 = vpack.c.b16 %v3027, %v3026
      %v3040 = vpack.c.b16 %v3029, %v3028
      %v3041 = vpack.c.b16 %v3031, %v3030
      %v3042 = vpack.c.b16 %v3033, %v3032
      %v3043 = vpack.c.b16 %v3035, %v3034
      %3052 = vmatpush.bf16.msra.mxu0 %v3043
      %3053 = vmatpush.bf16.msra.mxu0 %v3042
      %3054 = vmatpush.bf16.msra.mxu0 %v3041
      %3055 = vmatpush.bf16.msra.mxu0 %v3040
      %3056 = vmatpush.bf16.msra.mxu0 %v3039
      %3057 = vmatpush.bf16.msra.mxu0 %v3038
      %3058 = vmatpush.bf16.msra.mxu0 %v3037
      %3059 = vmatpush.bf16.msra.mxu0 %v3036
      %3060 = vmatmul.bf16.gmra.mxu0 %v2951
      %v3061 = vpop.f32.mrf.mxu0
      %v3062 = vadd.f32 0.0, %v3061
      %v3063 = vpop.f32.mrf.mxu0
      %v3064 = vadd.f32 0.0, %v3063
      %3065 = vmatmul.bf16.gmra.mxu0 %v2953
      %v3066 = vpop.f32.mrf.mxu0
      %v3067 = vadd.f32 0.0, %v3066
      %v3068 = vpop.f32.mrf.mxu0
      %v3069 = vadd.f32 0.0, %v3068
      %3070 = vmatmul.bf16.gmra.mxu0 %v2955
      %v3071 = vpop.f32.mrf.mxu0
      %v3072 = vadd.f32 0.0, %v3071
      %v3073 = vpop.f32.mrf.mxu0
      %v3074 = vadd.f32 0.0, %v3073
      %3075 = vmatmul.bf16.gmra.mxu0 %v2957
      %v3076 = vpop.f32.mrf.mxu0
      %v3077 = vadd.f32 0.0, %v3076
      %v3078 = vpop.f32.mrf.mxu0
      %v3079 = vadd.f32 0.0, %v3078
      %3080 = vmatmul.bf16.gmra.mxu0 %v2959
      %v3081 = vpop.f32.mrf.mxu0
      %v3082 = vadd.f32 0.0, %v3081
      %v3083 = vpop.f32.mrf.mxu0
      %v3084 = vadd.f32 0.0, %v3083
      %3085 = vmatmul.bf16.gmra.mxu0 %v2961
      %v3086 = vpop.f32.mrf.mxu0
      %v3087 = vadd.f32 0.0, %v3086
      %v3088 = vpop.f32.mrf.mxu0
      %v3089 = vadd.f32 0.0, %v3088
      %3090 = vmatmul.bf16.gmra.mxu0 %v2963
      %v3091 = vpop.f32.mrf.mxu0
      %v3092 = vadd.f32 0.0, %v3091
      %v3093 = vpop.f32.mrf.mxu0
      %v3094 = vadd.f32 0.0, %v3093
      %3095 = vmatmul.bf16.gmra.mxu0 %v2965
      %v3096 = vpop.f32.mrf.mxu0
      %v3097 = vadd.f32 0.0, %v3096
      %v3098 = vpop.f32.mrf.mxu0
      %v3099 = vadd.f32 0.0, %v3098
      %3100 = vmatmul.bf16.gmra.mxu0 %v2967
      %v3101 = vpop.f32.mrf.mxu0
      %v3102 = vadd.f32 0.0, %v3101
      %v3103 = vpop.f32.mrf.mxu0
      %v3104 = vadd.f32 0.0, %v3103
      %3105 = vmatmul.bf16.gmra.mxu0 %v2969
      %v3106 = vpop.f32.mrf.mxu0
      %v3107 = vadd.f32 0.0, %v3106
      %v3108 = vpop.f32.mrf.mxu0
      %v3109 = vadd.f32 0.0, %v3108
      %3110 = vmatmul.bf16.gmra.mxu0 %v2971
      %v3111 = vpop.f32.mrf.mxu0
      %v3112 = vadd.f32 0.0, %v3111
      %v3113 = vpop.f32.mrf.mxu0
      %v3114 = vadd.f32 0.0, %v3113
      %3115 = vmatmul.bf16.gmra.mxu0 %v2973
      %v3116 = vpop.f32.mrf.mxu0
      %v3117 = vadd.f32 0.0, %v3116
      %v3118 = vpop.f32.mrf.mxu0
      %v3119 = vadd.f32 0.0, %v3118
      %3120 = vmatmul.bf16.gmra.mxu0 %v2975
      %v3121 = vpop.f32.mrf.mxu0
      %v3122 = vadd.f32 0.0, %v3121
      %v3123 = vpop.f32.mrf.mxu0
      %v3124 = vadd.f32 0.0, %v3123
      %3125 = vmatmul.bf16.gmra.mxu0 %v2977
      %v3126 = vpop.f32.mrf.mxu0
      %v3127 = vadd.f32 0.0, %v3126
      %v3128 = vpop.f32.mrf.mxu0
      %v3129 = vadd.f32 0.0, %v3128
      %3130 = vmatmul.bf16.gmra.mxu0 %v2979
      %v3131 = vpop.f32.mrf.mxu0
      %v3132 = vadd.f32 0.0, %v3131
      %v3133 = vpop.f32.mrf.mxu0
      %v3134 = vadd.f32 0.0, %v3133
      %3135 = vmatmul.bf16.gmra.mxu0 %v2981
      %v3136 = vpop.f32.mrf.mxu0
      %v3137 = vadd.f32 0.0, %v3136
      %v3138 = vpop.f32.mrf.mxu0
      %v3139 = vadd.f32 0.0, %v3138
      %3140 = vmatmul.bf16.gmra.mxu0 %v2983
      %v3141 = vpop.f32.mrf.mxu0
      %v3142 = vadd.f32 0.0, %v3141
      %v3143 = vpop.f32.mrf.mxu0
      %v3144 = vadd.f32 0.0, %v3143
      %3145 = vmatmul.bf16.gmra.mxu0 %v2985
      %v3146 = vpop.f32.mrf.mxu0
      %v3147 = vadd.f32 0.0, %v3146
      %v3148 = vpop.f32.mrf.mxu0
      %v3149 = vadd.f32 0.0, %v3148
      %3150 = vdwg.mxu0
      %v3151 = vadd.f32 %v2891, %v3062
      %v3152 = vadd.f32 %v2892, %v3064
      %v3153 = vadd.f32 %v2893, %v3067
      %v3154 = vadd.f32 %v2894, %v3069
      %v3155 = vadd.f32 %v2895, %v3072
      %v3156 = vadd.f32 %v2896, %v3074
      %v3157 = vadd.f32 %v2897, %v3077
      %v3158 = vadd.f32 %v2898, %v3079
      %v3159 = vadd.f32 %v2899, %v3082
      %v3160 = vadd.f32 %v2900, %v3084
      %v3161 = vadd.f32 %v2901, %v3087
      %v3162 = vadd.f32 %v2902, %v3089
      %v3163 = vadd.f32 %v2903, %v3092
      %v3164 = vadd.f32 %v2904, %v3094
      %v3165 = vadd.f32 %v2905, %v3097
      %v3166 = vadd.f32 %v2906, %v3099
      %v3167 = vadd.f32 %v2907, %v3102
      %v3168 = vadd.f32 %v2908, %v3104
      %v3169 = vadd.f32 %v2909, %v3107
      %v3170 = vadd.f32 %v2910, %v3109
      %v3171 = vadd.f32 %v2911, %v3112
      %v3172 = vadd.f32 %v2912, %v3114
      %v3173 = vadd.f32 %v2913, %v3117
      %v3174 = vadd.f32 %v2914, %v3119
      %v3175 = vadd.f32 %v2915, %v3122
      %v3176 = vadd.f32 %v2916, %v3124
      %v3177 = vadd.f32 %v2917, %v3127
      %v3178 = vadd.f32 %v2918, %v3129
      %v3179 = vadd.f32 %v2919, %v3132
      %v3180 = vadd.f32 %v2920, %v3134
      %v3181 = vadd.f32 %v2921, %v3137
      %v3182 = vadd.f32 %v2922, %v3139
      %v3183 = vadd.f32 %v2923, %v3142
      %v3184 = vadd.f32 %v2924, %v3144
      %v3185 = vadd.f32 %v2925, %v3147
      %v3186 = vadd.f32 %v2926, %v3149
      %v3187 = vld [vmem:[%s2] sm:$0x1]
      %v3189 = vperm.slane %v3187, 0
      %v3191 = vadd.f32 %v3151, %v3189
      %v3192 = vadd.f32 %v3152, %v3189
      %v3193 = vadd.f32 %v3153, %v3189
      %v3194 = vadd.f32 %v3154, %v3189
      %v3195 = vadd.f32 %v3155, %v3189
      %v3196 = vadd.f32 %v3156, %v3189
      %v3197 = vadd.f32 %v3157, %v3189
      %v3198 = vadd.f32 %v3158, %v3189
      %v3199 = vadd.f32 %v3159, %v3189
      %v3200 = vadd.f32 %v3160, %v3189
      %v3201 = vadd.f32 %v3161, %v3189
      %v3202 = vadd.f32 %v3162, %v3189
      %v3203 = vadd.f32 %v3163, %v3189
      %v3204 = vadd.f32 %v3164, %v3189
      %v3205 = vadd.f32 %v3165, %v3189
      %v3206 = vadd.f32 %v3166, %v3189
      %v3207 = vadd.f32 %v3167, %v3189
      %v3208 = vadd.f32 %v3168, %v3189
      %v3209 = vadd.f32 %v3169, %v3189
      %v3210 = vadd.f32 %v3170, %v3189
      %v3211 = vadd.f32 %v3171, %v3189
      %v3212 = vadd.f32 %v3172, %v3189
      %v3213 = vadd.f32 %v3173, %v3189
      %v3214 = vadd.f32 %v3174, %v3189
      %v3215 = vadd.f32 %v3175, %v3189
      %v3216 = vadd.f32 %v3176, %v3189
      %v3217 = vadd.f32 %v3177, %v3189
      %v3218 = vadd.f32 %v3178, %v3189
      %v3219 = vadd.f32 %v3179, %v3189
      %v3220 = vadd.f32 %v3180, %v3189
      %v3221 = vadd.f32 %v3181, %v3189
      %v3222 = vadd.f32 %v3182, %v3189
      %v3223 = vadd.f32 %v3183, %v3189
      %v3224 = vadd.f32 %v3184, %v3189
      %v3225 = vadd.f32 %v3185, %v3189
      %v3226 = vadd.f32 %v3186, %v3189
      %v3263 = vrot.slane %v3191, 2
      %v3264 = vrot.slane %v3191, 4
      %v3265 = vrot.slane %v3191, 6
      %v3266 = vrot.slane %v3192, 2
      %v3267 = vrot.slane %v3192, 4
      %v3268 = vrot.slane %v3192, 6
      %v3269 = vrot.slane %v3193, 2
      %v3270 = vrot.slane %v3193, 4
      %v3271 = vrot.slane %v3193, 6
      %v3272 = vrot.slane %v3194, 2
      %v3273 = vrot.slane %v3194, 4
      %v3274 = vrot.slane %v3194, 6
      %v3275 = vrot.slane %v3195, 4
      %v3276 = vrot.slane %v3195, 6
      %v3277 = vrot.slane %v3196, 2
      %v3278 = vrot.slane %v3196, 4
      %v3279 = vrot.slane %v3196, 6
      %v3280 = vrot.slane %v3197, 2
      %v3281 = vrot.slane %v3197, 6
      %v3282 = vrot.slane %v3198, 2
      %v3283 = vrot.slane %v3198, 4
      %v3284 = vrot.slane %v3198, 6
      %v3285 = vrot.slane %v3199, 2
      %v3286 = vrot.slane %v3199, 4
      %v3287 = vrot.slane %v3200, 2
      %v3288 = vrot.slane %v3200, 4
      %v3289 = vrot.slane %v3200, 6
      %v3290 = vrot.slane %v3201, 2
      %v3291 = vrot.slane %v3201, 4
      %v3292 = vrot.slane %v3201, 6
      %v3293 = vrot.slane %v3202, 2
      %v3294 = vrot.slane %v3202, 4
      %v3295 = vrot.slane %v3202, 6
      %v3296 = vrot.slane %v3203, 2
      %v3297 = vrot.slane %v3203, 4
      %v3298 = vrot.slane %v3203, 6
      %v3299 = vrot.slane %v3204, 4
      %v3300 = vrot.slane %v3204, 6
      %v3301 = vrot.slane %v3205, 2
      %v3302 = vrot.slane %v3205, 4
      %v3303 = vrot.slane %v3205, 6
      %v3304 = vrot.slane %v3206, 2
      %v3305 = vrot.slane %v3206, 6
      %v3306 = vrot.slane %v3207, 2
      %v3307 = vrot.slane %v3207, 4
      %v3308 = vrot.slane %v3207, 6
      %v3309 = vrot.slane %v3208, 2
      %v3310 = vrot.slane %v3208, 4
      %v3311 = vrot.slane %v3209, 2
      %v3312 = vrot.slane %v3209, 4
      %v3313 = vrot.slane %v3209, 6
      %v3314 = vrot.slane %v3210, 2
      %v3315 = vrot.slane %v3210, 4
      %v3316 = vrot.slane %v3210, 6
      %v3317 = vrot.slane %v3211, 2
      %v3318 = vrot.slane %v3211, 4
      %v3319 = vrot.slane %v3211, 6
      %v3320 = vrot.slane %v3212, 2
      %v3321 = vrot.slane %v3212, 4
      %v3322 = vrot.slane %v3212, 6
      %v3323 = vrot.slane %v3213, 4
      %v3324 = vrot.slane %v3213, 6
      %v3325 = vrot.slane %v3214, 2
      %v3326 = vrot.slane %v3214, 4
      %v3327 = vrot.slane %v3214, 6
      %v3328 = vrot.slane %v3215, 2
      %v3329 = vrot.slane %v3215, 6
      %v3330 = vrot.slane %v3216, 2
      %v3331 = vrot.slane %v3216, 4
      %v3332 = vrot.slane %v3216, 6
      %v3333 = vrot.slane %v3217, 2
      %v3334 = vrot.slane %v3217, 4
      %v3335 = vrot.slane %v3218, 2
      %v3336 = vrot.slane %v3218, 4
      %v3337 = vrot.slane %v3218, 6
      %v3338 = vrot.slane %v3219, 2
      %v3339 = vrot.slane %v3219, 4
      %v3340 = vrot.slane %v3219, 6
      %v3341 = vrot.slane %v3220, 2
      %v3342 = vrot.slane %v3220, 4
      %v3343 = vrot.slane %v3220, 6
      %v3344 = vrot.slane %v3221, 2
      %v3345 = vrot.slane %v3221, 4
      %v3346 = vrot.slane %v3221, 6
      %v3347 = vrot.slane %v3222, 4
      %v3348 = vrot.slane %v3222, 6
      %v3349 = vrot.slane %v3223, 2
      %v3350 = vrot.slane %v3223, 4
      %v3351 = vrot.slane %v3223, 6
      %v3352 = vrot.slane %v3224, 2
      %v3353 = vrot.slane %v3224, 6
      %v3354 = vrot.slane %v3225, 2
      %v3355 = vrot.slane %v3225, 4
      %v3356 = vrot.slane %v3225, 6
      %v3357 = vrot.slane %v3226, 2
      %v3358 = vrot.slane %v3226, 4
      %3455 = vst [vmem:[#allocation1] ss:$4 sm:$0xff] %v3191
      %s3456 = scalar_lea.vmem [#allocation1], 1
      %3457 = vst [vmem:[%s3456] ss:$4 sm:$0xff] %v3263
      %s3458 = scalar_lea.vmem [#allocation1], 2
      %3459 = vst [vmem:[%s3458] ss:$4 sm:$0xff] %v3264
      %s3460 = scalar_lea.vmem [#allocation1], 3
      %3461 = vst [vmem:[%s3460] ss:$4 sm:$0xff] %v3265
      %s3462 = scalar_lea.vmem [#allocation1], 32
      %3463 = vst [vmem:[%s3462] ss:$4 sm:$0xff] %v3192
      %s3464 = scalar_lea.vmem [#allocation1], 33
      %3465 = vst [vmem:[%s3464] ss:$4 sm:$0xff] %v3266
      %s3466 = scalar_lea.vmem [#allocation1], 34
      %3467 = vst [vmem:[%s3466] ss:$4 sm:$0xff] %v3267
      %s3468 = scalar_lea.vmem [#allocation1], 35
      %3469 = vst [vmem:[%s3468] ss:$4 sm:$0xff] %v3268
      %v3470 = vld.sshfl [vmem:[#allocation1] sm:$0xff pattern:$0x73625140]
      %v3471 = vld.sshfl [vmem:[#allocation1 + $0x20] sm:$0xff pattern:$0x73625140]
      %3472 = vst [vmem:[#allocation1] ss:$4 sm:$0xff] %v3269
      %3473 = vst [vmem:[%s3456] ss:$4 sm:$0xff] %v3270
      %3474 = vst [vmem:[%s3458] ss:$4 sm:$0xff] %v3271
      %3475 = vst [vmem:[%s3460] ss:$4 sm:$0xff] %v3194
      %3476 = vst [vmem:[%s3462] ss:$4 sm:$0xff] %v3272
      %3477 = vst [vmem:[%s3464] ss:$4 sm:$0xff] %v3273
      %3478 = vst [vmem:[%s3466] ss:$4 sm:$0xff] %v3274
      %3479 = vst [vmem:[%s3468] ss:$4 sm:$0xff] %v3195
      %v3480 = vld.sshfl [vmem:[#allocation1] sm:$0xff pattern:$0x73625140]
      %v3481 = vld.sshfl [vmem:[#allocation1 + $0x20] sm:$0xff pattern:$0x73625140]
      %3482 = vst [vmem:[#allocation1] ss:$4 sm:$0xff] %v3275
      %3483 = vst [vmem:[%s3456] ss:$4 sm:$0xff] %v3276
      %3484 = vst [vmem:[%s3458] ss:$4 sm:$0xff] %v3196
      %3485 = vst [vmem:[%s3460] ss:$4 sm:$0xff] %v3277
      %3486 = vst [vmem:[%s3462] ss:$4 sm:$0xff] %v3278
      %3487 = vst [vmem:[%s3464] ss:$4 sm:$0xff] %v3279
      %3488 = vst [vmem:[%s3466] ss:$4 sm:$0xff] %v3197
      %3489 = vst [vmem:[%s3468] ss:$4 sm:$0xff] %v3280
      %v3490 = vld.sshfl [vmem:[#allocation1] sm:$0xff pattern:$0x73625140]
      %v3491 = vld.sshfl [vmem:[#allocation1 + $0x20] sm:$0xff pattern:$0x73625140]
      %3492 = vst [vmem:[#allocation1] ss:$4 sm:$0xff] %v3281
      %3493 = vst [vmem:[%s3456] ss:$4 sm:$0xff] %v3198
      %3494 = vst [vmem:[%s3458] ss:$4 sm:$0xff] %v3282
      %3495 = vst [vmem:[%s3460] ss:$4 sm:$0xff] %v3283
      %3496 = vst [vmem:[%s3462] ss:$4 sm:$0xff] %v3284
      %3497 = vst [vmem:[%s3464] ss:$4 sm:$0xff] %v3199
      %3498 = vst [vmem:[%s3466] ss:$4 sm:$0xff] %v3285
      %3499 = vst [vmem:[%s3468] ss:$4 sm:$0xff] %v3286
      %v3500 = vld.sshfl [vmem:[#allocation1] sm:$0xff pattern:$0x73625140]
      %v3501 = vld.sshfl [vmem:[#allocation1 + $0x20] sm:$0xff pattern:$0x73625140]
      %3502 = vst [vmem:[#allocation1] ss:$4 sm:$0xff] %v3200
      %3503 = vst [vmem:[%s3456] ss:$4 sm:$0xff] %v3287
      %3504 = vst [vmem:[%s3458] ss:$4 sm:$0xff] %v3288
      %3505 = vst [vmem:[%s3460] ss:$4 sm:$0xff] %v3289
      %3506 = vst [vmem:[%s3462] ss:$4 sm:$0xff] %v3201
      %3507 = vst [vmem:[%s3464] ss:$4 sm:$0xff] %v3290
      %3508 = vst [vmem:[%s3466] ss:$4 sm:$0xff] %v3291
      %3509 = vst [vmem:[%s3468] ss:$4 sm:$0xff] %v3292
      %v3510 = vld.sshfl [vmem:[#allocation1] sm:$0xff pattern:$0x73625140]
      %v3511 = vld.sshfl [vmem:[#allocation1 + $0x20] sm:$0xff pattern:$0x73625140]
      %3512 = vst [vmem:[#allocation1] ss:$4 sm:$0xff] %v3293
      %3513 = vst [vmem:[%s3456] ss:$4 sm:$0xff] %v3294
      %3514 = vst [vmem:[%s3458] ss:$4 sm:$0xff] %v3295
      %3515 = vst [vmem:[%s3460] ss:$4 sm:$0xff] %v3203
      %3516 = vst [vmem:[%s3462] ss:$4 sm:$0xff] %v3296
      %3517 = vst [vmem:[%s3464] ss:$4 sm:$0xff] %v3297
      %3518 = vst [vmem:[%s3466] ss:$4 sm:$0xff] %v3298
      %3519 = vst [vmem:[%s3468] ss:$4 sm:$0xff] %v3204
      %v3520 = vld.sshfl [vmem:[#allocation1] sm:$0xff pattern:$0x73625140]
      %v3521 = vld.sshfl [vmem:[#allocation1 + $0x20] sm:$0xff pattern:$0x73625140]
      %3522 = vst [vmem:[#allocation1] ss:$4 sm:$0xff] %v3299
      %3523 = vst [vmem:[%s3456] ss:$4 sm:$0xff] %v3300
      %3524 = vst [vmem:[%s3458] ss:$4 sm:$0xff] %v3205
      %3525 = vst [vmem:[%s3460] ss:$4 sm:$0xff] %v3301
      %3526 = vst [vmem:[%s3462] ss:$4 sm:$0xff] %v3302
      %3527 = vst [vmem:[%s3464] ss:$4 sm:$0xff] %v3303
      %3528 = vst [vmem:[%s3466] ss:$4 sm:$0xff] %v3206
      %3529 = vst [vmem:[%s3468] ss:$4 sm:$0xff] %v3304
      %v3530 = vld.sshfl [vmem:[#allocation1] sm:$0xff pattern:$0x73625140]
      %v3531 = vld.sshfl [vmem:[#allocation1 + $0x20] sm:$0xff pattern:$0x73625140]
      %3532 = vst [vmem:[#allocation1] ss:$4 sm:$0xff] %v3305
      %3533 = vst [vmem:[%s3456] ss:$4 sm:$0xff] %v3207
      %3534 = vst [vmem:[%s3458] ss:$4 sm:$0xff] %v3306
      %3535 = vst [vmem:[%s3460] ss:$4 sm:$0xff] %v3307
      %3536 = vst [vmem:[%s3462] ss:$4 sm:$0xff] %v3308
      %3537 = vst [vmem:[%s3464] ss:$4 sm:$0xff] %v3208
      %3538 = vst [vmem:[%s3466] ss:$4 sm:$0xff] %v3309
      %3539 = vst [vmem:[%s3468] ss:$4 sm:$0xff] %v3310
      %v3540 = vld.sshfl [vmem:[#allocation1] sm:$0xff pattern:$0x73625140]
      %v3541 = vld.sshfl [vmem:[#allocation1 + $0x20] sm:$0xff pattern:$0x73625140]
      %3542 = vst [vmem:[#allocation1] ss:$4 sm:$0xff] %v3209
      %3543 = vst [vmem:[%s3456] ss:$4 sm:$0xff] %v3311
      %3544 = vst [vmem:[%s3458] ss:$4 sm:$0xff] %v3312
      %3545 = vst [vmem:[%s3460] ss:$4 sm:$0xff] %v3313
      %3546 = vst [vmem:[%s3462] ss:$4 sm:$0xff] %v3210
      %3547 = vst [vmem:[%s3464] ss:$4 sm:$0xff] %v3314
      %3548 = vst [vmem:[%s3466] ss:$4 sm:$0xff] %v3315
      %3549 = vst [vmem:[%s3468] ss:$4 sm:$0xff] %v3316
      %v3550 = vld.sshfl [vmem:[#allocation1] sm:$0xff pattern:$0x73625140]
      %v3551 = vld.sshfl [vmem:[#allocation1 + $0x20] sm:$0xff pattern:$0x73625140]
      %3552 = vst [vmem:[#allocation1] ss:$4 sm:$0xff] %v3317
      %3553 = vst [vmem:[%s3456] ss:$4 sm:$0xff] %v3318
      %3554 = vst [vmem:[%s3458] ss:$4 sm:$0xff] %v3319
      %3555 = vst [vmem:[%s3460] ss:$4 sm:$0xff] %v3212
      %3556 = vst [vmem:[%s3462] ss:$4 sm:$0xff] %v3320
      %3557 = vst [vmem:[%s3464] ss:$4 sm:$0xff] %v3321
      %3558 = vst [vmem:[%s3466] ss:$4 sm:$0xff] %v3322
      %3559 = vst [vmem:[%s3468] ss:$4 sm:$0xff] %v3213
      %v3560 = vld.sshfl [vmem:[#allocation1] sm:$0xff pattern:$0x73625140]
      %v3561 = vld.sshfl [vmem:[#allocation1 + $0x20] sm:$0xff pattern:$0x73625140]
      %3562 = vst [vmem:[#allocation1] ss:$4 sm:$0xff] %v3323
      %3563 = vst [vmem:[%s3456] ss:$4 sm:$0xff] %v3324
      %3564 = vst [vmem:[%s3458] ss:$4 sm:$0xff] %v3214
      %3565 = vst [vmem:[%s3460] ss:$4 sm:$0xff] %v3325
      %3566 = vst [vmem:[%s3462] ss:$4 sm:$0xff] %v3326
      %3567 = vst [vmem:[%s3464] ss:$4 sm:$0xff] %v3327
      %3568 = vst [vmem:[%s3466] ss:$4 sm:$0xff] %v3215
      %3569 = vst [vmem:[%s3468] ss:$4 sm:$0xff] %v3328
      %v3570 = vld.sshfl [vmem:[#allocation1] sm:$0xff pattern:$0x73625140]
      %v3571 = vld.sshfl [vmem:[#allocation1 + $0x20] sm:$0xff pattern:$0x73625140]
      %3572 = vst [vmem:[#allocation1] ss:$4 sm:$0xff] %v3329
      %3573 = vst [vmem:[%s3456] ss:$4 sm:$0xff] %v3216
      %3574 = vst [vmem:[%s3458] ss:$4 sm:$0xff] %v3330
      %3575 = vst [vmem:[%s3460] ss:$4 sm:$0xff] %v3331
      %3576 = vst [vmem:[%s3462] ss:$4 sm:$0xff] %v3332
      %3577 = vst [vmem:[%s3464] ss:$4 sm:$0xff] %v3217
      %3578 = vst [vmem:[%s3466] ss:$4 sm:$0xff] %v3333
      %3579 = vst [vmem:[%s3468] ss:$4 sm:$0xff] %v3334
      %v3580 = vld.sshfl [vmem:[#allocation1] sm:$0xff pattern:$0x73625140]
      %v3581 = vld.sshfl [vmem:[#allocation1 + $0x20] sm:$0xff pattern:$0x73625140]
      %3582 = vst [vmem:[#allocation1] ss:$4 sm:$0xff] %v3218
      %3583 = vst [vmem:[%s3456] ss:$4 sm:$0xff] %v3335
      %3584 = vst [vmem:[%s3458] ss:$4 sm:$0xff] %v3336
      %3585 = vst [vmem:[%s3460] ss:$4 sm:$0xff] %v3337
      %3586 = vst [vmem:[%s3462] ss:$4 sm:$0xff] %v3219
      %3587 = vst [vmem:[%s3464] ss:$4 sm:$0xff] %v3338
      %3588 = vst [vmem:[%s3466] ss:$4 sm:$0xff] %v3339
      %3589 = vst [vmem:[%s3468] ss:$4 sm:$0xff] %v3340
      %v3590 = vld.sshfl [vmem:[#allocation1] sm:$0xff pattern:$0x73625140]
      %v3591 = vld.sshfl [vmem:[#allocation1 + $0x20] sm:$0xff pattern:$0x73625140]
      %3592 = vst [vmem:[#allocation1] ss:$4 sm:$0xff] %v3341
      %3593 = vst [vmem:[%s3456] ss:$4 sm:$0xff] %v3342
      %3594 = vst [vmem:[%s3458] ss:$4 sm:$0xff] %v3343
      %3595 = vst [vmem:[%s3460] ss:$4 sm:$0xff] %v3221
      %3596 = vst [vmem:[%s3462] ss:$4 sm:$0xff] %v3344
      %3597 = vst [vmem:[%s3464] ss:$4 sm:$0xff] %v3345
      %3598 = vst [vmem:[%s3466] ss:$4 sm:$0xff] %v3346
      %3599 = vst [vmem:[%s3468] ss:$4 sm:$0xff] %v3222
      %v3600 = vld.sshfl [vmem:[#allocation1] sm:$0xff pattern:$0x73625140]
      %v3601 = vld.sshfl [vmem:[#allocation1 + $0x20] sm:$0xff pattern:$0x73625140]
      %3602 = vst [vmem:[#allocation1] ss:$4 sm:$0xff] %v3347
      %3603 = vst [vmem:[%s3456] ss:$4 sm:$0xff] %v3348
      %3604 = vst [vmem:[%s3458] ss:$4 sm:$0xff] %v3223
      %3605 = vst [vmem:[%s3460] ss:$4 sm:$0xff] %v3349
      %3606 = vst [vmem:[%s3462] ss:$4 sm:$0xff] %v3350
      %3607 = vst [vmem:[%s3464] ss:$4 sm:$0xff] %v3351
      %3608 = vst [vmem:[%s3466] ss:$4 sm:$0xff] %v3224
      %3609 = vst [vmem:[%s3468] ss:$4 sm:$0xff] %v3352
      %v3610 = vld.sshfl [vmem:[#allocation1] sm:$0xff pattern:$0x73625140]
      %v3611 = vld.sshfl [vmem:[#allocation1 + $0x20] sm:$0xff pattern:$0x73625140]
      %3612 = vst [vmem:[#allocation1] ss:$4 sm:$0xff] %v3353
      %3613 = vst [vmem:[%s3456] ss:$4 sm:$0xff] %v3225
      %3614 = vst [vmem:[%s3458] ss:$4 sm:$0xff] %v3354
      %3615 = vst [vmem:[%s3460] ss:$4 sm:$0xff] %v3355
      %3616 = vst [vmem:[%s3462] ss:$4 sm:$0xff] %v3356
      %3617 = vst [vmem:[%s3464] ss:$4 sm:$0xff] %v3226
      %3618 = vst [vmem:[%s3466] ss:$4 sm:$0xff] %v3357
      %3619 = vst [vmem:[%s3468] ss:$4 sm:$0xff] %v3358
      %v3620 = vld.sshfl [vmem:[#allocation1] sm:$0xff pattern:$0x73625140]
      %v3621 = vld.sshfl [vmem:[#allocation1 + $0x20] sm:$0xff pattern:$0x73625140]
      %v3654 = vadd.f32 %v3470, %v3471
      %v3655 = vadd.f32 %v3654, %v3480
      %v3656 = vadd.f32 %v3655, %v3481
      %v3657 = vadd.f32 %v3656, %v3490
      %v3658 = vadd.f32 %v3657, %v3491
      %v3659 = vadd.f32 %v3658, %v3500
      %v3660 = vadd.f32 %v3659, %v3501
      %v3661 = vadd.f32 %v3660, %v3510
      %v3662 = vadd.f32 %v3661, %v3511
      %v3663 = vadd.f32 %v3662, %v3520
      %v3664 = vadd.f32 %v3663, %v3521
      %v3665 = vadd.f32 %v3664, %v3530
      %v3666 = vadd.f32 %v3665, %v3531
      %v3667 = vadd.f32 %v3666, %v3540
      %v3668 = vadd.f32 %v3667, %v3541
      %v3669 = vadd.f32 %v3668, %v3550
      %v3670 = vadd.f32 %v3669, %v3551
      %v3671 = vadd.f32 %v3670, %v3560
      %v3672 = vadd.f32 %v3671, %v3561
      %v3673 = vadd.f32 %v3672, %v3570
      %v3674 = vadd.f32 %v3673, %v3571
      %v3675 = vadd.f32 %v3674, %v3580
      %v3676 = vadd.f32 %v3675, %v3581
      %v3677 = vadd.f32 %v3676, %v3590
      %v3678 = vadd.f32 %v3677, %v3591
      %v3679 = vadd.f32 %v3678, %v3600
      %v3680 = vadd.f32 %v3679, %v3601
      %v3681 = vadd.f32 %v3680, %v3610
      %v3682 = vadd.f32 %v3681, %v3611
      %v3683 = vadd.f32 %v3682, %v3620
      %v3684 = vadd.f32 %v3683, %v3621
      %v3685 = vrot.slane %v3684, 4
      %v3686 = vadd.f32 %v3684, %v3685
      %v3687 = vrot.slane %v3686, 2
      %v3688 = vadd.f32 %v3686, %v3687
      %v3689 = vrot.slane %v3688, 1
      %v3690 = vadd.f32 %v3688, %v3689
      %v3691 = vmul.f32 %v3191, %v3191
      %v3692 = vmul.f32 %v3263, %v3263
      %v3693 = vmul.f32 %v3264, %v3264
      %v3694 = vmul.f32 %v3265, %v3265
      %v3695 = vmul.f32 %v3192, %v3192
      %v3696 = vmul.f32 %v3266, %v3266
      %v3697 = vmul.f32 %v3267, %v3267
      %v3698 = vmul.f32 %v3268, %v3268
      %v3699 = vmul.f32 %v3269, %v3269
      %v3700 = vmul.f32 %v3270, %v3270
      %v3701 = vmul.f32 %v3271, %v3271
      %v3702 = vmul.f32 %v3194, %v3194
      %v3703 = vmul.f32 %v3272, %v3272
      %v3704 = vmul.f32 %v3273, %v3273
      %v3705 = vmul.f32 %v3274, %v3274
      %v3706 = vmul.f32 %v3195, %v3195
      %v3707 = vmul.f32 %v3275, %v3275
      %v3708 = vmul.f32 %v3276, %v3276
      %v3709 = vmul.f32 %v3196, %v3196
      %v3710 = vmul.f32 %v3277, %v3277
      %v3711 = vmul.f32 %v3278, %v3278
      %v3712 = vmul.f32 %v3279, %v3279
      %v3713 = vmul.f32 %v3197, %v3197
      %v3714 = vmul.f32 %v3280, %v3280
      %v3715 = vmul.f32 %v3281, %v3281
      %v3716 = vmul.f32 %v3198, %v3198
      %v3717 = vmul.f32 %v3282, %v3282
      %v3718 = vmul.f32 %v3283, %v3283
      %v3719 = vmul.f32 %v3284, %v3284
      %v3720 = vmul.f32 %v3199, %v3199
      %v3721 = vmul.f32 %v3285, %v3285
      %v3722 = vmul.f32 %v3286, %v3286
      %v3723 = vmul.f32 %v3200, %v3200
      %v3724 = vmul.f32 %v3287, %v3287
      %v3725 = vmul.f32 %v3288, %v3288
      %v3726 = vmul.f32 %v3289, %v3289
      %v3727 = vmul.f32 %v3201, %v3201
      %v3728 = vmul.f32 %v3290, %v3290
      %v3729 = vmul.f32 %v3291, %v3291
      %v3730 = vmul.f32 %v3292, %v3292
      %v3731 = vmul.f32 %v3293, %v3293
      %v3732 = vmul.f32 %v3294, %v3294
      %v3733 = vmul.f32 %v3295, %v3295
      %v3734 = vmul.f32 %v3203, %v3203
      %v3735 = vmul.f32 %v3296, %v3296
      %v3736 = vmul.f32 %v3297, %v3297
      %v3737 = vmul.f32 %v3298, %v3298
      %v3738 = vmul.f32 %v3204, %v3204
      %v3739 = vmul.f32 %v3299, %v3299
      %v3740 = vmul.f32 %v3300, %v3300
      %v3741 = vmul.f32 %v3205, %v3205
      %v3742 = vmul.f32 %v3301, %v3301
      %v3743 = vmul.f32 %v3302, %v3302
      %v3744 = vmul.f32 %v3303, %v3303
      %v3745 = vmul.f32 %v3206, %v3206
      %v3746 = vmul.f32 %v3304, %v3304
      %v3747 = vmul.f32 %v3305, %v3305
      %v3748 = vmul.f32 %v3207, %v3207
      %v3749 = vmul.f32 %v3306, %v3306
      %v3750 = vmul.f32 %v3307, %v3307
      %v3751 = vmul.f32 %v3308, %v3308
      %v3752 = vmul.f32 %v3208, %v3208
      %v3753 = vmul.f32 %v3309, %v3309
      %v3754 = vmul.f32 %v3310, %v3310
      %v3755 = vmul.f32 %v3209, %v3209
      %v3756 = vmul.f32 %v3311, %v3311
      %v3757 = vmul.f32 %v3312, %v3312
      %v3758 = vmul.f32 %v3313, %v3313
      %v3759 = vmul.f32 %v3210, %v3210
      %v3760 = vmul.f32 %v3314, %v3314
      %v3761 = vmul.f32 %v3315, %v3315
      %v3762 = vmul.f32 %v3316, %v3316
      %v3763 = vmul.f32 %v3317, %v3317
      %v3764 = vmul.f32 %v3318, %v3318
      %v3765 = vmul.f32 %v3319, %v3319
      %v3766 = vmul.f32 %v3212, %v3212
      %v3767 = vmul.f32 %v3320, %v3320
      %v3768 = vmul.f32 %v3321, %v3321
      %v3769 = vmul.f32 %v3322, %v3322
      %v3770 = vmul.f32 %v3213, %v3213
      %v3771 = vmul.f32 %v3323, %v3323
      %v3772 = vmul.f32 %v3324, %v3324
      %v3773 = vmul.f32 %v3214, %v3214
      %v3774 = vmul.f32 %v3325, %v3325
      %v3775 = vmul.f32 %v3326, %v3326
      %v3776 = vmul.f32 %v3327, %v3327
      %v3777 = vmul.f32 %v3215, %v3215
      %v3778 = vmul.f32 %v3328, %v3328
      %v3779 = vmul.f32 %v3329, %v3329
      %v3780 = vmul.f32 %v3216, %v3216
      %v3781 = vmul.f32 %v3330, %v3330
      %v3782 = vmul.f32 %v3331, %v3331
      %v3783 = vmul.f32 %v3332, %v3332
      %v3784 = vmul.f32 %v3217, %v3217
      %v3785 = vmul.f32 %v3333, %v3333
      %v3786 = vmul.f32 %v3334, %v3334
      %v3787 = vmul.f32 %v3218, %v3218
      %v3788 = vmul.f32 %v3335, %v3335
      %v3789 = vmul.f32 %v3336, %v3336
      %v3790 = vmul.f32 %v3337, %v3337
      %v3791 = vmul.f32 %v3219, %v3219
      %v3792 = vmul.f32 %v3338, %v3338
      %v3793 = vmul.f32 %v3339, %v3339
      %v3794 = vmul.f32 %v3340, %v3340
      %v3795 = vmul.f32 %v3341, %v3341
      %v3796 = vmul.f32 %v3342, %v3342
      %v3797 = vmul.f32 %v3343, %v3343
      %v3798 = vmul.f32 %v3221, %v3221
      %v3799 = vmul.f32 %v3344, %v3344
      %v3800 = vmul.f32 %v3345, %v3345
      %v3801 = vmul.f32 %v3346, %v3346
      %v3802 = vmul.f32 %v3222, %v3222
      %v3803 = vmul.f32 %v3347, %v3347
      %v3804 = vmul.f32 %v3348, %v3348
      %v3805 = vmul.f32 %v3223, %v3223
      %v3806 = vmul.f32 %v3349, %v3349
      %v3807 = vmul.f32 %v3350, %v3350
      %v3808 = vmul.f32 %v3351, %v3351
      %v3809 = vmul.f32 %v3224, %v3224
      %v3810 = vmul.f32 %v3352, %v3352
      %v3811 = vmul.f32 %v3353, %v3353
      %v3812 = vmul.f32 %v3225, %v3225
      %v3813 = vmul.f32 %v3354, %v3354
      %v3814 = vmul.f32 %v3355, %v3355
      %v3815 = vmul.f32 %v3356, %v3356
      %v3816 = vmul.f32 %v3226, %v3226
      %v3817 = vmul.f32 %v3357, %v3357
      %v3818 = vmul.f32 %v3358, %v3358
      %3947 = vst [vmem:[#allocation1] ss:$4 sm:$0xff] %v3691
      %s3948 = scalar_lea.vmem [#allocation1], 1
      %3949 = vst [vmem:[%s3948] ss:$4 sm:$0xff] %v3692
      %s3950 = scalar_lea.vmem [#allocation1], 2
      %3951 = vst [vmem:[%s3950] ss:$4 sm:$0xff] %v3693
      %s3952 = scalar_lea.vmem [#allocation1], 3
      %3953 = vst [vmem:[%s3952] ss:$4 sm:$0xff] %v3694
      %s3954 = scalar_lea.vmem [#allocation1], 32
      %3955 = vst [vmem:[%s3954] ss:$4 sm:$0xff] %v3695
      %s3956 = scalar_lea.vmem [#allocation1], 33
      %3957 = vst [vmem:[%s3956] ss:$4 sm:$0xff] %v3696
      %s3958 = scalar_lea.vmem [#allocation1], 34
      %3959 = vst [vmem:[%s3958] ss:$4 sm:$0xff] %v3697
      %s3960 = scalar_lea.vmem [#allocation1], 35
      %3961 = vst [vmem:[%s3960] ss:$4 sm:$0xff] %v3698
      %v3962 = vld.sshfl [vmem:[#allocation1] sm:$0xff pattern:$0x73625140]
      %v3963 = vld.sshfl [vmem:[#allocation1 + $0x20] sm:$0xff pattern:$0x73625140]
      %3964 = vst [vmem:[#allocation1] ss:$4 sm:$0xff] %v3699
      %3965 = vst [vmem:[%s3948] ss:$4 sm:$0xff] %v3700
      %3966 = vst [vmem:[%s3950] ss:$4 sm:$0xff] %v3701
      %3967 = vst [vmem:[%s3952] ss:$4 sm:$0xff] %v3702
      %3968 = vst [vmem:[%s3954] ss:$4 sm:$0xff] %v3703
      %3969 = vst [vmem:[%s3956] ss:$4 sm:$0xff] %v3704
      %3970 = vst [vmem:[%s3958] ss:$4 sm:$0xff] %v3705
      %3971 = vst [vmem:[%s3960] ss:$4 sm:$0xff] %v3706
      %v3972 = vld.sshfl [vmem:[#allocation1] sm:$0xff pattern:$0x73625140]
      %v3973 = vld.sshfl [vmem:[#allocation1 + $0x20] sm:$0xff pattern:$0x73625140]
      %3974 = vst [vmem:[#allocation1] ss:$4 sm:$0xff] %v3707
      %3975 = vst [vmem:[%s3948] ss:$4 sm:$0xff] %v3708
      %3976 = vst [vmem:[%s3950] ss:$4 sm:$0xff] %v3709
      %3977 = vst [vmem:[%s3952] ss:$4 sm:$0xff] %v3710
      %3978 = vst [vmem:[%s3954] ss:$4 sm:$0xff] %v3711
      %3979 = vst [vmem:[%s3956] ss:$4 sm:$0xff] %v3712
      %3980 = vst [vmem:[%s3958] ss:$4 sm:$0xff] %v3713
      %3981 = vst [vmem:[%s3960] ss:$4 sm:$0xff] %v3714
      %v3982 = vld.sshfl [vmem:[#allocation1] sm:$0xff pattern:$0x73625140]
      %v3983 = vld.sshfl [vmem:[#allocation1 + $0x20] sm:$0xff pattern:$0x73625140]
      %3984 = vst [vmem:[#allocation1] ss:$4 sm:$0xff] %v3715
      %3985 = vst [vmem:[%s3948] ss:$4 sm:$0xff] %v3716
      %3986 = vst [vmem:[%s3950] ss:$4 sm:$0xff] %v3717
      %3987 = vst [vmem:[%s3952] ss:$4 sm:$0xff] %v3718
      %3988 = vst [vmem:[%s3954] ss:$4 sm:$0xff] %v3719
      %3989 = vst [vmem:[%s3956] ss:$4 sm:$0xff] %v3720
      %3990 = vst [vmem:[%s3958] ss:$4 sm:$0xff] %v3721
      %3991 = vst [vmem:[%s3960] ss:$4 sm:$0xff] %v3722
      %v3992 = vld.sshfl [vmem:[#allocation1] sm:$0xff pattern:$0x73625140]
      %v3993 = vld.sshfl [vmem:[#allocation1 + $0x20] sm:$0xff pattern:$0x73625140]
      %3994 = vst [vmem:[#allocation1] ss:$4 sm:$0xff] %v3723
      %3995 = vst [vmem:[%s3948] ss:$4 sm:$0xff] %v3724
      %3996 = vst [vmem:[%s3950] ss:$4 sm:$0xff] %v3725
      %3997 = vst [vmem:[%s3952] ss:$4 sm:$0xff] %v3726
      %3998 = vst [vmem:[%s3954] ss:$4 sm:$0xff] %v3727
      %3999 = vst [vmem:[%s3956] ss:$4 sm:$0xff] %v3728
      %4000 = vst [vmem:[%s3958] ss:$4 sm:$0xff] %v3729
      %4001 = vst [vmem:[%s3960] ss:$4 sm:$0xff] %v3730
      %v4002 = vld.sshfl [vmem:[#allocation1] sm:$0xff pattern:$0x73625140]
      %v4003 = vld.sshfl [vmem:[#allocation1 + $0x20] sm:$0xff pattern:$0x73625140]
      %4004 = vst [vmem:[#allocation1] ss:$4 sm:$0xff] %v3731
      %4005 = vst [vmem:[%s3948] ss:$4 sm:$0xff] %v3732
      %4006 = vst [vmem:[%s3950] ss:$4 sm:$0xff] %v3733
      %4007 = vst [vmem:[%s3952] ss:$4 sm:$0xff] %v3734
      %4008 = vst [vmem:[%s3954] ss:$4 sm:$0xff] %v3735
      %4009 = vst [vmem:[%s3956] ss:$4 sm:$0xff] %v3736
      %4010 = vst [vmem:[%s3958] ss:$4 sm:$0xff] %v3737
      %4011 = vst [vmem:[%s3960] ss:$4 sm:$0xff] %v3738
      %v4012 = vld.sshfl [vmem:[#allocation1] sm:$0xff pattern:$0x73625140]
      %v4013 = vld.sshfl [vmem:[#allocation1 + $0x20] sm:$0xff pattern:$0x73625140]
      %4014 = vst [vmem:[#allocation1] ss:$4 sm:$0xff] %v3739
      %4015 = vst [vmem:[%s3948] ss:$4 sm:$0xff] %v3740
      %4016 = vst [vmem:[%s3950] ss:$4 sm:$0xff] %v3741
      %4017 = vst [vmem:[%s3952] ss:$4 sm:$0xff] %v3742
      %4018 = vst [vmem:[%s3954] ss:$4 sm:$0xff] %v3743
      %4019 = vst [vmem:[%s3956] ss:$4 sm:$0xff] %v3744
      %4020 = vst [vmem:[%s3958] ss:$4 sm:$0xff] %v3745
      %4021 = vst [vmem:[%s3960] ss:$4 sm:$0xff] %v3746
      %v4022 = vld.sshfl [vmem:[#allocation1] sm:$0xff pattern:$0x73625140]
      %v4023 = vld.sshfl [vmem:[#allocation1 + $0x20] sm:$0xff pattern:$0x73625140]
      %4024 = vst [vmem:[#allocation1] ss:$4 sm:$0xff] %v3747
      %4025 = vst [vmem:[%s3948] ss:$4 sm:$0xff] %v3748
      %4026 = vst [vmem:[%s3950] ss:$4 sm:$0xff] %v3749
      %4027 = vst [vmem:[%s3952] ss:$4 sm:$0xff] %v3750
      %4028 = vst [vmem:[%s3954] ss:$4 sm:$0xff] %v3751
      %4029 = vst [vmem:[%s3956] ss:$4 sm:$0xff] %v3752
      %4030 = vst [vmem:[%s3958] ss:$4 sm:$0xff] %v3753
      %4031 = vst [vmem:[%s3960] ss:$4 sm:$0xff] %v3754
      %v4032 = vld.sshfl [vmem:[#allocation1] sm:$0xff pattern:$0x73625140]
      %v4033 = vld.sshfl [vmem:[#allocation1 + $0x20] sm:$0xff pattern:$0x73625140]
      %4034 = vst [vmem:[#allocation1] ss:$4 sm:$0xff] %v3755
      %4035 = vst [vmem:[%s3948] ss:$4 sm:$0xff] %v3756
      %4036 = vst [vmem:[%s3950] ss:$4 sm:$0xff] %v3757
      %4037 = vst [vmem:[%s3952] ss:$4 sm:$0xff] %v3758
      %4038 = vst [vmem:[%s3954] ss:$4 sm:$0xff] %v3759
      %4039 = vst [vmem:[%s3956] ss:$4 sm:$0xff] %v3760
      %4040 = vst [vmem:[%s3958] ss:$4 sm:$0xff] %v3761
      %4041 = vst [vmem:[%s3960] ss:$4 sm:$0xff] %v3762
      %v4042 = vld.sshfl [vmem:[#allocation1] sm:$0xff pattern:$0x73625140]
      %v4043 = vld.sshfl [vmem:[#allocation1 + $0x20] sm:$0xff pattern:$0x73625140]
      %4044 = vst [vmem:[#allocation1] ss:$4 sm:$0xff] %v3763
      %4045 = vst [vmem:[%s3948] ss:$4 sm:$0xff] %v3764
      %4046 = vst [vmem:[%s3950] ss:$4 sm:$0xff] %v3765
      %4047 = vst [vmem:[%s3952] ss:$4 sm:$0xff] %v3766
      %4048 = vst [vmem:[%s3954] ss:$4 sm:$0xff] %v3767
      %4049 = vst [vmem:[%s3956] ss:$4 sm:$0xff] %v3768
      %4050 = vst [vmem:[%s3958] ss:$4 sm:$0xff] %v3769
      %4051 = vst [vmem:[%s3960] ss:$4 sm:$0xff] %v3770
      %v4052 = vld.sshfl [vmem:[#allocation1] sm:$0xff pattern:$0x73625140]
      %v4053 = vld.sshfl [vmem:[#allocation1 + $0x20] sm:$0xff pattern:$0x73625140]
      %4054 = vst [vmem:[#allocation1] ss:$4 sm:$0xff] %v3771
      %4055 = vst [vmem:[%s3948] ss:$4 sm:$0xff] %v3772
      %4056 = vst [vmem:[%s3950] ss:$4 sm:$0xff] %v3773
      %4057 = vst [vmem:[%s3952] ss:$4 sm:$0xff] %v3774
      %4058 = vst [vmem:[%s3954] ss:$4 sm:$0xff] %v3775
      %4059 = vst [vmem:[%s3956] ss:$4 sm:$0xff] %v3776
      %4060 = vst [vmem:[%s3958] ss:$4 sm:$0xff] %v3777
      %4061 = vst [vmem:[%s3960] ss:$4 sm:$0xff] %v3778
      %v4062 = vld.sshfl [vmem:[#allocation1] sm:$0xff pattern:$0x73625140]
      %v4063 = vld.sshfl [vmem:[#allocation1 + $0x20] sm:$0xff pattern:$0x73625140]
      %4064 = vst [vmem:[#allocation1] ss:$4 sm:$0xff] %v3779
      %4065 = vst [vmem:[%s3948] ss:$4 sm:$0xff] %v3780
      %4066 = vst [vmem:[%s3950] ss:$4 sm:$0xff] %v3781
      %4067 = vst [vmem:[%s3952] ss:$4 sm:$0xff] %v3782
      %4068 = vst [vmem:[%s3954] ss:$4 sm:$0xff] %v3783
      %4069 = vst [vmem:[%s3956] ss:$4 sm:$0xff] %v3784
      %4070 = vst [vmem:[%s3958] ss:$4 sm:$0xff] %v3785
      %4071 = vst [vmem:[%s3960] ss:$4 sm:$0xff] %v3786
      %v4072 = vld.sshfl [vmem:[#allocation1] sm:$0xff pattern:$0x73625140]
      %v4073 = vld.sshfl [vmem:[#allocation1 + $0x20] sm:$0xff pattern:$0x73625140]
      %4074 = vst [vmem:[#allocation1] ss:$4 sm:$0xff] %v3787
      %4075 = vst [vmem:[%s3948] ss:$4 sm:$0xff] %v3788
      %4076 = vst [vmem:[%s3950] ss:$4 sm:$0xff] %v3789
      %4077 = vst [vmem:[%s3952] ss:$4 sm:$0xff] %v3790
      %4078 = vst [vmem:[%s3954] ss:$4 sm:$0xff] %v3791
      %4079 = vst [vmem:[%s3956] ss:$4 sm:$0xff] %v3792
      %4080 = vst [vmem:[%s3958] ss:$4 sm:$0xff] %v3793
      %4081 = vst [vmem:[%s3960] ss:$4 sm:$0xff] %v3794
      %v4082 = vld.sshfl [vmem:[#allocation1] sm:$0xff pattern:$0x73625140]
      %v4083 = vld.sshfl [vmem:[#allocation1 + $0x20] sm:$0xff pattern:$0x73625140]
      %4084 = vst [vmem:[#allocation1] ss:$4 sm:$0xff] %v3795
      %4085 = vst [vmem:[%s3948] ss:$4 sm:$0xff] %v3796
      %4086 = vst [vmem:[%s3950] ss:$4 sm:$0xff] %v3797
      %4087 = vst [vmem:[%s3952] ss:$4 sm:$0xff] %v3798
      %4088 = vst [vmem:[%s3954] ss:$4 sm:$0xff] %v3799
      %4089 = vst [vmem:[%s3956] ss:$4 sm:$0xff] %v3800
      %4090 = vst [vmem:[%s3958] ss:$4 sm:$0xff] %v3801
      %4091 = vst [vmem:[%s3960] ss:$4 sm:$0xff] %v3802
      %v4092 = vld.sshfl [vmem:[#allocation1] sm:$0xff pattern:$0x73625140]
      %v4093 = vld.sshfl [vmem:[#allocation1 + $0x20] sm:$0xff pattern:$0x73625140]
      %4094 = vst [vmem:[#allocation1] ss:$4 sm:$0xff] %v3803
      %4095 = vst [vmem:[%s3948] ss:$4 sm:$0xff] %v3804
      %4096 = vst [vmem:[%s3950] ss:$4 sm:$0xff] %v3805
      %4097 = vst [vmem:[%s3952] ss:$4 sm:$0xff] %v3806
      %4098 = vst [vmem:[%s3954] ss:$4 sm:$0xff] %v3807
      %4099 = vst [vmem:[%s3956] ss:$4 sm:$0xff] %v3808
      %4100 = vst [vmem:[%s3958] ss:$4 sm:$0xff] %v3809
      %4101 = vst [vmem:[%s3960] ss:$4 sm:$0xff] %v3810
      %v4102 = vld.sshfl [vmem:[#allocation1] sm:$0xff pattern:$0x73625140]
      %v4103 = vld.sshfl [vmem:[#allocation1 + $0x20] sm:$0xff pattern:$0x73625140]
      %4104 = vst [vmem:[#allocation1] ss:$4 sm:$0xff] %v3811
      %4105 = vst [vmem:[%s3948] ss:$4 sm:$0xff] %v3812
      %4106 = vst [vmem:[%s3950] ss:$4 sm:$0xff] %v3813
      %4107 = vst [vmem:[%s3952] ss:$4 sm:$0xff] %v3814
      %4108 = vst [vmem:[%s3954] ss:$4 sm:$0xff] %v3815
      %4109 = vst [vmem:[%s3956] ss:$4 sm:$0xff] %v3816
      %4110 = vst [vmem:[%s3958] ss:$4 sm:$0xff] %v3817
      %4111 = vst [vmem:[%s3960] ss:$4 sm:$0xff] %v3818
      %v4112 = vld.sshfl [vmem:[#allocation1] sm:$0xff pattern:$0x73625140]
      %v4113 = vld.sshfl [vmem:[#allocation1 + $0x20] sm:$0xff pattern:$0x73625140]
      %v4146 = vadd.f32 %v3962, %v3963
      %v4147 = vadd.f32 %v4146, %v3972
      %v4148 = vadd.f32 %v4147, %v3973
      %v4149 = vadd.f32 %v4148, %v3982
      %v4150 = vadd.f32 %v4149, %v3983
      %v4151 = vadd.f32 %v4150, %v3992
      %v4152 = vadd.f32 %v4151, %v3993
      %v4153 = vadd.f32 %v4152, %v4002
      %v4154 = vadd.f32 %v4153, %v4003
      %v4155 = vadd.f32 %v4154, %v4012
      %v4156 = vadd.f32 %v4155, %v4013
      %v4157 = vadd.f32 %v4156, %v4022
      %v4158 = vadd.f32 %v4157, %v4023
      %v4159 = vadd.f32 %v4158, %v4032
      %v4160 = vadd.f32 %v4159, %v4033
      %v4161 = vadd.f32 %v4160, %v4042
      %v4162 = vadd.f32 %v4161, %v4043
      %v4163 = vadd.f32 %v4162, %v4052
      %v4164 = vadd.f32 %v4163, %v4053
      %v4165 = vadd.f32 %v4164, %v4062
      %v4166 = vadd.f32 %v4165, %v4063
      %v4167 = vadd.f32 %v4166, %v4072
      %v4168 = vadd.f32 %v4167, %v4073
      %v4169 = vadd.f32 %v4168, %v4082
      %v4170 = vadd.f32 %v4169, %v4083
      %v4171 = vadd.f32 %v4170, %v4092
      %v4172 = vadd.f32 %v4171, %v4093
      %v4173 = vadd.f32 %v4172, %v4102
      %v4174 = vadd.f32 %v4173, %v4103
      %v4175 = vadd.f32 %v4174, %v4112
      %v4176 = vadd.f32 %v4175, %v4113
      %v4177 = vrot.slane %v4176, 4
      %v4178 = vadd.f32 %v4176, %v4177
      %v4179 = vrot.slane %v4178, 2
      %v4180 = vadd.f32 %v4178, %v4179
      %v4181 = vrot.slane %v4180, 1
      %v4182 = vadd.f32 %v4180, %v4181
      %vm4183 = vcmask 1040384
      %v4184 = vsel %vm4183, %v3690, %v4182
      %vm4185 = vcmask 1041408
      %v4186 = vsel %vm4185, %v4184, 0.0
      %4187 = vst [vmem:[%s208] sm:$0xff] %v4186
      %4188 = vst [vmem:[#allocation1] ss:$4 sm:$0xff] %v3191
      %s4189 = scalar_lea.vmem [#allocation1], 1
      %4190 = vst [vmem:[%s4189] ss:$4 sm:$0xff] %v3263
      %s4191 = scalar_lea.vmem [#allocation1], 2
      %4192 = vst [vmem:[%s4191] ss:$4 sm:$0xff] %v3264
      %s4193 = scalar_lea.vmem [#allocation1], 3
      %4194 = vst [vmem:[%s4193] ss:$4 sm:$0xff] %v3265
      %s4195 = scalar_lea.vmem [#allocation1], 32
      %4196 = vst [vmem:[%s4195] ss:$4 sm:$0xff] %v3192
      %s4197 = scalar_lea.vmem [#allocation1], 33
      %4198 = vst [vmem:[%s4197] ss:$4 sm:$0xff] %v3266
      %s4199 = scalar_lea.vmem [#allocation1], 34
      %4200 = vst [vmem:[%s4199] ss:$4 sm:$0xff] %v3267
      %s4201 = scalar_lea.vmem [#allocation1], 35
      %4202 = vst [vmem:[%s4201] ss:$4 sm:$0xff] %v3268
      %v4203 = vld.sshfl [vmem:[#allocation1] sm:$0xff pattern:$0x73625140]
      %v4204 = vld.sshfl [vmem:[#allocation1 + $0x20] sm:$0xff pattern:$0x73625140]
      %4205 = vst [vmem:[#allocation1] ss:$4 sm:$0xff] %v3269
      %4206 = vst [vmem:[%s4189] ss:$4 sm:$0xff] %v3270
      %4207 = vst [vmem:[%s4191] ss:$4 sm:$0xff] %v3271
      %4208 = vst [vmem:[%s4193] ss:$4 sm:$0xff] %v3194
      %4209 = vst [vmem:[%s4195] ss:$4 sm:$0xff] %v3272
      %4210 = vst [vmem:[%s4197] ss:$4 sm:$0xff] %v3273
      %4211 = vst [vmem:[%s4199] ss:$4 sm:$0xff] %v3274
      %4212 = vst [vmem:[%s4201] ss:$4 sm:$0xff] %v3195
      %v4213 = vld.sshfl [vmem:[#allocation1] sm:$0xff pattern:$0x73625140]
      %v4214 = vld.sshfl [vmem:[#allocation1 + $0x20] sm:$0xff pattern:$0x73625140]
      %4215 = vst [vmem:[#allocation1] ss:$4 sm:$0xff] %v3275
      %4216 = vst [vmem:[%s4189] ss:$4 sm:$0xff] %v3276
      %4217 = vst [vmem:[%s4191] ss:$4 sm:$0xff] %v3196
      %4218 = vst [vmem:[%s4193] ss:$4 sm:$0xff] %v3277
      %4219 = vst [vmem:[%s4195] ss:$4 sm:$0xff] %v3278
      %4220 = vst [vmem:[%s4197] ss:$4 sm:$0xff] %v3279
      %4221 = vst [vmem:[%s4199] ss:$4 sm:$0xff] %v3197
      %4222 = vst [vmem:[%s4201] ss:$4 sm:$0xff] %v3280
      %v4223 = vld.sshfl [vmem:[#allocation1] sm:$0xff pattern:$0x73625140]
      %v4224 = vld.sshfl [vmem:[#allocation1 + $0x20] sm:$0xff pattern:$0x73625140]
      %4225 = vst [vmem:[#allocation1] ss:$4 sm:$0xff] %v3281
      %4226 = vst [vmem:[%s4189] ss:$4 sm:$0xff] %v3198
      %4227 = vst [vmem:[%s4191] ss:$4 sm:$0xff] %v3282
      %4228 = vst [vmem:[%s4193] ss:$4 sm:$0xff] %v3283
      %4229 = vst [vmem:[%s4195] ss:$4 sm:$0xff] %v3284
      %4230 = vst [vmem:[%s4197] ss:$4 sm:$0xff] %v3199
      %4231 = vst [vmem:[%s4199] ss:$4 sm:$0xff] %v3285
      %4232 = vst [vmem:[%s4201] ss:$4 sm:$0xff] %v3286
      %v4233 = vld.sshfl [vmem:[#allocation1] sm:$0xff pattern:$0x73625140]
      %v4234 = vld.sshfl [vmem:[#allocation1 + $0x20] sm:$0xff pattern:$0x73625140]
      %4235 = vst [vmem:[#allocation1] ss:$4 sm:$0xff] %v3200
      %4236 = vst [vmem:[%s4189] ss:$4 sm:$0xff] %v3287
      %4237 = vst [vmem:[%s4191] ss:$4 sm:$0xff] %v3288
      %4238 = vst [vmem:[%s4193] ss:$4 sm:$0xff] %v3289
      %4239 = vst [vmem:[%s4195] ss:$4 sm:$0xff] %v3201
      %4240 = vst [vmem:[%s4197] ss:$4 sm:$0xff] %v3290
      %4241 = vst [vmem:[%s4199] ss:$4 sm:$0xff] %v3291
      %4242 = vst [vmem:[%s4201] ss:$4 sm:$0xff] %v3292
      %v4243 = vld.sshfl [vmem:[#allocation1] sm:$0xff pattern:$0x73625140]
      %v4244 = vld.sshfl [vmem:[#allocation1 + $0x20] sm:$0xff pattern:$0x73625140]
      %4245 = vst [vmem:[#allocation1] ss:$4 sm:$0xff] %v3293
      %4246 = vst [vmem:[%s4189] ss:$4 sm:$0xff] %v3294
      %4247 = vst [vmem:[%s4191] ss:$4 sm:$0xff] %v3295
      %4248 = vst [vmem:[%s4193] ss:$4 sm:$0xff] %v3203
      %4249 = vst [vmem:[%s4195] ss:$4 sm:$0xff] %v3296
      %4250 = vst [vmem:[%s4197] ss:$4 sm:$0xff] %v3297
      %4251 = vst [vmem:[%s4199] ss:$4 sm:$0xff] %v3298
      %4252 = vst [vmem:[%s4201] ss:$4 sm:$0xff] %v3204
      %v4253 = vld.sshfl [vmem:[#allocation1] sm:$0xff pattern:$0x73625140]
      %v4254 = vld.sshfl [vmem:[#allocation1 + $0x20] sm:$0xff pattern:$0x73625140]
      %4255 = vst [vmem:[#allocation1] ss:$4 sm:$0xff] %v3299
      %4256 = vst [vmem:[%s4189] ss:$4 sm:$0xff] %v3300
      %4257 = vst [vmem:[%s4191] ss:$4 sm:$0xff] %v3205
      %4258 = vst [vmem:[%s4193] ss:$4 sm:$0xff] %v3301
      %4259 = vst [vmem:[%s4195] ss:$4 sm:$0xff] %v3302
      %4260 = vst [vmem:[%s4197] ss:$4 sm:$0xff] %v3303
      %4261 = vst [vmem:[%s4199] ss:$4 sm:$0xff] %v3206
      %4262 = vst [vmem:[%s4201] ss:$4 sm:$0xff] %v3304
      %v4263 = vld.sshfl [vmem:[#allocation1] sm:$0xff pattern:$0x73625140]
      %v4264 = vld.sshfl [vmem:[#allocation1 + $0x20] sm:$0xff pattern:$0x73625140]
      %4265 = vst [vmem:[#allocation1] ss:$4 sm:$0xff] %v3305
      %4266 = vst [vmem:[%s4189] ss:$4 sm:$0xff] %v3207
      %4267 = vst [vmem:[%s4191] ss:$4 sm:$0xff] %v3306
      %4268 = vst [vmem:[%s4193] ss:$4 sm:$0xff] %v3307
      %4269 = vst [vmem:[%s4195] ss:$4 sm:$0xff] %v3308
      %4270 = vst [vmem:[%s4197] ss:$4 sm:$0xff] %v3208
      %4271 = vst [vmem:[%s4199] ss:$4 sm:$0xff] %v3309
      %4272 = vst [vmem:[%s4201] ss:$4 sm:$0xff] %v3310
      %v4273 = vld.sshfl [vmem:[#allocation1] sm:$0xff pattern:$0x73625140]
      %v4274 = vld.sshfl [vmem:[#allocation1 + $0x20] sm:$0xff pattern:$0x73625140]
      %4275 = vst [vmem:[#allocation1] ss:$4 sm:$0xff] %v3209
      %4276 = vst [vmem:[%s4189] ss:$4 sm:$0xff] %v3311
      %4277 = vst [vmem:[%s4191] ss:$4 sm:$0xff] %v3312
      %4278 = vst [vmem:[%s4193] ss:$4 sm:$0xff] %v3313
      %4279 = vst [vmem:[%s4195] ss:$4 sm:$0xff] %v3210
      %4280 = vst [vmem:[%s4197] ss:$4 sm:$0xff] %v3314
      %4281 = vst [vmem:[%s4199] ss:$4 sm:$0xff] %v3315
      %4282 = vst [vmem:[%s4201] ss:$4 sm:$0xff] %v3316
      %v4283 = vld.sshfl [vmem:[#allocation1] sm:$0xff pattern:$0x73625140]
      %v4284 = vld.sshfl [vmem:[#allocation1 + $0x20] sm:$0xff pattern:$0x73625140]
      %4285 = vst [vmem:[#allocation1] ss:$4 sm:$0xff] %v3317
      %4286 = vst [vmem:[%s4189] ss:$4 sm:$0xff] %v3318
      %4287 = vst [vmem:[%s4191] ss:$4 sm:$0xff] %v3319
      %4288 = vst [vmem:[%s4193] ss:$4 sm:$0xff] %v3212
      %4289 = vst [vmem:[%s4195] ss:$4 sm:$0xff] %v3320
      %4290 = vst [vmem:[%s4197] ss:$4 sm:$0xff] %v3321
      %4291 = vst [vmem:[%s4199] ss:$4 sm:$0xff] %v3322
      %4292 = vst [vmem:[%s4201] ss:$4 sm:$0xff] %v3213
      %v4293 = vld.sshfl [vmem:[#allocation1] sm:$0xff pattern:$0x73625140]
      %v4294 = vld.sshfl [vmem:[#allocation1 + $0x20] sm:$0xff pattern:$0x73625140]
      %4295 = vst [vmem:[#allocation1] ss:$4 sm:$0xff] %v3323
      %4296 = vst [vmem:[%s4189] ss:$4 sm:$0xff] %v3324
      %4297 = vst [vmem:[%s4191] ss:$4 sm:$0xff] %v3214
      %4298 = vst [vmem:[%s4193] ss:$4 sm:$0xff] %v3325
      %4299 = vst [vmem:[%s4195] ss:$4 sm:$0xff] %v3326
      %4300 = vst [vmem:[%s4197] ss:$4 sm:$0xff] %v3327
      %4301 = vst [vmem:[%s4199] ss:$4 sm:$0xff] %v3215
      %4302 = vst [vmem:[%s4201] ss:$4 sm:$0xff] %v3328
      %v4303 = vld.sshfl [vmem:[#allocation1] sm:$0xff pattern:$0x73625140]
      %v4304 = vld.sshfl [vmem:[#allocation1 + $0x20] sm:$0xff pattern:$0x73625140]
      %4305 = vst [vmem:[#allocation1] ss:$4 sm:$0xff] %v3329
      %4306 = vst [vmem:[%s4189] ss:$4 sm:$0xff] %v3216
      %4307 = vst [vmem:[%s4191] ss:$4 sm:$0xff] %v3330
      %4308 = vst [vmem:[%s4193] ss:$4 sm:$0xff] %v3331
      %4309 = vst [vmem:[%s4195] ss:$4 sm:$0xff] %v3332
      %4310 = vst [vmem:[%s4197] ss:$4 sm:$0xff] %v3217
      %4311 = vst [vmem:[%s4199] ss:$4 sm:$0xff] %v3333
      %4312 = vst [vmem:[%s4201] ss:$4 sm:$0xff] %v3334
      %v4313 = vld.sshfl [vmem:[#allocation1] sm:$0xff pattern:$0x73625140]
      %v4314 = vld.sshfl [vmem:[#allocation1 + $0x20] sm:$0xff pattern:$0x73625140]
      %4315 = vst [vmem:[#allocation1] ss:$4 sm:$0xff] %v3218
      %4316 = vst [vmem:[%s4189] ss:$4 sm:$0xff] %v3335
      %4317 = vst [vmem:[%s4191] ss:$4 sm:$0xff] %v3336
      %4318 = vst [vmem:[%s4193] ss:$4 sm:$0xff] %v3337
      %4319 = vst [vmem:[%s4195] ss:$4 sm:$0xff] %v3219
      %4320 = vst [vmem:[%s4197] ss:$4 sm:$0xff] %v3338
      %4321 = vst [vmem:[%s4199] ss:$4 sm:$0xff] %v3339
      %4322 = vst [vmem:[%s4201] ss:$4 sm:$0xff] %v3340
      %v4323 = vld.sshfl [vmem:[#allocation1] sm:$0xff pattern:$0x73625140]
      %v4324 = vld.sshfl [vmem:[#allocation1 + $0x20] sm:$0xff pattern:$0x73625140]
      %4325 = vst [vmem:[#allocation1] ss:$4 sm:$0xff] %v3341
      %4326 = vst [vmem:[%s4189] ss:$4 sm:$0xff] %v3342
      %4327 = vst [vmem:[%s4191] ss:$4 sm:$0xff] %v3343
      %4328 = vst [vmem:[%s4193] ss:$4 sm:$0xff] %v3221
      %4329 = vst [vmem:[%s4195] ss:$4 sm:$0xff] %v3344
      %4330 = vst [vmem:[%s4197] ss:$4 sm:$0xff] %v3345
      %4331 = vst [vmem:[%s4199] ss:$4 sm:$0xff] %v3346
      %4332 = vst [vmem:[%s4201] ss:$4 sm:$0xff] %v3222
      %v4333 = vld.sshfl [vmem:[#allocation1] sm:$0xff pattern:$0x73625140]
      %v4334 = vld.sshfl [vmem:[#allocation1 + $0x20] sm:$0xff pattern:$0x73625140]
      %4335 = vst [vmem:[#allocation1] ss:$4 sm:$0xff] %v3347
      %4336 = vst [vmem:[%s4189] ss:$4 sm:$0xff] %v3348
      %4337 = vst [vmem:[%s4191] ss:$4 sm:$0xff] %v3223
      %4338 = vst [vmem:[%s4193] ss:$4 sm:$0xff] %v3349
      %4339 = vst [vmem:[%s4195] ss:$4 sm:$0xff] %v3350
      %4340 = vst [vmem:[%s4197] ss:$4 sm:$0xff] %v3351
      %4341 = vst [vmem:[%s4199] ss:$4 sm:$0xff] %v3224
      %4342 = vst [vmem:[%s4201] ss:$4 sm:$0xff] %v3352
      %v4343 = vld.sshfl [vmem:[#allocation1] sm:$0xff pattern:$0x73625140]
      %v4344 = vld.sshfl [vmem:[#allocation1 + $0x20] sm:$0xff pattern:$0x73625140]
      %4345 = vst [vmem:[#allocation1] ss:$4 sm:$0xff] %v3353
      %4346 = vst [vmem:[%s4189] ss:$4 sm:$0xff] %v3225
      %4347 = vst [vmem:[%s4191] ss:$4 sm:$0xff] %v3354
      %4348 = vst [vmem:[%s4193] ss:$4 sm:$0xff] %v3355
      %4349 = vst [vmem:[%s4195] ss:$4 sm:$0xff] %v3356
      %4350 = vst [vmem:[%s4197] ss:$4 sm:$0xff] %v3226
      %4351 = vst [vmem:[%s4199] ss:$4 sm:$0xff] %v3357
      %4352 = vst [vmem:[%s4201] ss:$4 sm:$0xff] %v3358
      %v4353 = vld.sshfl [vmem:[#allocation1] sm:$0xff pattern:$0x73625140]
      %v4354 = vld.sshfl [vmem:[#allocation1 + $0x20] sm:$0xff pattern:$0x73625140]
      %v4387 = vpack.c.bf16 %v4203, %v4203
      %v4388 = vpack.c.bf16 %v4204, %v4204
      %v4389 = vpack.c.bf16 %v4213, %v4213
      %v4390 = vpack.c.bf16 %v4214, %v4214
      %v4391 = vpack.c.bf16 %v4223, %v4223
      %v4392 = vpack.c.bf16 %v4224, %v4224
      %v4393 = vpack.c.bf16 %v4233, %v4233
      %v4394 = vpack.c.bf16 %v4234, %v4234
      %v4395 = vpack.c.bf16 %v4243, %v4243
      %v4396 = vpack.c.bf16 %v4244, %v4244
      %v4397 = vpack.c.bf16 %v4253, %v4253
      %v4398 = vpack.c.bf16 %v4254, %v4254
      %v4399 = vpack.c.bf16 %v4263, %v4263
      %v4400 = vpack.c.bf16 %v4264, %v4264
      %v4401 = vpack.c.bf16 %v4273, %v4273
      %v4402 = vpack.c.bf16 %v4274, %v4274
      %v4403 = vpack.c.bf16 %v4283, %v4283
      %v4404 = vpack.c.bf16 %v4284, %v4284
      %v4405 = vpack.c.bf16 %v4293, %v4293
      %v4406 = vpack.c.bf16 %v4294, %v4294
      %v4407 = vpack.c.bf16 %v4303, %v4303
      %v4408 = vpack.c.bf16 %v4304, %v4304
      %v4409 = vpack.c.bf16 %v4313, %v4313
      %v4410 = vpack.c.bf16 %v4314, %v4314
      %v4411 = vpack.c.bf16 %v4323, %v4323
      %v4412 = vpack.c.bf16 %v4324, %v4324
      %v4413 = vpack.c.bf16 %v4333, %v4333
      %v4414 = vpack.c.bf16 %v4334, %v4334
      %v4415 = vpack.c.bf16 %v4343, %v4343
      %v4416 = vpack.c.bf16 %v4344, %v4344
      %v4417 = vpack.c.bf16 %v4353, %v4353
      %v4418 = vpack.c.bf16 %v4354, %v4354
      %4419 = vst [vmem:[%s204] sm:$0xf] %v4387
      %4420 = vst [vmem:[%s204 + $0x4] sm:$0xf] %v4388
      %4421 = vst [vmem:[%s204 + $0x8] sm:$0xf] %v4389
      %4422 = vst [vmem:[%s204 + $0xc] sm:$0xf] %v4390
      %4423 = vst [vmem:[%s204 + $0x10] sm:$0xf] %v4391
      %4424 = vst [vmem:[%s204 + $0x14] sm:$0xf] %v4392
      %4425 = vst [vmem:[%s204 + $0x18] sm:$0xf] %v4393
      %4426 = vst [vmem:[%s204 + $0x1c] sm:$0xf] %v4394
      %4427 = vst [vmem:[%s204 + $0x20] sm:$0xf] %v4395
      %4428 = vst [vmem:[%s204 + $0x24] sm:$0xf] %v4396
      %4429 = vst [vmem:[%s204 + $0x28] sm:$0xf] %v4397
      %4430 = vst [vmem:[%s204 + $0x2c] sm:$0xf] %v4398
      %4431 = vst [vmem:[%s204 + $0x30] sm:$0xf] %v4399
      %4432 = vst [vmem:[%s204 + $0x34] sm:$0xf] %v4400
      %4433 = vst [vmem:[%s204 + $0x38] sm:$0xf] %v4401
      %4434 = vst [vmem:[%s204 + $0x3c] sm:$0xf] %v4402
      %4435 = vst [vmem:[%s204 + $0x40] sm:$0xf] %v4403
      %4436 = vst [vmem:[%s204 + $0x44] sm:$0xf] %v4404
      %4437 = vst [vmem:[%s204 + $0x48] sm:$0xf] %v4405
      %4438 = vst [vmem:[%s204 + $0x4c] sm:$0xf] %v4406
      %4439 = vst [vmem:[%s204 + $0x50] sm:$0xf] %v4407
      %4440 = vst [vmem:[%s204 + $0x54] sm:$0xf] %v4408
      %4441 = vst [vmem:[%s204 + $0x58] sm:$0xf] %v4409
      %4442 = vst [vmem:[%s204 + $0x5c] sm:$0xf] %v4410
      %4443 = vst [vmem:[%s204 + $0x60] sm:$0xf] %v4411
      %4444 = vst [vmem:[%s204 + $0x64] sm:$0xf] %v4412
      %4445 = vst [vmem:[%s204 + $0x68] sm:$0xf] %v4413
      %4446 = vst [vmem:[%s204 + $0x6c] sm:$0xf] %v4414
      %4447 = vst [vmem:[%s204 + $0x70] sm:$0xf] %v4415
      %4448 = vst [vmem:[%s204 + $0x74] sm:$0xf] %v4416
      %4449 = vst [vmem:[%s204 + $0x78] sm:$0xf] %v4417
      %4450 = vst [vmem:[%s204 + $0x7c] sm:$0xf] %v4418
      %p4451 = scmp.lt.s32.totalorder %s16, 1
      %s4452 = scalar_select %p4451, %s16, 1
      %s4453 = smul.addr %s4452, 32
      %s4454 = smul.addr %s4453, 4
      %s4455 = scalar_lea.vmem %s3, %s4454
      %p4456 = scmp.lt.s32.totalorder %s16, 1
      %s4457 = scalar_select %p4456, %s16, 1
      %s4458 = smul.addr %s4457, 8
      %s4459 = scalar_lea.vmem %s4, %s4458
      // Predicated region
      $region33: #{residual_block_forward.3} parent=31 // pred_check
        %p4460 = pneg %p102
      $region34: #{residual_block_forward.3} parent=31 // pred_check_branch
        %4462 = sbr.rel (%p4460) target = $region36
      $region35: #{residual_block_forward.3} parent=31 // pred_region
        _
      $region36: #{residual_block_forward.3} parent=31 // pred_fallthru
        _
      // Predicated region
      $region37: #{residual_block_forward.3} parent=31 // pred_check
        %p4463 = pneg %p128
      $region38: #{residual_block_forward.3} parent=31 // pred_check_branch
        %4465 = sbr.rel (%p4463) target = $region40
      $region39: #{residual_block_forward.3} parent=31 // pred_region
        _
      $region40: #{residual_block_forward.3} parent=31 // pred_fallthru
        _
    $region32: #{residual_block_forward.3} parent=5 // pred_fallthru
      _
    %p4466 = scmp.le.s32.totalorder 2, %s11
    // Predicated region
    $region41: #{residual_block_forward.3} parent=5 // pred_check
      %p4467 = pneg %p4466
    $region42: #{residual_block_forward.3} parent=5 // pred_check_branch
      %4469 = sbr.rel (%p4467) target = $region44
    $region43: #{residual_block_forward.3} parent=5 // pred_region
      %s4470 = ssub.s32 %s11, 2
      // Predicated region
      $region45: #{residual_block_forward.3} parent=43 // pred_check
        %p4471 = pneg %p108
      $region46: #{residual_block_forward.3} parent=43 // pred_check_branch
        %4473 = sbr.rel (%p4471) target = $region48
      $region47: #{residual_block_forward.3} parent=43 // pred_region
        %p4474 = scmp.lt.s32.totalorder %s17, 1
        %s4475 = scalar_select %p4474, %s17, 1
        %s4476 = smul.addr %s4475, 32
        %s4477 = smul.addr %s4476, 4
        %s4478 = scalar_lea.vmem %s3, %s4477
      $region48: #{residual_block_forward.3} parent=43 // pred_fallthru
        _
      // Predicated region
      $region49: #{residual_block_forward.3} parent=43 // pred_check
        %p4479 = pneg %p134
      $region50: #{residual_block_forward.3} parent=43 // pred_check_branch
        %4481 = sbr.rel (%p4479) target = $region52
      $region51: #{residual_block_forward.3} parent=43 // pred_region
        %p4482 = scmp.lt.s32.totalorder %s17, 1
        %s4483 = scalar_select %p4482, %s17, 1
        %s4484 = smul.addr %s4483, 8
        %s4485 = scalar_lea.vmem %s4, %s4484
      $region52: #{residual_block_forward.3} parent=43 // pred_fallthru
        _
    $region44: #{residual_block_forward.3} parent=5 // pred_fallthru
      _
  $region6: #{residual_block_forward.3} parent=0 // loop_footer
    %s15 = sadd.s32 1, %s11
  $region7: #{residual_block_forward.3} parent=0 // loop_footer_branch
    %10 = sbr.rel target = $region3
  $region8: #{residual_block_forward.3} parent=0 // loop_exit
    _

// kernel: residual_block_forward.4
$region0: #{residual_block_forward.4}
  #allocation0 [shape = 'u32[]', space=smem, size = 0x4, offset = 0x4, fixed_abs, tag = 'smem constant byte address 0x4 - core index']
  #allocation1 [shape = 'u32[72,128]{1,0:T(1,128)}', space=vmem, size = 0x9000, scoped, tag = 'internal scratch']
  #allocation2 [shape = 'bf16[342,128]{1,0:T(8,128)(2,1)}', space=vmem, size = 0x15800, scoped, tag = 'scratch operand']
  %s0 = inlined_call_operand.vmem [shape: bf16[2,342,128], index: 0, kind: input, shape index: {}]
  %s1 = inlined_call_operand.vmem [shape: f32[342,1], index: 1, kind: input, shape index: {}]
  %s2 = inlined_call_operand.vmem [shape: f32[8,128], index: 2, kind: input, shape index: {}]
  %s3 = inlined_call_operand.vmem [shape: bf16[9,128,128], index: 3, kind: input, shape index: {}]
  %s4 = inlined_call_operand.vmem [shape: f32[1,128], index: 4, kind: input, shape index: {}]
  %s5 = inlined_call_operand.vmem [shape: bf16[2,16,16,128], index: 5, kind: output, shape index: {0}]
  %s6 = inlined_call_operand.vmem [shape: f32[2,8,128], index: 6, kind: output, shape index: {1}]
  %7 = xla_tuple %s5, %s6
  %s8 = sld [smem:[#allocation0]]
  $region61: #{residual_block_forward.4} parent=0
    _
  %s10 = ssub.s32 1, %s8
  %s11 = scalar_select 0, %s10, %s8
  loop: start=0, step=1, limit=4
  $region2: #{residual_block_forward.4} parent=0 // loop_pre_header
    _
  $region3: #{residual_block_forward.4} parent=0 // loop_header
    %s13 = sphi 0, %s17
    %p14 = scmp.ge.s32.totalorder %s13, 4
    %s23 = sphi 0, %s25
    %s26 = sphi 0, %s23
    %s27 = sphi 0, %s26
    %s43 = sphi 0, %s27
    %s47 = sphi 0, %s47
    %s49 = sphi 0, %s47
    %s50 = sphi 0, %s49
    %s64 = sphi 0, %s50
    %s68 = sphi 0, %s68
    %s70 = sphi 0, %s68
    %s71 = sphi 0, %s70
    %s85 = sphi 0, %s71
    %s89 = sphi 0, %s89
    %s91 = sphi 0, %s89
    %s92 = sphi 0, %s91
    %s106 = sphi 0, %s92
    %s110 = sphi 0, %s110
    %s112 = sphi 0, %s110
    %s113 = sphi 0, %s112
    %s127 = sphi 0, %s113
    %s133 = sphi 0, %s135
    %s136 = sphi 0, %s133
    %s137 = sphi 0, %s136
    %s153 = sphi 0, %s137
    %s159 = sphi 0, %s161
    %s162 = sphi 0, %s159
    %s163 = sphi 0, %s162
    %s179 = sphi 0, %s163
  $region4: #{residual_block_forward.4} parent=0 // loop_header_branch
    %16 = sbr.rel (%p14) target = $region8
  $region5: #{residual_block_forward.4} parent=0 // loop_body
    %s18 = ssub.s32 %s13, 1
    %s19 = ssub.s32 %s13, 2
    %s20 = sadd.s32 %s13, 1
    %s21 = ssub.s32 %s13, %s20
    %p22 = scmp.eq.s32.totalorder %s21, 0
    %s24 = sadd.s32 %s23, 1
    %s25 = scalar_select %p22, %s23, %s24
    %p28 = pneg %p22
    %p29 = scmp.eq.s32.totalorder %s13, 1
    %p30 = por %p28, %p29
    %p31 = scmp.ne.s32.totalorder %s23, %s26
    %p32 = scmp.eq.s32.totalorder %s13, 0
    %p33 = por %p31, %p32
    %p34 = scmp.ne.s32.totalorder %s23, %s26
    %p35 = scmp.eq.s32.totalorder %s18, 1
    %p36 = por %p34, %p35
    %p37 = scmp.ne.s32.totalorder %s26, %s27
    %p38 = scmp.eq.s32.totalorder %s18, 0
    %p39 = por %p37, %p38
    %p40 = scmp.ne.s32.totalorder %s26, %s27
    %p41 = scmp.eq.s32.totalorder %s19, 1
    %p42 = por %p40, %p41
    %p44 = scmp.ne.s32.totalorder %s27, %s43
    %p45 = scmp.eq.s32.totalorder %s19, 0
    %p46 = por %p44, %p45
    %s48 = sadd.s32 %s47, 1
    %p51 = scmp.eq.s32.totalorder %s13, 1
    %p52 = scmp.ne.s32.totalorder %s47, %s49
    %p53 = scmp.eq.s32.totalorder %s13, 0
    %p54 = por %p52, %p53
    %p55 = scmp.ne.s32.totalorder %s47, %s49
    %p56 = scmp.eq.s32.totalorder %s18, 1
    %p57 = por %p55, %p56
    %p58 = scmp.ne.s32.totalorder %s49, %s50
    %p59 = scmp.eq.s32.totalorder %s18, 0
    %p60 = por %p58, %p59
    %p61 = scmp.ne.s32.totalorder %s49, %s50
    %p62 = scmp.eq.s32.totalorder %s19, 1
    %p63 = por %p61, %p62
    %p65 = scmp.ne.s32.totalorder %s50, %s64
    %p66 = scmp.eq.s32.totalorder %s19, 0
    %p67 = por %p65, %p66
    %s69 = sadd.s32 %s68, 1
    %p72 = scmp.eq.s32.totalorder %s13, 1
    %p73 = scmp.ne.s32.totalorder %s68, %s70
    %p74 = scmp.eq.s32.totalorder %s13, 0
    %p75 = por %p73, %p74
    %p76 = scmp.ne.s32.totalorder %s68, %s70
    %p77 = scmp.eq.s32.totalorder %s18, 1
    %p78 = por %p76, %p77
    %p79 = scmp.ne.s32.totalorder %s70, %s71
    %p80 = scmp.eq.s32.totalorder %s18, 0
    %p81 = por %p79, %p80
    %p82 = scmp.ne.s32.totalorder %s70, %s71
    %p83 = scmp.eq.s32.totalorder %s19, 1
    %p84 = por %p82, %p83
    %p86 = scmp.ne.s32.totalorder %s71, %s85
    %p87 = scmp.eq.s32.totalorder %s19, 0
    %p88 = por %p86, %p87
    %s90 = sadd.s32 %s89, 1
    %p93 = scmp.eq.s32.totalorder %s13, 1
    %p94 = scmp.ne.s32.totalorder %s89, %s91
    %p95 = scmp.eq.s32.totalorder %s13, 0
    %p96 = por %p94, %p95
    %p97 = scmp.ne.s32.totalorder %s89, %s91
    %p98 = scmp.eq.s32.totalorder %s18, 1
    %p99 = por %p97, %p98
    %p100 = scmp.ne.s32.totalorder %s91, %s92
    %p101 = scmp.eq.s32.totalorder %s18, 0
    %p102 = por %p100, %p101
    %p103 = scmp.ne.s32.totalorder %s91, %s92
    %p104 = scmp.eq.s32.totalorder %s19, 1
    %p105 = por %p103, %p104
    %p107 = scmp.ne.s32.totalorder %s92, %s106
    %p108 = scmp.eq.s32.totalorder %s19, 0
    %p109 = por %p107, %p108
    %s111 = sadd.s32 %s110, 1
    %p114 = scmp.eq.s32.totalorder %s13, 1
    %p115 = scmp.ne.s32.totalorder %s110, %s112
    %p116 = scmp.eq.s32.totalorder %s13, 0
    %p117 = por %p115, %p116
    %p118 = scmp.ne.s32.totalorder %s110, %s112
    %p119 = scmp.eq.s32.totalorder %s18, 1
    %p120 = por %p118, %p119
    %p121 = scmp.ne.s32.totalorder %s112, %s113
    %p122 = scmp.eq.s32.totalorder %s18, 0
    %p123 = por %p121, %p122
    %p124 = scmp.ne.s32.totalorder %s112, %s113
    %p125 = scmp.eq.s32.totalorder %s19, 1
    %p126 = por %p124, %p125
    %p128 = scmp.ne.s32.totalorder %s113, %s127
    %p129 = scmp.eq.s32.totalorder %s19, 0
    %p130 = por %p128, %p129
    %s131 = ssub.s32 %s13, %s20
    %p132 = scmp.eq.s32.totalorder %s131, 0
    %s134 = sadd.s32 %s133, 1
    %s135 = scalar_select %p132, %s133, %s134
    %p138 = pneg %p132
    %p139 = scmp.eq.s32.totalorder %s13, 1
    %p140 = por %p138, %p139
    %p141 = scmp.ne.s32.totalorder %s133, %s136
    %p142 = scmp.eq.s32.totalorder %s13, 0
    %p143 = por %p141, %p142
    %p144 = scmp.ne.s32.totalorder %s133, %s136
    %p145 = scmp.eq.s32.totalorder %s18, 1
    %p146 = por %p144, %p145
    %p147 = scmp.ne.s32.totalorder %s136, %s137
    %p148 = scmp.eq.s32.totalorder %s18, 0
    %p149 = por %p147, %p148
    %p150 = scmp.ne.s32.totalorder %s136, %s137
    %p151 = scmp.eq.s32.totalorder %s19, 1
    %p152 = por %p150, %p151
    %p154 = scmp.ne.s32.totalorder %s137, %s153
    %p155 = scmp.eq.s32.totalorder %s19, 0
    %p156 = por %p154, %p155
    %s157 = ssub.s32 %s13, %s20
    %p158 = scmp.eq.s32.totalorder %s157, 0
    %s160 = sadd.s32 %s159, 1
    %s161 = scalar_select %p158, %s159, %s160
    %p164 = pneg %p158
    %p165 = scmp.eq.s32.totalorder %s13, 1
    %p166 = por %p164, %p165
    %p167 = scmp.ne.s32.totalorder %s159, %s162
    %p168 = scmp.eq.s32.totalorder %s13, 0
    %p169 = por %p167, %p168
    %p170 = scmp.ne.s32.totalorder %s159, %s162
    %p171 = scmp.eq.s32.totalorder %s18, 1
    %p172 = por %p170, %p171
    %p173 = scmp.ne.s32.totalorder %s162, %s163
    %p174 = scmp.eq.s32.totalorder %s18, 0
    %p175 = por %p173, %p174
    %p176 = scmp.ne.s32.totalorder %s162, %s163
    %p177 = scmp.eq.s32.totalorder %s19, 1
    %p178 = por %p176, %p177
    %p180 = scmp.ne.s32.totalorder %s163, %s179
    %p181 = scmp.eq.s32.totalorder %s19, 0
    %p182 = por %p180, %p181
    %p183 = scmp.le.s32.totalorder 1, %s13
    %p184 = scmp.lt.s32.totalorder %s13, 3
    %p185 = pnand %p183, %p184
    %p186 = pneg %p185
    // Predicated region
    $region9: #{residual_block_forward.4} parent=5 // pred_check
      _
    $region10: #{residual_block_forward.4} parent=5 // pred_check_branch
      %188 = sbr.rel (%p185) target = $region12
    $region11: #{residual_block_forward.4} parent=5 // pred_region
      %s189 = ssub.s32 %s13, 1
      // Predicated region
      $region13: #{residual_block_forward.4} parent=11 // pred_check
        %p190 = pneg %p60
      $region14: #{residual_block_forward.4} parent=11 // pred_check_branch
        %192 = sbr.rel (%p190) target = $region16
      $region15: #{residual_block_forward.4} parent=11 // pred_region
        _
      $region16: #{residual_block_forward.4} parent=11 // pred_fallthru
        _
      // Predicated region
      $region17: #{residual_block_forward.4} parent=11 // pred_check
        %p193 = pneg %p81
      $region18: #{residual_block_forward.4} parent=11 // pred_check_branch
        %195 = sbr.rel (%p193) target = $region20
      $region19: #{residual_block_forward.4} parent=11 // pred_region
        _
      $region20: #{residual_block_forward.4} parent=11 // pred_fallthru
        _
      // Predicated region
      $region21: #{residual_block_forward.4} parent=11 // pred_check
        %p196 = pneg %p102
      $region22: #{residual_block_forward.4} parent=11 // pred_check_branch
        %198 = sbr.rel (%p196) target = $region24
      $region23: #{residual_block_forward.4} parent=11 // pred_region
        _
      $region24: #{residual_block_forward.4} parent=11 // pred_fallthru
        _
      // Predicated region
      $region25: #{residual_block_forward.4} parent=11 // pred_check
        %p199 = pneg %p123
      $region26: #{residual_block_forward.4} parent=11 // pred_check_branch
        %201 = sbr.rel (%p199) target = $region28
      $region27: #{residual_block_forward.4} parent=11 // pred_region
        _
      $region28: #{residual_block_forward.4} parent=11 // pred_fallthru
        _
    $region12: #{residual_block_forward.4} parent=5 // pred_fallthru
      _
    %p202 = scmp.lt.s32.totalorder %s13, 2
    // Predicated region
    $region29: #{residual_block_forward.4} parent=5 // pred_check
      %p203 = pneg %p202
    $region30: #{residual_block_forward.4} parent=5 // pred_check_branch
      %205 = sbr.rel (%p203) target = $region32
    $region31: #{residual_block_forward.4} parent=5 // pred_region
      // Predicated region
      $region33: #{residual_block_forward.4} parent=31 // pred_check
        %p206 = pneg %p33
      $region34: #{residual_block_forward.4} parent=31 // pred_check_branch
        %208 = sbr.rel (%p206) target = $region36
      $region35: #{residual_block_forward.4} parent=31 // pred_region
        %p209 = scmp.lt.s32.totalorder %s13, 1
        %s210 = scalar_select %p209, %s13, 1
        %s211 = smul.addr %s210, 43
        %s212 = smul.addr %s211, 4
        %s213 = scalar_lea.vmem %s0, %s212
      $region36: #{residual_block_forward.4} parent=31 // pred_fallthru
        _
    $region32: #{residual_block_forward.4} parent=5 // pred_fallthru
      _
    %p214 = scmp.le.s32.totalorder 1, %s13
    %p215 = scmp.lt.s32.totalorder %s13, 3
    %p216 = pnand %p214, %p215
    %p217 = pneg %p216
    // Predicated region
    $region37: #{residual_block_forward.4} parent=5 // pred_check
      _
    $region38: #{residual_block_forward.4} parent=5 // pred_check_branch
      %219 = sbr.rel (%p216) target = $region40
    $region39: #{residual_block_forward.4} parent=5 // pred_region
      %s220 = ssub.s32 %s13, 1
      %p221 = scmp.lt.s32.totalorder %s18, 1
      %s222 = scalar_select %p221, %s18, 1
      %s223 = smul.addr %s222, 43
      %s224 = smul.addr %s223, 4
      %s225 = scalar_lea.vmem %s0, %s224
      %p226 = pneg %p39
      %p227 = pneg %p36
      %p228 = pneg %p60
      %p229 = pneg %p57
      %p230 = pneg %p81
      %p231 = pneg %p78
      %p232 = pneg %p102
      %p233 = pneg %p99
      %p234 = pneg %p123
      %p235 = pneg %p120
      %p236 = pneg %p149
      %p237 = pneg %p146
      %p238 = scmp.lt.s32.totalorder %s18, 1
      %s239 = scalar_select %p238, %s18, 1
      %s240 = smul.addr %s239, 32
      %s241 = smul.addr %s240, 4
      %s242 = scalar_lea.vmem %s5, %s241
      %p243 = pneg %p175
      %p244 = pneg %p172
      %p245 = scmp.lt.s32.totalorder %s18, 1
      %s246 = scalar_select %p245, %s18, 1
      %s247 = smul.addr %s246, 8
      %s248 = scalar_lea.vmem %s6, %s247
      %p249 = scmp.lt.s32.totalorder %s18, 1
      %s250 = scalar_select %p249, %s18, 1
      %s251 = smul.addr %s250, 43
      %s252 = smul.addr %s251, 4
      %s253 = scalar_lea.vmem %s0, %s252
      %p254 = scmp.lt.s32.totalorder %s18, 1
      %s255 = scalar_select %p254, %s18, 1
      %s256 = smul.addr %s255, 32
      %s257 = smul.addr %s256, 4
      %s258 = scalar_lea.vmem %s5, %s257
      %p259 = scmp.lt.s32.totalorder %s18, 1
      %s260 = scalar_select %p259, %s18, 1
      %s261 = smul.addr %s260, 8
      %s262 = scalar_lea.vmem %s6, %s261
      %v263 = vld [vmem:[%s2] sm:$0x1]
      %v264 = vld [vmem:[%s2 + $0x1] sm:$0x1]
      %v265 = vld [vmem:[%s253] sm:$0xf]
      %v266 = vld [vmem:[%s253 + $0x4] sm:$0xf]
      %v267 = vld [vmem:[%s253 + $0x8] sm:$0xf]
      %v268 = vld [vmem:[%s253 + $0xc] sm:$0xf]
      %v269 = vld [vmem:[%s253 + $0x10] sm:$0xf]
      %v270 = vld [vmem:[%s253 + $0x14] sm:$0xf]
      %v271 = vld [vmem:[%s253 + $0x18] sm:$0xf]
      %v272 = vld [vmem:[%s253 + $0x1c] sm:$0xf]
      %v273 = vld [vmem:[%s253 + $0x20] sm:$0xf]
      %v274 = vld [vmem:[%s253 + $0x24] sm:$0xf]
      %v275 = vld [vmem:[%s253 + $0x28] sm:$0xf]
      %v276 = vld [vmem:[%s253 + $0x2c] sm:$0xf]
      %v277 = vld [vmem:[%s253 + $0x30] sm:$0xf]
      %v278 = vld [vmem:[%s253 + $0x34] sm:$0xf]
      %v279 = vld [vmem:[%s253 + $0x38] sm:$0xf]
      %v280 = vld [vmem:[%s253 + $0x3c] sm:$0xf]
      %v281 = vld [vmem:[%s253 + $0x40] sm:$0xf]
      %v282 = vld [vmem:[%s253 + $0x44] sm:$0xf]
      %v283 = vld [vmem:[%s253 + $0x48] sm:$0xf]
      %v284 = vld [vmem:[%s253 + $0x4c] sm:$0xf]
      %v285 = vld [vmem:[%s253 + $0x50] sm:$0xf]
      %v286 = vld [vmem:[%s253 + $0x54] sm:$0xf]
      %v287 = vld [vmem:[%s253 + $0x58] sm:$0xf]
      %v288 = vld [vmem:[%s253 + $0x5c] sm:$0xf]
      %v289 = vld [vmem:[%s253 + $0x60] sm:$0xf]
      %v290 = vld [vmem:[%s253 + $0x64] sm:$0xf]
      %v291 = vld [vmem:[%s253 + $0x68] sm:$0xf]
      %v292 = vld [vmem:[%s253 + $0x6c] sm:$0xf]
      %v293 = vld [vmem:[%s253 + $0x70] sm:$0xf]
      %v294 = vld [vmem:[%s253 + $0x74] sm:$0xf]
      %v295 = vld [vmem:[%s253 + $0x78] sm:$0xf]
      %v296 = vld [vmem:[%s253 + $0x7c] sm:$0xf]
      %v297 = vld [vmem:[%s253 + $0x80] sm:$0xf]
      %v298 = vld [vmem:[%s253 + $0x84] sm:$0xf]
      %v299 = vld [vmem:[%s253 + $0x88] sm:$0xf]
      %v300 = vld [vmem:[%s253 + $0x8c] sm:$0xf]
      %v301 = vld [vmem:[%s253 + $0x90] sm:$0xf]
      %v302 = vld [vmem:[%s253 + $0x94] sm:$0xf]
      %v303 = vld [vmem:[%s253 + $0x98] sm:$0xf]
      %v304 = vld [vmem:[%s253 + $0x9c] sm:$0xf]
      %v305 = vld [vmem:[%s253 + $0xa0] sm:$0xf]
      %v306 = vld [vmem:[%s253 + $0xa4] sm:$0xf]
      %v307 = vld [vmem:[%s253 + $0xa8] sm:$0x7]
      %v308 = vunpack.c.l.bf16 %v265
      %v309 = vunpack.c.l.bf16 %v266
      %v310 = vunpack.c.l.bf16 %v267
      %v311 = vunpack.c.l.bf16 %v268
      %v312 = vunpack.c.l.bf16 %v269
      %v313 = vunpack.c.l.bf16 %v270
      %v314 = vunpack.c.l.bf16 %v271
      %v315 = vunpack.c.l.bf16 %v272
      %v316 = vunpack.c.l.bf16 %v273
      %v317 = vunpack.c.l.bf16 %v274
      %v318 = vunpack.c.l.bf16 %v275
      %v319 = vunpack.c.l.bf16 %v276
      %v320 = vunpack.c.l.bf16 %v277
      %v321 = vunpack.c.l.bf16 %v278
      %v322 = vunpack.c.l.bf16 %v279
      %v323 = vunpack.c.l.bf16 %v280
      %v324 = vunpack.c.l.bf16 %v281
      %v325 = vunpack.c.l.bf16 %v282
      %v326 = vunpack.c.l.bf16 %v283
      %v327 = vunpack.c.l.bf16 %v284
      %v328 = vunpack.c.l.bf16 %v285
      %v329 = vunpack.c.l.bf16 %v286
      %v330 = vunpack.c.l.bf16 %v287
      %v331 = vunpack.c.l.bf16 %v288
      %v332 = vunpack.c.l.bf16 %v289
      %v333 = vunpack.c.l.bf16 %v290
      %v334 = vunpack.c.l.bf16 %v291
      %v335 = vunpack.c.l.bf16 %v292
      %v336 = vunpack.c.l.bf16 %v293
      %v337 = vunpack.c.l.bf16 %v294
      %v338 = vunpack.c.l.bf16 %v295
      %v339 = vunpack.c.l.bf16 %v296
      %v340 = vunpack.c.l.bf16 %v297
      %v341 = vunpack.c.l.bf16 %v298
      %v342 = vunpack.c.l.bf16 %v299
      %v343 = vunpack.c.l.bf16 %v300
      %v344 = vunpack.c.l.bf16 %v301
      %v345 = vunpack.c.l.bf16 %v302
      %v346 = vunpack.c.l.bf16 %v303
      %v347 = vunpack.c.l.bf16 %v304
      %v348 = vunpack.c.l.bf16 %v305
      %v349 = vunpack.c.l.bf16 %v306
      %v350 = vunpack.c.l.bf16 %v307
      %v351 = vperm.slane %v263, 0
      %v352 = vmul.f32 %v308, %v351
      %v353 = vmul.f32 %v309, %v351
      %v354 = vmul.f32 %v310, %v351
      %v355 = vmul.f32 %v311, %v351
      %v356 = vmul.f32 %v312, %v351
      %v357 = vmul.f32 %v313, %v351
      %v358 = vmul.f32 %v314, %v351
      %v359 = vmul.f32 %v315, %v351
      %v360 = vmul.f32 %v316, %v351
      %v361 = vmul.f32 %v317, %v351
      %v362 = vmul.f32 %v318, %v351
      %v363 = vmul.f32 %v319, %v351
      %v364 = vmul.f32 %v320, %v351
      %v365 = vmul.f32 %v321, %v351
      %v366 = vmul.f32 %v322, %v351
      %v367 = vmul.f32 %v323, %v351
      %v368 = vmul.f32 %v324, %v351
      %v369 = vmul.f32 %v325, %v351
      %v370 = vmul.f32 %v326, %v351
      %v371 = vmul.f32 %v327, %v351
      %v372 = vmul.f32 %v328, %v351
      %v373 = vmul.f32 %v329, %v351
      %v374 = vmul.f32 %v330, %v351
      %v375 = vmul.f32 %v331, %v351
      %v376 = vmul.f32 %v332, %v351
      %v377 = vmul.f32 %v333, %v351
      %v378 = vmul.f32 %v334, %v351
      %v379 = vmul.f32 %v335, %v351
      %v380 = vmul.f32 %v336, %v351
      %v381 = vmul.f32 %v337, %v351
      %v382 = vmul.f32 %v338, %v351
      %v383 = vmul.f32 %v339, %v351
      %v384 = vmul.f32 %v340, %v351
      %v385 = vmul.f32 %v341, %v351
      %v386 = vmul.f32 %v342, %v351
      %v387 = vmul.f32 %v343, %v351
      %v388 = vmul.f32 %v344, %v351
      %v389 = vmul.f32 %v345, %v351
      %v390 = vmul.f32 %v346, %v351
      %v391 = vmul.f32 %v347, %v351
      %v392 = vmul.f32 %v348, %v351
      %v393 = vmul.f32 %v349, %v351
      %v394 = vmul.f32 %v350, %v351
      %v395 = vperm.slane %v264, 0
      %v396 = vadd.f32 %v352, %v395
      %v397 = vadd.f32 %v353, %v395
      %v398 = vadd.f32 %v354, %v395
      %v399 = vadd.f32 %v355, %v395
      %v400 = vadd.f32 %v356, %v395
      %v401 = vadd.f32 %v357, %v395
      %v402 = vadd.f32 %v358, %v395
      %v403 = vadd.f32 %v359, %v395
      %v404 = vadd.f32 %v360, %v395
      %v405 = vadd.f32 %v361, %v395
      %v406 = vadd.f32 %v362, %v395
      %v407 = vadd.f32 %v363, %v395
      %v408 = vadd.f32 %v364, %v395
      %v409 = vadd.f32 %v365, %v395
      %v410 = vadd.f32 %v366, %v395
      %v411 = vadd.f32 %v367, %v395
      %v412 = vadd.f32 %v368, %v395
      %v413 = vadd.f32 %v369, %v395
      %v414 = vadd.f32 %v370, %v395
      %v415 = vadd.f32 %v371, %v395
      %v416 = vadd.f32 %v372, %v395
      %v417 = vadd.f32 %v373, %v395
      %v418 = vadd.f32 %v374, %v395
      %v419 = vadd.f32 %v375, %v395
      %v420 = vadd.f32 %v376, %v395
      %v421 = vadd.f32 %v377, %v395
      %v422 = vadd.f32 %v378, %v395
      %v423 = vadd.f32 %v379, %v395
      %v424 = vadd.f32 %v380, %v395
      %v425 = vadd.f32 %v381, %v395
      %v426 = vadd.f32 %v382, %v395
      %v427 = vadd.f32 %v383, %v395
      %v428 = vadd.f32 %v384, %v395
      %v429 = vadd.f32 %v385, %v395
      %v430 = vadd.f32 %v386, %v395
      %v431 = vadd.f32 %v387, %v395
      %v432 = vadd.f32 %v388, %v395
      %v433 = vadd.f32 %v389, %v395
      %v434 = vadd.f32 %v390, %v395
      %v435 = vadd.f32 %v391, %v395
      %v436 = vadd.f32 %v392, %v395
      %v437 = vadd.f32 %v393, %v395
      %v438 = vadd.f32 %v394, %v395
      %v439 = vmax.f32 %v396, 0.0
      %v440 = vmax.f32 %v397, 0.0
      %v441 = vmax.f32 %v398, 0.0
      %v442 = vmax.f32 %v399, 0.0
      %v443 = vmax.f32 %v400, 0.0
      %v444 = vmax.f32 %v401, 0.0
      %v445 = vmax.f32 %v402, 0.0
      %v446 = vmax.f32 %v403, 0.0
      %v447 = vmax.f32 %v404, 0.0
      %v448 = vmax.f32 %v405, 0.0
      %v449 = vmax.f32 %v406, 0.0
      %v450 = vmax.f32 %v407, 0.0
      %v451 = vmax.f32 %v408, 0.0
      %v452 = vmax.f32 %v409, 0.0
      %v453 = vmax.f32 %v410, 0.0
      %v454 = vmax.f32 %v411, 0.0
      %v455 = vmax.f32 %v412, 0.0
      %v456 = vmax.f32 %v413, 0.0
      %v457 = vmax.f32 %v414, 0.0
      %v458 = vmax.f32 %v415, 0.0
      %v459 = vmax.f32 %v416, 0.0
      %v460 = vmax.f32 %v417, 0.0
      %v461 = vmax.f32 %v418, 0.0
      %v462 = vmax.f32 %v419, 0.0
      %v463 = vmax.f32 %v420, 0.0
      %v464 = vmax.f32 %v421, 0.0
      %v465 = vmax.f32 %v422, 0.0
      %v466 = vmax.f32 %v423, 0.0
      %v467 = vmax.f32 %v424, 0.0
      %v468 = vmax.f32 %v425, 0.0
      %v469 = vmax.f32 %v426, 0.0
      %v470 = vmax.f32 %v427, 0.0
      %v471 = vmax.f32 %v428, 0.0
      %v472 = vmax.f32 %v429, 0.0
      %v473 = vmax.f32 %v430, 0.0
      %v474 = vmax.f32 %v431, 0.0
      %v475 = vmax.f32 %v432, 0.0
      %v476 = vmax.f32 %v433, 0.0
      %v477 = vmax.f32 %v434, 0.0
      %v478 = vmax.f32 %v435, 0.0
      %v479 = vmax.f32 %v436, 0.0
      %v480 = vmax.f32 %v437, 0.0
      %v481 = vmax.f32 %v438, 0.0
      %v482 = vld [vmem:[%s1] sm:$0xff]
      %v483 = vld [vmem:[%s1 + $0x8] sm:$0xff]
      %v484 = vld [vmem:[%s1 + $0x10] sm:$0xff]
      %v485 = vld [vmem:[%s1 + $0x18] sm:$0xff]
      %v486 = vld [vmem:[%s1 + $0x20] sm:$0xff]
      %v487 = vld [vmem:[%s1 + $0x28] sm:$0xff]
      %v488 = vld [vmem:[%s1 + $0x30] sm:$0xff]
      %v489 = vld [vmem:[%s1 + $0x38] sm:$0xff]
      %v490 = vld [vmem:[%s1 + $0x40] sm:$0xff]
      %v491 = vld [vmem:[%s1 + $0x48] sm:$0xff]
      %v492 = vld [vmem:[%s1 + $0x50] sm:$0xff]
      %v493 = vld [vmem:[%s1 + $0x58] sm:$0xff]
      %v494 = vld [vmem:[%s1 + $0x60] sm:$0xff]
      %v495 = vld [vmem:[%s1 + $0x68] sm:$0xff]
      %v496 = vld [vmem:[%s1 + $0x70] sm:$0xff]
      %v497 = vld [vmem:[%s1 + $0x78] sm:$0xff]
      %v498 = vld [vmem:[%s1 + $0x80] sm:$0xff]
      %v499 = vld [vmem:[%s1 + $0x88] sm:$0xff]
      %v500 = vld [vmem:[%s1 + $0x90] sm:$0xff]
      %v501 = vld [vmem:[%s1 + $0x98] sm:$0xff]
      %v502 = vld [vmem:[%s1 + $0xa0] sm:$0xff]
      %v503 = vld [vmem:[%s1 + $0xa8] sm:$0xff]
      %v504 = vld [vmem:[%s1 + $0xb0] sm:$0xff]
      %v505 = vld [vmem:[%s1 + $0xb8] sm:$0xff]
      %v506 = vld [vmem:[%s1 + $0xc0] sm:$0xff]
      %v507 = vld [vmem:[%s1 + $0xc8] sm:$0xff]
      %v508 = vld [vmem:[%s1 + $0xd0] sm:$0xff]
      %v509 = vld [vmem:[%s1 + $0xd8] sm:$0xff]
      %v510 = vld [vmem:[%s1 + $0xe0] sm:$0xff]
      %v511 = vld [vmem:[%s1 + $0xe8] sm:$0xff]
      %v512 = vld [vmem:[%s1 + $0xf0] sm:$0xff]
      %v513 = vld [vmem:[%s1 + $0xf8] sm:$0xff]
      %v514 = vld [vmem:[%s1 + $0x100] sm:$0xff]
      %v515 = vld [vmem:[%s1 + $0x108] sm:$0xff]
      %v516 = vld [vmem:[%s1 + $0x110] sm:$0xff]
      %v517 = vld [vmem:[%s1 + $0x118] sm:$0xff]
      %v518 = vld [vmem:[%s1 + $0x120] sm:$0xff]
      %v519 = vld [vmem:[%s1 + $0x128] sm:$0xff]
      %v520 = vld [vmem:[%s1 + $0x130] sm:$0xff]
      %v521 = vld [vmem:[%s1 + $0x138] sm:$0xff]
      %v522 = vld [vmem:[%s1 + $0x140] sm:$0xff]
      %v523 = vld [vmem:[%s1 + $0x148] sm:$0xff]
      %v524 = vld [vmem:[%s1 + $0x150] sm:$0x3f]
      %526 = vset.pattern.permute.xlu0 0
      %527 = vperm.xlu0 %526, %v482
      %v528 = vpop.permute.xlu0 %527
      %531 = vset.pattern.permute.xlu0 0
      %532 = vperm.xlu0 %531, %v483
      %v533 = vpop.permute.xlu0 %532
      %536 = vset.pattern.permute.xlu0 0
      %537 = vperm.xlu0 %536, %v484
      %v538 = vpop.permute.xlu0 %537
      %541 = vset.pattern.permute.xlu0 0
      %542 = vperm.xlu0 %541, %v485
      %v543 = vpop.permute.xlu0 %542
      %546 = vset.pattern.permute.xlu0 0
      %547 = vperm.xlu0 %546, %v486
      %v548 = vpop.permute.xlu0 %547
      %551 = vset.pattern.permute.xlu0 0
      %552 = vperm.xlu0 %551, %v487
      %v553 = vpop.permute.xlu0 %552
      %556 = vset.pattern.permute.xlu0 0
      %557 = vperm.xlu0 %556, %v488
      %v558 = vpop.permute.xlu0 %557
      %561 = vset.pattern.permute.xlu0 0
      %562 = vperm.xlu0 %561, %v489
      %v563 = vpop.permute.xlu0 %562
      %566 = vset.pattern.permute.xlu0 0
      %567 = vperm.xlu0 %566, %v490
      %v568 = vpop.permute.xlu0 %567
      %571 = vset.pattern.permute.xlu0 0
      %572 = vperm.xlu0 %571, %v491
      %v573 = vpop.permute.xlu0 %572
      %576 = vset.pattern.permute.xlu0 0
      %577 = vperm.xlu0 %576, %v492
      %v578 = vpop.permute.xlu0 %577
      %581 = vset.pattern.permute.xlu0 0
      %582 = vperm.xlu0 %581, %v493
      %v583 = vpop.permute.xlu0 %582
      %586 = vset.pattern.permute.xlu0 0
      %587 = vperm.xlu0 %586, %v494
      %v588 = vpop.permute.xlu0 %587
      %591 = vset.pattern.permute.xlu0 0
      %592 = vperm.xlu0 %591, %v495
      %v593 = vpop.permute.xlu0 %592
      %596 = vset.pattern.permute.xlu0 0
      %597 = vperm.xlu0 %596, %v496
      %v598 = vpop.permute.xlu0 %597
      %601 = vset.pattern.permute.xlu0 0
      %602 = vperm.xlu0 %601, %v497
      %v603 = vpop.permute.xlu0 %602
      %606 = vset.pattern.permute.xlu0 0
      %607 = vperm.xlu0 %606, %v498
      %v608 = vpop.permute.xlu0 %607
      %611 = vset.pattern.permute.xlu0 0
      %612 = vperm.xlu0 %611, %v499
      %v613 = vpop.permute.xlu0 %612
      %616 = vset.pattern.permute.xlu0 0
      %617 = vperm.xlu0 %616, %v500
      %v618 = vpop.permute.xlu0 %617
      %621 = vset.pattern.permute.xlu0 0
      %622 = vperm.xlu0 %621, %v501
      %v623 = vpop.permute.xlu0 %622
      %626 = vset.pattern.permute.xlu0 0
      %627 = vperm.xlu0 %626, %v502
      %v628 = vpop.permute.xlu0 %627
      %631 = vset.pattern.permute.xlu0 0
      %632 = vperm.xlu0 %631, %v503
      %v633 = vpop.permute.xlu0 %632
      %636 = vset.pattern.permute.xlu0 0
      %637 = vperm.xlu0 %636, %v504
      %v638 = vpop.permute.xlu0 %637
      %641 = vset.pattern.permute.xlu0 0
      %642 = vperm.xlu0 %641, %v505
      %v643 = vpop.permute.xlu0 %642
      %646 = vset.pattern.permute.xlu0 0
      %647 = vperm.xlu0 %646, %v506
      %v648 = vpop.permute.xlu0 %647
      %651 = vset.pattern.permute.xlu0 0
      %652 = vperm.xlu0 %651, %v507
      %v653 = vpop.permute.xlu0 %652
      %656 = vset.pattern.permute.xlu0 0
      %657 = vperm.xlu0 %656, %v508
      %v658 = vpop.permute.xlu0 %657
      %661 = vset.pattern.permute.xlu0 0
      %662 = vperm.xlu0 %661, %v509
      %v663 = vpop.permute.xlu0 %662
      %666 = vset.pattern.permute.xlu0 0
      %667 = vperm.xlu0 %666, %v510
      %v668 = vpop.permute.xlu0 %667
      %671 = vset.pattern.permute.xlu0 0
      %672 = vperm.xlu0 %671, %v511
      %v673 = vpop.permute.xlu0 %672
      %676 = vset.pattern.permute.xlu0 0
      %677 = vperm.xlu0 %676, %v512
      %v678 = vpop.permute.xlu0 %677
      %681 = vset.pattern.permute.xlu0 0
      %682 = vperm.xlu0 %681, %v513
      %v683 = vpop.permute.xlu0 %682
      %686 = vset.pattern.permute.xlu0 0
      %687 = vperm.xlu0 %686, %v514
      %v688 = vpop.permute.xlu0 %687
      %691 = vset.pattern.permute.xlu0 0
      %692 = vperm.xlu0 %691, %v515
      %v693 = vpop.permute.xlu0 %692
      %696 = vset.pattern.permute.xlu0 0
      %697 = vperm.xlu0 %696, %v516
      %v698 = vpop.permute.xlu0 %697
      %701 = vset.pattern.permute.xlu0 0
      %702 = vperm.xlu0 %701, %v517
      %v703 = vpop.permute.xlu0 %702
      %706 = vset.pattern.permute.xlu0 0
      %707 = vperm.xlu0 %706, %v518
      %v708 = vpop.permute.xlu0 %707
      %711 = vset.pattern.permute.xlu0 0
      %712 = vperm.xlu0 %711, %v519
      %v713 = vpop.permute.xlu0 %712
      %716 = vset.pattern.permute.xlu0 0
      %717 = vperm.xlu0 %716, %v520
      %v718 = vpop.permute.xlu0 %717
      %721 = vset.pattern.permute.xlu0 0
      %722 = vperm.xlu0 %721, %v521
      %v723 = vpop.permute.xlu0 %722
      %726 = vset.pattern.permute.xlu0 0
      %727 = vperm.xlu0 %726, %v522
      %v728 = vpop.permute.xlu0 %727
      %731 = vset.pattern.permute.xlu0 0
      %732 = vperm.xlu0 %731, %v523
      %v733 = vpop.permute.xlu0 %732
      %736 = vset.pattern.permute.xlu0 0
      %737 = vperm.xlu0 %736, %v524
      %v738 = vpop.permute.xlu0 %737
      %v740 = vmul.f32 %v439, %v528
      %v741 = vmul.f32 %v440, %v533
      %v742 = vmul.f32 %v441, %v538
      %v743 = vmul.f32 %v442, %v543
      %v744 = vmul.f32 %v443, %v548
      %v745 = vmul.f32 %v444, %v553
      %v746 = vmul.f32 %v445, %v558
      %v747 = vmul.f32 %v446, %v563
      %v748 = vmul.f32 %v447, %v568
      %v749 = vmul.f32 %v448, %v573
      %v750 = vmul.f32 %v449, %v578
      %v751 = vmul.f32 %v450, %v583
      %v752 = vmul.f32 %v451, %v588
      %v753 = vmul.f32 %v452, %v593
      %v754 = vmul.f32 %v453, %v598
      %v755 = vmul.f32 %v454, %v603
      %v756 = vmul.f32 %v455, %v608
      %v757 = vmul.f32 %v456, %v613
      %v758 = vmul.f32 %v457, %v618
      %v759 = vmul.f32 %v458, %v623
      %v760 = vmul.f32 %v459, %v628
      %v761 = vmul.f32 %v460, %v633
      %v762 = vmul.f32 %v461, %v638
      %v763 = vmul.f32 %v462, %v643
      %v764 = vmul.f32 %v463, %v648
      %v765 = vmul.f32 %v464, %v653
      %v766 = vmul.f32 %v465, %v658
      %v767 = vmul.f32 %v466, %v663
      %v768 = vmul.f32 %v467, %v668
      %v769 = vmul.f32 %v468, %v673
      %v770 = vmul.f32 %v469, %v678
      %v771 = vmul.f32 %v470, %v683
      %v772 = vmul.f32 %v471, %v688
      %v773 = vmul.f32 %v472, %v693
      %v774 = vmul.f32 %v473, %v698
      %v775 = vmul.f32 %v474, %v703
      %v776 = vmul.f32 %v475, %v708
      %v777 = vmul.f32 %v476, %v713
      %v778 = vmul.f32 %v477, %v718
      %v779 = vmul.f32 %v478, %v723
      %v780 = vmul.f32 %v479, %v728
      %v781 = vmul.f32 %v480, %v733
      %v782 = vmul.f32 %v481, %v738
      %v783 = vpack.c.bf16 %v740, %v740
      %v784 = vpack.c.bf16 %v741, %v741
      %v785 = vpack.c.bf16 %v742, %v742
      %v786 = vpack.c.bf16 %v743, %v743
      %v787 = vpack.c.bf16 %v744, %v744
      %v788 = vpack.c.bf16 %v745, %v745
      %v789 = vpack.c.bf16 %v746, %v746
      %v790 = vpack.c.bf16 %v747, %v747
      %v791 = vpack.c.bf16 %v748, %v748
      %v792 = vpack.c.bf16 %v749, %v749
      %v793 = vpack.c.bf16 %v750, %v750
      %v794 = vpack.c.bf16 %v751, %v751
      %v795 = vpack.c.bf16 %v752, %v752
      %v796 = vpack.c.bf16 %v753, %v753
      %v797 = vpack.c.bf16 %v754, %v754
      %v798 = vpack.c.bf16 %v755, %v755
      %v799 = vpack.c.bf16 %v756, %v756
      %v800 = vpack.c.bf16 %v757, %v757
      %v801 = vpack.c.bf16 %v758, %v758
      %v802 = vpack.c.bf16 %v759, %v759
      %v803 = vpack.c.bf16 %v760, %v760
      %v804 = vpack.c.bf16 %v761, %v761
      %v805 = vpack.c.bf16 %v762, %v762
      %v806 = vpack.c.bf16 %v763, %v763
      %v807 = vpack.c.bf16 %v764, %v764
      %v808 = vpack.c.bf16 %v765, %v765
      %v809 = vpack.c.bf16 %v766, %v766
      %v810 = vpack.c.bf16 %v767, %v767
      %v811 = vpack.c.bf16 %v768, %v768
      %v812 = vpack.c.bf16 %v769, %v769
      %v813 = vpack.c.bf16 %v770, %v770
      %v814 = vpack.c.bf16 %v771, %v771
      %v815 = vpack.c.bf16 %v772, %v772
      %v816 = vpack.c.bf16 %v773, %v773
      %v817 = vpack.c.bf16 %v774, %v774
      %v818 = vpack.c.bf16 %v775, %v775
      %v819 = vpack.c.bf16 %v776, %v776
      %v820 = vpack.c.bf16 %v777, %v777
      %v821 = vpack.c.bf16 %v778, %v778
      %v822 = vpack.c.bf16 %v779, %v779
      %v823 = vpack.c.bf16 %v780, %v780
      %v824 = vpack.c.bf16 %v781, %v781
      %v825 = vpack.c.bf16 %v782, %v782
      %826 = vst [vmem:[#allocation2] sm:$0xf] %v783
      %827 = vst [vmem:[#allocation2 + $0x4] sm:$0xf] %v784
      %828 = vst [vmem:[#allocation2 + $0x8] sm:$0xf] %v785
      %829 = vst [vmem:[#allocation2 + $0xc] sm:$0xf] %v786
      %830 = vst [vmem:[#allocation2 + $0x10] sm:$0xf] %v787
      %831 = vst [vmem:[#allocation2 + $0x14] sm:$0xf] %v788
      %832 = vst [vmem:[#allocation2 + $0x18] sm:$0xf] %v789
      %833 = vst [vmem:[#allocation2 + $0x1c] sm:$0xf] %v790
      %834 = vst [vmem:[#allocation2 + $0x20] sm:$0xf] %v791
      %835 = vst [vmem:[#allocation2 + $0x24] sm:$0xf] %v792
      %836 = vst [vmem:[#allocation2 + $0x28] sm:$0xf] %v793
      %837 = vst [vmem:[#allocation2 + $0x2c] sm:$0xf] %v794
      %838 = vst [vmem:[#allocation2 + $0x30] sm:$0xf] %v795
      %839 = vst [vmem:[#allocation2 + $0x34] sm:$0xf] %v796
      %840 = vst [vmem:[#allocation2 + $0x38] sm:$0xf] %v797
      %841 = vst [vmem:[#allocation2 + $0x3c] sm:$0xf] %v798
      %842 = vst [vmem:[#allocation2 + $0x40] sm:$0xf] %v799
      %843 = vst [vmem:[#allocation2 + $0x44] sm:$0xf] %v800
      %844 = vst [vmem:[#allocation2 + $0x48] sm:$0xf] %v801
      %845 = vst [vmem:[#allocation2 + $0x4c] sm:$0xf] %v802
      %846 = vst [vmem:[#allocation2 + $0x50] sm:$0xf] %v803
      %847 = vst [vmem:[#allocation2 + $0x54] sm:$0xf] %v804
      %848 = vst [vmem:[#allocation2 + $0x58] sm:$0xf] %v805
      %849 = vst [vmem:[#allocation2 + $0x5c] sm:$0xf] %v806
      %850 = vst [vmem:[#allocation2 + $0x60] sm:$0xf] %v807
      %851 = vst [vmem:[#allocation2 + $0x64] sm:$0xf] %v808
      %852 = vst [vmem:[#allocation2 + $0x68] sm:$0xf] %v809
      %853 = vst [vmem:[#allocation2 + $0x6c] sm:$0xf] %v810
      %854 = vst [vmem:[#allocation2 + $0x70] sm:$0xf] %v811
      %855 = vst [vmem:[#allocation2 + $0x74] sm:$0xf] %v812
      %856 = vst [vmem:[#allocation2 + $0x78] sm:$0xf] %v813
      %857 = vst [vmem:[#allocation2 + $0x7c] sm:$0xf] %v814
      %858 = vst [vmem:[#allocation2 + $0x80] sm:$0xf] %v815
      %859 = vst [vmem:[#allocation2 + $0x84] sm:$0xf] %v816
      %860 = vst [vmem:[#allocation2 + $0x88] sm:$0xf] %v817
      %861 = vst [vmem:[#allocation2 + $0x8c] sm:$0xf] %v818
      %862 = vst [vmem:[#allocation2 + $0x90] sm:$0xf] %v819
      %863 = vst [vmem:[#allocation2 + $0x94] sm:$0xf] %v820
      %864 = vst [vmem:[#allocation2 + $0x98] sm:$0xf] %v821
      %865 = vst [vmem:[#allocation2 + $0x9c] sm:$0xf] %v822
      %866 = vst [vmem:[#allocation2 + $0xa0] sm:$0xf] %v823
      %867 = vst [vmem:[#allocation2 + $0xa4] sm:$0xf] %v824
      %868 = vst [vmem:[#allocation2 + $0xa8] sm:$0x7] %v825
      %v869 = vld [vmem:[#allocation2] sm:$0xf]
      %v870 = vld [vmem:[#allocation2 + $0x4] sm:$0xf]
      %v871 = vld [vmem:[#allocation2 + $0x8] sm:$0xf]
      %v872 = vld [vmem:[#allocation2 + $0xc] sm:$0xf]
      %v873 = vld [vmem:[#allocation2 + $0x10] sm:$0xf]
      %v874 = vld [vmem:[#allocation2 + $0x14] sm:$0xf]
      %v875 = vld [vmem:[#allocation2 + $0x18] sm:$0xf]
      %v876 = vld [vmem:[#allocation2 + $0x1c] sm:$0xf]
      %v877 = vld [vmem:[#allocation2 + $0x20] sm:$0xf]
      %v878 = vld [vmem:[#allocation2 + $0x24] sm:$0xf]
      %v879 = vld [vmem:[#allocation2 + $0x28] sm:$0xf]
      %v880 = vld [vmem:[#allocation2 + $0x2c] sm:$0xf]
      %v881 = vld [vmem:[#allocation2 + $0x30] sm:$0xf]
      %v882 = vld [vmem:[#allocation2 + $0x34] sm:$0xf]
      %v883 = vld [vmem:[#allocation2 + $0x38] sm:$0xf]
      %v884 = vld [vmem:[#allocation2 + $0x3c] sm:$0xf]
      %v885 = vld [vmem:[#allocation2 + $0x40] sm:$0xf]
      %v886 = vld [vmem:[#allocation2 + $0x44] sm:$0xf]
      %v887 = vld [vmem:[#allocation2 + $0x48] sm:$0xf]
      %v888 = vld [vmem:[#allocation2 + $0x4c] sm:$0xf]
      %v889 = vld [vmem:[#allocation2 + $0x50] sm:$0xf]
      %v890 = vld [vmem:[#allocation2 + $0x54] sm:$0xf]
      %v891 = vld [vmem:[#allocation2 + $0x58] sm:$0xf]
      %v892 = vld [vmem:[#allocation2 + $0x5c] sm:$0xf]
      %v893 = vld [vmem:[#allocation2 + $0x60] sm:$0xf]
      %v894 = vld [vmem:[#allocation2 + $0x64] sm:$0xf]
      %v895 = vld [vmem:[#allocation2 + $0x68] sm:$0xf]
      %v896 = vld [vmem:[#allocation2 + $0x6c] sm:$0xf]
      %v897 = vld [vmem:[#allocation2 + $0x70] sm:$0xf]
      %v898 = vld [vmem:[#allocation2 + $0x74] sm:$0xf]
      %v899 = vld [vmem:[#allocation2 + $0x78] sm:$0xf]
      %v900 = vld [vmem:[#allocation2 + $0x7c] sm:$0xf]
      %v901 = vld [vmem:[#allocation2 + $0x80] sm:$0xf]
      %v902 = vld [vmem:[#allocation2 + $0x84] sm:$0xf]
      %v903 = vld [vmem:[#allocation2 + $0x88] sm:$0xf]
      %v904 = vld [vmem:[#allocation2 + $0x8c] sm:$0xf]
      %v905 = vld [vmem:[%s3] sm:$0xf]
      %v906 = vld [vmem:[%s3 + $0x4] sm:$0xf]
      %v907 = vld [vmem:[%s3 + $0x8] sm:$0xf]
      %v908 = vld [vmem:[%s3 + $0xc] sm:$0xf]
      %v909 = vld [vmem:[%s3 + $0x10] sm:$0xf]
      %v910 = vld [vmem:[%s3 + $0x14] sm:$0xf]
      %v911 = vld [vmem:[%s3 + $0x18] sm:$0xf]
      %v912 = vld [vmem:[%s3 + $0x1c] sm:$0xf]
      %v913 = vld [vmem:[%s3 + $0x20] sm:$0xf]
      %v914 = vld [vmem:[%s3 + $0x24] sm:$0xf]
      %v915 = vld [vmem:[%s3 + $0x28] sm:$0xf]
      %v916 = vld [vmem:[%s3 + $0x2c] sm:$0xf]
      %v917 = vld [vmem:[%s3 + $0x30] sm:$0xf]
      %v918 = vld [vmem:[%s3 + $0x34] sm:$0xf]
      %v919 = vld [vmem:[%s3 + $0x38] sm:$0xf]
      %v920 = vld [vmem:[%s3 + $0x3c] sm:$0xf]
      %v921 = vld [vmem:[#allocation2 + $0x90] sm:$0x1]
      %s922 = scalar_lea.vmem %s3, 64
      %v923 = vld [vmem:[%s922] sm:$0xf]
      %v924 = vld [vmem:[%s922 + $0x4] sm:$0xf]
      %v925 = vld [vmem:[%s922 + $0x8] sm:$0xf]
      %v926 = vld [vmem:[%s922 + $0xc] sm:$0xf]
      %v927 = vld [vmem:[%s922 + $0x10] sm:$0xf]
      %v928 = vld [vmem:[%s922 + $0x14] sm:$0xf]
      %v929 = vld [vmem:[%s922 + $0x18] sm:$0xf]
      %v930 = vld [vmem:[%s922 + $0x1c] sm:$0xf]
      %v931 = vld [vmem:[%s922 + $0x20] sm:$0xf]
      %v932 = vld [vmem:[%s922 + $0x24] sm:$0xf]
      %v933 = vld [vmem:[%s922 + $0x28] sm:$0xf]
      %v934 = vld [vmem:[%s922 + $0x2c] sm:$0xf]
      %v935 = vld [vmem:[%s922 + $0x30] sm:$0xf]
      %v936 = vld [vmem:[%s922 + $0x34] sm:$0xf]
      %v937 = vld [vmem:[%s922 + $0x38] sm:$0xf]
      %v938 = vld [vmem:[%s922 + $0x3c] sm:$0xf]
      %v976 = vunpack.c.l.b16 %v869
      %v977 = vunpack.c.l.b16 %v870
      %v978 = vunpack.c.l.b16 %v871
      %v979 = vunpack.c.l.b16 %v872
      %v980 = vunpack.c.l.b16 %v873
      %v981 = vunpack.c.l.b16 %v874
      %v982 = vunpack.c.l.b16 %v875
      %v983 = vunpack.c.l.b16 %v876
      %v984 = vunpack.c.l.b16 %v877
      %v985 = vunpack.c.l.b16 %v878
      %v986 = vunpack.c.l.b16 %v879
      %v987 = vunpack.c.l.b16 %v880
      %v988 = vunpack.c.l.b16 %v881
      %v989 = vunpack.c.l.b16 %v882
      %v990 = vunpack.c.l.b16 %v883
      %v991 = vunpack.c.l.b16 %v884
      %v992 = vunpack.c.l.b16 %v885
      %v993 = vunpack.c.l.b16 %v886
      %v994 = vunpack.c.l.b16 %v887
      %v995 = vunpack.c.l.b16 %v888
      %v996 = vunpack.c.l.b16 %v889
      %v997 = vunpack.c.l.b16 %v890
      %v998 = vunpack.c.l.b16 %v891
      %v999 = vunpack.c.l.b16 %v892
      %v1000 = vunpack.c.l.b16 %v893
      %v1001 = vunpack.c.l.b16 %v894
      %v1002 = vunpack.c.l.b16 %v895
      %v1003 = vunpack.c.l.b16 %v896
      %v1004 = vunpack.c.l.b16 %v897
      %v1005 = vunpack.c.l.b16 %v898
      %v1006 = vunpack.c.l.b16 %v899
      %v1007 = vunpack.c.l.b16 %v900
      %v1008 = vunpack.c.l.b16 %v901
      %v1009 = vunpack.c.l.b16 %v902
      %v1010 = vunpack.c.l.b16 %v903
      %v1011 = vunpack.c.l.b16 %v904
      %v1012 = vunpack.c.l.b16 %v921
      %v1013 = vpack.c.b16 %v977, %v976
      %v1014 = vpack.c.b16 %v979, %v978
      %v1015 = vpack.c.b16 %v981, %v980
      %v1016 = vpack.c.b16 %v983, %v982
      %v1017 = vpack.c.b16 %v985, %v984
      %v1018 = vpack.c.b16 %v987, %v986
      %v1019 = vpack.c.b16 %v989, %v988
      %v1020 = vpack.c.b16 %v991, %v990
      %v1021 = vpack.c.b16 %v993, %v992
      %v1022 = vpack.c.b16 %v995, %v994
      %v1023 = vpack.c.b16 %v997, %v996
      %v1024 = vpack.c.b16 %v999, %v998
      %v1025 = vpack.c.b16 %v1001, %v1000
      %v1026 = vpack.c.b16 %v1003, %v1002
      %v1027 = vpack.c.b16 %v1005, %v1004
      %v1028 = vpack.c.b16 %v1007, %v1006
      %v1029 = vpack.c.b16 %v1009, %v1008
      %v1030 = vpack.c.b16 %v1011, %v1010
      %v1031 = vpack.c.b16 %v1012, %v1012
      %vm1032 = vsmask.f32 7424
      %v1034 = vshrl.u32 %v1013, 16
      %v1036 = vshll.u32 %v1013, 16
      %v1038 = vrot.slane %v1036, 1
      %v1039 = vor.u32 %v1034, %v1038
      %v1041 = vshll.u32 %v1014, 16
      %v1043 = vrot.slane %v1041, 1
      %v1044 = vsel %vm1032, %v1039, %v1043
      %v1045 = vshrl.u32 %v1014, 16
      %v1047 = vor.u32 %v1045, %v1043
      %v1049 = vshll.u32 %v1015, 16
      %v1051 = vrot.slane %v1049, 1
      %v1052 = vsel %vm1032, %v1047, %v1051
      %v1053 = vshrl.u32 %v1015, 16
      %v1055 = vor.u32 %v1053, %v1051
      %v1057 = vshll.u32 %v1016, 16
      %v1059 = vrot.slane %v1057, 1
      %v1060 = vsel %vm1032, %v1055, %v1059
      %v1061 = vshrl.u32 %v1016, 16
      %v1063 = vor.u32 %v1061, %v1059
      %v1065 = vshll.u32 %v1017, 16
      %v1067 = vrot.slane %v1065, 1
      %v1068 = vsel %vm1032, %v1063, %v1067
      %v1069 = vshrl.u32 %v1017, 16
      %v1071 = vor.u32 %v1069, %v1067
      %v1073 = vshll.u32 %v1018, 16
      %v1075 = vrot.slane %v1073, 1
      %v1076 = vsel %vm1032, %v1071, %v1075
      %v1077 = vshrl.u32 %v1018, 16
      %v1079 = vor.u32 %v1077, %v1075
      %v1081 = vshll.u32 %v1019, 16
      %v1083 = vrot.slane %v1081, 1
      %v1084 = vsel %vm1032, %v1079, %v1083
      %v1085 = vshrl.u32 %v1019, 16
      %v1087 = vor.u32 %v1085, %v1083
      %v1089 = vshll.u32 %v1020, 16
      %v1091 = vrot.slane %v1089, 1
      %v1092 = vsel %vm1032, %v1087, %v1091
      %v1093 = vshrl.u32 %v1020, 16
      %v1095 = vor.u32 %v1093, %v1091
      %v1097 = vshll.u32 %v1021, 16
      %v1099 = vrot.slane %v1097, 1
      %v1100 = vsel %vm1032, %v1095, %v1099
      %v1101 = vshrl.u32 %v1021, 16
      %v1103 = vor.u32 %v1101, %v1099
      %v1105 = vshll.u32 %v1022, 16
      %v1107 = vrot.slane %v1105, 1
      %v1108 = vsel %vm1032, %v1103, %v1107
      %v1109 = vshrl.u32 %v1022, 16
      %v1111 = vor.u32 %v1109, %v1107
      %v1113 = vshll.u32 %v1023, 16
      %v1115 = vrot.slane %v1113, 1
      %v1116 = vsel %vm1032, %v1111, %v1115
      %v1117 = vshrl.u32 %v1023, 16
      %v1119 = vor.u32 %v1117, %v1115
      %v1121 = vshll.u32 %v1024, 16
      %v1123 = vrot.slane %v1121, 1
      %v1124 = vsel %vm1032, %v1119, %v1123
      %v1125 = vshrl.u32 %v1024, 16
      %v1127 = vor.u32 %v1125, %v1123
      %v1129 = vshll.u32 %v1025, 16
      %v1131 = vrot.slane %v1129, 1
      %v1132 = vsel %vm1032, %v1127, %v1131
      %v1133 = vshrl.u32 %v1025, 16
      %v1135 = vor.u32 %v1133, %v1131
      %v1137 = vshll.u32 %v1026, 16
      %v1139 = vrot.slane %v1137, 1
      %v1140 = vsel %vm1032, %v1135, %v1139
      %v1141 = vshrl.u32 %v1026, 16
      %v1143 = vor.u32 %v1141, %v1139
      %v1145 = vshll.u32 %v1027, 16
      %v1147 = vrot.slane %v1145, 1
      %v1148 = vsel %vm1032, %v1143, %v1147
      %v1149 = vshrl.u32 %v1027, 16
      %v1151 = vor.u32 %v1149, %v1147
      %v1153 = vshll.u32 %v1028, 16
      %v1155 = vrot.slane %v1153, 1
      %v1156 = vsel %vm1032, %v1151, %v1155
      %v1157 = vshrl.u32 %v1028, 16
      %v1159 = vor.u32 %v1157, %v1155
      %v1161 = vshll.u32 %v1029, 16
      %v1163 = vrot.slane %v1161, 1
      %v1164 = vsel %vm1032, %v1159, %v1163
      %v1165 = vshrl.u32 %v1029, 16
      %v1167 = vor.u32 %v1165, %v1163
      %v1169 = vshll.u32 %v1030, 16
      %v1171 = vrot.slane %v1169, 1
      %v1172 = vsel %vm1032, %v1167, %v1171
      %v1173 = vshrl.u32 %v1030, 16
      %v1175 = vor.u32 %v1173, %v1171
      %v1177 = vshll.u32 %v1031, 16
      %v1179 = vrot.slane %v1177, 1
      %v1180 = vsel %vm1032, %v1175, %v1179
      %v1215 = vunpack.c.l.b16 %v923
      %v1216 = vunpack.c.l.b16 %v924
      %v1217 = vunpack.c.l.b16 %v925
      %v1218 = vunpack.c.l.b16 %v926
      %v1219 = vunpack.c.l.b16 %v927
      %v1220 = vunpack.c.l.b16 %v928
      %v1221 = vunpack.c.l.b16 %v929
      %v1222 = vunpack.c.l.b16 %v930
      %v1223 = vunpack.c.l.b16 %v931
      %v1224 = vunpack.c.l.b16 %v932
      %v1225 = vunpack.c.l.b16 %v933
      %v1226 = vunpack.c.l.b16 %v934
      %v1227 = vunpack.c.l.b16 %v935
      %v1228 = vunpack.c.l.b16 %v936
      %v1229 = vunpack.c.l.b16 %v937
      %v1230 = vunpack.c.l.b16 %v938
      %v1231 = vpack.c.b16 %v1216, %v1215
      %v1232 = vpack.c.b16 %v1218, %v1217
      %v1233 = vpack.c.b16 %v1220, %v1219
      %v1234 = vpack.c.b16 %v1222, %v1221
      %v1235 = vpack.c.b16 %v1224, %v1223
      %v1236 = vpack.c.b16 %v1226, %v1225
      %v1237 = vpack.c.b16 %v1228, %v1227
      %v1238 = vpack.c.b16 %v1230, %v1229
      %1247 = vmatpush.bf16.msra.mxu0 %v1238
      %1248 = vmatpush.bf16.msra.mxu0 %v1237
      %1249 = vmatpush.bf16.msra.mxu0 %v1236
      %1250 = vmatpush.bf16.msra.mxu0 %v1235
      %1251 = vmatpush.bf16.msra.mxu0 %v1234
      %1252 = vmatpush.bf16.msra.mxu0 %v1233
      %1253 = vmatpush.bf16.msra.mxu0 %v1232
      %1254 = vmatpush.bf16.msra.mxu0 %v1231
      %1255 = vmatmul.bf16.gmra.mxu0 %v1044
      %v1256 = vpop.f32.mrf.mxu0
      %v1257 = vadd.f32 0.0, %v1256
      %v1258 = vpop.f32.mrf.mxu0
      %v1259 = vadd.f32 0.0, %v1258
      %1260 = vmatmul.bf16.gmra.mxu0 %v1052
      %v1261 = vpop.f32.mrf.mxu0
      %v1262 = vadd.f32 0.0, %v1261
      %v1263 = vpop.f32.mrf.mxu0
      %v1264 = vadd.f32 0.0, %v1263
      %1265 = vmatmul.bf16.gmra.mxu0 %v1060
      %v1266 = vpop.f32.mrf.mxu0
      %v1267 = vadd.f32 0.0, %v1266
      %v1268 = vpop.f32.mrf.mxu0
      %v1269 = vadd.f32 0.0, %v1268
      %1270 = vmatmul.bf16.gmra.mxu0 %v1068
      %v1271 = vpop.f32.mrf.mxu0
      %v1272 = vadd.f32 0.0, %v1271
      %v1273 = vpop.f32.mrf.mxu0
      %v1274 = vadd.f32 0.0, %v1273
      %1275 = vmatmul.bf16.gmra.mxu0 %v1076
      %v1276 = vpop.f32.mrf.mxu0
      %v1277 = vadd.f32 0.0, %v1276
      %v1278 = vpop.f32.mrf.mxu0
      %v1279 = vadd.f32 0.0, %v1278
      %1280 = vmatmul.bf16.gmra.mxu0 %v1084
      %v1281 = vpop.f32.mrf.mxu0
      %v1282 = vadd.f32 0.0, %v1281
      %v1283 = vpop.f32.mrf.mxu0
      %v1284 = vadd.f32 0.0, %v1283
      %1285 = vmatmul.bf16.gmra.mxu0 %v1092
      %v1286 = vpop.f32.mrf.mxu0
      %v1287 = vadd.f32 0.0, %v1286
      %v1288 = vpop.f32.mrf.mxu0
      %v1289 = vadd.f32 0.0, %v1288
      %1290 = vmatmul.bf16.gmra.mxu0 %v1100
      %v1291 = vpop.f32.mrf.mxu0
      %v1292 = vadd.f32 0.0, %v1291
      %v1293 = vpop.f32.mrf.mxu0
      %v1294 = vadd.f32 0.0, %v1293
      %1295 = vmatmul.bf16.gmra.mxu0 %v1108
      %v1296 = vpop.f32.mrf.mxu0
      %v1297 = vadd.f32 0.0, %v1296
      %v1298 = vpop.f32.mrf.mxu0
      %v1299 = vadd.f32 0.0, %v1298
      %1300 = vmatmul.bf16.gmra.mxu0 %v1116
      %v1301 = vpop.f32.mrf.mxu0
      %v1302 = vadd.f32 0.0, %v1301
      %v1303 = vpop.f32.mrf.mxu0
      %v1304 = vadd.f32 0.0, %v1303
      %1305 = vmatmul.bf16.gmra.mxu0 %v1124
      %v1306 = vpop.f32.mrf.mxu0
      %v1307 = vadd.f32 0.0, %v1306
      %v1308 = vpop.f32.mrf.mxu0
      %v1309 = vadd.f32 0.0, %v1308
      %1310 = vmatmul.bf16.gmra.mxu0 %v1132
      %v1311 = vpop.f32.mrf.mxu0
      %v1312 = vadd.f32 0.0, %v1311
      %v1313 = vpop.f32.mrf.mxu0
      %v1314 = vadd.f32 0.0, %v1313
      %1315 = vmatmul.bf16.gmra.mxu0 %v1140
      %v1316 = vpop.f32.mrf.mxu0
      %v1317 = vadd.f32 0.0, %v1316
      %v1318 = vpop.f32.mrf.mxu0
      %v1319 = vadd.f32 0.0, %v1318
      %1320 = vmatmul.bf16.gmra.mxu0 %v1148
      %v1321 = vpop.f32.mrf.mxu0
      %v1322 = vadd.f32 0.0, %v1321
      %v1323 = vpop.f32.mrf.mxu0
      %v1324 = vadd.f32 0.0, %v1323
      %1325 = vmatmul.bf16.gmra.mxu0 %v1156
      %v1326 = vpop.f32.mrf.mxu0
      %v1327 = vadd.f32 0.0, %v1326
      %v1328 = vpop.f32.mrf.mxu0
      %v1329 = vadd.f32 0.0, %v1328
      %1330 = vmatmul.bf16.gmra.mxu0 %v1164
      %v1331 = vpop.f32.mrf.mxu0
      %v1332 = vadd.f32 0.0, %v1331
      %v1333 = vpop.f32.mrf.mxu0
      %v1334 = vadd.f32 0.0, %v1333
      %1335 = vmatmul.bf16.gmra.mxu0 %v1172
      %v1336 = vpop.f32.mrf.mxu0
      %v1337 = vadd.f32 0.0, %v1336
      %v1338 = vpop.f32.mrf.mxu0
      %v1339 = vadd.f32 0.0, %v1338
      %1340 = vmatmul.bf16.gmra.mxu0 %v1180
      %v1341 = vpop.f32.mrf.mxu0
      %v1342 = vadd.f32 0.0, %v1341
      %v1343 = vpop.f32.mrf.mxu0
      %v1344 = vadd.f32 0.0, %v1343
      %1345 = vdwg.mxu0
      %v1380 = vunpack.c.l.b16 %v905
      %v1381 = vunpack.c.l.b16 %v906
      %v1382 = vunpack.c.l.b16 %v907
      %v1383 = vunpack.c.l.b16 %v908
      %v1384 = vunpack.c.l.b16 %v909
      %v1385 = vunpack.c.l.b16 %v910
      %v1386 = vunpack.c.l.b16 %v911
      %v1387 = vunpack.c.l.b16 %v912
      %v1388 = vunpack.c.l.b16 %v913
      %v1389 = vunpack.c.l.b16 %v914
      %v1390 = vunpack.c.l.b16 %v915
      %v1391 = vunpack.c.l.b16 %v916
      %v1392 = vunpack.c.l.b16 %v917
      %v1393 = vunpack.c.l.b16 %v918
      %v1394 = vunpack.c.l.b16 %v919
      %v1395 = vunpack.c.l.b16 %v920
      %v1396 = vpack.c.b16 %v1381, %v1380
      %v1397 = vpack.c.b16 %v1383, %v1382
      %v1398 = vpack.c.b16 %v1385, %v1384
      %v1399 = vpack.c.b16 %v1387, %v1386
      %v1400 = vpack.c.b16 %v1389, %v1388
      %v1401 = vpack.c.b16 %v1391, %v1390
      %v1402 = vpack.c.b16 %v1393, %v1392
      %v1403 = vpack.c.b16 %v1395, %v1394
      %1412 = vmatpush.bf16.msra.mxu0 %v1403
      %1413 = vmatpush.bf16.msra.mxu0 %v1402
      %1414 = vmatpush.bf16.msra.mxu0 %v1401
      %1415 = vmatpush.bf16.msra.mxu0 %v1400
      %1416 = vmatpush.bf16.msra.mxu0 %v1399
      %1417 = vmatpush.bf16.msra.mxu0 %v1398
      %1418 = vmatpush.bf16.msra.mxu0 %v1397
      %1419 = vmatpush.bf16.msra.mxu0 %v1396
      %1420 = vmatmul.bf16.gmra.mxu0 %v1013
      %v1421 = vpop.f32.mrf.mxu0
      %v1422 = vadd.f32 %v1257, %v1421
      %v1423 = vpop.f32.mrf.mxu0
      %v1424 = vadd.f32 %v1259, %v1423
      %1425 = vmatmul.bf16.gmra.mxu0 %v1014
      %v1426 = vpop.f32.mrf.mxu0
      %v1427 = vadd.f32 %v1262, %v1426
      %v1428 = vpop.f32.mrf.mxu0
      %v1429 = vadd.f32 %v1264, %v1428
      %1430 = vmatmul.bf16.gmra.mxu0 %v1015
      %v1431 = vpop.f32.mrf.mxu0
      %v1432 = vadd.f32 %v1267, %v1431
      %v1433 = vpop.f32.mrf.mxu0
      %v1434 = vadd.f32 %v1269, %v1433
      %1435 = vmatmul.bf16.gmra.mxu0 %v1016
      %v1436 = vpop.f32.mrf.mxu0
      %v1437 = vadd.f32 %v1272, %v1436
      %v1438 = vpop.f32.mrf.mxu0
      %v1439 = vadd.f32 %v1274, %v1438
      %1440 = vmatmul.bf16.gmra.mxu0 %v1017
      %v1441 = vpop.f32.mrf.mxu0
      %v1442 = vadd.f32 %v1277, %v1441
      %v1443 = vpop.f32.mrf.mxu0
      %v1444 = vadd.f32 %v1279, %v1443
      %1445 = vmatmul.bf16.gmra.mxu0 %v1018
      %v1446 = vpop.f32.mrf.mxu0
      %v1447 = vadd.f32 %v1282, %v1446
      %v1448 = vpop.f32.mrf.mxu0
      %v1449 = vadd.f32 %v1284, %v1448
      %1450 = vmatmul.bf16.gmra.mxu0 %v1019
      %v1451 = vpop.f32.mrf.mxu0
      %v1452 = vadd.f32 %v1287, %v1451
      %v1453 = vpop.f32.mrf.mxu0
      %v1454 = vadd.f32 %v1289, %v1453
      %1455 = vmatmul.bf16.gmra.mxu0 %v1020
      %v1456 = vpop.f32.mrf.mxu0
      %v1457 = vadd.f32 %v1292, %v1456
      %v1458 = vpop.f32.mrf.mxu0
      %v1459 = vadd.f32 %v1294, %v1458
      %1460 = vmatmul.bf16.gmra.mxu0 %v1021
      %v1461 = vpop.f32.mrf.mxu0
      %v1462 = vadd.f32 %v1297, %v1461
      %v1463 = vpop.f32.mrf.mxu0
      %v1464 = vadd.f32 %v1299, %v1463
      %1465 = vmatmul.bf16.gmra.mxu0 %v1022
      %v1466 = vpop.f32.mrf.mxu0
      %v1467 = vadd.f32 %v1302, %v1466
      %v1468 = vpop.f32.mrf.mxu0
      %v1469 = vadd.f32 %v1304, %v1468
      %1470 = vmatmul.bf16.gmra.mxu0 %v1023
      %v1471 = vpop.f32.mrf.mxu0
      %v1472 = vadd.f32 %v1307, %v1471
      %v1473 = vpop.f32.mrf.mxu0
      %v1474 = vadd.f32 %v1309, %v1473
      %1475 = vmatmul.bf16.gmra.mxu0 %v1024
      %v1476 = vpop.f32.mrf.mxu0
      %v1477 = vadd.f32 %v1312, %v1476
      %v1478 = vpop.f32.mrf.mxu0
      %v1479 = vadd.f32 %v1314, %v1478
      %1480 = vmatmul.bf16.gmra.mxu0 %v1025
      %v1481 = vpop.f32.mrf.mxu0
      %v1482 = vadd.f32 %v1317, %v1481
      %v1483 = vpop.f32.mrf.mxu0
      %v1484 = vadd.f32 %v1319, %v1483
      %1485 = vmatmul.bf16.gmra.mxu0 %v1026
      %v1486 = vpop.f32.mrf.mxu0
      %v1487 = vadd.f32 %v1322, %v1486
      %v1488 = vpop.f32.mrf.mxu0
      %v1489 = vadd.f32 %v1324, %v1488
      %1490 = vmatmul.bf16.gmra.mxu0 %v1027
      %v1491 = vpop.f32.mrf.mxu0
      %v1492 = vadd.f32 %v1327, %v1491
      %v1493 = vpop.f32.mrf.mxu0
      %v1494 = vadd.f32 %v1329, %v1493
      %1495 = vmatmul.bf16.gmra.mxu0 %v1028
      %v1496 = vpop.f32.mrf.mxu0
      %v1497 = vadd.f32 %v1332, %v1496
      %v1498 = vpop.f32.mrf.mxu0
      %v1499 = vadd.f32 %v1334, %v1498
      %1500 = vmatmul.bf16.gmra.mxu0 %v1029
      %v1501 = vpop.f32.mrf.mxu0
      %v1502 = vadd.f32 %v1337, %v1501
      %v1503 = vpop.f32.mrf.mxu0
      %v1504 = vadd.f32 %v1339, %v1503
      %1505 = vmatmul.bf16.gmra.mxu0 %v1030
      %v1506 = vpop.f32.mrf.mxu0
      %v1507 = vadd.f32 %v1342, %v1506
      %v1508 = vpop.f32.mrf.mxu0
      %v1509 = vadd.f32 %v1344, %v1508
      %1510 = vdwg.mxu0
      %v1511 = vld [vmem:[#allocation2] sm:$0xe]
      %s1512 = scalar_lea.vmem %s3, 128
      %v1513 = vld [vmem:[%s1512] sm:$0xf]
      %v1514 = vld [vmem:[%s1512 + $0x4] sm:$0xf]
      %v1515 = vld [vmem:[%s1512 + $0x8] sm:$0xf]
      %v1516 = vld [vmem:[%s1512 + $0xc] sm:$0xf]
      %v1517 = vld [vmem:[%s1512 + $0x10] sm:$0xf]
      %v1518 = vld [vmem:[%s1512 + $0x14] sm:$0xf]
      %v1519 = vld [vmem:[%s1512 + $0x18] sm:$0xf]
      %v1520 = vld [vmem:[%s1512 + $0x1c] sm:$0xf]
      %v1521 = vld [vmem:[%s1512 + $0x20] sm:$0xf]
      %v1522 = vld [vmem:[%s1512 + $0x24] sm:$0xf]
      %v1523 = vld [vmem:[%s1512 + $0x28] sm:$0xf]
      %v1524 = vld [vmem:[%s1512 + $0x2c] sm:$0xf]
      %v1525 = vld [vmem:[%s1512 + $0x30] sm:$0xf]
      %v1526 = vld [vmem:[%s1512 + $0x34] sm:$0xf]
      %v1527 = vld [vmem:[%s1512 + $0x38] sm:$0xf]
      %v1528 = vld [vmem:[%s1512 + $0x3c] sm:$0xf]
      %v1530 = vunpack.c.l.b16 %v1511
      %v1531 = vpack.c.b16 %v977, %v1530
      %vm1532 = vcmask 1046528
      %v1533 = vrot.slane %v1531, 1
      %v1534 = vrot.slane %v1014, 1
      %v1535 = vsel %vm1532, %v1533, %v1534
      %v1536 = vrot.slane %v1015, 1
      %v1537 = vsel %vm1532, %v1534, %v1536
      %v1538 = vrot.slane %v1016, 1
      %v1539 = vsel %vm1532, %v1536, %v1538
      %v1540 = vrot.slane %v1017, 1
      %v1541 = vsel %vm1532, %v1538, %v1540
      %v1542 = vrot.slane %v1018, 1
      %v1543 = vsel %vm1532, %v1540, %v1542
      %v1544 = vrot.slane %v1019, 1
      %v1545 = vsel %vm1532, %v1542, %v1544
      %v1546 = vrot.slane %v1020, 1
      %v1547 = vsel %vm1532, %v1544, %v1546
      %v1548 = vrot.slane %v1021, 1
      %v1549 = vsel %vm1532, %v1546, %v1548
      %v1550 = vrot.slane %v1022, 1
      %v1551 = vsel %vm1532, %v1548, %v1550
      %v1552 = vrot.slane %v1023, 1
      %v1553 = vsel %vm1532, %v1550, %v1552
      %v1554 = vrot.slane %v1024, 1
      %v1555 = vsel %vm1532, %v1552, %v1554
      %v1556 = vrot.slane %v1025, 1
      %v1557 = vsel %vm1532, %v1554, %v1556
      %v1558 = vrot.slane %v1026, 1
      %v1559 = vsel %vm1532, %v1556, %v1558
      %v1560 = vrot.slane %v1027, 1
      %v1561 = vsel %vm1532, %v1558, %v1560
      %v1562 = vrot.slane %v1028, 1
      %v1563 = vsel %vm1532, %v1560, %v1562
      %v1564 = vrot.slane %v1029, 1
      %v1565 = vsel %vm1532, %v1562, %v1564
      %v1566 = vrot.slane %v1030, 1
      %v1567 = vsel %vm1532, %v1564, %v1566
      %v1568 = vrot.slane %v1031, 1
      %v1569 = vsel %vm1532, %v1566, %v1568
      %v1604 = vunpack.c.l.b16 %v1513
      %v1605 = vunpack.c.l.b16 %v1514
      %v1606 = vunpack.c.l.b16 %v1515
      %v1607 = vunpack.c.l.b16 %v1516
      %v1608 = vunpack.c.l.b16 %v1517
      %v1609 = vunpack.c.l.b16 %v1518
      %v1610 = vunpack.c.l.b16 %v1519
      %v1611 = vunpack.c.l.b16 %v1520
      %v1612 = vunpack.c.l.b16 %v1521
      %v1613 = vunpack.c.l.b16 %v1522
      %v1614 = vunpack.c.l.b16 %v1523
      %v1615 = vunpack.c.l.b16 %v1524
      %v1616 = vunpack.c.l.b16 %v1525
      %v1617 = vunpack.c.l.b16 %v1526
      %v1618 = vunpack.c.l.b16 %v1527
      %v1619 = vunpack.c.l.b16 %v1528
      %v1620 = vpack.c.b16 %v1605, %v1604
      %v1621 = vpack.c.b16 %v1607, %v1606
      %v1622 = vpack.c.b16 %v1609, %v1608
      %v1623 = vpack.c.b16 %v1611, %v1610
      %v1624 = vpack.c.b16 %v1613, %v1612
      %v1625 = vpack.c.b16 %v1615, %v1614
      %v1626 = vpack.c.b16 %v1617, %v1616
      %v1627 = vpack.c.b16 %v1619, %v1618
      %1636 = vmatpush.bf16.msra.mxu0 %v1627
      %1637 = vmatpush.bf16.msra.mxu0 %v1626
      %1638 = vmatpush.bf16.msra.mxu0 %v1625
      %1639 = vmatpush.bf16.msra.mxu0 %v1624
      %1640 = vmatpush.bf16.msra.mxu0 %v1623
      %1641 = vmatpush.bf16.msra.mxu0 %v1622
      %1642 = vmatpush.bf16.msra.mxu0 %v1621
      %1643 = vmatpush.bf16.msra.mxu0 %v1620
      %1644 = vmatmul.bf16.gmra.mxu0 %v1535
      %v1645 = vpop.f32.mrf.mxu0
      %v1646 = vadd.f32 0.0, %v1645
      %v1647 = vpop.f32.mrf.mxu0
      %v1648 = vadd.f32 0.0, %v1647
      %1649 = vmatmul.bf16.gmra.mxu0 %v1537
      %v1650 = vpop.f32.mrf.mxu0
      %v1651 = vadd.f32 0.0, %v1650
      %v1652 = vpop.f32.mrf.mxu0
      %v1653 = vadd.f32 0.0, %v1652
      %1654 = vmatmul.bf16.gmra.mxu0 %v1539
      %v1655 = vpop.f32.mrf.mxu0
      %v1656 = vadd.f32 0.0, %v1655
      %v1657 = vpop.f32.mrf.mxu0
      %v1658 = vadd.f32 0.0, %v1657
      %1659 = vmatmul.bf16.gmra.mxu0 %v1541
      %v1660 = vpop.f32.mrf.mxu0
      %v1661 = vadd.f32 0.0, %v1660
      %v1662 = vpop.f32.mrf.mxu0
      %v1663 = vadd.f32 0.0, %v1662
      %1664 = vmatmul.bf16.gmra.mxu0 %v1543
      %v1665 = vpop.f32.mrf.mxu0
      %v1666 = vadd.f32 0.0, %v1665
      %v1667 = vpop.f32.mrf.mxu0
      %v1668 = vadd.f32 0.0, %v1667
      %1669 = vmatmul.bf16.gmra.mxu0 %v1545
      %v1670 = vpop.f32.mrf.mxu0
      %v1671 = vadd.f32 0.0, %v1670
      %v1672 = vpop.f32.mrf.mxu0
      %v1673 = vadd.f32 0.0, %v1672
      %1674 = vmatmul.bf16.gmra.mxu0 %v1547
      %v1675 = vpop.f32.mrf.mxu0
      %v1676 = vadd.f32 0.0, %v1675
      %v1677 = vpop.f32.mrf.mxu0
      %v1678 = vadd.f32 0.0, %v1677
      %1679 = vmatmul.bf16.gmra.mxu0 %v1549
      %v1680 = vpop.f32.mrf.mxu0
      %v1681 = vadd.f32 0.0, %v1680
      %v1682 = vpop.f32.mrf.mxu0
      %v1683 = vadd.f32 0.0, %v1682
      %1684 = vmatmul.bf16.gmra.mxu0 %v1551
      %v1685 = vpop.f32.mrf.mxu0
      %v1686 = vadd.f32 0.0, %v1685
      %v1687 = vpop.f32.mrf.mxu0
      %v1688 = vadd.f32 0.0, %v1687
      %1689 = vmatmul.bf16.gmra.mxu0 %v1553
      %v1690 = vpop.f32.mrf.mxu0
      %v1691 = vadd.f32 0.0, %v1690
      %v1692 = vpop.f32.mrf.mxu0
      %v1693 = vadd.f32 0.0, %v1692
      %1694 = vmatmul.bf16.gmra.mxu0 %v1555
      %v1695 = vpop.f32.mrf.mxu0
      %v1696 = vadd.f32 0.0, %v1695
      %v1697 = vpop.f32.mrf.mxu0
      %v1698 = vadd.f32 0.0, %v1697
      %1699 = vmatmul.bf16.gmra.mxu0 %v1557
      %v1700 = vpop.f32.mrf.mxu0
      %v1701 = vadd.f32 0.0, %v1700
      %v1702 = vpop.f32.mrf.mxu0
      %v1703 = vadd.f32 0.0, %v1702
      %1704 = vmatmul.bf16.gmra.mxu0 %v1559
      %v1705 = vpop.f32.mrf.mxu0
      %v1706 = vadd.f32 0.0, %v1705
      %v1707 = vpop.f32.mrf.mxu0
      %v1708 = vadd.f32 0.0, %v1707
      %1709 = vmatmul.bf16.gmra.mxu0 %v1561
      %v1710 = vpop.f32.mrf.mxu0
      %v1711 = vadd.f32 0.0, %v1710
      %v1712 = vpop.f32.mrf.mxu0
      %v1713 = vadd.f32 0.0, %v1712
      %1714 = vmatmul.bf16.gmra.mxu0 %v1563
      %v1715 = vpop.f32.mrf.mxu0
      %v1716 = vadd.f32 0.0, %v1715
      %v1717 = vpop.f32.mrf.mxu0
      %v1718 = vadd.f32 0.0, %v1717
      %1719 = vmatmul.bf16.gmra.mxu0 %v1565
      %v1720 = vpop.f32.mrf.mxu0
      %v1721 = vadd.f32 0.0, %v1720
      %v1722 = vpop.f32.mrf.mxu0
      %v1723 = vadd.f32 0.0, %v1722
      %1724 = vmatmul.bf16.gmra.mxu0 %v1567
      %v1725 = vpop.f32.mrf.mxu0
      %v1726 = vadd.f32 0.0, %v1725
      %v1727 = vpop.f32.mrf.mxu0
      %v1728 = vadd.f32 0.0, %v1727
      %1729 = vmatmul.bf16.gmra.mxu0 %v1569
      %v1730 = vpop.f32.mrf.mxu0
      %v1731 = vadd.f32 0.0, %v1730
      %v1732 = vpop.f32.mrf.mxu0
      %v1733 = vadd.f32 0.0, %v1732
      %1734 = vdwg.mxu0
      %v1735 = vadd.f32 %v1422, %v1646
      %v1736 = vadd.f32 %v1424, %v1648
      %v1737 = vadd.f32 %v1427, %v1651
      %v1738 = vadd.f32 %v1429, %v1653
      %v1739 = vadd.f32 %v1432, %v1656
      %v1740 = vadd.f32 %v1434, %v1658
      %v1741 = vadd.f32 %v1437, %v1661
      %v1742 = vadd.f32 %v1439, %v1663
      %v1743 = vadd.f32 %v1442, %v1666
      %v1744 = vadd.f32 %v1444, %v1668
      %v1745 = vadd.f32 %v1447, %v1671
      %v1746 = vadd.f32 %v1449, %v1673
      %v1747 = vadd.f32 %v1452, %v1676
      %v1748 = vadd.f32 %v1454, %v1678
      %v1749 = vadd.f32 %v1457, %v1681
      %v1750 = vadd.f32 %v1459, %v1683
      %v1751 = vadd.f32 %v1462, %v1686
      %v1752 = vadd.f32 %v1464, %v1688
      %v1753 = vadd.f32 %v1467, %v1691
      %v1754 = vadd.f32 %v1469, %v1693
      %v1755 = vadd.f32 %v1472, %v1696
      %v1756 = vadd.f32 %v1474, %v1698
      %v1757 = vadd.f32 %v1477, %v1701
      %v1758 = vadd.f32 %v1479, %v1703
      %v1759 = vadd.f32 %v1482, %v1706
      %v1760 = vadd.f32 %v1484, %v1708
      %v1761 = vadd.f32 %v1487, %v1711
      %v1762 = vadd.f32 %v1489, %v1713
      %v1763 = vadd.f32 %v1492, %v1716
      %v1764 = vadd.f32 %v1494, %v1718
      %v1765 = vadd.f32 %v1497, %v1721
      %v1766 = vadd.f32 %v1499, %v1723
      %v1767 = vadd.f32 %v1502, %v1726
      %v1768 = vadd.f32 %v1504, %v1728
      %v1769 = vadd.f32 %v1507, %v1731
      %v1770 = vadd.f32 %v1509, %v1733
      %v1771 = vld [vmem:[#allocation2 + $0x8] sm:$0xe]
      %v1772 = vld [vmem:[#allocation2 + $0xc] sm:$0xf]
      %v1773 = vld [vmem:[#allocation2 + $0x10] sm:$0xf]
      %v1774 = vld [vmem:[#allocation2 + $0x14] sm:$0xf]
      %v1775 = vld [vmem:[#allocation2 + $0x18] sm:$0xf]
      %v1776 = vld [vmem:[#allocation2 + $0x1c] sm:$0xf]
      %v1777 = vld [vmem:[#allocation2 + $0x20] sm:$0xf]
      %v1778 = vld [vmem:[#allocation2 + $0x24] sm:$0xf]
      %v1779 = vld [vmem:[#allocation2 + $0x28] sm:$0xf]
      %v1780 = vld [vmem:[#allocation2 + $0x2c] sm:$0xf]
      %v1781 = vld [vmem:[#allocation2 + $0x30] sm:$0xf]
      %v1782 = vld [vmem:[#allocation2 + $0x34] sm:$0xf]
      %v1783 = vld [vmem:[#allocation2 + $0x38] sm:$0xf]
      %v1784 = vld [vmem:[#allocation2 + $0x3c] sm:$0xf]
      %v1785 = vld [vmem:[#allocation2 + $0x40] sm:$0xf]
      %v1786 = vld [vmem:[#allocation2 + $0x44] sm:$0xf]
      %v1787 = vld [vmem:[#allocation2 + $0x48] sm:$0xf]
      %v1788 = vld [vmem:[#allocation2 + $0x4c] sm:$0xf]
      %v1789 = vld [vmem:[#allocation2 + $0x50] sm:$0xf]
      %v1790 = vld [vmem:[#allocation2 + $0x54] sm:$0xf]
      %v1791 = vld [vmem:[#allocation2 + $0x58] sm:$0xf]
      %v1792 = vld [vmem:[#allocation2 + $0x5c] sm:$0xf]
      %v1793 = vld [vmem:[#allocation2 + $0x60] sm:$0xf]
      %v1794 = vld [vmem:[#allocation2 + $0x64] sm:$0xf]
      %v1795 = vld [vmem:[#allocation2 + $0x68] sm:$0xf]
      %v1796 = vld [vmem:[#allocation2 + $0x6c] sm:$0xf]
      %v1797 = vld [vmem:[#allocation2 + $0x70] sm:$0xf]
      %v1798 = vld [vmem:[#allocation2 + $0x74] sm:$0xf]
      %v1799 = vld [vmem:[#allocation2 + $0x78] sm:$0xf]
      %v1800 = vld [vmem:[#allocation2 + $0x7c] sm:$0xf]
      %v1801 = vld [vmem:[#allocation2 + $0x80] sm:$0xf]
      %v1802 = vld [vmem:[#allocation2 + $0x84] sm:$0xf]
      %v1803 = vld [vmem:[#allocation2 + $0x88] sm:$0xf]
      %v1804 = vld [vmem:[#allocation2 + $0x8c] sm:$0xf]
      %v1805 = vld [vmem:[#allocation2 + $0x90] sm:$0xf]
      %v1806 = vld [vmem:[#allocation2 + $0x94] sm:$0xf]
      %v1807 = vld [vmem:[#allocation2 + $0x98] sm:$0x1]
      %s1808 = scalar_lea.vmem %s3, 192
      %v1809 = vld [vmem:[%s1808] sm:$0xf]
      %v1810 = vld [vmem:[%s1808 + $0x4] sm:$0xf]
      %v1811 = vld [vmem:[%s1808 + $0x8] sm:$0xf]
      %v1812 = vld [vmem:[%s1808 + $0xc] sm:$0xf]
      %v1813 = vld [vmem:[%s1808 + $0x10] sm:$0xf]
      %v1814 = vld [vmem:[%s1808 + $0x14] sm:$0xf]
      %v1815 = vld [vmem:[%s1808 + $0x18] sm:$0xf]
      %v1816 = vld [vmem:[%s1808 + $0x1c] sm:$0xf]
      %v1817 = vld [vmem:[%s1808 + $0x20] sm:$0xf]
      %v1818 = vld [vmem:[%s1808 + $0x24] sm:$0xf]
      %v1819 = vld [vmem:[%s1808 + $0x28] sm:$0xf]
      %v1820 = vld [vmem:[%s1808 + $0x2c] sm:$0xf]
      %v1821 = vld [vmem:[%s1808 + $0x30] sm:$0xf]
      %v1822 = vld [vmem:[%s1808 + $0x34] sm:$0xf]
      %v1823 = vld [vmem:[%s1808 + $0x38] sm:$0xf]
      %v1824 = vld [vmem:[%s1808 + $0x3c] sm:$0xf]
      %v1862 = vunpack.c.l.b16 %v1771
      %v1863 = vunpack.c.l.b16 %v1772
      %v1864 = vunpack.c.l.b16 %v1773
      %v1865 = vunpack.c.l.b16 %v1774
      %v1866 = vunpack.c.l.b16 %v1775
      %v1867 = vunpack.c.l.b16 %v1776
      %v1868 = vunpack.c.l.b16 %v1777
      %v1869 = vunpack.c.l.b16 %v1778
      %v1870 = vunpack.c.l.b16 %v1779
      %v1871 = vunpack.c.l.b16 %v1780
      %v1872 = vunpack.c.l.b16 %v1781
      %v1873 = vunpack.c.l.b16 %v1782
      %v1874 = vunpack.c.l.b16 %v1783
      %v1875 = vunpack.c.l.b16 %v1784
      %v1876 = vunpack.c.l.b16 %v1785
      %v1877 = vunpack.c.l.b16 %v1786
      %v1878 = vunpack.c.l.b16 %v1787
      %v1879 = vunpack.c.l.b16 %v1788
      %v1880 = vunpack.c.l.b16 %v1789
      %v1881 = vunpack.c.l.b16 %v1790
      %v1882 = vunpack.c.l.b16 %v1791
      %v1883 = vunpack.c.l.b16 %v1792
      %v1884 = vunpack.c.l.b16 %v1793
      %v1885 = vunpack.c.l.b16 %v1794
      %v1886 = vunpack.c.l.b16 %v1795
      %v1887 = vunpack.c.l.b16 %v1796
      %v1888 = vunpack.c.l.b16 %v1797
      %v1889 = vunpack.c.l.b16 %v1798
      %v1890 = vunpack.c.l.b16 %v1799
      %v1891 = vunpack.c.l.b16 %v1800
      %v1892 = vunpack.c.l.b16 %v1801
      %v1893 = vunpack.c.l.b16 %v1802
      %v1894 = vunpack.c.l.b16 %v1803
      %v1895 = vunpack.c.l.b16 %v1804
      %v1896 = vunpack.c.l.b16 %v1805
      %v1897 = vunpack.c.l.b16 %v1806
      %v1898 = vunpack.c.l.b16 %v1807
      %v1899 = vpack.c.b16 %v1863, %v1862
      %v1900 = vpack.c.b16 %v1865, %v1864
      %v1901 = vpack.c.b16 %v1867, %v1866
      %v1902 = vpack.c.b16 %v1869, %v1868
      %v1903 = vpack.c.b16 %v1871, %v1870
      %v1904 = vpack.c.b16 %v1873, %v1872
      %v1905 = vpack.c.b16 %v1875, %v1874
      %v1906 = vpack.c.b16 %v1877, %v1876
      %v1907 = vpack.c.b16 %v1879, %v1878
      %v1908 = vpack.c.b16 %v1881, %v1880
      %v1909 = vpack.c.b16 %v1883, %v1882
      %v1910 = vpack.c.b16 %v1885, %v1884
      %v1911 = vpack.c.b16 %v1887, %v1886
      %v1912 = vpack.c.b16 %v1889, %v1888
      %v1913 = vpack.c.b16 %v1891, %v1890
      %v1914 = vpack.c.b16 %v1893, %v1892
      %v1915 = vpack.c.b16 %v1895, %v1894
      %v1916 = vpack.c.b16 %v1897, %v1896
      %v1917 = vpack.c.b16 %v1898, %v1898
      %v1918 = vrot.slane %v1899, 1
      %v1919 = vrot.slane %v1900, 1
      %v1920 = vsel %vm1532, %v1918, %v1919
      %v1921 = vrot.slane %v1901, 1
      %v1922 = vsel %vm1532, %v1919, %v1921
      %v1923 = vrot.slane %v1902, 1
      %v1924 = vsel %vm1532, %v1921, %v1923
      %v1925 = vrot.slane %v1903, 1
      %v1926 = vsel %vm1532, %v1923, %v1925
      %v1927 = vrot.slane %v1904, 1
      %v1928 = vsel %vm1532, %v1925, %v1927
      %v1929 = vrot.slane %v1905, 1
      %v1930 = vsel %vm1532, %v1927, %v1929
      %v1931 = vrot.slane %v1906, 1
      %v1932 = vsel %vm1532, %v1929, %v1931
      %v1933 = vrot.slane %v1907, 1
      %v1934 = vsel %vm1532, %v1931, %v1933
      %v1935 = vrot.slane %v1908, 1
      %v1936 = vsel %vm1532, %v1933, %v1935
      %v1937 = vrot.slane %v1909, 1
      %v1938 = vsel %vm1532, %v1935, %v1937
      %v1939 = vrot.slane %v1910, 1
      %v1940 = vsel %vm1532, %v1937, %v1939
      %v1941 = vrot.slane %v1911, 1
      %v1942 = vsel %vm1532, %v1939, %v1941
      %v1943 = vrot.slane %v1912, 1
      %v1944 = vsel %vm1532, %v1941, %v1943
      %v1945 = vrot.slane %v1913, 1
      %v1946 = vsel %vm1532, %v1943, %v1945
      %v1947 = vrot.slane %v1914, 1
      %v1948 = vsel %vm1532, %v1945, %v1947
      %v1949 = vrot.slane %v1915, 1
      %v1950 = vsel %vm1532, %v1947, %v1949
      %v1951 = vrot.slane %v1916, 1
      %v1952 = vsel %vm1532, %v1949, %v1951
      %v1953 = vrot.slane %v1917, 1
      %v1954 = vsel %vm1532, %v1951, %v1953
      %v1989 = vunpack.c.l.b16 %v1809
      %v1990 = vunpack.c.l.b16 %v1810
      %v1991 = vunpack.c.l.b16 %v1811
      %v1992 = vunpack.c.l.b16 %v1812
      %v1993 = vunpack.c.l.b16 %v1813
      %v1994 = vunpack.c.l.b16 %v1814
      %v1995 = vunpack.c.l.b16 %v1815
      %v1996 = vunpack.c.l.b16 %v1816
      %v1997 = vunpack.c.l.b16 %v1817
      %v1998 = vunpack.c.l.b16 %v1818
      %v1999 = vunpack.c.l.b16 %v1819
      %v2000 = vunpack.c.l.b16 %v1820
      %v2001 = vunpack.c.l.b16 %v1821
      %v2002 = vunpack.c.l.b16 %v1822
      %v2003 = vunpack.c.l.b16 %v1823
      %v2004 = vunpack.c.l.b16 %v1824
      %v2005 = vpack.c.b16 %v1990, %v1989
      %v2006 = vpack.c.b16 %v1992, %v1991
      %v2007 = vpack.c.b16 %v1994, %v1993
      %v2008 = vpack.c.b16 %v1996, %v1995
      %v2009 = vpack.c.b16 %v1998, %v1997
      %v2010 = vpack.c.b16 %v2000, %v1999
      %v2011 = vpack.c.b16 %v2002, %v2001
      %v2012 = vpack.c.b16 %v2004, %v2003
      %2021 = vmatpush.bf16.msra.mxu0 %v2012
      %2022 = vmatpush.bf16.msra.mxu0 %v2011
      %2023 = vmatpush.bf16.msra.mxu0 %v2010
      %2024 = vmatpush.bf16.msra.mxu0 %v2009
      %2025 = vmatpush.bf16.msra.mxu0 %v2008
      %2026 = vmatpush.bf16.msra.mxu0 %v2007
      %2027 = vmatpush.bf16.msra.mxu0 %v2006
      %2028 = vmatpush.bf16.msra.mxu0 %v2005
      %2029 = vmatmul.bf16.gmra.mxu0 %v1920
      %v2030 = vpop.f32.mrf.mxu0
      %v2031 = vadd.f32 0.0, %v2030
      %v2032 = vpop.f32.mrf.mxu0
      %v2033 = vadd.f32 0.0, %v2032
      %2034 = vmatmul.bf16.gmra.mxu0 %v1922
      %v2035 = vpop.f32.mrf.mxu0
      %v2036 = vadd.f32 0.0, %v2035
      %v2037 = vpop.f32.mrf.mxu0
      %v2038 = vadd.f32 0.0, %v2037
      %2039 = vmatmul.bf16.gmra.mxu0 %v1924
      %v2040 = vpop.f32.mrf.mxu0
      %v2041 = vadd.f32 0.0, %v2040
      %v2042 = vpop.f32.mrf.mxu0
      %v2043 = vadd.f32 0.0, %v2042
      %2044 = vmatmul.bf16.gmra.mxu0 %v1926
      %v2045 = vpop.f32.mrf.mxu0
      %v2046 = vadd.f32 0.0, %v2045
      %v2047 = vpop.f32.mrf.mxu0
      %v2048 = vadd.f32 0.0, %v2047
      %2049 = vmatmul.bf16.gmra.mxu0 %v1928
      %v2050 = vpop.f32.mrf.mxu0
      %v2051 = vadd.f32 0.0, %v2050
      %v2052 = vpop.f32.mrf.mxu0
      %v2053 = vadd.f32 0.0, %v2052
      %2054 = vmatmul.bf16.gmra.mxu0 %v1930
      %v2055 = vpop.f32.mrf.mxu0
      %v2056 = vadd.f32 0.0, %v2055
      %v2057 = vpop.f32.mrf.mxu0
      %v2058 = vadd.f32 0.0, %v2057
      %2059 = vmatmul.bf16.gmra.mxu0 %v1932
      %v2060 = vpop.f32.mrf.mxu0
      %v2061 = vadd.f32 0.0, %v2060
      %v2062 = vpop.f32.mrf.mxu0
      %v2063 = vadd.f32 0.0, %v2062
      %2064 = vmatmul.bf16.gmra.mxu0 %v1934
      %v2065 = vpop.f32.mrf.mxu0
      %v2066 = vadd.f32 0.0, %v2065
      %v2067 = vpop.f32.mrf.mxu0
      %v2068 = vadd.f32 0.0, %v2067
      %2069 = vmatmul.bf16.gmra.mxu0 %v1936
      %v2070 = vpop.f32.mrf.mxu0
      %v2071 = vadd.f32 0.0, %v2070
      %v2072 = vpop.f32.mrf.mxu0
      %v2073 = vadd.f32 0.0, %v2072
      %2074 = vmatmul.bf16.gmra.mxu0 %v1938
      %v2075 = vpop.f32.mrf.mxu0
      %v2076 = vadd.f32 0.0, %v2075
      %v2077 = vpop.f32.mrf.mxu0
      %v2078 = vadd.f32 0.0, %v2077
      %2079 = vmatmul.bf16.gmra.mxu0 %v1940
      %v2080 = vpop.f32.mrf.mxu0
      %v2081 = vadd.f32 0.0, %v2080
      %v2082 = vpop.f32.mrf.mxu0
      %v2083 = vadd.f32 0.0, %v2082
      %2084 = vmatmul.bf16.gmra.mxu0 %v1942
      %v2085 = vpop.f32.mrf.mxu0
      %v2086 = vadd.f32 0.0, %v2085
      %v2087 = vpop.f32.mrf.mxu0
      %v2088 = vadd.f32 0.0, %v2087
      %2089 = vmatmul.bf16.gmra.mxu0 %v1944
      %v2090 = vpop.f32.mrf.mxu0
      %v2091 = vadd.f32 0.0, %v2090
      %v2092 = vpop.f32.mrf.mxu0
      %v2093 = vadd.f32 0.0, %v2092
      %2094 = vmatmul.bf16.gmra.mxu0 %v1946
      %v2095 = vpop.f32.mrf.mxu0
      %v2096 = vadd.f32 0.0, %v2095
      %v2097 = vpop.f32.mrf.mxu0
      %v2098 = vadd.f32 0.0, %v2097
      %2099 = vmatmul.bf16.gmra.mxu0 %v1948
      %v2100 = vpop.f32.mrf.mxu0
      %v2101 = vadd.f32 0.0, %v2100
      %v2102 = vpop.f32.mrf.mxu0
      %v2103 = vadd.f32 0.0, %v2102
      %2104 = vmatmul.bf16.gmra.mxu0 %v1950
      %v2105 = vpop.f32.mrf.mxu0
      %v2106 = vadd.f32 0.0, %v2105
      %v2107 = vpop.f32.mrf.mxu0
      %v2108 = vadd.f32 0.0, %v2107
      %2109 = vmatmul.bf16.gmra.mxu0 %v1952
      %v2110 = vpop.f32.mrf.mxu0
      %v2111 = vadd.f32 0.0, %v2110
      %v2112 = vpop.f32.mrf.mxu0
      %v2113 = vadd.f32 0.0, %v2112
      %2114 = vmatmul.bf16.gmra.mxu0 %v1954
      %v2115 = vpop.f32.mrf.mxu0
      %v2116 = vadd.f32 0.0, %v2115
      %v2117 = vpop.f32.mrf.mxu0
      %v2118 = vadd.f32 0.0, %v2117
      %2119 = vdwg.mxu0
      %v2120 = vadd.f32 %v1735, %v2031
      %v2121 = vadd.f32 %v1736, %v2033
      %v2122 = vadd.f32 %v1737, %v2036
      %v2123 = vadd.f32 %v1738, %v2038
      %v2124 = vadd.f32 %v1739, %v2041
      %v2125 = vadd.f32 %v1740, %v2043
      %v2126 = vadd.f32 %v1741, %v2046
      %v2127 = vadd.f32 %v1742, %v2048
      %v2128 = vadd.f32 %v1743, %v2051
      %v2129 = vadd.f32 %v1744, %v2053
      %v2130 = vadd.f32 %v1745, %v2056
      %v2131 = vadd.f32 %v1746, %v2058
      %v2132 = vadd.f32 %v1747, %v2061
      %v2133 = vadd.f32 %v1748, %v2063
      %v2134 = vadd.f32 %v1749, %v2066
      %v2135 = vadd.f32 %v1750, %v2068
      %v2136 = vadd.f32 %v1751, %v2071
      %v2137 = vadd.f32 %v1752, %v2073
      %v2138 = vadd.f32 %v1753, %v2076
      %v2139 = vadd.f32 %v1754, %v2078
      %v2140 = vadd.f32 %v1755, %v2081
      %v2141 = vadd.f32 %v1756, %v2083
      %v2142 = vadd.f32 %v1757, %v2086
      %v2143 = vadd.f32 %v1758, %v2088
      %v2144 = vadd.f32 %v1759, %v2091
      %v2145 = vadd.f32 %v1760, %v2093
      %v2146 = vadd.f32 %v1761, %v2096
      %v2147 = vadd.f32 %v1762, %v2098
      %v2148 = vadd.f32 %v1763, %v2101
      %v2149 = vadd.f32 %v1764, %v2103
      %v2150 = vadd.f32 %v1765, %v2106
      %v2151 = vadd.f32 %v1766, %v2108
      %v2152 = vadd.f32 %v1767, %v2111
      %v2153 = vadd.f32 %v1768, %v2113
      %v2154 = vadd.f32 %v1769, %v2116
      %v2155 = vadd.f32 %v1770, %v2118
      %v2156 = vld [vmem:[#allocation2 + $0x98] sm:$0x3]
      %s2157 = scalar_lea.vmem %s3, 256
      %v2158 = vld [vmem:[%s2157] sm:$0xf]
      %v2159 = vld [vmem:[%s2157 + $0x4] sm:$0xf]
      %v2160 = vld [vmem:[%s2157 + $0x8] sm:$0xf]
      %v2161 = vld [vmem:[%s2157 + $0xc] sm:$0xf]
      %v2162 = vld [vmem:[%s2157 + $0x10] sm:$0xf]
      %v2163 = vld [vmem:[%s2157 + $0x14] sm:$0xf]
      %v2164 = vld [vmem:[%s2157 + $0x18] sm:$0xf]
      %v2165 = vld [vmem:[%s2157 + $0x1c] sm:$0xf]
      %v2166 = vld [vmem:[%s2157 + $0x20] sm:$0xf]
      %v2167 = vld [vmem:[%s2157 + $0x24] sm:$0xf]
      %v2168 = vld [vmem:[%s2157 + $0x28] sm:$0xf]
      %v2169 = vld [vmem:[%s2157 + $0x2c] sm:$0xf]
      %v2170 = vld [vmem:[%s2157 + $0x30] sm:$0xf]
      %v2171 = vld [vmem:[%s2157 + $0x34] sm:$0xf]
      %v2172 = vld [vmem:[%s2157 + $0x38] sm:$0xf]
      %v2173 = vld [vmem:[%s2157 + $0x3c] sm:$0xf]
      %v2175 = vunpack.c.l.b16 %v2156
      %v2176 = vpack.c.b16 %v2175, %v2175
      %vm2177 = vsmask.f32 6400
      %v2179 = vshrl.u32 %v1899, 16
      %v2181 = vrot.slane %v2179, 1
      %v2182 = vshll.u32 %v1899, 16
      %v2184 = vrot.slane %v2182, 2
      %v2185 = vor.u32 %v2181, %v2184
      %v2187 = vshrl.u32 %v1900, 16
      %v2189 = vrot.slane %v2187, 1
      %v2190 = vshll.u32 %v1900, 16
      %v2192 = vrot.slane %v2190, 2
      %v2193 = vor.u32 %v2189, %v2192
      %v2194 = vsel %vm2177, %v2185, %v2193
      %v2196 = vshrl.u32 %v1901, 16
      %v2198 = vrot.slane %v2196, 1
      %v2199 = vshll.u32 %v1901, 16
      %v2201 = vrot.slane %v2199, 2
      %v2202 = vor.u32 %v2198, %v2201
      %v2203 = vsel %vm2177, %v2193, %v2202
      %v2205 = vshrl.u32 %v1902, 16
      %v2207 = vrot.slane %v2205, 1
      %v2208 = vshll.u32 %v1902, 16
      %v2210 = vrot.slane %v2208, 2
      %v2211 = vor.u32 %v2207, %v2210
      %v2212 = vsel %vm2177, %v2202, %v2211
      %v2214 = vshrl.u32 %v1903, 16
      %v2216 = vrot.slane %v2214, 1
      %v2217 = vshll.u32 %v1903, 16
      %v2219 = vrot.slane %v2217, 2
      %v2220 = vor.u32 %v2216, %v2219
      %v2221 = vsel %vm2177, %v2211, %v2220
      %v2223 = vshrl.u32 %v1904, 16
      %v2225 = vrot.slane %v2223, 1
      %v2226 = vshll.u32 %v1904, 16
      %v2228 = vrot.slane %v2226, 2
      %v2229 = vor.u32 %v2225, %v2228
      %v2230 = vsel %vm2177, %v2220, %v2229
      %v2232 = vshrl.u32 %v1905, 16
      %v2234 = vrot.slane %v2232, 1
      %v2235 = vshll.u32 %v1905, 16
      %v2237 = vrot.slane %v2235, 2
      %v2238 = vor.u32 %v2234, %v2237
      %v2239 = vsel %vm2177, %v2229, %v2238
      %v2241 = vshrl.u32 %v1906, 16
      %v2243 = vrot.slane %v2241, 1
      %v2244 = vshll.u32 %v1906, 16
      %v2246 = vrot.slane %v2244, 2
      %v2247 = vor.u32 %v2243, %v2246
      %v2248 = vsel %vm2177, %v2238, %v2247
      %v2250 = vshrl.u32 %v1907, 16
      %v2252 = vrot.slane %v2250, 1
      %v2253 = vshll.u32 %v1907, 16
      %v2255 = vrot.slane %v2253, 2
      %v2256 = vor.u32 %v2252, %v2255
      %v2257 = vsel %vm2177, %v2247, %v2256
      %v2259 = vshrl.u32 %v1908, 16
      %v2261 = vrot.slane %v2259, 1
      %v2262 = vshll.u32 %v1908, 16
      %v2264 = vrot.slane %v2262, 2
      %v2265 = vor.u32 %v2261, %v2264
      %v2266 = vsel %vm2177, %v2256, %v2265
      %v2268 = vshrl.u32 %v1909, 16
      %v2270 = vrot.slane %v2268, 1
      %v2271 = vshll.u32 %v1909, 16
      %v2273 = vrot.slane %v2271, 2
      %v2274 = vor.u32 %v2270, %v2273
      %v2275 = vsel %vm2177, %v2265, %v2274
      %v2277 = vshrl.u32 %v1910, 16
      %v2279 = vrot.slane %v2277, 1
      %v2280 = vshll.u32 %v1910, 16
      %v2282 = vrot.slane %v2280, 2
      %v2283 = vor.u32 %v2279, %v2282
      %v2284 = vsel %vm2177, %v2274, %v2283
      %v2286 = vshrl.u32 %v1911, 16
      %v2288 = vrot.slane %v2286, 1
      %v2289 = vshll.u32 %v1911, 16
      %v2291 = vrot.slane %v2289, 2
      %v2292 = vor.u32 %v2288, %v2291
      %v2293 = vsel %vm2177, %v2283, %v2292
      %v2295 = vshrl.u32 %v1912, 16
      %v2297 = vrot.slane %v2295, 1
      %v2298 = vshll.u32 %v1912, 16
      %v2300 = vrot.slane %v2298, 2
      %v2301 = vor.u32 %v2297, %v2300
      %v2302 = vsel %vm2177, %v2292, %v2301
      %v2304 = vshrl.u32 %v1913, 16
      %v2306 = vrot.slane %v2304, 1
      %v2307 = vshll.u32 %v1913, 16
      %v2309 = vrot.slane %v2307, 2
      %v2310 = vor.u32 %v2306, %v2309
      %v2311 = vsel %vm2177, %v2301, %v2310
      %v2313 = vshrl.u32 %v1914, 16
      %v2315 = vrot.slane %v2313, 1
      %v2316 = vshll.u32 %v1914, 16
      %v2318 = vrot.slane %v2316, 2
      %v2319 = vor.u32 %v2315, %v2318
      %v2320 = vsel %vm2177, %v2310, %v2319
      %v2322 = vshrl.u32 %v1915, 16
      %v2324 = vrot.slane %v2322, 1
      %v2325 = vshll.u32 %v1915, 16
      %v2327 = vrot.slane %v2325, 2
      %v2328 = vor.u32 %v2324, %v2327
      %v2329 = vsel %vm2177, %v2319, %v2328
      %v2331 = vshrl.u32 %v1916, 16
      %v2333 = vrot.slane %v2331, 1
      %v2334 = vshll.u32 %v1916, 16
      %v2336 = vrot.slane %v2334, 2
      %v2337 = vor.u32 %v2333, %v2336
      %v2338 = vsel %vm2177, %v2328, %v2337
      %v2340 = vshrl.u32 %v2176, 16
      %v2342 = vrot.slane %v2340, 1
      %v2343 = vshll.u32 %v2176, 16
      %v2345 = vrot.slane %v2343, 2
      %v2346 = vor.u32 %v2342, %v2345
      %v2347 = vsel %vm2177, %v2337, %v2346
      %v2382 = vunpack.c.l.b16 %v2158
      %v2383 = vunpack.c.l.b16 %v2159
      %v2384 = vunpack.c.l.b16 %v2160
      %v2385 = vunpack.c.l.b16 %v2161
      %v2386 = vunpack.c.l.b16 %v2162
      %v2387 = vunpack.c.l.b16 %v2163
      %v2388 = vunpack.c.l.b16 %v2164
      %v2389 = vunpack.c.l.b16 %v2165
      %v2390 = vunpack.c.l.b16 %v2166
      %v2391 = vunpack.c.l.b16 %v2167
      %v2392 = vunpack.c.l.b16 %v2168
      %v2393 = vunpack.c.l.b16 %v2169
      %v2394 = vunpack.c.l.b16 %v2170
      %v2395 = vunpack.c.l.b16 %v2171
      %v2396 = vunpack.c.l.b16 %v2172
      %v2397 = vunpack.c.l.b16 %v2173
      %v2398 = vpack.c.b16 %v2383, %v2382
      %v2399 = vpack.c.b16 %v2385, %v2384
      %v2400 = vpack.c.b16 %v2387, %v2386
      %v2401 = vpack.c.b16 %v2389, %v2388
      %v2402 = vpack.c.b16 %v2391, %v2390
      %v2403 = vpack.c.b16 %v2393, %v2392
      %v2404 = vpack.c.b16 %v2395, %v2394
      %v2405 = vpack.c.b16 %v2397, %v2396
      %2414 = vmatpush.bf16.msra.mxu0 %v2405
      %2415 = vmatpush.bf16.msra.mxu0 %v2404
      %2416 = vmatpush.bf16.msra.mxu0 %v2403
      %2417 = vmatpush.bf16.msra.mxu0 %v2402
      %2418 = vmatpush.bf16.msra.mxu0 %v2401
      %2419 = vmatpush.bf16.msra.mxu0 %v2400
      %2420 = vmatpush.bf16.msra.mxu0 %v2399
      %2421 = vmatpush.bf16.msra.mxu0 %v2398
      %2422 = vmatmul.bf16.gmra.mxu0 %v2194
      %v2423 = vpop.f32.mrf.mxu0
      %v2424 = vadd.f32 0.0, %v2423
      %v2425 = vpop.f32.mrf.mxu0
      %v2426 = vadd.f32 0.0, %v2425
      %2427 = vmatmul.bf16.gmra.mxu0 %v2203
      %v2428 = vpop.f32.mrf.mxu0
      %v2429 = vadd.f32 0.0, %v2428
      %v2430 = vpop.f32.mrf.mxu0
      %v2431 = vadd.f32 0.0, %v2430
      %2432 = vmatmul.bf16.gmra.mxu0 %v2212
      %v2433 = vpop.f32.mrf.mxu0
      %v2434 = vadd.f32 0.0, %v2433
      %v2435 = vpop.f32.mrf.mxu0
      %v2436 = vadd.f32 0.0, %v2435
      %2437 = vmatmul.bf16.gmra.mxu0 %v2221
      %v2438 = vpop.f32.mrf.mxu0
      %v2439 = vadd.f32 0.0, %v2438
      %v2440 = vpop.f32.mrf.mxu0
      %v2441 = vadd.f32 0.0, %v2440
      %2442 = vmatmul.bf16.gmra.mxu0 %v2230
      %v2443 = vpop.f32.mrf.mxu0
      %v2444 = vadd.f32 0.0, %v2443
      %v2445 = vpop.f32.mrf.mxu0
      %v2446 = vadd.f32 0.0, %v2445
      %2447 = vmatmul.bf16.gmra.mxu0 %v2239
      %v2448 = vpop.f32.mrf.mxu0
      %v2449 = vadd.f32 0.0, %v2448
      %v2450 = vpop.f32.mrf.mxu0
      %v2451 = vadd.f32 0.0, %v2450
      %2452 = vmatmul.bf16.gmra.mxu0 %v2248
      %v2453 = vpop.f32.mrf.mxu0
      %v2454 = vadd.f32 0.0, %v2453
      %v2455 = vpop.f32.mrf.mxu0
      %v2456 = vadd.f32 0.0, %v2455
      %2457 = vmatmul.bf16.gmra.mxu0 %v2257
      %v2458 = vpop.f32.mrf.mxu0
      %v2459 = vadd.f32 0.0, %v2458
      %v2460 = vpop.f32.mrf.mxu0
      %v2461 = vadd.f32 0.0, %v2460
      %2462 = vmatmul.bf16.gmra.mxu0 %v2266
      %v2463 = vpop.f32.mrf.mxu0
      %v2464 = vadd.f32 0.0, %v2463
      %v2465 = vpop.f32.mrf.mxu0
      %v2466 = vadd.f32 0.0, %v2465
      %2467 = vmatmul.bf16.gmra.mxu0 %v2275
      %v2468 = vpop.f32.mrf.mxu0
      %v2469 = vadd.f32 0.0, %v2468
      %v2470 = vpop.f32.mrf.mxu0
      %v2471 = vadd.f32 0.0, %v2470
      %2472 = vmatmul.bf16.gmra.mxu0 %v2284
      %v2473 = vpop.f32.mrf.mxu0
      %v2474 = vadd.f32 0.0, %v2473
      %v2475 = vpop.f32.mrf.mxu0
      %v2476 = vadd.f32 0.0, %v2475
      %2477 = vmatmul.bf16.gmra.mxu0 %v2293
      %v2478 = vpop.f32.mrf.mxu0
      %v2479 = vadd.f32 0.0, %v2478
      %v2480 = vpop.f32.mrf.mxu0
      %v2481 = vadd.f32 0.0, %v2480
      %2482 = vmatmul.bf16.gmra.mxu0 %v2302
      %v2483 = vpop.f32.mrf.mxu0
      %v2484 = vadd.f32 0.0, %v2483
      %v2485 = vpop.f32.mrf.mxu0
      %v2486 = vadd.f32 0.0, %v2485
      %2487 = vmatmul.bf16.gmra.mxu0 %v2311
      %v2488 = vpop.f32.mrf.mxu0
      %v2489 = vadd.f32 0.0, %v2488
      %v2490 = vpop.f32.mrf.mxu0
      %v2491 = vadd.f32 0.0, %v2490
      %2492 = vmatmul.bf16.gmra.mxu0 %v2320
      %v2493 = vpop.f32.mrf.mxu0
      %v2494 = vadd.f32 0.0, %v2493
      %v2495 = vpop.f32.mrf.mxu0
      %v2496 = vadd.f32 0.0, %v2495
      %2497 = vmatmul.bf16.gmra.mxu0 %v2329
      %v2498 = vpop.f32.mrf.mxu0
      %v2499 = vadd.f32 0.0, %v2498
      %v2500 = vpop.f32.mrf.mxu0
      %v2501 = vadd.f32 0.0, %v2500
      %2502 = vmatmul.bf16.gmra.mxu0 %v2338
      %v2503 = vpop.f32.mrf.mxu0
      %v2504 = vadd.f32 0.0, %v2503
      %v2505 = vpop.f32.mrf.mxu0
      %v2506 = vadd.f32 0.0, %v2505
      %2507 = vmatmul.bf16.gmra.mxu0 %v2347
      %v2508 = vpop.f32.mrf.mxu0
      %v2509 = vadd.f32 0.0, %v2508
      %v2510 = vpop.f32.mrf.mxu0
      %v2511 = vadd.f32 0.0, %v2510
      %2512 = vdwg.mxu0
      %v2513 = vadd.f32 %v2120, %v2424
      %v2514 = vadd.f32 %v2121, %v2426
      %v2515 = vadd.f32 %v2122, %v2429
      %v2516 = vadd.f32 %v2123, %v2431
      %v2517 = vadd.f32 %v2124, %v2434
      %v2518 = vadd.f32 %v2125, %v2436
      %v2519 = vadd.f32 %v2126, %v2439
      %v2520 = vadd.f32 %v2127, %v2441
      %v2521 = vadd.f32 %v2128, %v2444
      %v2522 = vadd.f32 %v2129, %v2446
      %v2523 = vadd.f32 %v2130, %v2449
      %v2524 = vadd.f32 %v2131, %v2451
      %v2525 = vadd.f32 %v2132, %v2454
      %v2526 = vadd.f32 %v2133, %v2456
      %v2527 = vadd.f32 %v2134, %v2459
      %v2528 = vadd.f32 %v2135, %v2461
      %v2529 = vadd.f32 %v2136, %v2464
      %v2530 = vadd.f32 %v2137, %v2466
      %v2531 = vadd.f32 %v2138, %v2469
      %v2532 = vadd.f32 %v2139, %v2471
      %v2533 = vadd.f32 %v2140, %v2474
      %v2534 = vadd.f32 %v2141, %v2476
      %v2535 = vadd.f32 %v2142, %v2479
      %v2536 = vadd.f32 %v2143, %v2481
      %v2537 = vadd.f32 %v2144, %v2484
      %v2538 = vadd.f32 %v2145, %v2486
      %v2539 = vadd.f32 %v2146, %v2489
      %v2540 = vadd.f32 %v2147, %v2491
      %v2541 = vadd.f32 %v2148, %v2494
      %v2542 = vadd.f32 %v2149, %v2496
      %v2543 = vadd.f32 %v2150, %v2499
      %v2544 = vadd.f32 %v2151, %v2501
      %v2545 = vadd.f32 %v2152, %v2504
      %v2546 = vadd.f32 %v2153, %v2506
      %v2547 = vadd.f32 %v2154, %v2509
      %v2548 = vadd.f32 %v2155, %v2511
      %v2549 = vld [vmem:[#allocation2 + $0x8] sm:$0xc]
      %s2550 = scalar_lea.vmem %s3, 320
      %v2551 = vld [vmem:[%s2550] sm:$0xf]
      %v2552 = vld [vmem:[%s2550 + $0x4] sm:$0xf]
      %v2553 = vld [vmem:[%s2550 + $0x8] sm:$0xf]
      %v2554 = vld [vmem:[%s2550 + $0xc] sm:$0xf]
      %v2555 = vld [vmem:[%s2550 + $0x10] sm:$0xf]
      %v2556 = vld [vmem:[%s2550 + $0x14] sm:$0xf]
      %v2557 = vld [vmem:[%s2550 + $0x18] sm:$0xf]
      %v2558 = vld [vmem:[%s2550 + $0x1c] sm:$0xf]
      %v2559 = vld [vmem:[%s2550 + $0x20] sm:$0xf]
      %v2560 = vld [vmem:[%s2550 + $0x24] sm:$0xf]
      %v2561 = vld [vmem:[%s2550 + $0x28] sm:$0xf]
      %v2562 = vld [vmem:[%s2550 + $0x2c] sm:$0xf]
      %v2563 = vld [vmem:[%s2550 + $0x30] sm:$0xf]
      %v2564 = vld [vmem:[%s2550 + $0x34] sm:$0xf]
      %v2565 = vld [vmem:[%s2550 + $0x38] sm:$0xf]
      %v2566 = vld [vmem:[%s2550 + $0x3c] sm:$0xf]
      %v2568 = vunpack.c.l.b16 %v2549
      %v2569 = vpack.c.b16 %v1863, %v2568
      %vm2570 = vcmask 1045504
      %v2571 = vrot.slane %v2569, 2
      %v2572 = vrot.slane %v1900, 2
      %v2573 = vsel %vm2570, %v2571, %v2572
      %v2574 = vrot.slane %v1901, 2
      %v2575 = vsel %vm2570, %v2572, %v2574
      %v2576 = vrot.slane %v1902, 2
      %v2577 = vsel %vm2570, %v2574, %v2576
      %v2578 = vrot.slane %v1903, 2
      %v2579 = vsel %vm2570, %v2576, %v2578
      %v2580 = vrot.slane %v1904, 2
      %v2581 = vsel %vm2570, %v2578, %v2580
      %v2582 = vrot.slane %v1905, 2
      %v2583 = vsel %vm2570, %v2580, %v2582
      %v2584 = vrot.slane %v1906, 2
      %v2585 = vsel %vm2570, %v2582, %v2584
      %v2586 = vrot.slane %v1907, 2
      %v2587 = vsel %vm2570, %v2584, %v2586
      %v2588 = vrot.slane %v1908, 2
      %v2589 = vsel %vm2570, %v2586, %v2588
      %v2590 = vrot.slane %v1909, 2
      %v2591 = vsel %vm2570, %v2588, %v2590
      %v2592 = vrot.slane %v1910, 2
      %v2593 = vsel %vm2570, %v2590, %v2592
      %v2594 = vrot.slane %v1911, 2
      %v2595 = vsel %vm2570, %v2592, %v2594
      %v2596 = vrot.slane %v1912, 2
      %v2597 = vsel %vm2570, %v2594, %v2596
      %v2598 = vrot.slane %v1913, 2
      %v2599 = vsel %vm2570, %v2596, %v2598
      %v2600 = vrot.slane %v1914, 2
      %v2601 = vsel %vm2570, %v2598, %v2600
      %v2602 = vrot.slane %v1915, 2
      %v2603 = vsel %vm2570, %v2600, %v2602
      %v2604 = vrot.slane %v1916, 2
      %v2605 = vsel %vm2570, %v2602, %v2604
      %v2606 = vrot.slane %v2176, 2
      %v2607 = vsel %vm2570, %v2604, %v2606
      %v2642 = vunpack.c.l.b16 %v2551
      %v2643 = vunpack.c.l.b16 %v2552
      %v2644 = vunpack.c.l.b16 %v2553
      %v2645 = vunpack.c.l.b16 %v2554
      %v2646 = vunpack.c.l.b16 %v2555
      %v2647 = vunpack.c.l.b16 %v2556
      %v2648 = vunpack.c.l.b16 %v2557
      %v2649 = vunpack.c.l.b16 %v2558
      %v2650 = vunpack.c.l.b16 %v2559
      %v2651 = vunpack.c.l.b16 %v2560
      %v2652 = vunpack.c.l.b16 %v2561
      %v2653 = vunpack.c.l.b16 %v2562
      %v2654 = vunpack.c.l.b16 %v2563
      %v2655 = vunpack.c.l.b16 %v2564
      %v2656 = vunpack.c.l.b16 %v2565
      %v2657 = vunpack.c.l.b16 %v2566
      %v2658 = vpack.c.b16 %v2643, %v2642
      %v2659 = vpack.c.b16 %v2645, %v2644
      %v2660 = vpack.c.b16 %v2647, %v2646
      %v2661 = vpack.c.b16 %v2649, %v2648
      %v2662 = vpack.c.b16 %v2651, %v2650
      %v2663 = vpack.c.b16 %v2653, %v2652
      %v2664 = vpack.c.b16 %v2655, %v2654
      %v2665 = vpack.c.b16 %v2657, %v2656
      %2674 = vmatpush.bf16.msra.mxu0 %v2665
      %2675 = vmatpush.bf16.msra.mxu0 %v2664
      %2676 = vmatpush.bf16.msra.mxu0 %v2663
      %2677 = vmatpush.bf16.msra.mxu0 %v2662
      %2678 = vmatpush.bf16.msra.mxu0 %v2661
      %2679 = vmatpush.bf16.msra.mxu0 %v2660
      %2680 = vmatpush.bf16.msra.mxu0 %v2659
      %2681 = vmatpush.bf16.msra.mxu0 %v2658
      %2682 = vmatmul.bf16.gmra.mxu0 %v2573
      %v2683 = vpop.f32.mrf.mxu0
      %v2684 = vadd.f32 0.0, %v2683
      %v2685 = vpop.f32.mrf.mxu0
      %v2686 = vadd.f32 0.0, %v2685
      %2687 = vmatmul.bf16.gmra.mxu0 %v2575
      %v2688 = vpop.f32.mrf.mxu0
      %v2689 = vadd.f32 0.0, %v2688
      %v2690 = vpop.f32.mrf.mxu0
      %v2691 = vadd.f32 0.0, %v2690
      %2692 = vmatmul.bf16.gmra.mxu0 %v2577
      %v2693 = vpop.f32.mrf.mxu0
      %v2694 = vadd.f32 0.0, %v2693
      %v2695 = vpop.f32.mrf.mxu0
      %v2696 = vadd.f32 0.0, %v2695
      %2697 = vmatmul.bf16.gmra.mxu0 %v2579
      %v2698 = vpop.f32.mrf.mxu0
      %v2699 = vadd.f32 0.0, %v2698
      %v2700 = vpop.f32.mrf.mxu0
      %v2701 = vadd.f32 0.0, %v2700
      %2702 = vmatmul.bf16.gmra.mxu0 %v2581
      %v2703 = vpop.f32.mrf.mxu0
      %v2704 = vadd.f32 0.0, %v2703
      %v2705 = vpop.f32.mrf.mxu0
      %v2706 = vadd.f32 0.0, %v2705
      %2707 = vmatmul.bf16.gmra.mxu0 %v2583
      %v2708 = vpop.f32.mrf.mxu0
      %v2709 = vadd.f32 0.0, %v2708
      %v2710 = vpop.f32.mrf.mxu0
      %v2711 = vadd.f32 0.0, %v2710
      %2712 = vmatmul.bf16.gmra.mxu0 %v2585
      %v2713 = vpop.f32.mrf.mxu0
      %v2714 = vadd.f32 0.0, %v2713
      %v2715 = vpop.f32.mrf.mxu0
      %v2716 = vadd.f32 0.0, %v2715
      %2717 = vmatmul.bf16.gmra.mxu0 %v2587
      %v2718 = vpop.f32.mrf.mxu0
      %v2719 = vadd.f32 0.0, %v2718
      %v2720 = vpop.f32.mrf.mxu0
      %v2721 = vadd.f32 0.0, %v2720
      %2722 = vmatmul.bf16.gmra.mxu0 %v2589
      %v2723 = vpop.f32.mrf.mxu0
      %v2724 = vadd.f32 0.0, %v2723
      %v2725 = vpop.f32.mrf.mxu0
      %v2726 = vadd.f32 0.0, %v2725
      %2727 = vmatmul.bf16.gmra.mxu0 %v2591
      %v2728 = vpop.f32.mrf.mxu0
      %v2729 = vadd.f32 0.0, %v2728
      %v2730 = vpop.f32.mrf.mxu0
      %v2731 = vadd.f32 0.0, %v2730
      %2732 = vmatmul.bf16.gmra.mxu0 %v2593
      %v2733 = vpop.f32.mrf.mxu0
      %v2734 = vadd.f32 0.0, %v2733
      %v2735 = vpop.f32.mrf.mxu0
      %v2736 = vadd.f32 0.0, %v2735
      %2737 = vmatmul.bf16.gmra.mxu0 %v2595
      %v2738 = vpop.f32.mrf.mxu0
      %v2739 = vadd.f32 0.0, %v2738
      %v2740 = vpop.f32.mrf.mxu0
      %v2741 = vadd.f32 0.0, %v2740
      %2742 = vmatmul.bf16.gmra.mxu0 %v2597
      %v2743 = vpop.f32.mrf.mxu0
      %v2744 = vadd.f32 0.0, %v2743
      %v2745 = vpop.f32.mrf.mxu0
      %v2746 = vadd.f32 0.0, %v2745
      %2747 = vmatmul.bf16.gmra.mxu0 %v2599
      %v2748 = vpop.f32.mrf.mxu0
      %v2749 = vadd.f32 0.0, %v2748
      %v2750 = vpop.f32.mrf.mxu0
      %v2751 = vadd.f32 0.0, %v2750
      %2752 = vmatmul.bf16.gmra.mxu0 %v2601
      %v2753 = vpop.f32.mrf.mxu0
      %v2754 = vadd.f32 0.0, %v2753
      %v2755 = vpop.f32.mrf.mxu0
      %v2756 = vadd.f32 0.0, %v2755
      %2757 = vmatmul.bf16.gmra.mxu0 %v2603
      %v2758 = vpop.f32.mrf.mxu0
      %v2759 = vadd.f32 0.0, %v2758
      %v2760 = vpop.f32.mrf.mxu0
      %v2761 = vadd.f32 0.0, %v2760
      %2762 = vmatmul.bf16.gmra.mxu0 %v2605
      %v2763 = vpop.f32.mrf.mxu0
      %v2764 = vadd.f32 0.0, %v2763
      %v2765 = vpop.f32.mrf.mxu0
      %v2766 = vadd.f32 0.0, %v2765
      %2767 = vmatmul.bf16.gmra.mxu0 %v2607
      %v2768 = vpop.f32.mrf.mxu0
      %v2769 = vadd.f32 0.0, %v2768
      %v2770 = vpop.f32.mrf.mxu0
      %v2771 = vadd.f32 0.0, %v2770
      %2772 = vdwg.mxu0
      %v2773 = vadd.f32 %v2513, %v2684
      %v2774 = vadd.f32 %v2514, %v2686
      %v2775 = vadd.f32 %v2515, %v2689
      %v2776 = vadd.f32 %v2516, %v2691
      %v2777 = vadd.f32 %v2517, %v2694
      %v2778 = vadd.f32 %v2518, %v2696
      %v2779 = vadd.f32 %v2519, %v2699
      %v2780 = vadd.f32 %v2520, %v2701
      %v2781 = vadd.f32 %v2521, %v2704
      %v2782 = vadd.f32 %v2522, %v2706
      %v2783 = vadd.f32 %v2523, %v2709
      %v2784 = vadd.f32 %v2524, %v2711
      %v2785 = vadd.f32 %v2525, %v2714
      %v2786 = vadd.f32 %v2526, %v2716
      %v2787 = vadd.f32 %v2527, %v2719
      %v2788 = vadd.f32 %v2528, %v2721
      %v2789 = vadd.f32 %v2529, %v2724
      %v2790 = vadd.f32 %v2530, %v2726
      %v2791 = vadd.f32 %v2531, %v2729
      %v2792 = vadd.f32 %v2532, %v2731
      %v2793 = vadd.f32 %v2533, %v2734
      %v2794 = vadd.f32 %v2534, %v2736
      %v2795 = vadd.f32 %v2535, %v2739
      %v2796 = vadd.f32 %v2536, %v2741
      %v2797 = vadd.f32 %v2537, %v2744
      %v2798 = vadd.f32 %v2538, %v2746
      %v2799 = vadd.f32 %v2539, %v2749
      %v2800 = vadd.f32 %v2540, %v2751
      %v2801 = vadd.f32 %v2541, %v2754
      %v2802 = vadd.f32 %v2542, %v2756
      %v2803 = vadd.f32 %v2543, %v2759
      %v2804 = vadd.f32 %v2544, %v2761
      %v2805 = vadd.f32 %v2545, %v2764
      %v2806 = vadd.f32 %v2546, %v2766
      %v2807 = vadd.f32 %v2547, %v2769
      %v2808 = vadd.f32 %v2548, %v2771
      %v2809 = vld [vmem:[#allocation2 + $0x10] sm:$0xc]
      %v2810 = vld [vmem:[#allocation2 + $0x14] sm:$0xf]
      %v2811 = vld [vmem:[#allocation2 + $0x18] sm:$0xf]
      %v2812 = vld [vmem:[#allocation2 + $0x1c] sm:$0xf]
      %v2813 = vld [vmem:[#allocation2 + $0x20] sm:$0xf]
      %v2814 = vld [vmem:[#allocation2 + $0x24] sm:$0xf]
      %v2815 = vld [vmem:[#allocation2 + $0x28] sm:$0xf]
      %v2816 = vld [vmem:[#allocation2 + $0x2c] sm:$0xf]
      %v2817 = vld [vmem:[#allocation2 + $0x30] sm:$0xf]
      %v2818 = vld [vmem:[#allocation2 + $0x34] sm:$0xf]
      %v2819 = vld [vmem:[#allocation2 + $0x38] sm:$0xf]
      %v2820 = vld [vmem:[#allocation2 + $0x3c] sm:$0xf]
      %v2821 = vld [vmem:[#allocation2 + $0x40] sm:$0xf]
      %v2822 = vld [vmem:[#allocation2 + $0x44] sm:$0xf]
      %v2823 = vld [vmem:[#allocation2 + $0x48] sm:$0xf]
      %v2824 = vld [vmem:[#allocation2 + $0x4c] sm:$0xf]
      %v2825 = vld [vmem:[#allocation2 + $0x50] sm:$0xf]
      %v2826 = vld [vmem:[#allocation2 + $0x54] sm:$0xf]
      %v2827 = vld [vmem:[#allocation2 + $0x58] sm:$0xf]
      %v2828 = vld [vmem:[#allocation2 + $0x5c] sm:$0xf]
      %v2829 = vld [vmem:[#allocation2 + $0x60] sm:$0xf]
      %v2830 = vld [vmem:[#allocation2 + $0x64] sm:$0xf]
      %v2831 = vld [vmem:[#allocation2 + $0x68] sm:$0xf]
      %v2832 = vld [vmem:[#allocation2 + $0x6c] sm:$0xf]
      %v2833 = vld [vmem:[#allocation2 + $0x70] sm:$0xf]
      %v2834 = vld [vmem:[#allocation2 + $0x74] sm:$0xf]
      %v2835 = vld [vmem:[#allocation2 + $0x78] sm:$0xf]
      %v2836 = vld [vmem:[#allocation2 + $0x7c] sm:$0xf]
      %v2837 = vld [vmem:[#allocation2 + $0x80] sm:$0xf]
      %v2838 = vld [vmem:[#allocation2 + $0x84] sm:$0xf]
      %v2839 = vld [vmem:[#allocation2 + $0x88] sm:$0xf]
      %v2840 = vld [vmem:[#allocation2 + $0x8c] sm:$0xf]
      %v2841 = vld [vmem:[#allocation2 + $0x90] sm:$0xf]
      %v2842 = vld [vmem:[#allocation2 + $0x94] sm:$0xf]
      %v2843 = vld [vmem:[#allocation2 + $0x98] sm:$0xf]
      %v2844 = vld [vmem:[#allocation2 + $0x9c] sm:$0xf]
      %v2845 = vld [vmem:[#allocation2 + $0xa0] sm:$0x3]
      %s2846 = scalar_lea.vmem %s3, 384
      %v2847 = vld [vmem:[%s2846] sm:$0xf]
      %v2848 = vld [vmem:[%s2846 + $0x4] sm:$0xf]
      %v2849 = vld [vmem:[%s2846 + $0x8] sm:$0xf]
      %v2850 = vld [vmem:[%s2846 + $0xc] sm:$0xf]
      %v2851 = vld [vmem:[%s2846 + $0x10] sm:$0xf]
      %v2852 = vld [vmem:[%s2846 + $0x14] sm:$0xf]
      %v2853 = vld [vmem:[%s2846 + $0x18] sm:$0xf]
      %v2854 = vld [vmem:[%s2846 + $0x1c] sm:$0xf]
      %v2855 = vld [vmem:[%s2846 + $0x20] sm:$0xf]
      %v2856 = vld [vmem:[%s2846 + $0x24] sm:$0xf]
      %v2857 = vld [vmem:[%s2846 + $0x28] sm:$0xf]
      %v2858 = vld [vmem:[%s2846 + $0x2c] sm:$0xf]
      %v2859 = vld [vmem:[%s2846 + $0x30] sm:$0xf]
      %v2860 = vld [vmem:[%s2846 + $0x34] sm:$0xf]
      %v2861 = vld [vmem:[%s2846 + $0x38] sm:$0xf]
      %v2862 = vld [vmem:[%s2846 + $0x3c] sm:$0xf]
      %v2900 = vunpack.c.l.b16 %v2809
      %v2901 = vunpack.c.l.b16 %v2810
      %v2902 = vunpack.c.l.b16 %v2811
      %v2903 = vunpack.c.l.b16 %v2812
      %v2904 = vunpack.c.l.b16 %v2813
      %v2905 = vunpack.c.l.b16 %v2814
      %v2906 = vunpack.c.l.b16 %v2815
      %v2907 = vunpack.c.l.b16 %v2816
      %v2908 = vunpack.c.l.b16 %v2817
      %v2909 = vunpack.c.l.b16 %v2818
      %v2910 = vunpack.c.l.b16 %v2819
      %v2911 = vunpack.c.l.b16 %v2820
      %v2912 = vunpack.c.l.b16 %v2821
      %v2913 = vunpack.c.l.b16 %v2822
      %v2914 = vunpack.c.l.b16 %v2823
      %v2915 = vunpack.c.l.b16 %v2824
      %v2916 = vunpack.c.l.b16 %v2825
      %v2917 = vunpack.c.l.b16 %v2826
      %v2918 = vunpack.c.l.b16 %v2827
      %v2919 = vunpack.c.l.b16 %v2828
      %v2920 = vunpack.c.l.b16 %v2829
      %v2921 = vunpack.c.l.b16 %v2830
      %v2922 = vunpack.c.l.b16 %v2831
      %v2923 = vunpack.c.l.b16 %v2832
      %v2924 = vunpack.c.l.b16 %v2833
      %v2925 = vunpack.c.l.b16 %v2834
      %v2926 = vunpack.c.l.b16 %v2835
      %v2927 = vunpack.c.l.b16 %v2836
      %v2928 = vunpack.c.l.b16 %v2837
      %v2929 = vunpack.c.l.b16 %v2838
      %v2930 = vunpack.c.l.b16 %v2839
      %v2931 = vunpack.c.l.b16 %v2840
      %v2932 = vunpack.c.l.b16 %v2841
      %v2933 = vunpack.c.l.b16 %v2842
      %v2934 = vunpack.c.l.b16 %v2843
      %v2935 = vunpack.c.l.b16 %v2844
      %v2936 = vunpack.c.l.b16 %v2845
      %v2937 = vpack.c.b16 %v2901, %v2900
      %v2938 = vpack.c.b16 %v2903, %v2902
      %v2939 = vpack.c.b16 %v2905, %v2904
      %v2940 = vpack.c.b16 %v2907, %v2906
      %v2941 = vpack.c.b16 %v2909, %v2908
      %v2942 = vpack.c.b16 %v2911, %v2910
      %v2943 = vpack.c.b16 %v2913, %v2912
      %v2944 = vpack.c.b16 %v2915, %v2914
      %v2945 = vpack.c.b16 %v2917, %v2916
      %v2946 = vpack.c.b16 %v2919, %v2918
      %v2947 = vpack.c.b16 %v2921, %v2920
      %v2948 = vpack.c.b16 %v2923, %v2922
      %v2949 = vpack.c.b16 %v2925, %v2924
      %v2950 = vpack.c.b16 %v2927, %v2926
      %v2951 = vpack.c.b16 %v2929, %v2928
      %v2952 = vpack.c.b16 %v2931, %v2930
      %v2953 = vpack.c.b16 %v2933, %v2932
      %v2954 = vpack.c.b16 %v2935, %v2934
      %v2955 = vpack.c.b16 %v2936, %v2936
      %v2956 = vrot.slane %v2937, 2
      %v2957 = vrot.slane %v2938, 2
      %v2958 = vsel %vm2570, %v2956, %v2957
      %v2959 = vrot.slane %v2939, 2
      %v2960 = vsel %vm2570, %v2957, %v2959
      %v2961 = vrot.slane %v2940, 2
      %v2962 = vsel %vm2570, %v2959, %v2961
      %v2963 = vrot.slane %v2941, 2
      %v2964 = vsel %vm2570, %v2961, %v2963
      %v2965 = vrot.slane %v2942, 2
      %v2966 = vsel %vm2570, %v2963, %v2965
      %v2967 = vrot.slane %v2943, 2
      %v2968 = vsel %vm2570, %v2965, %v2967
      %v2969 = vrot.slane %v2944, 2
      %v2970 = vsel %vm2570, %v2967, %v2969
      %v2971 = vrot.slane %v2945, 2
      %v2972 = vsel %vm2570, %v2969, %v2971
      %v2973 = vrot.slane %v2946, 2
      %v2974 = vsel %vm2570, %v2971, %v2973
      %v2975 = vrot.slane %v2947, 2
      %v2976 = vsel %vm2570, %v2973, %v2975
      %v2977 = vrot.slane %v2948, 2
      %v2978 = vsel %vm2570, %v2975, %v2977
      %v2979 = vrot.slane %v2949, 2
      %v2980 = vsel %vm2570, %v2977, %v2979
      %v2981 = vrot.slane %v2950, 2
      %v2982 = vsel %vm2570, %v2979, %v2981
      %v2983 = vrot.slane %v2951, 2
      %v2984 = vsel %vm2570, %v2981, %v2983
      %v2985 = vrot.slane %v2952, 2
      %v2986 = vsel %vm2570, %v2983, %v2985
      %v2987 = vrot.slane %v2953, 2
      %v2988 = vsel %vm2570, %v2985, %v2987
      %v2989 = vrot.slane %v2954, 2
      %v2990 = vsel %vm2570, %v2987, %v2989
      %v2991 = vrot.slane %v2955, 2
      %v2992 = vsel %vm2570, %v2989, %v2991
      %v3027 = vunpack.c.l.b16 %v2847
      %v3028 = vunpack.c.l.b16 %v2848
      %v3029 = vunpack.c.l.b16 %v2849
      %v3030 = vunpack.c.l.b16 %v2850
      %v3031 = vunpack.c.l.b16 %v2851
      %v3032 = vunpack.c.l.b16 %v2852
      %v3033 = vunpack.c.l.b16 %v2853
      %v3034 = vunpack.c.l.b16 %v2854
      %v3035 = vunpack.c.l.b16 %v2855
      %v3036 = vunpack.c.l.b16 %v2856
      %v3037 = vunpack.c.l.b16 %v2857
      %v3038 = vunpack.c.l.b16 %v2858
      %v3039 = vunpack.c.l.b16 %v2859
      %v3040 = vunpack.c.l.b16 %v2860
      %v3041 = vunpack.c.l.b16 %v2861
      %v3042 = vunpack.c.l.b16 %v2862
      %v3043 = vpack.c.b16 %v3028, %v3027
      %v3044 = vpack.c.b16 %v3030, %v3029
      %v3045 = vpack.c.b16 %v3032, %v3031
      %v3046 = vpack.c.b16 %v3034, %v3033
      %v3047 = vpack.c.b16 %v3036, %v3035
      %v3048 = vpack.c.b16 %v3038, %v3037
      %v3049 = vpack.c.b16 %v3040, %v3039
      %v3050 = vpack.c.b16 %v3042, %v3041
      %3059 = vmatpush.bf16.msra.mxu0 %v3050
      %3060 = vmatpush.bf16.msra.mxu0 %v3049
      %3061 = vmatpush.bf16.msra.mxu0 %v3048
      %3062 = vmatpush.bf16.msra.mxu0 %v3047
      %3063 = vmatpush.bf16.msra.mxu0 %v3046
      %3064 = vmatpush.bf16.msra.mxu0 %v3045
      %3065 = vmatpush.bf16.msra.mxu0 %v3044
      %3066 = vmatpush.bf16.msra.mxu0 %v3043
      %3067 = vmatmul.bf16.gmra.mxu0 %v2958
      %v3068 = vpop.f32.mrf.mxu0
      %v3069 = vadd.f32 0.0, %v3068
      %v3070 = vpop.f32.mrf.mxu0
      %v3071 = vadd.f32 0.0, %v3070
      %3072 = vmatmul.bf16.gmra.mxu0 %v2960
      %v3073 = vpop.f32.mrf.mxu0
      %v3074 = vadd.f32 0.0, %v3073
      %v3075 = vpop.f32.mrf.mxu0
      %v3076 = vadd.f32 0.0, %v3075
      %3077 = vmatmul.bf16.gmra.mxu0 %v2962
      %v3078 = vpop.f32.mrf.mxu0
      %v3079 = vadd.f32 0.0, %v3078
      %v3080 = vpop.f32.mrf.mxu0
      %v3081 = vadd.f32 0.0, %v3080
      %3082 = vmatmul.bf16.gmra.mxu0 %v2964
      %v3083 = vpop.f32.mrf.mxu0
      %v3084 = vadd.f32 0.0, %v3083
      %v3085 = vpop.f32.mrf.mxu0
      %v3086 = vadd.f32 0.0, %v3085
      %3087 = vmatmul.bf16.gmra.mxu0 %v2966
      %v3088 = vpop.f32.mrf.mxu0
      %v3089 = vadd.f32 0.0, %v3088
      %v3090 = vpop.f32.mrf.mxu0
      %v3091 = vadd.f32 0.0, %v3090
      %3092 = vmatmul.bf16.gmra.mxu0 %v2968
      %v3093 = vpop.f32.mrf.mxu0
      %v3094 = vadd.f32 0.0, %v3093
      %v3095 = vpop.f32.mrf.mxu0
      %v3096 = vadd.f32 0.0, %v3095
      %3097 = vmatmul.bf16.gmra.mxu0 %v2970
      %v3098 = vpop.f32.mrf.mxu0
      %v3099 = vadd.f32 0.0, %v3098
      %v3100 = vpop.f32.mrf.mxu0
      %v3101 = vadd.f32 0.0, %v3100
      %3102 = vmatmul.bf16.gmra.mxu0 %v2972
      %v3103 = vpop.f32.mrf.mxu0
      %v3104 = vadd.f32 0.0, %v3103
      %v3105 = vpop.f32.mrf.mxu0
      %v3106 = vadd.f32 0.0, %v3105
      %3107 = vmatmul.bf16.gmra.mxu0 %v2974
      %v3108 = vpop.f32.mrf.mxu0
      %v3109 = vadd.f32 0.0, %v3108
      %v3110 = vpop.f32.mrf.mxu0
      %v3111 = vadd.f32 0.0, %v3110
      %3112 = vmatmul.bf16.gmra.mxu0 %v2976
      %v3113 = vpop.f32.mrf.mxu0
      %v3114 = vadd.f32 0.0, %v3113
      %v3115 = vpop.f32.mrf.mxu0
      %v3116 = vadd.f32 0.0, %v3115
      %3117 = vmatmul.bf16.gmra.mxu0 %v2978
      %v3118 = vpop.f32.mrf.mxu0
      %v3119 = vadd.f32 0.0, %v3118
      %v3120 = vpop.f32.mrf.mxu0
      %v3121 = vadd.f32 0.0, %v3120
      %3122 = vmatmul.bf16.gmra.mxu0 %v2980
      %v3123 = vpop.f32.mrf.mxu0
      %v3124 = vadd.f32 0.0, %v3123
      %v3125 = vpop.f32.mrf.mxu0
      %v3126 = vadd.f32 0.0, %v3125
      %3127 = vmatmul.bf16.gmra.mxu0 %v2982
      %v3128 = vpop.f32.mrf.mxu0
      %v3129 = vadd.f32 0.0, %v3128
      %v3130 = vpop.f32.mrf.mxu0
      %v3131 = vadd.f32 0.0, %v3130
      %3132 = vmatmul.bf16.gmra.mxu0 %v2984
      %v3133 = vpop.f32.mrf.mxu0
      %v3134 = vadd.f32 0.0, %v3133
      %v3135 = vpop.f32.mrf.mxu0
      %v3136 = vadd.f32 0.0, %v3135
      %3137 = vmatmul.bf16.gmra.mxu0 %v2986
      %v3138 = vpop.f32.mrf.mxu0
      %v3139 = vadd.f32 0.0, %v3138
      %v3140 = vpop.f32.mrf.mxu0
      %v3141 = vadd.f32 0.0, %v3140
      %3142 = vmatmul.bf16.gmra.mxu0 %v2988
      %v3143 = vpop.f32.mrf.mxu0
      %v3144 = vadd.f32 0.0, %v3143
      %v3145 = vpop.f32.mrf.mxu0
      %v3146 = vadd.f32 0.0, %v3145
      %3147 = vmatmul.bf16.gmra.mxu0 %v2990
      %v3148 = vpop.f32.mrf.mxu0
      %v3149 = vadd.f32 0.0, %v3148
      %v3150 = vpop.f32.mrf.mxu0
      %v3151 = vadd.f32 0.0, %v3150
      %3152 = vmatmul.bf16.gmra.mxu0 %v2992
      %v3153 = vpop.f32.mrf.mxu0
      %v3154 = vadd.f32 0.0, %v3153
      %v3155 = vpop.f32.mrf.mxu0
      %v3156 = vadd.f32 0.0, %v3155
      %3157 = vdwg.mxu0
      %v3158 = vadd.f32 %v2773, %v3069
      %v3159 = vadd.f32 %v2774, %v3071
      %v3160 = vadd.f32 %v2775, %v3074
      %v3161 = vadd.f32 %v2776, %v3076
      %v3162 = vadd.f32 %v2777, %v3079
      %v3163 = vadd.f32 %v2778, %v3081
      %v3164 = vadd.f32 %v2779, %v3084
      %v3165 = vadd.f32 %v2780, %v3086
      %v3166 = vadd.f32 %v2781, %v3089
      %v3167 = vadd.f32 %v2782, %v3091
      %v3168 = vadd.f32 %v2783, %v3094
      %v3169 = vadd.f32 %v2784, %v3096
      %v3170 = vadd.f32 %v2785, %v3099
      %v3171 = vadd.f32 %v2786, %v3101
      %v3172 = vadd.f32 %v2787, %v3104
      %v3173 = vadd.f32 %v2788, %v3106
      %v3174 = vadd.f32 %v2789, %v3109
      %v3175 = vadd.f32 %v2790, %v3111
      %v3176 = vadd.f32 %v2791, %v3114
      %v3177 = vadd.f32 %v2792, %v3116
      %v3178 = vadd.f32 %v2793, %v3119
      %v3179 = vadd.f32 %v2794, %v3121
      %v3180 = vadd.f32 %v2795, %v3124
      %v3181 = vadd.f32 %v2796, %v3126
      %v3182 = vadd.f32 %v2797, %v3129
      %v3183 = vadd.f32 %v2798, %v3131
      %v3184 = vadd.f32 %v2799, %v3134
      %v3185 = vadd.f32 %v2800, %v3136
      %v3186 = vadd.f32 %v2801, %v3139
      %v3187 = vadd.f32 %v2802, %v3141
      %v3188 = vadd.f32 %v2803, %v3144
      %v3189 = vadd.f32 %v2804, %v3146
      %v3190 = vadd.f32 %v2805, %v3149
      %v3191 = vadd.f32 %v2806, %v3151
      %v3192 = vadd.f32 %v2807, %v3154
      %v3193 = vadd.f32 %v2808, %v3156
      %v3194 = vld [vmem:[#allocation2 + $0xa0] sm:$0x7]
      %s3195 = scalar_lea.vmem %s3, 448
      %v3196 = vld [vmem:[%s3195] sm:$0xf]
      %v3197 = vld [vmem:[%s3195 + $0x4] sm:$0xf]
      %v3198 = vld [vmem:[%s3195 + $0x8] sm:$0xf]
      %v3199 = vld [vmem:[%s3195 + $0xc] sm:$0xf]
      %v3200 = vld [vmem:[%s3195 + $0x10] sm:$0xf]
      %v3201 = vld [vmem:[%s3195 + $0x14] sm:$0xf]
      %v3202 = vld [vmem:[%s3195 + $0x18] sm:$0xf]
      %v3203 = vld [vmem:[%s3195 + $0x1c] sm:$0xf]
      %v3204 = vld [vmem:[%s3195 + $0x20] sm:$0xf]
      %v3205 = vld [vmem:[%s3195 + $0x24] sm:$0xf]
      %v3206 = vld [vmem:[%s3195 + $0x28] sm:$0xf]
      %v3207 = vld [vmem:[%s3195 + $0x2c] sm:$0xf]
      %v3208 = vld [vmem:[%s3195 + $0x30] sm:$0xf]
      %v3209 = vld [vmem:[%s3195 + $0x34] sm:$0xf]
      %v3210 = vld [vmem:[%s3195 + $0x38] sm:$0xf]
      %v3211 = vld [vmem:[%s3195 + $0x3c] sm:$0xf]
      %v3213 = vunpack.c.l.b16 %v3194
      %v3214 = vpack.c.b16 %v3213, %v3213
      %vm3215 = vsmask.f32 5376
      %v3217 = vshrl.u32 %v2937, 16
      %v3219 = vrot.slane %v3217, 2
      %v3220 = vshll.u32 %v2937, 16
      %v3222 = vrot.slane %v3220, 3
      %v3223 = vor.u32 %v3219, %v3222
      %v3225 = vshrl.u32 %v2938, 16
      %v3227 = vrot.slane %v3225, 2
      %v3228 = vshll.u32 %v2938, 16
      %v3230 = vrot.slane %v3228, 3
      %v3231 = vor.u32 %v3227, %v3230
      %v3232 = vsel %vm3215, %v3223, %v3231
      %v3234 = vshrl.u32 %v2939, 16
      %v3236 = vrot.slane %v3234, 2
      %v3237 = vshll.u32 %v2939, 16
      %v3239 = vrot.slane %v3237, 3
      %v3240 = vor.u32 %v3236, %v3239
      %v3241 = vsel %vm3215, %v3231, %v3240
      %v3243 = vshrl.u32 %v2940, 16
      %v3245 = vrot.slane %v3243, 2
      %v3246 = vshll.u32 %v2940, 16
      %v3248 = vrot.slane %v3246, 3
      %v3249 = vor.u32 %v3245, %v3248
      %v3250 = vsel %vm3215, %v3240, %v3249
      %v3252 = vshrl.u32 %v2941, 16
      %v3254 = vrot.slane %v3252, 2
      %v3255 = vshll.u32 %v2941, 16
      %v3257 = vrot.slane %v3255, 3
      %v3258 = vor.u32 %v3254, %v3257
      %v3259 = vsel %vm3215, %v3249, %v3258
      %v3261 = vshrl.u32 %v2942, 16
      %v3263 = vrot.slane %v3261, 2
      %v3264 = vshll.u32 %v2942, 16
      %v3266 = vrot.slane %v3264, 3
      %v3267 = vor.u32 %v3263, %v3266
      %v3268 = vsel %vm3215, %v3258, %v3267
      %v3270 = vshrl.u32 %v2943, 16
      %v3272 = vrot.slane %v3270, 2
      %v3273 = vshll.u32 %v2943, 16
      %v3275 = vrot.slane %v3273, 3
      %v3276 = vor.u32 %v3272, %v3275
      %v3277 = vsel %vm3215, %v3267, %v3276
      %v3279 = vshrl.u32 %v2944, 16
      %v3281 = vrot.slane %v3279, 2
      %v3282 = vshll.u32 %v2944, 16
      %v3284 = vrot.slane %v3282, 3
      %v3285 = vor.u32 %v3281, %v3284
      %v3286 = vsel %vm3215, %v3276, %v3285
      %v3288 = vshrl.u32 %v2945, 16
      %v3290 = vrot.slane %v3288, 2
      %v3291 = vshll.u32 %v2945, 16
      %v3293 = vrot.slane %v3291, 3
      %v3294 = vor.u32 %v3290, %v3293
      %v3295 = vsel %vm3215, %v3285, %v3294
      %v3297 = vshrl.u32 %v2946, 16
      %v3299 = vrot.slane %v3297, 2
      %v3300 = vshll.u32 %v2946, 16
      %v3302 = vrot.slane %v3300, 3
      %v3303 = vor.u32 %v3299, %v3302
      %v3304 = vsel %vm3215, %v3294, %v3303
      %v3306 = vshrl.u32 %v2947, 16
      %v3308 = vrot.slane %v3306, 2
      %v3309 = vshll.u32 %v2947, 16
      %v3311 = vrot.slane %v3309, 3
      %v3312 = vor.u32 %v3308, %v3311
      %v3313 = vsel %vm3215, %v3303, %v3312
      %v3315 = vshrl.u32 %v2948, 16
      %v3317 = vrot.slane %v3315, 2
      %v3318 = vshll.u32 %v2948, 16
      %v3320 = vrot.slane %v3318, 3
      %v3321 = vor.u32 %v3317, %v3320
      %v3322 = vsel %vm3215, %v3312, %v3321
      %v3324 = vshrl.u32 %v2949, 16
      %v3326 = vrot.slane %v3324, 2
      %v3327 = vshll.u32 %v2949, 16
      %v3329 = vrot.slane %v3327, 3
      %v3330 = vor.u32 %v3326, %v3329
      %v3331 = vsel %vm3215, %v3321, %v3330
      %v3333 = vshrl.u32 %v2950, 16
      %v3335 = vrot.slane %v3333, 2
      %v3336 = vshll.u32 %v2950, 16
      %v3338 = vrot.slane %v3336, 3
      %v3339 = vor.u32 %v3335, %v3338
      %v3340 = vsel %vm3215, %v3330, %v3339
      %v3342 = vshrl.u32 %v2951, 16
      %v3344 = vrot.slane %v3342, 2
      %v3345 = vshll.u32 %v2951, 16
      %v3347 = vrot.slane %v3345, 3
      %v3348 = vor.u32 %v3344, %v3347
      %v3349 = vsel %vm3215, %v3339, %v3348
      %v3351 = vshrl.u32 %v2952, 16
      %v3353 = vrot.slane %v3351, 2
      %v3354 = vshll.u32 %v2952, 16
      %v3356 = vrot.slane %v3354, 3
      %v3357 = vor.u32 %v3353, %v3356
      %v3358 = vsel %vm3215, %v3348, %v3357
      %v3360 = vshrl.u32 %v2953, 16
      %v3362 = vrot.slane %v3360, 2
      %v3363 = vshll.u32 %v2953, 16
      %v3365 = vrot.slane %v3363, 3
      %v3366 = vor.u32 %v3362, %v3365
      %v3367 = vsel %vm3215, %v3357, %v3366
      %v3369 = vshrl.u32 %v2954, 16
      %v3371 = vrot.slane %v3369, 2
      %v3372 = vshll.u32 %v2954, 16
      %v3374 = vrot.slane %v3372, 3
      %v3375 = vor.u32 %v3371, %v3374
      %v3376 = vsel %vm3215, %v3366, %v3375
      %v3378 = vshrl.u32 %v3214, 16
      %v3380 = vrot.slane %v3378, 2
      %v3381 = vshll.u32 %v3214, 16
      %v3383 = vrot.slane %v3381, 3
      %v3384 = vor.u32 %v3380, %v3383
      %v3385 = vsel %vm3215, %v3375, %v3384
      %v3420 = vunpack.c.l.b16 %v3196
      %v3421 = vunpack.c.l.b16 %v3197
      %v3422 = vunpack.c.l.b16 %v3198
      %v3423 = vunpack.c.l.b16 %v3199
      %v3424 = vunpack.c.l.b16 %v3200
      %v3425 = vunpack.c.l.b16 %v3201
      %v3426 = vunpack.c.l.b16 %v3202
      %v3427 = vunpack.c.l.b16 %v3203
      %v3428 = vunpack.c.l.b16 %v3204
      %v3429 = vunpack.c.l.b16 %v3205
      %v3430 = vunpack.c.l.b16 %v3206
      %v3431 = vunpack.c.l.b16 %v3207
      %v3432 = vunpack.c.l.b16 %v3208
      %v3433 = vunpack.c.l.b16 %v3209
      %v3434 = vunpack.c.l.b16 %v3210
      %v3435 = vunpack.c.l.b16 %v3211
      %v3436 = vpack.c.b16 %v3421, %v3420
      %v3437 = vpack.c.b16 %v3423, %v3422
      %v3438 = vpack.c.b16 %v3425, %v3424
      %v3439 = vpack.c.b16 %v3427, %v3426
      %v3440 = vpack.c.b16 %v3429, %v3428
      %v3441 = vpack.c.b16 %v3431, %v3430
      %v3442 = vpack.c.b16 %v3433, %v3432
      %v3443 = vpack.c.b16 %v3435, %v3434
      %3452 = vmatpush.bf16.msra.mxu0 %v3443
      %3453 = vmatpush.bf16.msra.mxu0 %v3442
      %3454 = vmatpush.bf16.msra.mxu0 %v3441
      %3455 = vmatpush.bf16.msra.mxu0 %v3440
      %3456 = vmatpush.bf16.msra.mxu0 %v3439
      %3457 = vmatpush.bf16.msra.mxu0 %v3438
      %3458 = vmatpush.bf16.msra.mxu0 %v3437
      %3459 = vmatpush.bf16.msra.mxu0 %v3436
      %3460 = vmatmul.bf16.gmra.mxu0 %v3232
      %v3461 = vpop.f32.mrf.mxu0
      %v3462 = vadd.f32 0.0, %v3461
      %v3463 = vpop.f32.mrf.mxu0
      %v3464 = vadd.f32 0.0, %v3463
      %3465 = vmatmul.bf16.gmra.mxu0 %v3241
      %v3466 = vpop.f32.mrf.mxu0
      %v3467 = vadd.f32 0.0, %v3466
      %v3468 = vpop.f32.mrf.mxu0
      %v3469 = vadd.f32 0.0, %v3468
      %3470 = vmatmul.bf16.gmra.mxu0 %v3250
      %v3471 = vpop.f32.mrf.mxu0
      %v3472 = vadd.f32 0.0, %v3471
      %v3473 = vpop.f32.mrf.mxu0
      %v3474 = vadd.f32 0.0, %v3473
      %3475 = vmatmul.bf16.gmra.mxu0 %v3259
      %v3476 = vpop.f32.mrf.mxu0
      %v3477 = vadd.f32 0.0, %v3476
      %v3478 = vpop.f32.mrf.mxu0
      %v3479 = vadd.f32 0.0, %v3478
      %3480 = vmatmul.bf16.gmra.mxu0 %v3268
      %v3481 = vpop.f32.mrf.mxu0
      %v3482 = vadd.f32 0.0, %v3481
      %v3483 = vpop.f32.mrf.mxu0
      %v3484 = vadd.f32 0.0, %v3483
      %3485 = vmatmul.bf16.gmra.mxu0 %v3277
      %v3486 = vpop.f32.mrf.mxu0
      %v3487 = vadd.f32 0.0, %v3486
      %v3488 = vpop.f32.mrf.mxu0
      %v3489 = vadd.f32 0.0, %v3488
      %3490 = vmatmul.bf16.gmra.mxu0 %v3286
      %v3491 = vpop.f32.mrf.mxu0
      %v3492 = vadd.f32 0.0, %v3491
      %v3493 = vpop.f32.mrf.mxu0
      %v3494 = vadd.f32 0.0, %v3493
      %3495 = vmatmul.bf16.gmra.mxu0 %v3295
      %v3496 = vpop.f32.mrf.mxu0
      %v3497 = vadd.f32 0.0, %v3496
      %v3498 = vpop.f32.mrf.mxu0
      %v3499 = vadd.f32 0.0, %v3498
      %3500 = vmatmul.bf16.gmra.mxu0 %v3304
      %v3501 = vpop.f32.mrf.mxu0
      %v3502 = vadd.f32 0.0, %v3501
      %v3503 = vpop.f32.mrf.mxu0
      %v3504 = vadd.f32 0.0, %v3503
      %3505 = vmatmul.bf16.gmra.mxu0 %v3313
      %v3506 = vpop.f32.mrf.mxu0
      %v3507 = vadd.f32 0.0, %v3506
      %v3508 = vpop.f32.mrf.mxu0
      %v3509 = vadd.f32 0.0, %v3508
      %3510 = vmatmul.bf16.gmra.mxu0 %v3322
      %v3511 = vpop.f32.mrf.mxu0
      %v3512 = vadd.f32 0.0, %v3511
      %v3513 = vpop.f32.mrf.mxu0
      %v3514 = vadd.f32 0.0, %v3513
      %3515 = vmatmul.bf16.gmra.mxu0 %v3331
      %v3516 = vpop.f32.mrf.mxu0
      %v3517 = vadd.f32 0.0, %v3516
      %v3518 = vpop.f32.mrf.mxu0
      %v3519 = vadd.f32 0.0, %v3518
      %3520 = vmatmul.bf16.gmra.mxu0 %v3340
      %v3521 = vpop.f32.mrf.mxu0
      %v3522 = vadd.f32 0.0, %v3521
      %v3523 = vpop.f32.mrf.mxu0
      %v3524 = vadd.f32 0.0, %v3523
      %3525 = vmatmul.bf16.gmra.mxu0 %v3349
      %v3526 = vpop.f32.mrf.mxu0
      %v3527 = vadd.f32 0.0, %v3526
      %v3528 = vpop.f32.mrf.mxu0
      %v3529 = vadd.f32 0.0, %v3528
      %3530 = vmatmul.bf16.gmra.mxu0 %v3358
      %v3531 = vpop.f32.mrf.mxu0
      %v3532 = vadd.f32 0.0, %v3531
      %v3533 = vpop.f32.mrf.mxu0
      %v3534 = vadd.f32 0.0, %v3533
      %3535 = vmatmul.bf16.gmra.mxu0 %v3367
      %v3536 = vpop.f32.mrf.mxu0
      %v3537 = vadd.f32 0.0, %v3536
      %v3538 = vpop.f32.mrf.mxu0
      %v3539 = vadd.f32 0.0, %v3538
      %3540 = vmatmul.bf16.gmra.mxu0 %v3376
      %v3541 = vpop.f32.mrf.mxu0
      %v3542 = vadd.f32 0.0, %v3541
      %v3543 = vpop.f32.mrf.mxu0
      %v3544 = vadd.f32 0.0, %v3543
      %3545 = vmatmul.bf16.gmra.mxu0 %v3385
      %v3546 = vpop.f32.mrf.mxu0
      %v3547 = vadd.f32 0.0, %v3546
      %v3548 = vpop.f32.mrf.mxu0
      %v3549 = vadd.f32 0.0, %v3548
      %3550 = vdwg.mxu0
      %v3551 = vadd.f32 %v3158, %v3462
      %v3552 = vadd.f32 %v3159, %v3464
      %v3553 = vadd.f32 %v3160, %v3467
      %v3554 = vadd.f32 %v3161, %v3469
      %v3555 = vadd.f32 %v3162, %v3472
      %v3556 = vadd.f32 %v3163, %v3474
      %v3557 = vadd.f32 %v3164, %v3477
      %v3558 = vadd.f32 %v3165, %v3479
      %v3559 = vadd.f32 %v3166, %v3482
      %v3560 = vadd.f32 %v3167, %v3484
      %v3561 = vadd.f32 %v3168, %v3487
      %v3562 = vadd.f32 %v3169, %v3489
      %v3563 = vadd.f32 %v3170, %v3492
      %v3564 = vadd.f32 %v3171, %v3494
      %v3565 = vadd.f32 %v3172, %v3497
      %v3566 = vadd.f32 %v3173, %v3499
      %v3567 = vadd.f32 %v3174, %v3502
      %v3568 = vadd.f32 %v3175, %v3504
      %v3569 = vadd.f32 %v3176, %v3507
      %v3570 = vadd.f32 %v3177, %v3509
      %v3571 = vadd.f32 %v3178, %v3512
      %v3572 = vadd.f32 %v3179, %v3514
      %v3573 = vadd.f32 %v3180, %v3517
      %v3574 = vadd.f32 %v3181, %v3519
      %v3575 = vadd.f32 %v3182, %v3522
      %v3576 = vadd.f32 %v3183, %v3524
      %v3577 = vadd.f32 %v3184, %v3527
      %v3578 = vadd.f32 %v3185, %v3529
      %v3579 = vadd.f32 %v3186, %v3532
      %v3580 = vadd.f32 %v3187, %v3534
      %v3581 = vadd.f32 %v3188, %v3537
      %v3582 = vadd.f32 %v3189, %v3539
      %v3583 = vadd.f32 %v3190, %v3542
      %v3584 = vadd.f32 %v3191, %v3544
      %v3585 = vadd.f32 %v3192, %v3547
      %v3586 = vadd.f32 %v3193, %v3549
      %v3587 = vld [vmem:[#allocation2 + $0x10] sm:$0x8]
      %s3588 = scalar_lea.vmem %s3, 512
      %v3589 = vld [vmem:[%s3588] sm:$0xf]
      %v3590 = vld [vmem:[%s3588 + $0x4] sm:$0xf]
      %v3591 = vld [vmem:[%s3588 + $0x8] sm:$0xf]
      %v3592 = vld [vmem:[%s3588 + $0xc] sm:$0xf]
      %v3593 = vld [vmem:[%s3588 + $0x10] sm:$0xf]
      %v3594 = vld [vmem:[%s3588 + $0x14] sm:$0xf]
      %v3595 = vld [vmem:[%s3588 + $0x18] sm:$0xf]
      %v3596 = vld [vmem:[%s3588 + $0x1c] sm:$0xf]
      %v3597 = vld [vmem:[%s3588 + $0x20] sm:$0xf]
      %v3598 = vld [vmem:[%s3588 + $0x24] sm:$0xf]
      %v3599 = vld [vmem:[%s3588 + $0x28] sm:$0xf]
      %v3600 = vld [vmem:[%s3588 + $0x2c] sm:$0xf]
      %v3601 = vld [vmem:[%s3588 + $0x30] sm:$0xf]
      %v3602 = vld [vmem:[%s3588 + $0x34] sm:$0xf]
      %v3603 = vld [vmem:[%s3588 + $0x38] sm:$0xf]
      %v3604 = vld [vmem:[%s3588 + $0x3c] sm:$0xf]
      %v3606 = vunpack.c.l.b16 %v3587
      %v3607 = vpack.c.b16 %v2901, %v3606
      %vm3608 = vcmask 1044480
      %v3609 = vrot.slane %v3607, 3
      %v3610 = vrot.slane %v2938, 3
      %v3611 = vsel %vm3608, %v3609, %v3610
      %v3612 = vrot.slane %v2939, 3
      %v3613 = vsel %vm3608, %v3610, %v3612
      %v3614 = vrot.slane %v2940, 3
      %v3615 = vsel %vm3608, %v3612, %v3614
      %v3616 = vrot.slane %v2941, 3
      %v3617 = vsel %vm3608, %v3614, %v3616
      %v3618 = vrot.slane %v2942, 3
      %v3619 = vsel %vm3608, %v3616, %v3618
      %v3620 = vrot.slane %v2943, 3
      %v3621 = vsel %vm3608, %v3618, %v3620
      %v3622 = vrot.slane %v2944, 3
      %v3623 = vsel %vm3608, %v3620, %v3622
      %v3624 = vrot.slane %v2945, 3
      %v3625 = vsel %vm3608, %v3622, %v3624
      %v3626 = vrot.slane %v2946, 3
      %v3627 = vsel %vm3608, %v3624, %v3626
      %v3628 = vrot.slane %v2947, 3
      %v3629 = vsel %vm3608, %v3626, %v3628
      %v3630 = vrot.slane %v2948, 3
      %v3631 = vsel %vm3608, %v3628, %v3630
      %v3632 = vrot.slane %v2949, 3
      %v3633 = vsel %vm3608, %v3630, %v3632
      %v3634 = vrot.slane %v2950, 3
      %v3635 = vsel %vm3608, %v3632, %v3634
      %v3636 = vrot.slane %v2951, 3
      %v3637 = vsel %vm3608, %v3634, %v3636
      %v3638 = vrot.slane %v2952, 3
      %v3639 = vsel %vm3608, %v3636, %v3638
      %v3640 = vrot.slane %v2953, 3
      %v3641 = vsel %vm3608, %v3638, %v3640
      %v3642 = vrot.slane %v2954, 3
      %v3643 = vsel %vm3608, %v3640, %v3642
      %v3644 = vrot.slane %v3214, 3
      %v3645 = vsel %vm3608, %v3642, %v3644
      %v3680 = vunpack.c.l.b16 %v3589
      %v3681 = vunpack.c.l.b16 %v3590
      %v3682 = vunpack.c.l.b16 %v3591
      %v3683 = vunpack.c.l.b16 %v3592
      %v3684 = vunpack.c.l.b16 %v3593
      %v3685 = vunpack.c.l.b16 %v3594
      %v3686 = vunpack.c.l.b16 %v3595
      %v3687 = vunpack.c.l.b16 %v3596
      %v3688 = vunpack.c.l.b16 %v3597
      %v3689 = vunpack.c.l.b16 %v3598
      %v3690 = vunpack.c.l.b16 %v3599
      %v3691 = vunpack.c.l.b16 %v3600
      %v3692 = vunpack.c.l.b16 %v3601
      %v3693 = vunpack.c.l.b16 %v3602
      %v3694 = vunpack.c.l.b16 %v3603
      %v3695 = vunpack.c.l.b16 %v3604
      %v3696 = vpack.c.b16 %v3681, %v3680
      %v3697 = vpack.c.b16 %v3683, %v3682
      %v3698 = vpack.c.b16 %v3685, %v3684
      %v3699 = vpack.c.b16 %v3687, %v3686
      %v3700 = vpack.c.b16 %v3689, %v3688
      %v3701 = vpack.c.b16 %v3691, %v3690
      %v3702 = vpack.c.b16 %v3693, %v3692
      %v3703 = vpack.c.b16 %v3695, %v3694
      %3712 = vmatpush.bf16.msra.mxu0 %v3703
      %3713 = vmatpush.bf16.msra.mxu0 %v3702
      %3714 = vmatpush.bf16.msra.mxu0 %v3701
      %3715 = vmatpush.bf16.msra.mxu0 %v3700
      %3716 = vmatpush.bf16.msra.mxu0 %v3699
      %3717 = vmatpush.bf16.msra.mxu0 %v3698
      %3718 = vmatpush.bf16.msra.mxu0 %v3697
      %3719 = vmatpush.bf16.msra.mxu0 %v3696
      %3720 = vmatmul.bf16.gmra.mxu0 %v3611
      %v3721 = vpop.f32.mrf.mxu0
      %v3722 = vadd.f32 0.0, %v3721
      %v3723 = vpop.f32.mrf.mxu0
      %v3724 = vadd.f32 0.0, %v3723
      %3725 = vmatmul.bf16.gmra.mxu0 %v3613
      %v3726 = vpop.f32.mrf.mxu0
      %v3727 = vadd.f32 0.0, %v3726
      %v3728 = vpop.f32.mrf.mxu0
      %v3729 = vadd.f32 0.0, %v3728
      %3730 = vmatmul.bf16.gmra.mxu0 %v3615
      %v3731 = vpop.f32.mrf.mxu0
      %v3732 = vadd.f32 0.0, %v3731
      %v3733 = vpop.f32.mrf.mxu0
      %v3734 = vadd.f32 0.0, %v3733
      %3735 = vmatmul.bf16.gmra.mxu0 %v3617
      %v3736 = vpop.f32.mrf.mxu0
      %v3737 = vadd.f32 0.0, %v3736
      %v3738 = vpop.f32.mrf.mxu0
      %v3739 = vadd.f32 0.0, %v3738
      %3740 = vmatmul.bf16.gmra.mxu0 %v3619
      %v3741 = vpop.f32.mrf.mxu0
      %v3742 = vadd.f32 0.0, %v3741
      %v3743 = vpop.f32.mrf.mxu0
      %v3744 = vadd.f32 0.0, %v3743
      %3745 = vmatmul.bf16.gmra.mxu0 %v3621
      %v3746 = vpop.f32.mrf.mxu0
      %v3747 = vadd.f32 0.0, %v3746
      %v3748 = vpop.f32.mrf.mxu0
      %v3749 = vadd.f32 0.0, %v3748
      %3750 = vmatmul.bf16.gmra.mxu0 %v3623
      %v3751 = vpop.f32.mrf.mxu0
      %v3752 = vadd.f32 0.0, %v3751
      %v3753 = vpop.f32.mrf.mxu0
      %v3754 = vadd.f32 0.0, %v3753
      %3755 = vmatmul.bf16.gmra.mxu0 %v3625
      %v3756 = vpop.f32.mrf.mxu0
      %v3757 = vadd.f32 0.0, %v3756
      %v3758 = vpop.f32.mrf.mxu0
      %v3759 = vadd.f32 0.0, %v3758
      %3760 = vmatmul.bf16.gmra.mxu0 %v3627
      %v3761 = vpop.f32.mrf.mxu0
      %v3762 = vadd.f32 0.0, %v3761
      %v3763 = vpop.f32.mrf.mxu0
      %v3764 = vadd.f32 0.0, %v3763
      %3765 = vmatmul.bf16.gmra.mxu0 %v3629
      %v3766 = vpop.f32.mrf.mxu0
      %v3767 = vadd.f32 0.0, %v3766
      %v3768 = vpop.f32.mrf.mxu0
      %v3769 = vadd.f32 0.0, %v3768
      %3770 = vmatmul.bf16.gmra.mxu0 %v3631
      %v3771 = vpop.f32.mrf.mxu0
      %v3772 = vadd.f32 0.0, %v3771
      %v3773 = vpop.f32.mrf.mxu0
      %v3774 = vadd.f32 0.0, %v3773
      %3775 = vmatmul.bf16.gmra.mxu0 %v3633
      %v3776 = vpop.f32.mrf.mxu0
      %v3777 = vadd.f32 0.0, %v3776
      %v3778 = vpop.f32.mrf.mxu0
      %v3779 = vadd.f32 0.0, %v3778
      %3780 = vmatmul.bf16.gmra.mxu0 %v3635
      %v3781 = vpop.f32.mrf.mxu0
      %v3782 = vadd.f32 0.0, %v3781
      %v3783 = vpop.f32.mrf.mxu0
      %v3784 = vadd.f32 0.0, %v3783
      %3785 = vmatmul.bf16.gmra.mxu0 %v3637
      %v3786 = vpop.f32.mrf.mxu0
      %v3787 = vadd.f32 0.0, %v3786
      %v3788 = vpop.f32.mrf.mxu0
      %v3789 = vadd.f32 0.0, %v3788
      %3790 = vmatmul.bf16.gmra.mxu0 %v3639
      %v3791 = vpop.f32.mrf.mxu0
      %v3792 = vadd.f32 0.0, %v3791
      %v3793 = vpop.f32.mrf.mxu0
      %v3794 = vadd.f32 0.0, %v3793
      %3795 = vmatmul.bf16.gmra.mxu0 %v3641
      %v3796 = vpop.f32.mrf.mxu0
      %v3797 = vadd.f32 0.0, %v3796
      %v3798 = vpop.f32.mrf.mxu0
      %v3799 = vadd.f32 0.0, %v3798
      %3800 = vmatmul.bf16.gmra.mxu0 %v3643
      %v3801 = vpop.f32.mrf.mxu0
      %v3802 = vadd.f32 0.0, %v3801
      %v3803 = vpop.f32.mrf.mxu0
      %v3804 = vadd.f32 0.0, %v3803
      %3805 = vmatmul.bf16.gmra.mxu0 %v3645
      %v3806 = vpop.f32.mrf.mxu0
      %v3807 = vadd.f32 0.0, %v3806
      %v3808 = vpop.f32.mrf.mxu0
      %v3809 = vadd.f32 0.0, %v3808
      %3810 = vdwg.mxu0
      %v3811 = vadd.f32 %v3551, %v3722
      %v3812 = vadd.f32 %v3552, %v3724
      %v3813 = vadd.f32 %v3553, %v3727
      %v3814 = vadd.f32 %v3554, %v3729
      %v3815 = vadd.f32 %v3555, %v3732
      %v3816 = vadd.f32 %v3556, %v3734
      %v3817 = vadd.f32 %v3557, %v3737
      %v3818 = vadd.f32 %v3558, %v3739
      %v3819 = vadd.f32 %v3559, %v3742
      %v3820 = vadd.f32 %v3560, %v3744
      %v3821 = vadd.f32 %v3561, %v3747
      %v3822 = vadd.f32 %v3562, %v3749
      %v3823 = vadd.f32 %v3563, %v3752
      %v3824 = vadd.f32 %v3564, %v3754
      %v3825 = vadd.f32 %v3565, %v3757
      %v3826 = vadd.f32 %v3566, %v3759
      %v3827 = vadd.f32 %v3567, %v3762
      %v3828 = vadd.f32 %v3568, %v3764
      %v3829 = vadd.f32 %v3569, %v3767
      %v3830 = vadd.f32 %v3570, %v3769
      %v3831 = vadd.f32 %v3571, %v3772
      %v3832 = vadd.f32 %v3572, %v3774
      %v3833 = vadd.f32 %v3573, %v3777
      %v3834 = vadd.f32 %v3574, %v3779
      %v3835 = vadd.f32 %v3575, %v3782
      %v3836 = vadd.f32 %v3576, %v3784
      %v3837 = vadd.f32 %v3577, %v3787
      %v3838 = vadd.f32 %v3578, %v3789
      %v3839 = vadd.f32 %v3579, %v3792
      %v3840 = vadd.f32 %v3580, %v3794
      %v3841 = vadd.f32 %v3581, %v3797
      %v3842 = vadd.f32 %v3582, %v3799
      %v3843 = vadd.f32 %v3583, %v3802
      %v3844 = vadd.f32 %v3584, %v3804
      %v3845 = vadd.f32 %v3585, %v3807
      %v3846 = vadd.f32 %v3586, %v3809
      %v3847 = vld [vmem:[%s4] sm:$0x1]
      %v3849 = vperm.slane %v3847, 0
      %v3851 = vadd.f32 %v3811, %v3849
      %v3852 = vadd.f32 %v3812, %v3849
      %v3853 = vadd.f32 %v3813, %v3849
      %v3854 = vadd.f32 %v3814, %v3849
      %v3855 = vadd.f32 %v3815, %v3849
      %v3856 = vadd.f32 %v3816, %v3849
      %v3857 = vadd.f32 %v3817, %v3849
      %v3858 = vadd.f32 %v3818, %v3849
      %v3859 = vadd.f32 %v3819, %v3849
      %v3860 = vadd.f32 %v3820, %v3849
      %v3861 = vadd.f32 %v3821, %v3849
      %v3862 = vadd.f32 %v3822, %v3849
      %v3863 = vadd.f32 %v3823, %v3849
      %v3864 = vadd.f32 %v3824, %v3849
      %v3865 = vadd.f32 %v3825, %v3849
      %v3866 = vadd.f32 %v3826, %v3849
      %v3867 = vadd.f32 %v3827, %v3849
      %v3868 = vadd.f32 %v3828, %v3849
      %v3869 = vadd.f32 %v3829, %v3849
      %v3870 = vadd.f32 %v3830, %v3849
      %v3871 = vadd.f32 %v3831, %v3849
      %v3872 = vadd.f32 %v3832, %v3849
      %v3873 = vadd.f32 %v3833, %v3849
      %v3874 = vadd.f32 %v3834, %v3849
      %v3875 = vadd.f32 %v3835, %v3849
      %v3876 = vadd.f32 %v3836, %v3849
      %v3877 = vadd.f32 %v3837, %v3849
      %v3878 = vadd.f32 %v3838, %v3849
      %v3879 = vadd.f32 %v3839, %v3849
      %v3880 = vadd.f32 %v3840, %v3849
      %v3881 = vadd.f32 %v3841, %v3849
      %v3882 = vadd.f32 %v3842, %v3849
      %v3883 = vadd.f32 %v3843, %v3849
      %v3884 = vadd.f32 %v3844, %v3849
      %v3885 = vadd.f32 %v3845, %v3849
      %v3886 = vadd.f32 %v3846, %v3849
      %v3923 = vrot.slane %v3851, 2
      %v3924 = vrot.slane %v3851, 4
      %v3925 = vrot.slane %v3851, 6
      %v3926 = vrot.slane %v3852, 2
      %v3927 = vrot.slane %v3852, 4
      %v3928 = vrot.slane %v3852, 6
      %v3929 = vrot.slane %v3853, 2
      %v3930 = vrot.slane %v3853, 4
      %v3931 = vrot.slane %v3853, 6
      %v3932 = vrot.slane %v3854, 2
      %v3933 = vrot.slane %v3854, 4
      %v3934 = vrot.slane %v3854, 6
      %v3935 = vrot.slane %v3855, 4
      %v3936 = vrot.slane %v3855, 6
      %v3937 = vrot.slane %v3856, 2
      %v3938 = vrot.slane %v3856, 4
      %v3939 = vrot.slane %v3856, 6
      %v3940 = vrot.slane %v3857, 2
      %v3941 = vrot.slane %v3857, 6
      %v3942 = vrot.slane %v3858, 2
      %v3943 = vrot.slane %v3858, 4
      %v3944 = vrot.slane %v3858, 6
      %v3945 = vrot.slane %v3859, 2
      %v3946 = vrot.slane %v3859, 4
      %v3947 = vrot.slane %v3860, 2
      %v3948 = vrot.slane %v3860, 4
      %v3949 = vrot.slane %v3860, 6
      %v3950 = vrot.slane %v3861, 2
      %v3951 = vrot.slane %v3861, 4
      %v3952 = vrot.slane %v3861, 6
      %v3953 = vrot.slane %v3862, 2
      %v3954 = vrot.slane %v3862, 4
      %v3955 = vrot.slane %v3862, 6
      %v3956 = vrot.slane %v3863, 2
      %v3957 = vrot.slane %v3863, 4
      %v3958 = vrot.slane %v3863, 6
      %v3959 = vrot.slane %v3864, 4
      %v3960 = vrot.slane %v3864, 6
      %v3961 = vrot.slane %v3865, 2
      %v3962 = vrot.slane %v3865, 4
      %v3963 = vrot.slane %v3865, 6
      %v3964 = vrot.slane %v3866, 2
      %v3965 = vrot.slane %v3866, 6
      %v3966 = vrot.slane %v3867, 2
      %v3967 = vrot.slane %v3867, 4
      %v3968 = vrot.slane %v3867, 6
      %v3969 = vrot.slane %v3868, 2
      %v3970 = vrot.slane %v3868, 4
      %v3971 = vrot.slane %v3869, 2
      %v3972 = vrot.slane %v3869, 4
      %v3973 = vrot.slane %v3869, 6
      %v3974 = vrot.slane %v3870, 2
      %v3975 = vrot.slane %v3870, 4
      %v3976 = vrot.slane %v3870, 6
      %v3977 = vrot.slane %v3871, 2
      %v3978 = vrot.slane %v3871, 4
      %v3979 = vrot.slane %v3871, 6
      %v3980 = vrot.slane %v3872, 2
      %v3981 = vrot.slane %v3872, 4
      %v3982 = vrot.slane %v3872, 6
      %v3983 = vrot.slane %v3873, 4
      %v3984 = vrot.slane %v3873, 6
      %v3985 = vrot.slane %v3874, 2
      %v3986 = vrot.slane %v3874, 4
      %v3987 = vrot.slane %v3874, 6
      %v3988 = vrot.slane %v3875, 2
      %v3989 = vrot.slane %v3875, 6
      %v3990 = vrot.slane %v3876, 2
      %v3991 = vrot.slane %v3876, 4
      %v3992 = vrot.slane %v3876, 6
      %v3993 = vrot.slane %v3877, 2
      %v3994 = vrot.slane %v3877, 4
      %v3995 = vrot.slane %v3878, 2
      %v3996 = vrot.slane %v3878, 4
      %v3997 = vrot.slane %v3878, 6
      %v3998 = vrot.slane %v3879, 2
      %v3999 = vrot.slane %v3879, 4
      %v4000 = vrot.slane %v3879, 6
      %v4001 = vrot.slane %v3880, 2
      %v4002 = vrot.slane %v3880, 4
      %v4003 = vrot.slane %v3880, 6
      %v4004 = vrot.slane %v3881, 2
      %v4005 = vrot.slane %v3881, 4
      %v4006 = vrot.slane %v3881, 6
      %v4007 = vrot.slane %v3882, 4
      %v4008 = vrot.slane %v3882, 6
      %v4009 = vrot.slane %v3883, 2
      %v4010 = vrot.slane %v3883, 4
      %v4011 = vrot.slane %v3883, 6
      %v4012 = vrot.slane %v3884, 2
      %v4013 = vrot.slane %v3884, 6
      %v4014 = vrot.slane %v3885, 2
      %v4015 = vrot.slane %v3885, 4
      %v4016 = vrot.slane %v3885, 6
      %v4017 = vrot.slane %v3886, 2
      %v4018 = vrot.slane %v3886, 4
      %4115 = vst [vmem:[#allocation1] ss:$4 sm:$0xff] %v3851
      %s4116 = scalar_lea.vmem [#allocation1], 1
      %4117 = vst [vmem:[%s4116] ss:$4 sm:$0xff] %v3923
      %s4118 = scalar_lea.vmem [#allocation1], 2
      %4119 = vst [vmem:[%s4118] ss:$4 sm:$0xff] %v3924
      %s4120 = scalar_lea.vmem [#allocation1], 3
      %4121 = vst [vmem:[%s4120] ss:$4 sm:$0xff] %v3925
      %s4122 = scalar_lea.vmem [#allocation1], 32
      %4123 = vst [vmem:[%s4122] ss:$4 sm:$0xff] %v3852
      %s4124 = scalar_lea.vmem [#allocation1], 33
      %4125 = vst [vmem:[%s4124] ss:$4 sm:$0xff] %v3926
      %s4126 = scalar_lea.vmem [#allocation1], 34
      %4127 = vst [vmem:[%s4126] ss:$4 sm:$0xff] %v3927
      %s4128 = scalar_lea.vmem [#allocation1], 35
      %4129 = vst [vmem:[%s4128] ss:$4 sm:$0xff] %v3928
      %v4130 = vld.sshfl [vmem:[#allocation1] sm:$0xff pattern:$0x73625140]
      %v4131 = vld.sshfl [vmem:[#allocation1 + $0x20] sm:$0xff pattern:$0x73625140]
      %4132 = vst [vmem:[#allocation1] ss:$4 sm:$0xff] %v3929
      %4133 = vst [vmem:[%s4116] ss:$4 sm:$0xff] %v3930
      %4134 = vst [vmem:[%s4118] ss:$4 sm:$0xff] %v3931
      %4135 = vst [vmem:[%s4120] ss:$4 sm:$0xff] %v3854
      %4136 = vst [vmem:[%s4122] ss:$4 sm:$0xff] %v3932
      %4137 = vst [vmem:[%s4124] ss:$4 sm:$0xff] %v3933
      %4138 = vst [vmem:[%s4126] ss:$4 sm:$0xff] %v3934
      %4139 = vst [vmem:[%s4128] ss:$4 sm:$0xff] %v3855
      %v4140 = vld.sshfl [vmem:[#allocation1] sm:$0xff pattern:$0x73625140]
      %v4141 = vld.sshfl [vmem:[#allocation1 + $0x20] sm:$0xff pattern:$0x73625140]
      %4142 = vst [vmem:[#allocation1] ss:$4 sm:$0xff] %v3935
      %4143 = vst [vmem:[%s4116] ss:$4 sm:$0xff] %v3936
      %4144 = vst [vmem:[%s4118] ss:$4 sm:$0xff] %v3856
      %4145 = vst [vmem:[%s4120] ss:$4 sm:$0xff] %v3937
      %4146 = vst [vmem:[%s4122] ss:$4 sm:$0xff] %v3938
      %4147 = vst [vmem:[%s4124] ss:$4 sm:$0xff] %v3939
      %4148 = vst [vmem:[%s4126] ss:$4 sm:$0xff] %v3857
      %4149 = vst [vmem:[%s4128] ss:$4 sm:$0xff] %v3940
      %v4150 = vld.sshfl [vmem:[#allocation1] sm:$0xff pattern:$0x73625140]
      %v4151 = vld.sshfl [vmem:[#allocation1 + $0x20] sm:$0xff pattern:$0x73625140]
      %4152 = vst [vmem:[#allocation1] ss:$4 sm:$0xff] %v3941
      %4153 = vst [vmem:[%s4116] ss:$4 sm:$0xff] %v3858
      %4154 = vst [vmem:[%s4118] ss:$4 sm:$0xff] %v3942
      %4155 = vst [vmem:[%s4120] ss:$4 sm:$0xff] %v3943
      %4156 = vst [vmem:[%s4122] ss:$4 sm:$0xff] %v3944
      %4157 = vst [vmem:[%s4124] ss:$4 sm:$0xff] %v3859
      %4158 = vst [vmem:[%s4126] ss:$4 sm:$0xff] %v3945
      %4159 = vst [vmem:[%s4128] ss:$4 sm:$0xff] %v3946
      %v4160 = vld.sshfl [vmem:[#allocation1] sm:$0xff pattern:$0x73625140]
      %v4161 = vld.sshfl [vmem:[#allocation1 + $0x20] sm:$0xff pattern:$0x73625140]
      %4162 = vst [vmem:[#allocation1] ss:$4 sm:$0xff] %v3860
      %4163 = vst [vmem:[%s4116] ss:$4 sm:$0xff] %v3947
      %4164 = vst [vmem:[%s4118] ss:$4 sm:$0xff] %v3948
      %4165 = vst [vmem:[%s4120] ss:$4 sm:$0xff] %v3949
      %4166 = vst [vmem:[%s4122] ss:$4 sm:$0xff] %v3861
      %4167 = vst [vmem:[%s4124] ss:$4 sm:$0xff] %v3950
      %4168 = vst [vmem:[%s4126] ss:$4 sm:$0xff] %v3951
      %4169 = vst [vmem:[%s4128] ss:$4 sm:$0xff] %v3952
      %v4170 = vld.sshfl [vmem:[#allocation1] sm:$0xff pattern:$0x73625140]
      %v4171 = vld.sshfl [vmem:[#allocation1 + $0x20] sm:$0xff pattern:$0x73625140]
      %4172 = vst [vmem:[#allocation1] ss:$4 sm:$0xff] %v3953
      %4173 = vst [vmem:[%s4116] ss:$4 sm:$0xff] %v3954
      %4174 = vst [vmem:[%s4118] ss:$4 sm:$0xff] %v3955
      %4175 = vst [vmem:[%s4120] ss:$4 sm:$0xff] %v3863
      %4176 = vst [vmem:[%s4122] ss:$4 sm:$0xff] %v3956
      %4177 = vst [vmem:[%s4124] ss:$4 sm:$0xff] %v3957
      %4178 = vst [vmem:[%s4126] ss:$4 sm:$0xff] %v3958
      %4179 = vst [vmem:[%s4128] ss:$4 sm:$0xff] %v3864
      %v4180 = vld.sshfl [vmem:[#allocation1] sm:$0xff pattern:$0x73625140]
      %v4181 = vld.sshfl [vmem:[#allocation1 + $0x20] sm:$0xff pattern:$0x73625140]
      %4182 = vst [vmem:[#allocation1] ss:$4 sm:$0xff] %v3959
      %4183 = vst [vmem:[%s4116] ss:$4 sm:$0xff] %v3960
      %4184 = vst [vmem:[%s4118] ss:$4 sm:$0xff] %v3865
      %4185 = vst [vmem:[%s4120] ss:$4 sm:$0xff] %v3961
      %4186 = vst [vmem:[%s4122] ss:$4 sm:$0xff] %v3962
      %4187 = vst [vmem:[%s4124] ss:$4 sm:$0xff] %v3963
      %4188 = vst [vmem:[%s4126] ss:$4 sm:$0xff] %v3866
      %4189 = vst [vmem:[%s4128] ss:$4 sm:$0xff] %v3964
      %v4190 = vld.sshfl [vmem:[#allocation1] sm:$0xff pattern:$0x73625140]
      %v4191 = vld.sshfl [vmem:[#allocation1 + $0x20] sm:$0xff pattern:$0x73625140]
      %4192 = vst [vmem:[#allocation1] ss:$4 sm:$0xff] %v3965
      %4193 = vst [vmem:[%s4116] ss:$4 sm:$0xff] %v3867
      %4194 = vst [vmem:[%s4118] ss:$4 sm:$0xff] %v3966
      %4195 = vst [vmem:[%s4120] ss:$4 sm:$0xff] %v3967
      %4196 = vst [vmem:[%s4122] ss:$4 sm:$0xff] %v3968
      %4197 = vst [vmem:[%s4124] ss:$4 sm:$0xff] %v3868
      %4198 = vst [vmem:[%s4126] ss:$4 sm:$0xff] %v3969
      %4199 = vst [vmem:[%s4128] ss:$4 sm:$0xff] %v3970
      %v4200 = vld.sshfl [vmem:[#allocation1] sm:$0xff pattern:$0x73625140]
      %v4201 = vld.sshfl [vmem:[#allocation1 + $0x20] sm:$0xff pattern:$0x73625140]
      %4202 = vst [vmem:[#allocation1] ss:$4 sm:$0xff] %v3869
      %4203 = vst [vmem:[%s4116] ss:$4 sm:$0xff] %v3971
      %4204 = vst [vmem:[%s4118] ss:$4 sm:$0xff] %v3972
      %4205 = vst [vmem:[%s4120] ss:$4 sm:$0xff] %v3973
      %4206 = vst [vmem:[%s4122] ss:$4 sm:$0xff] %v3870
      %4207 = vst [vmem:[%s4124] ss:$4 sm:$0xff] %v3974
      %4208 = vst [vmem:[%s4126] ss:$4 sm:$0xff] %v3975
      %4209 = vst [vmem:[%s4128] ss:$4 sm:$0xff] %v3976
      %v4210 = vld.sshfl [vmem:[#allocation1] sm:$0xff pattern:$0x73625140]
      %v4211 = vld.sshfl [vmem:[#allocation1 + $0x20] sm:$0xff pattern:$0x73625140]
      %4212 = vst [vmem:[#allocation1] ss:$4 sm:$0xff] %v3977
      %4213 = vst [vmem:[%s4116] ss:$4 sm:$0xff] %v3978
      %4214 = vst [vmem:[%s4118] ss:$4 sm:$0xff] %v3979
      %4215 = vst [vmem:[%s4120] ss:$4 sm:$0xff] %v3872
      %4216 = vst [vmem:[%s4122] ss:$4 sm:$0xff] %v3980
      %4217 = vst [vmem:[%s4124] ss:$4 sm:$0xff] %v3981
      %4218 = vst [vmem:[%s4126] ss:$4 sm:$0xff] %v3982
      %4219 = vst [vmem:[%s4128] ss:$4 sm:$0xff] %v3873
      %v4220 = vld.sshfl [vmem:[#allocation1] sm:$0xff pattern:$0x73625140]
      %v4221 = vld.sshfl [vmem:[#allocation1 + $0x20] sm:$0xff pattern:$0x73625140]
      %4222 = vst [vmem:[#allocation1] ss:$4 sm:$0xff] %v3983
      %4223 = vst [vmem:[%s4116] ss:$4 sm:$0xff] %v3984
      %4224 = vst [vmem:[%s4118] ss:$4 sm:$0xff] %v3874
      %4225 = vst [vmem:[%s4120] ss:$4 sm:$0xff] %v3985
      %4226 = vst [vmem:[%s4122] ss:$4 sm:$0xff] %v3986
      %4227 = vst [vmem:[%s4124] ss:$4 sm:$0xff] %v3987
      %4228 = vst [vmem:[%s4126] ss:$4 sm:$0xff] %v3875
      %4229 = vst [vmem:[%s4128] ss:$4 sm:$0xff] %v3988
      %v4230 = vld.sshfl [vmem:[#allocation1] sm:$0xff pattern:$0x73625140]
      %v4231 = vld.sshfl [vmem:[#allocation1 + $0x20] sm:$0xff pattern:$0x73625140]
      %4232 = vst [vmem:[#allocation1] ss:$4 sm:$0xff] %v3989
      %4233 = vst [vmem:[%s4116] ss:$4 sm:$0xff] %v3876
      %4234 = vst [vmem:[%s4118] ss:$4 sm:$0xff] %v3990
      %4235 = vst [vmem:[%s4120] ss:$4 sm:$0xff] %v3991
      %4236 = vst [vmem:[%s4122] ss:$4 sm:$0xff] %v3992
      %4237 = vst [vmem:[%s4124] ss:$4 sm:$0xff] %v3877
      %4238 = vst [vmem:[%s4126] ss:$4 sm:$0xff] %v3993
      %4239 = vst [vmem:[%s4128] ss:$4 sm:$0xff] %v3994
      %v4240 = vld.sshfl [vmem:[#allocation1] sm:$0xff pattern:$0x73625140]
      %v4241 = vld.sshfl [vmem:[#allocation1 + $0x20] sm:$0xff pattern:$0x73625140]
      %4242 = vst [vmem:[#allocation1] ss:$4 sm:$0xff] %v3878
      %4243 = vst [vmem:[%s4116] ss:$4 sm:$0xff] %v3995
      %4244 = vst [vmem:[%s4118] ss:$4 sm:$0xff] %v3996
      %4245 = vst [vmem:[%s4120] ss:$4 sm:$0xff] %v3997
      %4246 = vst [vmem:[%s4122] ss:$4 sm:$0xff] %v3879
      %4247 = vst [vmem:[%s4124] ss:$4 sm:$0xff] %v3998
      %4248 = vst [vmem:[%s4126] ss:$4 sm:$0xff] %v3999
      %4249 = vst [vmem:[%s4128] ss:$4 sm:$0xff] %v4000
      %v4250 = vld.sshfl [vmem:[#allocation1] sm:$0xff pattern:$0x73625140]
      %v4251 = vld.sshfl [vmem:[#allocation1 + $0x20] sm:$0xff pattern:$0x73625140]
      %4252 = vst [vmem:[#allocation1] ss:$4 sm:$0xff] %v4001
      %4253 = vst [vmem:[%s4116] ss:$4 sm:$0xff] %v4002
      %4254 = vst [vmem:[%s4118] ss:$4 sm:$0xff] %v4003
      %4255 = vst [vmem:[%s4120] ss:$4 sm:$0xff] %v3881
      %4256 = vst [vmem:[%s4122] ss:$4 sm:$0xff] %v4004
      %4257 = vst [vmem:[%s4124] ss:$4 sm:$0xff] %v4005
      %4258 = vst [vmem:[%s4126] ss:$4 sm:$0xff] %v4006
      %4259 = vst [vmem:[%s4128] ss:$4 sm:$0xff] %v3882
      %v4260 = vld.sshfl [vmem:[#allocation1] sm:$0xff pattern:$0x73625140]
      %v4261 = vld.sshfl [vmem:[#allocation1 + $0x20] sm:$0xff pattern:$0x73625140]
      %4262 = vst [vmem:[#allocation1] ss:$4 sm:$0xff] %v4007
      %4263 = vst [vmem:[%s4116] ss:$4 sm:$0xff] %v4008
      %4264 = vst [vmem:[%s4118] ss:$4 sm:$0xff] %v3883
      %4265 = vst [vmem:[%s4120] ss:$4 sm:$0xff] %v4009
      %4266 = vst [vmem:[%s4122] ss:$4 sm:$0xff] %v4010
      %4267 = vst [vmem:[%s4124] ss:$4 sm:$0xff] %v4011
      %4268 = vst [vmem:[%s4126] ss:$4 sm:$0xff] %v3884
      %4269 = vst [vmem:[%s4128] ss:$4 sm:$0xff] %v4012
      %v4270 = vld.sshfl [vmem:[#allocation1] sm:$0xff pattern:$0x73625140]
      %v4271 = vld.sshfl [vmem:[#allocation1 + $0x20] sm:$0xff pattern:$0x73625140]
      %4272 = vst [vmem:[#allocation1] ss:$4 sm:$0xff] %v4013
      %4273 = vst [vmem:[%s4116] ss:$4 sm:$0xff] %v3885
      %4274 = vst [vmem:[%s4118] ss:$4 sm:$0xff] %v4014
      %4275 = vst [vmem:[%s4120] ss:$4 sm:$0xff] %v4015
      %4276 = vst [vmem:[%s4122] ss:$4 sm:$0xff] %v4016
      %4277 = vst [vmem:[%s4124] ss:$4 sm:$0xff] %v3886
      %4278 = vst [vmem:[%s4126] ss:$4 sm:$0xff] %v4017
      %4279 = vst [vmem:[%s4128] ss:$4 sm:$0xff] %v4018
      %v4280 = vld.sshfl [vmem:[#allocation1] sm:$0xff pattern:$0x73625140]
      %v4281 = vld.sshfl [vmem:[#allocation1 + $0x20] sm:$0xff pattern:$0x73625140]
      %v4314 = vadd.f32 %v4130, %v4131
      %v4315 = vadd.f32 %v4314, %v4140
      %v4316 = vadd.f32 %v4315, %v4141
      %v4317 = vadd.f32 %v4316, %v4150
      %v4318 = vadd.f32 %v4317, %v4151
      %v4319 = vadd.f32 %v4318, %v4160
      %v4320 = vadd.f32 %v4319, %v4161
      %v4321 = vadd.f32 %v4320, %v4170
      %v4322 = vadd.f32 %v4321, %v4171
      %v4323 = vadd.f32 %v4322, %v4180
      %v4324 = vadd.f32 %v4323, %v4181
      %v4325 = vadd.f32 %v4324, %v4190
      %v4326 = vadd.f32 %v4325, %v4191
      %v4327 = vadd.f32 %v4326, %v4200
      %v4328 = vadd.f32 %v4327, %v4201
      %v4329 = vadd.f32 %v4328, %v4210
      %v4330 = vadd.f32 %v4329, %v4211
      %v4331 = vadd.f32 %v4330, %v4220
      %v4332 = vadd.f32 %v4331, %v4221
      %v4333 = vadd.f32 %v4332, %v4230
      %v4334 = vadd.f32 %v4333, %v4231
      %v4335 = vadd.f32 %v4334, %v4240
      %v4336 = vadd.f32 %v4335, %v4241
      %v4337 = vadd.f32 %v4336, %v4250
      %v4338 = vadd.f32 %v4337, %v4251
      %v4339 = vadd.f32 %v4338, %v4260
      %v4340 = vadd.f32 %v4339, %v4261
      %v4341 = vadd.f32 %v4340, %v4270
      %v4342 = vadd.f32 %v4341, %v4271
      %v4343 = vadd.f32 %v4342, %v4280
      %v4344 = vadd.f32 %v4343, %v4281
      %v4345 = vrot.slane %v4344, 4
      %v4346 = vadd.f32 %v4344, %v4345
      %v4347 = vrot.slane %v4346, 2
      %v4348 = vadd.f32 %v4346, %v4347
      %v4349 = vrot.slane %v4348, 1
      %v4350 = vadd.f32 %v4348, %v4349
      %v4351 = vmul.f32 %v3851, %v3851
      %v4352 = vmul.f32 %v3923, %v3923
      %v4353 = vmul.f32 %v3924, %v3924
      %v4354 = vmul.f32 %v3925, %v3925
      %v4355 = vmul.f32 %v3852, %v3852
      %v4356 = vmul.f32 %v3926, %v3926
      %v4357 = vmul.f32 %v3927, %v3927
      %v4358 = vmul.f32 %v3928, %v3928
      %v4359 = vmul.f32 %v3929, %v3929
      %v4360 = vmul.f32 %v3930, %v3930
      %v4361 = vmul.f32 %v3931, %v3931
      %v4362 = vmul.f32 %v3854, %v3854
      %v4363 = vmul.f32 %v3932, %v3932
      %v4364 = vmul.f32 %v3933, %v3933
      %v4365 = vmul.f32 %v3934, %v3934
      %v4366 = vmul.f32 %v3855, %v3855
      %v4367 = vmul.f32 %v3935, %v3935
      %v4368 = vmul.f32 %v3936, %v3936
      %v4369 = vmul.f32 %v3856, %v3856
      %v4370 = vmul.f32 %v3937, %v3937
      %v4371 = vmul.f32 %v3938, %v3938
      %v4372 = vmul.f32 %v3939, %v3939
      %v4373 = vmul.f32 %v3857, %v3857
      %v4374 = vmul.f32 %v3940, %v3940
      %v4375 = vmul.f32 %v3941, %v3941
      %v4376 = vmul.f32 %v3858, %v3858
      %v4377 = vmul.f32 %v3942, %v3942
      %v4378 = vmul.f32 %v3943, %v3943
      %v4379 = vmul.f32 %v3944, %v3944
      %v4380 = vmul.f32 %v3859, %v3859
      %v4381 = vmul.f32 %v3945, %v3945
      %v4382 = vmul.f32 %v3946, %v3946
      %v4383 = vmul.f32 %v3860, %v3860
      %v4384 = vmul.f32 %v3947, %v3947
      %v4385 = vmul.f32 %v3948, %v3948
      %v4386 = vmul.f32 %v3949, %v3949
      %v4387 = vmul.f32 %v3861, %v3861
      %v4388 = vmul.f32 %v3950, %v3950
      %v4389 = vmul.f32 %v3951, %v3951
      %v4390 = vmul.f32 %v3952, %v3952
      %v4391 = vmul.f32 %v3953, %v3953
      %v4392 = vmul.f32 %v3954, %v3954
      %v4393 = vmul.f32 %v3955, %v3955
      %v4394 = vmul.f32 %v3863, %v3863
      %v4395 = vmul.f32 %v3956, %v3956
      %v4396 = vmul.f32 %v3957, %v3957
      %v4397 = vmul.f32 %v3958, %v3958
      %v4398 = vmul.f32 %v3864, %v3864
      %v4399 = vmul.f32 %v3959, %v3959
      %v4400 = vmul.f32 %v3960, %v3960
      %v4401 = vmul.f32 %v3865, %v3865
      %v4402 = vmul.f32 %v3961, %v3961
      %v4403 = vmul.f32 %v3962, %v3962
      %v4404 = vmul.f32 %v3963, %v3963
      %v4405 = vmul.f32 %v3866, %v3866
      %v4406 = vmul.f32 %v3964, %v3964
      %v4407 = vmul.f32 %v3965, %v3965
      %v4408 = vmul.f32 %v3867, %v3867
      %v4409 = vmul.f32 %v3966, %v3966
      %v4410 = vmul.f32 %v3967, %v3967
      %v4411 = vmul.f32 %v3968, %v3968
      %v4412 = vmul.f32 %v3868, %v3868
      %v4413 = vmul.f32 %v3969, %v3969
      %v4414 = vmul.f32 %v3970, %v3970
      %v4415 = vmul.f32 %v3869, %v3869
      %v4416 = vmul.f32 %v3971, %v3971
      %v4417 = vmul.f32 %v3972, %v3972
      %v4418 = vmul.f32 %v3973, %v3973
      %v4419 = vmul.f32 %v3870, %v3870
      %v4420 = vmul.f32 %v3974, %v3974
      %v4421 = vmul.f32 %v3975, %v3975
      %v4422 = vmul.f32 %v3976, %v3976
      %v4423 = vmul.f32 %v3977, %v3977
      %v4424 = vmul.f32 %v3978, %v3978
      %v4425 = vmul.f32 %v3979, %v3979
      %v4426 = vmul.f32 %v3872, %v3872
      %v4427 = vmul.f32 %v3980, %v3980
      %v4428 = vmul.f32 %v3981, %v3981
      %v4429 = vmul.f32 %v3982, %v3982
      %v4430 = vmul.f32 %v3873, %v3873
      %v4431 = vmul.f32 %v3983, %v3983
      %v4432 = vmul.f32 %v3984, %v3984
      %v4433 = vmul.f32 %v3874, %v3874
      %v4434 = vmul.f32 %v3985, %v3985
      %v4435 = vmul.f32 %v3986, %v3986
      %v4436 = vmul.f32 %v3987, %v3987
      %v4437 = vmul.f32 %v3875, %v3875
      %v4438 = vmul.f32 %v3988, %v3988
      %v4439 = vmul.f32 %v3989, %v3989
      %v4440 = vmul.f32 %v3876, %v3876
      %v4441 = vmul.f32 %v3990, %v3990
      %v4442 = vmul.f32 %v3991, %v3991
      %v4443 = vmul.f32 %v3992, %v3992
      %v4444 = vmul.f32 %v3877, %v3877
      %v4445 = vmul.f32 %v3993, %v3993
      %v4446 = vmul.f32 %v3994, %v3994
      %v4447 = vmul.f32 %v3878, %v3878
      %v4448 = vmul.f32 %v3995, %v3995
      %v4449 = vmul.f32 %v3996, %v3996
      %v4450 = vmul.f32 %v3997, %v3997
      %v4451 = vmul.f32 %v3879, %v3879
      %v4452 = vmul.f32 %v3998, %v3998
      %v4453 = vmul.f32 %v3999, %v3999
      %v4454 = vmul.f32 %v4000, %v4000
      %v4455 = vmul.f32 %v4001, %v4001
      %v4456 = vmul.f32 %v4002, %v4002
      %v4457 = vmul.f32 %v4003, %v4003
      %v4458 = vmul.f32 %v3881, %v3881
      %v4459 = vmul.f32 %v4004, %v4004
      %v4460 = vmul.f32 %v4005, %v4005
      %v4461 = vmul.f32 %v4006, %v4006
      %v4462 = vmul.f32 %v3882, %v3882
      %v4463 = vmul.f32 %v4007, %v4007
      %v4464 = vmul.f32 %v4008, %v4008
      %v4465 = vmul.f32 %v3883, %v3883
      %v4466 = vmul.f32 %v4009, %v4009
      %v4467 = vmul.f32 %v4010, %v4010
      %v4468 = vmul.f32 %v4011, %v4011
      %v4469 = vmul.f32 %v3884, %v3884
      %v4470 = vmul.f32 %v4012, %v4012
      %v4471 = vmul.f32 %v4013, %v4013
      %v4472 = vmul.f32 %v3885, %v3885
      %v4473 = vmul.f32 %v4014, %v4014
      %v4474 = vmul.f32 %v4015, %v4015
      %v4475 = vmul.f32 %v4016, %v4016
      %v4476 = vmul.f32 %v3886, %v3886
      %v4477 = vmul.f32 %v4017, %v4017
      %v4478 = vmul.f32 %v4018, %v4018
      %4607 = vst [vmem:[#allocation1] ss:$4 sm:$0xff] %v4351
      %s4608 = scalar_lea.vmem [#allocation1], 1
      %4609 = vst [vmem:[%s4608] ss:$4 sm:$0xff] %v4352
      %s4610 = scalar_lea.vmem [#allocation1], 2
      %4611 = vst [vmem:[%s4610] ss:$4 sm:$0xff] %v4353
      %s4612 = scalar_lea.vmem [#allocation1], 3
      %4613 = vst [vmem:[%s4612] ss:$4 sm:$0xff] %v4354
      %s4614 = scalar_lea.vmem [#allocation1], 32
      %4615 = vst [vmem:[%s4614] ss:$4 sm:$0xff] %v4355
      %s4616 = scalar_lea.vmem [#allocation1], 33
      %4617 = vst [vmem:[%s4616] ss:$4 sm:$0xff] %v4356
      %s4618 = scalar_lea.vmem [#allocation1], 34
      %4619 = vst [vmem:[%s4618] ss:$4 sm:$0xff] %v4357
      %s4620 = scalar_lea.vmem [#allocation1], 35
      %4621 = vst [vmem:[%s4620] ss:$4 sm:$0xff] %v4358
      %v4622 = vld.sshfl [vmem:[#allocation1] sm:$0xff pattern:$0x73625140]
      %v4623 = vld.sshfl [vmem:[#allocation1 + $0x20] sm:$0xff pattern:$0x73625140]
      %4624 = vst [vmem:[#allocation1] ss:$4 sm:$0xff] %v4359
      %4625 = vst [vmem:[%s4608] ss:$4 sm:$0xff] %v4360
      %4626 = vst [vmem:[%s4610] ss:$4 sm:$0xff] %v4361
      %4627 = vst [vmem:[%s4612] ss:$4 sm:$0xff] %v4362
      %4628 = vst [vmem:[%s4614] ss:$4 sm:$0xff] %v4363
      %4629 = vst [vmem:[%s4616] ss:$4 sm:$0xff] %v4364
      %4630 = vst [vmem:[%s4618] ss:$4 sm:$0xff] %v4365
      %4631 = vst [vmem:[%s4620] ss:$4 sm:$0xff] %v4366
      %v4632 = vld.sshfl [vmem:[#allocation1] sm:$0xff pattern:$0x73625140]
      %v4633 = vld.sshfl [vmem:[#allocation1 + $0x20] sm:$0xff pattern:$0x73625140]
      %4634 = vst [vmem:[#allocation1] ss:$4 sm:$0xff] %v4367
      %4635 = vst [vmem:[%s4608] ss:$4 sm:$0xff] %v4368
      %4636 = vst [vmem:[%s4610] ss:$4 sm:$0xff] %v4369
      %4637 = vst [vmem:[%s4612] ss:$4 sm:$0xff] %v4370
      %4638 = vst [vmem:[%s4614] ss:$4 sm:$0xff] %v4371
      %4639 = vst [vmem:[%s4616] ss:$4 sm:$0xff] %v4372
      %4640 = vst [vmem:[%s4618] ss:$4 sm:$0xff] %v4373
      %4641 = vst [vmem:[%s4620] ss:$4 sm:$0xff] %v4374
      %v4642 = vld.sshfl [vmem:[#allocation1] sm:$0xff pattern:$0x73625140]
      %v4643 = vld.sshfl [vmem:[#allocation1 + $0x20] sm:$0xff pattern:$0x73625140]
      %4644 = vst [vmem:[#allocation1] ss:$4 sm:$0xff] %v4375
      %4645 = vst [vmem:[%s4608] ss:$4 sm:$0xff] %v4376
      %4646 = vst [vmem:[%s4610] ss:$4 sm:$0xff] %v4377
      %4647 = vst [vmem:[%s4612] ss:$4 sm:$0xff] %v4378
      %4648 = vst [vmem:[%s4614] ss:$4 sm:$0xff] %v4379
      %4649 = vst [vmem:[%s4616] ss:$4 sm:$0xff] %v4380
      %4650 = vst [vmem:[%s4618] ss:$4 sm:$0xff] %v4381
      %4651 = vst [vmem:[%s4620] ss:$4 sm:$0xff] %v4382
      %v4652 = vld.sshfl [vmem:[#allocation1] sm:$0xff pattern:$0x73625140]
      %v4653 = vld.sshfl [vmem:[#allocation1 + $0x20] sm:$0xff pattern:$0x73625140]
      %4654 = vst [vmem:[#allocation1] ss:$4 sm:$0xff] %v4383
      %4655 = vst [vmem:[%s4608] ss:$4 sm:$0xff] %v4384
      %4656 = vst [vmem:[%s4610] ss:$4 sm:$0xff] %v4385
      %4657 = vst [vmem:[%s4612] ss:$4 sm:$0xff] %v4386
      %4658 = vst [vmem:[%s4614] ss:$4 sm:$0xff] %v4387
      %4659 = vst [vmem:[%s4616] ss:$4 sm:$0xff] %v4388
      %4660 = vst [vmem:[%s4618] ss:$4 sm:$0xff] %v4389
      %4661 = vst [vmem:[%s4620] ss:$4 sm:$0xff] %v4390
      %v4662 = vld.sshfl [vmem:[#allocation1] sm:$0xff pattern:$0x73625140]
      %v4663 = vld.sshfl [vmem:[#allocation1 + $0x20] sm:$0xff pattern:$0x73625140]
      %4664 = vst [vmem:[#allocation1] ss:$4 sm:$0xff] %v4391
      %4665 = vst [vmem:[%s4608] ss:$4 sm:$0xff] %v4392
      %4666 = vst [vmem:[%s4610] ss:$4 sm:$0xff] %v4393
      %4667 = vst [vmem:[%s4612] ss:$4 sm:$0xff] %v4394
      %4668 = vst [vmem:[%s4614] ss:$4 sm:$0xff] %v4395
      %4669 = vst [vmem:[%s4616] ss:$4 sm:$0xff] %v4396
      %4670 = vst [vmem:[%s4618] ss:$4 sm:$0xff] %v4397
      %4671 = vst [vmem:[%s4620] ss:$4 sm:$0xff] %v4398
      %v4672 = vld.sshfl [vmem:[#allocation1] sm:$0xff pattern:$0x73625140]
      %v4673 = vld.sshfl [vmem:[#allocation1 + $0x20] sm:$0xff pattern:$0x73625140]
      %4674 = vst [vmem:[#allocation1] ss:$4 sm:$0xff] %v4399
      %4675 = vst [vmem:[%s4608] ss:$4 sm:$0xff] %v4400
      %4676 = vst [vmem:[%s4610] ss:$4 sm:$0xff] %v4401
      %4677 = vst [vmem:[%s4612] ss:$4 sm:$0xff] %v4402
      %4678 = vst [vmem:[%s4614] ss:$4 sm:$0xff] %v4403
      %4679 = vst [vmem:[%s4616] ss:$4 sm:$0xff] %v4404
      %4680 = vst [vmem:[%s4618] ss:$4 sm:$0xff] %v4405
      %4681 = vst [vmem:[%s4620] ss:$4 sm:$0xff] %v4406
      %v4682 = vld.sshfl [vmem:[#allocation1] sm:$0xff pattern:$0x73625140]
      %v4683 = vld.sshfl [vmem:[#allocation1 + $0x20] sm:$0xff pattern:$0x73625140]
      %4684 = vst [vmem:[#allocation1] ss:$4 sm:$0xff] %v4407
      %4685 = vst [vmem:[%s4608] ss:$4 sm:$0xff] %v4408
      %4686 = vst [vmem:[%s4610] ss:$4 sm:$0xff] %v4409
      %4687 = vst [vmem:[%s4612] ss:$4 sm:$0xff] %v4410
      %4688 = vst [vmem:[%s4614] ss:$4 sm:$0xff] %v4411
      %4689 = vst [vmem:[%s4616] ss:$4 sm:$0xff] %v4412
      %4690 = vst [vmem:[%s4618] ss:$4 sm:$0xff] %v4413
      %4691 = vst [vmem:[%s4620] ss:$4 sm:$0xff] %v4414
      %v4692 = vld.sshfl [vmem:[#allocation1] sm:$0xff pattern:$0x73625140]
      %v4693 = vld.sshfl [vmem:[#allocation1 + $0x20] sm:$0xff pattern:$0x73625140]
      %4694 = vst [vmem:[#allocation1] ss:$4 sm:$0xff] %v4415
      %4695 = vst [vmem:[%s4608] ss:$4 sm:$0xff] %v4416
      %4696 = vst [vmem:[%s4610] ss:$4 sm:$0xff] %v4417
      %4697 = vst [vmem:[%s4612] ss:$4 sm:$0xff] %v4418
      %4698 = vst [vmem:[%s4614] ss:$4 sm:$0xff] %v4419
      %4699 = vst [vmem:[%s4616] ss:$4 sm:$0xff] %v4420
      %4700 = vst [vmem:[%s4618] ss:$4 sm:$0xff] %v4421
      %4701 = vst [vmem:[%s4620] ss:$4 sm:$0xff] %v4422
      %v4702 = vld.sshfl [vmem:[#allocation1] sm:$0xff pattern:$0x73625140]
      %v4703 = vld.sshfl [vmem:[#allocation1 + $0x20] sm:$0xff pattern:$0x73625140]
      %4704 = vst [vmem:[#allocation1] ss:$4 sm:$0xff] %v4423
      %4705 = vst [vmem:[%s4608] ss:$4 sm:$0xff] %v4424
      %4706 = vst [vmem:[%s4610] ss:$4 sm:$0xff] %v4425
      %4707 = vst [vmem:[%s4612] ss:$4 sm:$0xff] %v4426
      %4708 = vst [vmem:[%s4614] ss:$4 sm:$0xff] %v4427
      %4709 = vst [vmem:[%s4616] ss:$4 sm:$0xff] %v4428
      %4710 = vst [vmem:[%s4618] ss:$4 sm:$0xff] %v4429
      %4711 = vst [vmem:[%s4620] ss:$4 sm:$0xff] %v4430
      %v4712 = vld.sshfl [vmem:[#allocation1] sm:$0xff pattern:$0x73625140]
      %v4713 = vld.sshfl [vmem:[#allocation1 + $0x20] sm:$0xff pattern:$0x73625140]
      %4714 = vst [vmem:[#allocation1] ss:$4 sm:$0xff] %v4431
      %4715 = vst [vmem:[%s4608] ss:$4 sm:$0xff] %v4432
      %4716 = vst [vmem:[%s4610] ss:$4 sm:$0xff] %v4433
      %4717 = vst [vmem:[%s4612] ss:$4 sm:$0xff] %v4434
      %4718 = vst [vmem:[%s4614] ss:$4 sm:$0xff] %v4435
      %4719 = vst [vmem:[%s4616] ss:$4 sm:$0xff] %v4436
      %4720 = vst [vmem:[%s4618] ss:$4 sm:$0xff] %v4437
      %4721 = vst [vmem:[%s4620] ss:$4 sm:$0xff] %v4438
      %v4722 = vld.sshfl [vmem:[#allocation1] sm:$0xff pattern:$0x73625140]
      %v4723 = vld.sshfl [vmem:[#allocation1 + $0x20] sm:$0xff pattern:$0x73625140]
      %4724 = vst [vmem:[#allocation1] ss:$4 sm:$0xff] %v4439
      %4725 = vst [vmem:[%s4608] ss:$4 sm:$0xff] %v4440
      %4726 = vst [vmem:[%s4610] ss:$4 sm:$0xff] %v4441
      %4727 = vst [vmem:[%s4612] ss:$4 sm:$0xff] %v4442
      %4728 = vst [vmem:[%s4614] ss:$4 sm:$0xff] %v4443
      %4729 = vst [vmem:[%s4616] ss:$4 sm:$0xff] %v4444
      %4730 = vst [vmem:[%s4618] ss:$4 sm:$0xff] %v4445
      %4731 = vst [vmem:[%s4620] ss:$4 sm:$0xff] %v4446
      %v4732 = vld.sshfl [vmem:[#allocation1] sm:$0xff pattern:$0x73625140]
      %v4733 = vld.sshfl [vmem:[#allocation1 + $0x20] sm:$0xff pattern:$0x73625140]
      %4734 = vst [vmem:[#allocation1] ss:$4 sm:$0xff] %v4447
      %4735 = vst [vmem:[%s4608] ss:$4 sm:$0xff] %v4448
      %4736 = vst [vmem:[%s4610] ss:$4 sm:$0xff] %v4449
      %4737 = vst [vmem:[%s4612] ss:$4 sm:$0xff] %v4450
      %4738 = vst [vmem:[%s4614] ss:$4 sm:$0xff] %v4451
      %4739 = vst [vmem:[%s4616] ss:$4 sm:$0xff] %v4452
      %4740 = vst [vmem:[%s4618] ss:$4 sm:$0xff] %v4453
      %4741 = vst [vmem:[%s4620] ss:$4 sm:$0xff] %v4454
      %v4742 = vld.sshfl [vmem:[#allocation1] sm:$0xff pattern:$0x73625140]
      %v4743 = vld.sshfl [vmem:[#allocation1 + $0x20] sm:$0xff pattern:$0x73625140]
      %4744 = vst [vmem:[#allocation1] ss:$4 sm:$0xff] %v4455
      %4745 = vst [vmem:[%s4608] ss:$4 sm:$0xff] %v4456
      %4746 = vst [vmem:[%s4610] ss:$4 sm:$0xff] %v4457
      %4747 = vst [vmem:[%s4612] ss:$4 sm:$0xff] %v4458
      %4748 = vst [vmem:[%s4614] ss:$4 sm:$0xff] %v4459
      %4749 = vst [vmem:[%s4616] ss:$4 sm:$0xff] %v4460
      %4750 = vst [vmem:[%s4618] ss:$4 sm:$0xff] %v4461
      %4751 = vst [vmem:[%s4620] ss:$4 sm:$0xff] %v4462
      %v4752 = vld.sshfl [vmem:[#allocation1] sm:$0xff pattern:$0x73625140]
      %v4753 = vld.sshfl [vmem:[#allocation1 + $0x20] sm:$0xff pattern:$0x73625140]
      %4754 = vst [vmem:[#allocation1] ss:$4 sm:$0xff] %v4463
      %4755 = vst [vmem:[%s4608] ss:$4 sm:$0xff] %v4464
      %4756 = vst [vmem:[%s4610] ss:$4 sm:$0xff] %v4465
      %4757 = vst [vmem:[%s4612] ss:$4 sm:$0xff] %v4466
      %4758 = vst [vmem:[%s4614] ss:$4 sm:$0xff] %v4467
      %4759 = vst [vmem:[%s4616] ss:$4 sm:$0xff] %v4468
      %4760 = vst [vmem:[%s4618] ss:$4 sm:$0xff] %v4469
      %4761 = vst [vmem:[%s4620] ss:$4 sm:$0xff] %v4470
      %v4762 = vld.sshfl [vmem:[#allocation1] sm:$0xff pattern:$0x73625140]
      %v4763 = vld.sshfl [vmem:[#allocation1 + $0x20] sm:$0xff pattern:$0x73625140]
      %4764 = vst [vmem:[#allocation1] ss:$4 sm:$0xff] %v4471
      %4765 = vst [vmem:[%s4608] ss:$4 sm:$0xff] %v4472
      %4766 = vst [vmem:[%s4610] ss:$4 sm:$0xff] %v4473
      %4767 = vst [vmem:[%s4612] ss:$4 sm:$0xff] %v4474
      %4768 = vst [vmem:[%s4614] ss:$4 sm:$0xff] %v4475
      %4769 = vst [vmem:[%s4616] ss:$4 sm:$0xff] %v4476
      %4770 = vst [vmem:[%s4618] ss:$4 sm:$0xff] %v4477
      %4771 = vst [vmem:[%s4620] ss:$4 sm:$0xff] %v4478
      %v4772 = vld.sshfl [vmem:[#allocation1] sm:$0xff pattern:$0x73625140]
      %v4773 = vld.sshfl [vmem:[#allocation1 + $0x20] sm:$0xff pattern:$0x73625140]
      %v4806 = vadd.f32 %v4622, %v4623
      %v4807 = vadd.f32 %v4806, %v4632
      %v4808 = vadd.f32 %v4807, %v4633
      %v4809 = vadd.f32 %v4808, %v4642
      %v4810 = vadd.f32 %v4809, %v4643
      %v4811 = vadd.f32 %v4810, %v4652
      %v4812 = vadd.f32 %v4811, %v4653
      %v4813 = vadd.f32 %v4812, %v4662
      %v4814 = vadd.f32 %v4813, %v4663
      %v4815 = vadd.f32 %v4814, %v4672
      %v4816 = vadd.f32 %v4815, %v4673
      %v4817 = vadd.f32 %v4816, %v4682
      %v4818 = vadd.f32 %v4817, %v4683
      %v4819 = vadd.f32 %v4818, %v4692
      %v4820 = vadd.f32 %v4819, %v4693
      %v4821 = vadd.f32 %v4820, %v4702
      %v4822 = vadd.f32 %v4821, %v4703
      %v4823 = vadd.f32 %v4822, %v4712
      %v4824 = vadd.f32 %v4823, %v4713
      %v4825 = vadd.f32 %v4824, %v4722
      %v4826 = vadd.f32 %v4825, %v4723
      %v4827 = vadd.f32 %v4826, %v4732
      %v4828 = vadd.f32 %v4827, %v4733
      %v4829 = vadd.f32 %v4828, %v4742
      %v4830 = vadd.f32 %v4829, %v4743
      %v4831 = vadd.f32 %v4830, %v4752
      %v4832 = vadd.f32 %v4831, %v4753
      %v4833 = vadd.f32 %v4832, %v4762
      %v4834 = vadd.f32 %v4833, %v4763
      %v4835 = vadd.f32 %v4834, %v4772
      %v4836 = vadd.f32 %v4835, %v4773
      %v4837 = vrot.slane %v4836, 4
      %v4838 = vadd.f32 %v4836, %v4837
      %v4839 = vrot.slane %v4838, 2
      %v4840 = vadd.f32 %v4838, %v4839
      %v4841 = vrot.slane %v4840, 1
      %v4842 = vadd.f32 %v4840, %v4841
      %vm4843 = vcmask 1040384
      %v4844 = vsel %vm4843, %v4350, %v4842
      %vm4845 = vcmask 1041408
      %v4846 = vsel %vm4845, %v4844, 0.0
      %4847 = vst [vmem:[%s262] sm:$0xff] %v4846
      %4848 = vst [vmem:[#allocation1] ss:$4 sm:$0xff] %v3851
      %s4849 = scalar_lea.vmem [#allocation1], 1
      %4850 = vst [vmem:[%s4849] ss:$4 sm:$0xff] %v3923
      %s4851 = scalar_lea.vmem [#allocation1], 2
      %4852 = vst [vmem:[%s4851] ss:$4 sm:$0xff] %v3924
      %s4853 = scalar_lea.vmem [#allocation1], 3
      %4854 = vst [vmem:[%s4853] ss:$4 sm:$0xff] %v3925
      %s4855 = scalar_lea.vmem [#allocation1], 32
      %4856 = vst [vmem:[%s4855] ss:$4 sm:$0xff] %v3852
      %s4857 = scalar_lea.vmem [#allocation1], 33
      %4858 = vst [vmem:[%s4857] ss:$4 sm:$0xff] %v3926
      %s4859 = scalar_lea.vmem [#allocation1], 34
      %4860 = vst [vmem:[%s4859] ss:$4 sm:$0xff] %v3927
      %s4861 = scalar_lea.vmem [#allocation1], 35
      %4862 = vst [vmem:[%s4861] ss:$4 sm:$0xff] %v3928
      %v4863 = vld.sshfl [vmem:[#allocation1] sm:$0xff pattern:$0x73625140]
      %v4864 = vld.sshfl [vmem:[#allocation1 + $0x20] sm:$0xff pattern:$0x73625140]
      %4865 = vst [vmem:[#allocation1] ss:$4 sm:$0xff] %v3929
      %4866 = vst [vmem:[%s4849] ss:$4 sm:$0xff] %v3930
      %4867 = vst [vmem:[%s4851] ss:$4 sm:$0xff] %v3931
      %4868 = vst [vmem:[%s4853] ss:$4 sm:$0xff] %v3854
      %4869 = vst [vmem:[%s4855] ss:$4 sm:$0xff] %v3932
      %4870 = vst [vmem:[%s4857] ss:$4 sm:$0xff] %v3933
      %4871 = vst [vmem:[%s4859] ss:$4 sm:$0xff] %v3934
      %4872 = vst [vmem:[%s4861] ss:$4 sm:$0xff] %v3855
      %v4873 = vld.sshfl [vmem:[#allocation1] sm:$0xff pattern:$0x73625140]
      %v4874 = vld.sshfl [vmem:[#allocation1 + $0x20] sm:$0xff pattern:$0x73625140]
      %4875 = vst [vmem:[#allocation1] ss:$4 sm:$0xff] %v3935
      %4876 = vst [vmem:[%s4849] ss:$4 sm:$0xff] %v3936
      %4877 = vst [vmem:[%s4851] ss:$4 sm:$0xff] %v3856
      %4878 = vst [vmem:[%s4853] ss:$4 sm:$0xff] %v3937
      %4879 = vst [vmem:[%s4855] ss:$4 sm:$0xff] %v3938
      %4880 = vst [vmem:[%s4857] ss:$4 sm:$0xff] %v3939
      %4881 = vst [vmem:[%s4859] ss:$4 sm:$0xff] %v3857
      %4882 = vst [vmem:[%s4861] ss:$4 sm:$0xff] %v3940
      %v4883 = vld.sshfl [vmem:[#allocation1] sm:$0xff pattern:$0x73625140]
      %v4884 = vld.sshfl [vmem:[#allocation1 + $0x20] sm:$0xff pattern:$0x73625140]
      %4885 = vst [vmem:[#allocation1] ss:$4 sm:$0xff] %v3941
      %4886 = vst [vmem:[%s4849] ss:$4 sm:$0xff] %v3858
      %4887 = vst [vmem:[%s4851] ss:$4 sm:$0xff] %v3942
      %4888 = vst [vmem:[%s4853] ss:$4 sm:$0xff] %v3943
      %4889 = vst [vmem:[%s4855] ss:$4 sm:$0xff] %v3944
      %4890 = vst [vmem:[%s4857] ss:$4 sm:$0xff] %v3859
      %4891 = vst [vmem:[%s4859] ss:$4 sm:$0xff] %v3945
      %4892 = vst [vmem:[%s4861] ss:$4 sm:$0xff] %v3946
      %v4893 = vld.sshfl [vmem:[#allocation1] sm:$0xff pattern:$0x73625140]
      %v4894 = vld.sshfl [vmem:[#allocation1 + $0x20] sm:$0xff pattern:$0x73625140]
      %4895 = vst [vmem:[#allocation1] ss:$4 sm:$0xff] %v3860
      %4896 = vst [vmem:[%s4849] ss:$4 sm:$0xff] %v3947
      %4897 = vst [vmem:[%s4851] ss:$4 sm:$0xff] %v3948
      %4898 = vst [vmem:[%s4853] ss:$4 sm:$0xff] %v3949
      %4899 = vst [vmem:[%s4855] ss:$4 sm:$0xff] %v3861
      %4900 = vst [vmem:[%s4857] ss:$4 sm:$0xff] %v3950
      %4901 = vst [vmem:[%s4859] ss:$4 sm:$0xff] %v3951
      %4902 = vst [vmem:[%s4861] ss:$4 sm:$0xff] %v3952
      %v4903 = vld.sshfl [vmem:[#allocation1] sm:$0xff pattern:$0x73625140]
      %v4904 = vld.sshfl [vmem:[#allocation1 + $0x20] sm:$0xff pattern:$0x73625140]
      %4905 = vst [vmem:[#allocation1] ss:$4 sm:$0xff] %v3953
      %4906 = vst [vmem:[%s4849] ss:$4 sm:$0xff] %v3954
      %4907 = vst [vmem:[%s4851] ss:$4 sm:$0xff] %v3955
      %4908 = vst [vmem:[%s4853] ss:$4 sm:$0xff] %v3863
      %4909 = vst [vmem:[%s4855] ss:$4 sm:$0xff] %v3956
      %4910 = vst [vmem:[%s4857] ss:$4 sm:$0xff] %v3957
      %4911 = vst [vmem:[%s4859] ss:$4 sm:$0xff] %v3958
      %4912 = vst [vmem:[%s4861] ss:$4 sm:$0xff] %v3864
      %v4913 = vld.sshfl [vmem:[#allocation1] sm:$0xff pattern:$0x73625140]
      %v4914 = vld.sshfl [vmem:[#allocation1 + $0x20] sm:$0xff pattern:$0x73625140]
      %4915 = vst [vmem:[#allocation1] ss:$4 sm:$0xff] %v3959
      %4916 = vst [vmem:[%s4849] ss:$4 sm:$0xff] %v3960
      %4917 = vst [vmem:[%s4851] ss:$4 sm:$0xff] %v3865
      %4918 = vst [vmem:[%s4853] ss:$4 sm:$0xff] %v3961
      %4919 = vst [vmem:[%s4855] ss:$4 sm:$0xff] %v3962
      %4920 = vst [vmem:[%s4857] ss:$4 sm:$0xff] %v3963
      %4921 = vst [vmem:[%s4859] ss:$4 sm:$0xff] %v3866
      %4922 = vst [vmem:[%s4861] ss:$4 sm:$0xff] %v3964
      %v4923 = vld.sshfl [vmem:[#allocation1] sm:$0xff pattern:$0x73625140]
      %v4924 = vld.sshfl [vmem:[#allocation1 + $0x20] sm:$0xff pattern:$0x73625140]
      %4925 = vst [vmem:[#allocation1] ss:$4 sm:$0xff] %v3965
      %4926 = vst [vmem:[%s4849] ss:$4 sm:$0xff] %v3867
      %4927 = vst [vmem:[%s4851] ss:$4 sm:$0xff] %v3966
      %4928 = vst [vmem:[%s4853] ss:$4 sm:$0xff] %v3967
      %4929 = vst [vmem:[%s4855] ss:$4 sm:$0xff] %v3968
      %4930 = vst [vmem:[%s4857] ss:$4 sm:$0xff] %v3868
      %4931 = vst [vmem:[%s4859] ss:$4 sm:$0xff] %v3969
      %4932 = vst [vmem:[%s4861] ss:$4 sm:$0xff] %v3970
      %v4933 = vld.sshfl [vmem:[#allocation1] sm:$0xff pattern:$0x73625140]
      %v4934 = vld.sshfl [vmem:[#allocation1 + $0x20] sm:$0xff pattern:$0x73625140]
      %4935 = vst [vmem:[#allocation1] ss:$4 sm:$0xff] %v3869
      %4936 = vst [vmem:[%s4849] ss:$4 sm:$0xff] %v3971
      %4937 = vst [vmem:[%s4851] ss:$4 sm:$0xff] %v3972
      %4938 = vst [vmem:[%s4853] ss:$4 sm:$0xff] %v3973
      %4939 = vst [vmem:[%s4855] ss:$4 sm:$0xff] %v3870
      %4940 = vst [vmem:[%s4857] ss:$4 sm:$0xff] %v3974
      %4941 = vst [vmem:[%s4859] ss:$4 sm:$0xff] %v3975
      %4942 = vst [vmem:[%s4861] ss:$4 sm:$0xff] %v3976
      %v4943 = vld.sshfl [vmem:[#allocation1] sm:$0xff pattern:$0x73625140]
      %v4944 = vld.sshfl [vmem:[#allocation1 + $0x20] sm:$0xff pattern:$0x73625140]
      %4945 = vst [vmem:[#allocation1] ss:$4 sm:$0xff] %v3977
      %4946 = vst [vmem:[%s4849] ss:$4 sm:$0xff] %v3978
      %4947 = vst [vmem:[%s4851] ss:$4 sm:$0xff] %v3979
      %4948 = vst [vmem:[%s4853] ss:$4 sm:$0xff] %v3872
      %4949 = vst [vmem:[%s4855] ss:$4 sm:$0xff] %v3980
      %4950 = vst [vmem:[%s4857] ss:$4 sm:$0xff] %v3981
      %4951 = vst [vmem:[%s4859] ss:$4 sm:$0xff] %v3982
      %4952 = vst [vmem:[%s4861] ss:$4 sm:$0xff] %v3873
      %v4953 = vld.sshfl [vmem:[#allocation1] sm:$0xff pattern:$0x73625140]
      %v4954 = vld.sshfl [vmem:[#allocation1 + $0x20] sm:$0xff pattern:$0x73625140]
      %4955 = vst [vmem:[#allocation1] ss:$4 sm:$0xff] %v3983
      %4956 = vst [vmem:[%s4849] ss:$4 sm:$0xff] %v3984
      %4957 = vst [vmem:[%s4851] ss:$4 sm:$0xff] %v3874
      %4958 = vst [vmem:[%s4853] ss:$4 sm:$0xff] %v3985
      %4959 = vst [vmem:[%s4855] ss:$4 sm:$0xff] %v3986
      %4960 = vst [vmem:[%s4857] ss:$4 sm:$0xff] %v3987
      %4961 = vst [vmem:[%s4859] ss:$4 sm:$0xff] %v3875
      %4962 = vst [vmem:[%s4861] ss:$4 sm:$0xff] %v3988
      %v4963 = vld.sshfl [vmem:[#allocation1] sm:$0xff pattern:$0x73625140]
      %v4964 = vld.sshfl [vmem:[#allocation1 + $0x20] sm:$0xff pattern:$0x73625140]
      %4965 = vst [vmem:[#allocation1] ss:$4 sm:$0xff] %v3989
      %4966 = vst [vmem:[%s4849] ss:$4 sm:$0xff] %v3876
      %4967 = vst [vmem:[%s4851] ss:$4 sm:$0xff] %v3990
      %4968 = vst [vmem:[%s4853] ss:$4 sm:$0xff] %v3991
      %4969 = vst [vmem:[%s4855] ss:$4 sm:$0xff] %v3992
      %4970 = vst [vmem:[%s4857] ss:$4 sm:$0xff] %v3877
      %4971 = vst [vmem:[%s4859] ss:$4 sm:$0xff] %v3993
      %4972 = vst [vmem:[%s4861] ss:$4 sm:$0xff] %v3994
      %v4973 = vld.sshfl [vmem:[#allocation1] sm:$0xff pattern:$0x73625140]
      %v4974 = vld.sshfl [vmem:[#allocation1 + $0x20] sm:$0xff pattern:$0x73625140]
      %4975 = vst [vmem:[#allocation1] ss:$4 sm:$0xff] %v3878
      %4976 = vst [vmem:[%s4849] ss:$4 sm:$0xff] %v3995
      %4977 = vst [vmem:[%s4851] ss:$4 sm:$0xff] %v3996
      %4978 = vst [vmem:[%s4853] ss:$4 sm:$0xff] %v3997
      %4979 = vst [vmem:[%s4855] ss:$4 sm:$0xff] %v3879
      %4980 = vst [vmem:[%s4857] ss:$4 sm:$0xff] %v3998
      %4981 = vst [vmem:[%s4859] ss:$4 sm:$0xff] %v3999
      %4982 = vst [vmem:[%s4861] ss:$4 sm:$0xff] %v4000
      %v4983 = vld.sshfl [vmem:[#allocation1] sm:$0xff pattern:$0x73625140]
      %v4984 = vld.sshfl [vmem:[#allocation1 + $0x20] sm:$0xff pattern:$0x73625140]
      %4985 = vst [vmem:[#allocation1] ss:$4 sm:$0xff] %v4001
      %4986 = vst [vmem:[%s4849] ss:$4 sm:$0xff] %v4002
      %4987 = vst [vmem:[%s4851] ss:$4 sm:$0xff] %v4003
      %4988 = vst [vmem:[%s4853] ss:$4 sm:$0xff] %v3881
      %4989 = vst [vmem:[%s4855] ss:$4 sm:$0xff] %v4004
      %4990 = vst [vmem:[%s4857] ss:$4 sm:$0xff] %v4005
      %4991 = vst [vmem:[%s4859] ss:$4 sm:$0xff] %v4006
      %4992 = vst [vmem:[%s4861] ss:$4 sm:$0xff] %v3882
      %v4993 = vld.sshfl [vmem:[#allocation1] sm:$0xff pattern:$0x73625140]
      %v4994 = vld.sshfl [vmem:[#allocation1 + $0x20] sm:$0xff pattern:$0x73625140]
      %4995 = vst [vmem:[#allocation1] ss:$4 sm:$0xff] %v4007
      %4996 = vst [vmem:[%s4849] ss:$4 sm:$0xff] %v4008
      %4997 = vst [vmem:[%s4851] ss:$4 sm:$0xff] %v3883
      %4998 = vst [vmem:[%s4853] ss:$4 sm:$0xff] %v4009
      %4999 = vst [vmem:[%s4855] ss:$4 sm:$0xff] %v4010
      %5000 = vst [vmem:[%s4857] ss:$4 sm:$0xff] %v4011
      %5001 = vst [vmem:[%s4859] ss:$4 sm:$0xff] %v3884
      %5002 = vst [vmem:[%s4861] ss:$4 sm:$0xff] %v4012
      %v5003 = vld.sshfl [vmem:[#allocation1] sm:$0xff pattern:$0x73625140]
      %v5004 = vld.sshfl [vmem:[#allocation1 + $0x20] sm:$0xff pattern:$0x73625140]
      %5005 = vst [vmem:[#allocation1] ss:$4 sm:$0xff] %v4013
      %5006 = vst [vmem:[%s4849] ss:$4 sm:$0xff] %v3885
      %5007 = vst [vmem:[%s4851] ss:$4 sm:$0xff] %v4014
      %5008 = vst [vmem:[%s4853] ss:$4 sm:$0xff] %v4015
      %5009 = vst [vmem:[%s4855] ss:$4 sm:$0xff] %v4016
      %5010 = vst [vmem:[%s4857] ss:$4 sm:$0xff] %v3886
      %5011 = vst [vmem:[%s4859] ss:$4 sm:$0xff] %v4017
      %5012 = vst [vmem:[%s4861] ss:$4 sm:$0xff] %v4018
      %v5013 = vld.sshfl [vmem:[#allocation1] sm:$0xff pattern:$0x73625140]
      %v5014 = vld.sshfl [vmem:[#allocation1 + $0x20] sm:$0xff pattern:$0x73625140]
      %v5047 = vpack.c.bf16 %v4863, %v4863
      %v5048 = vpack.c.bf16 %v4864, %v4864
      %v5049 = vpack.c.bf16 %v4873, %v4873
      %v5050 = vpack.c.bf16 %v4874, %v4874
      %v5051 = vpack.c.bf16 %v4883, %v4883
      %v5052 = vpack.c.bf16 %v4884, %v4884
      %v5053 = vpack.c.bf16 %v4893, %v4893
      %v5054 = vpack.c.bf16 %v4894, %v4894
      %v5055 = vpack.c.bf16 %v4903, %v4903
      %v5056 = vpack.c.bf16 %v4904, %v4904
      %v5057 = vpack.c.bf16 %v4913, %v4913
      %v5058 = vpack.c.bf16 %v4914, %v4914
      %v5059 = vpack.c.bf16 %v4923, %v4923
      %v5060 = vpack.c.bf16 %v4924, %v4924
      %v5061 = vpack.c.bf16 %v4933, %v4933
      %v5062 = vpack.c.bf16 %v4934, %v4934
      %v5063 = vpack.c.bf16 %v4943, %v4943
      %v5064 = vpack.c.bf16 %v4944, %v4944
      %v5065 = vpack.c.bf16 %v4953, %v4953
      %v5066 = vpack.c.bf16 %v4954, %v4954
      %v5067 = vpack.c.bf16 %v4963, %v4963
      %v5068 = vpack.c.bf16 %v4964, %v4964
      %v5069 = vpack.c.bf16 %v4973, %v4973
      %v5070 = vpack.c.bf16 %v4974, %v4974
      %v5071 = vpack.c.bf16 %v4983, %v4983
      %v5072 = vpack.c.bf16 %v4984, %v4984
      %v5073 = vpack.c.bf16 %v4993, %v4993
      %v5074 = vpack.c.bf16 %v4994, %v4994
      %v5075 = vpack.c.bf16 %v5003, %v5003
      %v5076 = vpack.c.bf16 %v5004, %v5004
      %v5077 = vpack.c.bf16 %v5013, %v5013
      %v5078 = vpack.c.bf16 %v5014, %v5014
      %5079 = vst [vmem:[%s258] sm:$0xf] %v5047
      %5080 = vst [vmem:[%s258 + $0x4] sm:$0xf] %v5048
      %5081 = vst [vmem:[%s258 + $0x8] sm:$0xf] %v5049
      %5082 = vst [vmem:[%s258 + $0xc] sm:$0xf] %v5050
      %5083 = vst [vmem:[%s258 + $0x10] sm:$0xf] %v5051
      %5084 = vst [vmem:[%s258 + $0x14] sm:$0xf] %v5052
      %5085 = vst [vmem:[%s258 + $0x18] sm:$0xf] %v5053
      %5086 = vst [vmem:[%s258 + $0x1c] sm:$0xf] %v5054
      %5087 = vst [vmem:[%s258 + $0x20] sm:$0xf] %v5055
      %5088 = vst [vmem:[%s258 + $0x24] sm:$0xf] %v5056
      %5089 = vst [vmem:[%s258 + $0x28] sm:$0xf] %v5057
      %5090 = vst [vmem:[%s258 + $0x2c] sm:$0xf] %v5058
      %5091 = vst [vmem:[%s258 + $0x30] sm:$0xf] %v5059
      %5092 = vst [vmem:[%s258 + $0x34] sm:$0xf] %v5060
      %5093 = vst [vmem:[%s258 + $0x38] sm:$0xf] %v5061
      %5094 = vst [vmem:[%s258 + $0x3c] sm:$0xf] %v5062
      %5095 = vst [vmem:[%s258 + $0x40] sm:$0xf] %v5063
      %5096 = vst [vmem:[%s258 + $0x44] sm:$0xf] %v5064
      %5097 = vst [vmem:[%s258 + $0x48] sm:$0xf] %v5065
      %5098 = vst [vmem:[%s258 + $0x4c] sm:$0xf] %v5066
      %5099 = vst [vmem:[%s258 + $0x50] sm:$0xf] %v5067
      %5100 = vst [vmem:[%s258 + $0x54] sm:$0xf] %v5068
      %5101 = vst [vmem:[%s258 + $0x58] sm:$0xf] %v5069
      %5102 = vst [vmem:[%s258 + $0x5c] sm:$0xf] %v5070
      %5103 = vst [vmem:[%s258 + $0x60] sm:$0xf] %v5071
      %5104 = vst [vmem:[%s258 + $0x64] sm:$0xf] %v5072
      %5105 = vst [vmem:[%s258 + $0x68] sm:$0xf] %v5073
      %5106 = vst [vmem:[%s258 + $0x6c] sm:$0xf] %v5074
      %5107 = vst [vmem:[%s258 + $0x70] sm:$0xf] %v5075
      %5108 = vst [vmem:[%s258 + $0x74] sm:$0xf] %v5076
      %5109 = vst [vmem:[%s258 + $0x78] sm:$0xf] %v5077
      %5110 = vst [vmem:[%s258 + $0x7c] sm:$0xf] %v5078
      %p5111 = scmp.lt.s32.totalorder %s18, 1
      %s5112 = scalar_select %p5111, %s18, 1
      %s5113 = smul.addr %s5112, 32
      %s5114 = smul.addr %s5113, 4
      %s5115 = scalar_lea.vmem %s5, %s5114
      %p5116 = scmp.lt.s32.totalorder %s18, 1
      %s5117 = scalar_select %p5116, %s18, 1
      %s5118 = smul.addr %s5117, 8
      %s5119 = scalar_lea.vmem %s6, %s5118
      // Predicated region
      $region41: #{residual_block_forward.4} parent=39 // pred_check
        %p5120 = pneg %p146
      $region42: #{residual_block_forward.4} parent=39 // pred_check_branch
        %5122 = sbr.rel (%p5120) target = $region44
      $region43: #{residual_block_forward.4} parent=39 // pred_region
        _
      $region44: #{residual_block_forward.4} parent=39 // pred_fallthru
        _
      // Predicated region
      $region45: #{residual_block_forward.4} parent=39 // pred_check
        %p5123 = pneg %p172
      $region46: #{residual_block_forward.4} parent=39 // pred_check_branch
        %5125 = sbr.rel (%p5123) target = $region48
      $region47: #{residual_block_forward.4} parent=39 // pred_region
        _
      $region48: #{residual_block_forward.4} parent=39 // pred_fallthru
        _
    $region40: #{residual_block_forward.4} parent=5 // pred_fallthru
      _
    %p5126 = scmp.le.s32.totalorder 2, %s13
    // Predicated region
    $region49: #{residual_block_forward.4} parent=5 // pred_check
      %p5127 = pneg %p5126
    $region50: #{residual_block_forward.4} parent=5 // pred_check_branch
      %5129 = sbr.rel (%p5127) target = $region52
    $region51: #{residual_block_forward.4} parent=5 // pred_region
      %s5130 = ssub.s32 %s13, 2
      // Predicated region
      $region53: #{residual_block_forward.4} parent=51 // pred_check
        %p5131 = pneg %p152
      $region54: #{residual_block_forward.4} parent=51 // pred_check_branch
        %5133 = sbr.rel (%p5131) target = $region56
      $region55: #{residual_block_forward.4} parent=51 // pred_region
        %p5134 = scmp.lt.s32.totalorder %s19, 1
        %s5135 = scalar_select %p5134, %s19, 1
        %s5136 = smul.addr %s5135, 32
        %s5137 = smul.addr %s5136, 4
        %s5138 = scalar_lea.vmem %s5, %s5137
      $region56: #{residual_block_forward.4} parent=51 // pred_fallthru
        _
      // Predicated region
      $region57: #{residual_block_forward.4} parent=51 // pred_check
        %p5139 = pneg %p178
      $region58: #{residual_block_forward.4} parent=51 // pred_check_branch
        %5141 = sbr.rel (%p5139) target = $region60
      $region59: #{residual_block_forward.4} parent=51 // pred_region
        %p5142 = scmp.lt.s32.totalorder %s19, 1
        %s5143 = scalar_select %p5142, %s19, 1
        %s5144 = smul.addr %s5143, 8
        %s5145 = scalar_lea.vmem %s6, %s5144
      $region60: #{residual_block_forward.4} parent=51 // pred_fallthru
        _
    $region52: #{residual_block_forward.4} parent=5 // pred_fallthru
      _
  $region6: #{residual_block_forward.4} parent=0 // loop_footer
    %s17 = sadd.s32 1, %s13
  $region7: #{residual_block_forward.4} parent=0 // loop_footer_branch
    %12 = sbr.rel target = $region3
  $region8: #{residual_block_forward.4} parent=0 // loop_exit
    _

</llo_original>
